<compile_context>
chip_gen: v7x
topology: tpu7x:2x2x1
jax: 0.10.0
libtpu: 0.0.40
codegen_flags: <defaults>
</compile_context>

<pallas_src>
import jax
import jax.numpy as jnp
from jax.experimental import pallas as pl
from jax.experimental.pallas import tpu as pltpu


# ------------------------------ fused Pallas kernel ------------------------------

def _dqn_kernel(x_ref, w1_ref, b1_ref, w2_ref, b2_ref, w3_ref, b3_ref,
                wf1_ref, bf1_ref, wf2_ref, bf2_ref, o_ref):
    bf16, f32 = jnp.bfloat16, jnp.float32

    x = x_ref[...].astype(bf16)                                            # (TB, 168)

    # conv1 as one dense GEMM: (TB,168) @ (168,1280); bias + ReLU in f32 on the VPU.
    a1 = jnp.dot(x, w1_ref[...], preferred_element_type=f32)
    a1 = jnp.maximum(a1 + b1_ref[...], 0.0)                                # (TB, 1280)

    # conv2: (TB,1280) @ (1280,1120)
    a2 = jnp.dot(a1.astype(bf16), w2_ref[...], preferred_element_type=f32)
    a2 = jnp.maximum(a2 + b2_ref[...], 0.0)                                # (TB, 1120)

    # conv3: (TB,1120) @ (1120,768)
    a3 = jnp.dot(a2.astype(bf16), w3_ref[...], preferred_element_type=f32)
    a3 = jnp.maximum(a3 + b3_ref[...], 0.0)                                # (TB, 768)

    # fc1: (TB,768) @ (768,512)  (weight pre-permuted to the kernel's (h, w, c) flatten order)
    h = jnp.dot(a3.astype(bf16), wf1_ref[...], preferred_element_type=f32)
    h = jnp.maximum(h + bf1_ref[...], 0.0)                                 # (TB, 512)

    # fc2 (512 -> 1): VPU multiply + lane reduction (avoids an N=1 lane-sparse MXU pass).
    q = jnp.sum(h * wf2_ref[...], axis=-1, keepdims=True) + bf2_ref[...]   # (TB, 1)
    o_ref[...] = q.astype(o_ref.dtype)


# ------------------------------- forward wrapper ---------------------------------

def _round_up(x, m):
    return (x + m - 1) // m * m


def dqn_forward(prep, states_nchw, block_b=128):
    B, C, H, W = states_nchw.shape
    assert (C, H, W) == (1, 12, 14), "DeepQNetworkV0 (fc1=768) implies input (B, 1, 12, 14)"
    x = states_nchw.reshape(B, H * W).astype(jnp.float32)     # (B, 168), flat index = h*14 + w

    # Pick the per-step batch tile: multiple of 8 (sublane tiling), capped at block_b.
    TB = _round_up(min(block_b, _round_up(B, 8)), 8)
    Bp = _round_up(B, TB)
    if Bp != B:
        x = jnp.pad(x, ((0, Bp - B), (0, 0)))
    grid = (Bp // TB,)

    out = pl.pallas_call(
        _dqn_kernel,
        out_shape=jax.ShapeDtypeStruct((Bp, 1), jnp.float32),
        grid=grid,
        in_specs=[
            pl.BlockSpec((TB, 168), lambda g: (g, 0)),         # x (TB samples / step)
            pl.BlockSpec((168, 1280), lambda g: (0, 0)),       # conv1 dense (Toeplitz) weight
            pl.BlockSpec((1, 1280), lambda g: (0, 0)),         # conv1 bias (tiled over h,w)
            pl.BlockSpec((1280, 1120), lambda g: (0, 0)),      # conv2 dense weight
            pl.BlockSpec((1, 1120), lambda g: (0, 0)),         # conv2 bias
            pl.BlockSpec((1120, 768), lambda g: (0, 0)),       # conv3 dense weight
            pl.BlockSpec((1, 768), lambda g: (0, 0)),          # conv3 bias
            pl.BlockSpec((768, 512), lambda g: (0, 0)),        # fc1 weight (pre-permuted)
            pl.BlockSpec((1, 512), lambda g: (0, 0)),          # fc1 bias
            pl.BlockSpec((1, 512), lambda g: (0, 0)),          # fc2 weight (row vector)
            pl.BlockSpec((1, 1), lambda g: (0, 0)),            # fc2 bias
        ],
        out_specs=pl.BlockSpec((TB, 1), lambda g: (g, 0)),
        compiler_params=pltpu.CompilerParams(
            dimension_semantics=("parallel",),
            vmem_limit_bytes=48 * 1024 * 1024),
    )(x, prep["w1d"], prep["b1d"], prep["w2d"], prep["b2d"],
      prep["w3d"], prep["b3d"], prep["wf1p"], prep["bf1p"],
      prep["wf2p"], prep["bf2p"])

    return out[:B]


# ------------------------- one-time weight pre-packing ---------------------------

def _conv_to_dense(w, h_in, w_in):
    """Lower an OIHW VALID conv kernel to the dense matrix mapping the (h, w, c)-flattened
    input to the (h, w, c)-flattened output.  Built by pushing the identity basis through the
    exact conv, so every nonzero entry is exactly a weight value (no packing-index math)."""
    c_out, c_in, kh, kw = w.shape
    h_out, w_out = h_in - kh + 1, w_in - kw + 1
    n_in = h_in * w_in * c_in
    eye = jnp.eye(n_in, dtype=jnp.float32).reshape(n_in, h_in, w_in, c_in)
    eye = jnp.transpose(eye, (0, 3, 1, 2))                                  # NCHW basis
    out = jax.lax.conv_general_dilated(
        eye, w.astype(jnp.float32), (1, 1), "VALID",
        dimension_numbers=("NCHW", "OIHW", "NCHW"))                         # (n_in, Cout, Ho, Wo)
    out = jnp.transpose(out, (0, 2, 3, 1))                                  # (n_in, Ho, Wo, Cout)
    return out.reshape(n_in, h_out * w_out * c_out)


def prepare_params(p):
    """Pack PyTorch-layout weights into the kernel's layouts (done once, outside the forward)."""
    w1d = _conv_to_dense(p["w1"], 12, 14).astype(jnp.bfloat16)     # (168, 1280)
    w2d = _conv_to_dense(p["w2"], 8, 10).astype(jnp.bfloat16)      # (1280, 1120)
    w3d = _conv_to_dense(p["w3"], 5, 7).astype(jnp.bfloat16)       # (1120, 768)
    # fc1 (512,768): PyTorch input index c*24 + h*6 + w  ->  kernel order h*192 + w*32 + c.
    wf1p = jnp.transpose(p["wf1"].reshape(512, 32, 4, 6), (2, 3, 1, 0)) \
              .reshape(768, 512).astype(jnp.bfloat16)
    return {
        "w1d": w1d, "b1d": jnp.tile(p["b1"], 8 * 10).reshape(1, 1280).astype(jnp.float32),
        "w2d": w2d, "b2d": jnp.tile(p["b2"], 5 * 7).reshape(1, 1120).astype(jnp.float32),
        "w3d": w3d, "b3d": jnp.tile(p["b3"], 4 * 6).reshape(1, 768).astype(jnp.float32),
        "wf1p": wf1p, "bf1p": p["bf1"].reshape(1, 512).astype(jnp.float32),
        "wf2p": p["wf2"].reshape(1, 512).astype(jnp.float32),
        "bf2p": p["bf2"].reshape(1, 1).astype(jnp.float32),
    }


# --------------------------- references (pure JAX) --------------------------------

def dqn_forward_reference(params, states_nchw):
    """f32 reference of the original PyTorch forward."""
    def conv(x, w, b):
        y = jax.lax.conv_general_dilated(
            x, w, window_strides=(1, 1), padding="VALID",
            dimension_numbers=("NCHW", "OIHW", "NCHW"))
        return jax.nn.relu(y + b[None, :, None, None])

    x = conv(states_nchw, params["w1"], params["b1"])
    x = conv(x, params["w2"], params["b2"])
    x = conv(x, params["w3"], params["b3"])
    x = x.reshape(x.shape[0], -1)
    x = jax.nn.relu(x @ params["wf1"].T + params["bf1"])
    return x @ params["wf2"].T + params["bf2"]


def dqn_forward_bf16_reference(prep, states_nchw):
    """Pure-JAX mirror of the kernel's exact math (bf16 MXU operands, f32 accumulation) — used
    as a tight check so packing/indexing bugs cannot hide behind the bf16 tolerance."""
    bf16, f32 = jnp.bfloat16, jnp.float32
    B = states_nchw.shape[0]
    x = states_nchw.reshape(B, 168).astype(bf16)
    a1 = jnp.maximum(jnp.dot(x, prep["w1d"], preferred_element_type=f32) + prep["b1d"], 0.0)
    a2 = jnp.maximum(jnp.dot(a1.astype(bf16), prep["w2d"], preferred_element_type=f32) + prep["b2d"], 0.0)
    a3 = jnp.maximum(jnp.dot(a2.astype(bf16), prep["w3d"], preferred_element_type=f32) + prep["b3d"], 0.0)
    h = jnp.maximum(jnp.dot(a3.astype(bf16), prep["wf1p"], preferred_element_type=f32) + prep["bf1p"], 0.0)
    return jnp.sum(h * prep["wf2p"], axis=-1, keepdims=True) + prep["bf2p"]


# --------------------------------- params init ------------------------------------

def init_params(key):
    # PyTorch-style uniform(-1/sqrt(fan_in), 1/sqrt(fan_in)) synthetic init.
    ks = jax.random.split(key, 10)

    def u(k, shape, fan_in):
        bound = 1.0 / (fan_in ** 0.5)
        return jax.random.uniform(k, shape, jnp.float32, -bound, bound)

    return {
        "w1": u(ks[0], (16, 1, 5, 5), 1 * 5 * 5),
        "b1": u(ks[1], (16,), 1 * 5 * 5),
        "w2": u(ks[2], (32, 16, 4, 4), 16 * 4 * 4),
        "b2": u(ks[3], (32,), 16 * 4 * 4),
        "w3": u(ks[4], (32, 32, 2, 2), 32 * 2 * 2),
        "b3": u(ks[5], (32,), 32 * 2 * 2),
        "wf1": u(ks[6], (512, 768), 768),
        "bf1": u(ks[7], (512,), 768),
        "wf2": u(ks[8], (1, 512), 512),
        "bf2": u(ks[9], (1,), 512),
    }


# TODO(synk): nn.MSELoss (self.criterion) is training-only and not part of forward(); not ported.

if __name__ == "__main__":
    key = jax.random.PRNGKey(0)
    pkey, xkey = jax.random.split(key)
    params = init_params(pkey)
    prep = prepare_params(params)

    # Input spatial size (12, 14) -> after 5/4/2 valid convs: (4, 6); 32*4*6 = 768 = fc1.in_features.
    B = 20
    states = jax.random.normal(xkey, (B, 1, 12, 14), dtype=jnp.float32)

    fwd = jax.jit(dqn_forward, static_argnames=("block_b",))
    out = jax.block_until_ready(fwd(prep, states))                   # single step, TB = 24
    out_multi = jax.block_until_ready(fwd(prep, states, block_b=8))  # grid = (3,), exercises padding

    ref = jax.block_until_ready(dqn_forward_reference(params, states))
    ref_bf16 = jax.block_until_ready(dqn_forward_bf16_reference(prep, states))

    assert out.shape == (B, 1), out.shape
    assert out_multi.shape == (B, 1), out_multi.shape

    # Different batch tilings must agree (rows are independent).
    assert float(jnp.max(jnp.abs(out - out_multi))) <= 1e-5, "tiling mismatch"

    # Loose check vs the f32 reference (bf16 MXU operands vs f32 math).
    scale = float(jnp.max(jnp.abs(ref)))
    err_f32 = float(jnp.max(jnp.abs(out - ref)))
    assert err_f32 <= 5e-3 + 5e-2 * scale, (err_f32, scale)

    # Tight check vs a bf16-matched reference (catches packing/indexing bugs).
    err_bf16 = float(jnp.max(jnp.abs(out - ref_bf16)))
    assert err_bf16 <= 2e-3 + 2e-3 * scale, (err_bf16, scale)

    print("KERNEL_OK")
</pallas_src>

<mosaic_0001>
module attributes {stable_mosaic.version = 11 : i64} {
  func.func @_dqn_kernel(%arg0: i32, %arg1: memref<24x168xf32, #tpu.memory_space<vmem>>, %arg2: memref<168x1280xbf16, #tpu.memory_space<vmem>>, %arg3: memref<1x1280xf32, #tpu.memory_space<vmem>>, %arg4: memref<1280x1120xbf16, #tpu.memory_space<vmem>>, %arg5: memref<1x1120xf32, #tpu.memory_space<vmem>>, %arg6: memref<1120x768xbf16, #tpu.memory_space<vmem>>, %arg7: memref<1x768xf32, #tpu.memory_space<vmem>>, %arg8: memref<768x512xbf16, #tpu.memory_space<vmem>>, %arg9: memref<1x512xf32, #tpu.memory_space<vmem>>, %arg10: memref<1x512xf32, #tpu.memory_space<vmem>>, %arg11: memref<1x1xf32, #tpu.memory_space<vmem>>, %arg12: memref<24x1xf32, #tpu.memory_space<vmem>>) attributes {dimension_semantics = [#tpu.dimension_semantics<parallel>], iteration_bounds = array<i64: 1>, scalar_prefetch = 0 : i64, scratch_operands = 0 : i64, tpu.core_type = #tpu.core_type<tc>, window_params = [{transform_indices = @transform_0, window_bounds = array<i64: 24, 168>}, {pipeline_mode = #tpu.pipeline_mode<synchronous>, transform_indices = @transform_1, window_bounds = array<i64: 168, 1280>}, {pipeline_mode = #tpu.pipeline_mode<synchronous>, transform_indices = @transform_2, window_bounds = array<i64: 1, 1280>}, {pipeline_mode = #tpu.pipeline_mode<synchronous>, transform_indices = @transform_3, window_bounds = array<i64: 1280, 1120>}, {pipeline_mode = #tpu.pipeline_mode<synchronous>, transform_indices = @transform_4, window_bounds = array<i64: 1, 1120>}, {pipeline_mode = #tpu.pipeline_mode<synchronous>, transform_indices = @transform_5, window_bounds = array<i64: 1120, 768>}, {pipeline_mode = #tpu.pipeline_mode<synchronous>, transform_indices = @transform_6, window_bounds = array<i64: 1, 768>}, {pipeline_mode = #tpu.pipeline_mode<synchronous>, transform_indices = @transform_7, window_bounds = array<i64: 768, 512>}, {pipeline_mode = #tpu.pipeline_mode<synchronous>, transform_indices = @transform_8, window_bounds = array<i64: 1, 512>}, {pipeline_mode = #tpu.pipeline_mode<synchronous>, transform_indices = @transform_9, window_bounds = array<i64: 1, 512>}, {pipeline_mode = #tpu.pipeline_mode<synchronous>, transform_indices = @transform_10, window_bounds = array<i64: 1, 1>}, {transform_indices = @transform_11, window_bounds = array<i64: 24, 1>}]} {
    %c0 = arith.constant 0 : index
    %c0_0 = arith.constant 0 : index
    %0 = vector.load %arg1[%c0, %c0_0] : memref<24x168xf32, #tpu.memory_space<vmem>>, vector<24x168xf32>
    %1 = arith.truncf %0 : vector<24x168xf32> to vector<24x168xbf16>
    %c0_1 = arith.constant 0 : index
    %c0_2 = arith.constant 0 : index
    %2 = vector.load %arg2[%c0_1, %c0_2] : memref<168x1280xbf16, #tpu.memory_space<vmem>>, vector<168x1280xbf16>
    %cst = arith.constant dense<0.000000e+00> : vector<24x1280xf32>
    %3 = tpu.matmul %1, %2, %cst {dimension_numbers = #tpu.dot_dimension_numbers<[1], [0], [0], [1], [0, 0, 1, 1], [], []>} : vector<24x168xbf16>, vector<168x1280xbf16>, vector<24x1280xf32> -> vector<24x1280xf32>
    %c0_3 = arith.constant 0 : index
    %c0_4 = arith.constant 0 : index
    %4 = vector.load %arg3[%c0_3, %c0_4] : memref<1x1280xf32, #tpu.memory_space<vmem>>, vector<1x1280xf32>
    %5 = vector.broadcast %4 : vector<1x1280xf32> to vector<24x1280xf32>
    %6 = arith.addf %3, %5 : vector<24x1280xf32>
    %cst_5 = arith.constant 0.000000e+00 : f32
    %7 = vector.broadcast %cst_5 : f32 to vector<24x1280xf32>
    %8 = arith.maximumf %6, %7 : vector<24x1280xf32>
    %9 = arith.truncf %8 : vector<24x1280xf32> to vector<24x1280xbf16>
    %c0_6 = arith.constant 0 : index
    %c0_7 = arith.constant 0 : index
    %10 = vector.load %arg4[%c0_6, %c0_7] : memref<1280x1120xbf16, #tpu.memory_space<vmem>>, vector<1280x1120xbf16>
    %cst_8 = arith.constant dense<0.000000e+00> : vector<24x1120xf32>
    %11 = tpu.matmul %9, %10, %cst_8 {dimension_numbers = #tpu.dot_dimension_numbers<[1], [0], [0], [1], [0, 0, 1, 1], [], []>} : vector<24x1280xbf16>, vector<1280x1120xbf16>, vector<24x1120xf32> -> vector<24x1120xf32>
    %c0_9 = arith.constant 0 : index
    %c0_10 = arith.constant 0 : index
    %12 = vector.load %arg5[%c0_9, %c0_10] : memref<1x1120xf32, #tpu.memory_space<vmem>>, vector<1x1120xf32>
    %13 = vector.broadcast %12 : vector<1x1120xf32> to vector<24x1120xf32>
    %14 = arith.addf %11, %13 : vector<24x1120xf32>
    %cst_11 = arith.constant 0.000000e+00 : f32
    %15 = vector.broadcast %cst_11 : f32 to vector<24x1120xf32>
    %16 = arith.maximumf %14, %15 : vector<24x1120xf32>
    %17 = arith.truncf %16 : vector<24x1120xf32> to vector<24x1120xbf16>
    %c0_12 = arith.constant 0 : index
    %c0_13 = arith.constant 0 : index
    %18 = vector.load %arg6[%c0_12, %c0_13] : memref<1120x768xbf16, #tpu.memory_space<vmem>>, vector<1120x768xbf16>
    %cst_14 = arith.constant dense<0.000000e+00> : vector<24x768xf32>
    %19 = tpu.matmul %17, %18, %cst_14 {dimension_numbers = #tpu.dot_dimension_numbers<[1], [0], [0], [1], [0, 0, 1, 1], [], []>} : vector<24x1120xbf16>, vector<1120x768xbf16>, vector<24x768xf32> -> vector<24x768xf32>
    %c0_15 = arith.constant 0 : index
    %c0_16 = arith.constant 0 : index
    %20 = vector.load %arg7[%c0_15, %c0_16] : memref<1x768xf32, #tpu.memory_space<vmem>>, vector<1x768xf32>
    %21 = vector.broadcast %20 : vector<1x768xf32> to vector<24x768xf32>
    %22 = arith.addf %19, %21 : vector<24x768xf32>
    %cst_17 = arith.constant 0.000000e+00 : f32
    %23 = vector.broadcast %cst_17 : f32 to vector<24x768xf32>
    %24 = arith.maximumf %22, %23 : vector<24x768xf32>
    %25 = arith.truncf %24 : vector<24x768xf32> to vector<24x768xbf16>
    %c0_18 = arith.constant 0 : index
    %c0_19 = arith.constant 0 : index
    %26 = vector.load %arg8[%c0_18, %c0_19] : memref<768x512xbf16, #tpu.memory_space<vmem>>, vector<768x512xbf16>
    %cst_20 = arith.constant dense<0.000000e+00> : vector<24x512xf32>
    %27 = tpu.matmul %25, %26, %cst_20 {dimension_numbers = #tpu.dot_dimension_numbers<[1], [0], [0], [1], [0, 0, 1, 1], [], []>} : vector<24x768xbf16>, vector<768x512xbf16>, vector<24x512xf32> -> vector<24x512xf32>
    %c0_21 = arith.constant 0 : index
    %c0_22 = arith.constant 0 : index
    %28 = vector.load %arg9[%c0_21, %c0_22] : memref<1x512xf32, #tpu.memory_space<vmem>>, vector<1x512xf32>
    %29 = vector.broadcast %28 : vector<1x512xf32> to vector<24x512xf32>
    %30 = arith.addf %27, %29 : vector<24x512xf32>
    %cst_23 = arith.constant 0.000000e+00 : f32
    %31 = vector.broadcast %cst_23 : f32 to vector<24x512xf32>
    %32 = arith.maximumf %30, %31 : vector<24x512xf32>
    %c0_24 = arith.constant 0 : index
    %c0_25 = arith.constant 0 : index
    %33 = vector.load %arg10[%c0_24, %c0_25] : memref<1x512xf32, #tpu.memory_space<vmem>>, vector<1x512xf32>
    %34 = vector.broadcast %33 : vector<1x512xf32> to vector<24x512xf32>
    %35 = arith.mulf %32, %34 : vector<24x512xf32>
    %cst_26 = arith.constant dense<0.000000e+00> : vector<24xf32>
    %36 = vector.multi_reduction <add>, %35, %cst_26 [1] : vector<24x512xf32> to vector<24xf32>
    %37 = vector.shape_cast %36 : vector<24xf32> to vector<24x1xf32>
    %c0_27 = arith.constant 0 : index
    %c0_28 = arith.constant 0 : index
    %38 = vector.load %arg11[%c0_27, %c0_28] : memref<1x1xf32, #tpu.memory_space<vmem>>, vector<1x1xf32>
    %39 = vector.broadcast %38 : vector<1x1xf32> to vector<24x1xf32>
    %40 = arith.addf %37, %39 : vector<24x1xf32>
    %c0_29 = arith.constant 0 : index
    %c0_30 = arith.constant 0 : index
    %41 = vector.load %arg12[%c0_29, %c0_30] : memref<24x1xf32, #tpu.memory_space<vmem>>, vector<24x1xf32>
    tpu.vector_store %arg12[%c0_29, %c0_30], %40 {strides = array<i32>} : memref<24x1xf32, #tpu.memory_space<vmem>>, vector<24x1xf32>,
    return
  }
  func.func @transform_0(%arg0: i32) -> (i32, i32) {
    %c0_i32 = arith.constant 0 : i32
    %c0_i32_0 = arith.constant 0 : i32
    return %arg0, %c0_i32 : i32, i32
  }
  func.func @transform_1(%arg0: i32) -> (i32, i32) {
    %c0_i32 = arith.constant 0 : i32
    %c0_i32_0 = arith.constant 0 : i32
    %c0_i32_1 = arith.constant 0 : i32
    return %c0_i32, %c0_i32_0 : i32, i32
  }
  func.func @transform_2(%arg0: i32) -> (i32, i32) {
    %c0_i32 = arith.constant 0 : i32
    %c0_i32_0 = arith.constant 0 : i32
    %c0_i32_1 = arith.constant 0 : i32
    return %c0_i32, %c0_i32_0 : i32, i32
  }
  func.func @transform_3(%arg0: i32) -> (i32, i32) {
    %c0_i32 = arith.constant 0 : i32
    %c0_i32_0 = arith.constant 0 : i32
    %c0_i32_1 = arith.constant 0 : i32
    return %c0_i32, %c0_i32_0 : i32, i32
  }
  func.func @transform_4(%arg0: i32) -> (i32, i32) {
    %c0_i32 = arith.constant 0 : i32
    %c0_i32_0 = arith.constant 0 : i32
    %c0_i32_1 = arith.constant 0 : i32
    return %c0_i32, %c0_i32_0 : i32, i32
  }
  func.func @transform_5(%arg0: i32) -> (i32, i32) {
    %c0_i32 = arith.constant 0 : i32
    %c0_i32_0 = arith.constant 0 : i32
    %c0_i32_1 = arith.constant 0 : i32
    return %c0_i32, %c0_i32_0 : i32, i32
  }
  func.func @transform_6(%arg0: i32) -> (i32, i32) {
    %c0_i32 = arith.constant 0 : i32
    %c0_i32_0 = arith.constant 0 : i32
    %c0_i32_1 = arith.constant 0 : i32
    return %c0_i32, %c0_i32_0 : i32, i32
  }
  func.func @transform_7(%arg0: i32) -> (i32, i32) {
    %c0_i32 = arith.constant 0 : i32
    %c0_i32_0 = arith.constant 0 : i32
    %c0_i32_1 = arith.constant 0 : i32
    return %c0_i32, %c0_i32_0 : i32, i32
  }
  func.func @transform_8(%arg0: i32) -> (i32, i32) {
    %c0_i32 = arith.constant 0 : i32
    %c0_i32_0 = arith.constant 0 : i32
    %c0_i32_1 = arith.constant 0 : i32
    return %c0_i32, %c0_i32_0 : i32, i32
  }
  func.func @transform_9(%arg0: i32) -> (i32, i32) {
    %c0_i32 = arith.constant 0 : i32
    %c0_i32_0 = arith.constant 0 : i32
    %c0_i32_1 = arith.constant 0 : i32
    return %c0_i32, %c0_i32_0 : i32, i32
  }
  func.func @transform_10(%arg0: i32) -> (i32, i32) {
    %c0_i32 = arith.constant 0 : i32
    %c0_i32_0 = arith.constant 0 : i32
    %c0_i32_1 = arith.constant 0 : i32
    return %c0_i32, %c0_i32_0 : i32, i32
  }
  func.func @transform_11(%arg0: i32) -> (i32, i32) {
    %c0_i32 = arith.constant 0 : i32
    %c0_i32_0 = arith.constant 0 : i32
    return %arg0, %c0_i32 : i32, i32
  }
}

</mosaic_0001>

<llo_original>
// kernel: dqn_forward.1
$region0: #{dqn_forward.1}
  #allocation0 [shape = 'u32[]', space=smem, size = 0x4, offset = 0x4, fixed_abs, tag = 'smem constant byte address 0x4 - core index']
  #allocation1 [shape = 'u32[144,128]{1,0:T(1,128)}', space=vmem, size = 0x12000, scoped, tag = 'internal scratch']
  #allocation2 [shape = 'f32[1,1]{1,0:T(1,128)S(1)}', space=vmem, size = 0x200, scoped, tag = 'scoped memory for dqn_forward.1']
  %s0 = inlined_call_operand.vmem [shape: f32[24,168], index: 0, kind: input, shape index: {}]
  %s1 = inlined_call_operand.vmem [shape: bf16[168,1280], index: 1, kind: input, shape index: {}]
  %s2 = inlined_call_operand.vmem [shape: f32[1,1280], index: 2, kind: input, shape index: {}]
  %s3 = inlined_call_operand.vmem [shape: bf16[1280,1120], index: 3, kind: input, shape index: {}]
  %s4 = inlined_call_operand.vmem [shape: f32[1,1120], index: 4, kind: input, shape index: {}]
  %s5 = inlined_call_operand.vmem [shape: bf16[1120,768], index: 5, kind: input, shape index: {}]
  %s6 = inlined_call_operand.vmem [shape: f32[1,768], index: 6, kind: input, shape index: {}]
  %s7 = inlined_call_operand.vmem [shape: bf16[768,512], index: 7, kind: input, shape index: {}]
  %s8 = inlined_call_operand.vmem [shape: f32[1,512], index: 8, kind: input, shape index: {}]
  %s9 = inlined_call_operand.vmem [shape: f32[1,512], index: 9, kind: input, shape index: {}]
  %s10 = inlined_call_operand.<no memory space> [shape: f32[1,1], index: 10, kind: input, shape index: {}]
  %s11 = inlined_call_operand.vmem [shape: f32[24,1], index: 11, kind: output, shape index: {}]
  %s12 = sld [smem:[#allocation0]]
  $region54: #{dqn_forward.1} parent=0
    _
  %s14 = ssub.s32 1, %s12
  %s15 = scalar_select 0, %s14, %s12
  %v16 = vstv %s10
  %17 = vst [vmem:[#allocation2] sm:$0x1] %v16
  // Predicated region
  $region2: #{dqn_forward.1} parent=0 // pred_check
    _
  $region3: #{dqn_forward.1} parent=0 // pred_check_branch
    %19 = sbr.rel (0) target = $region5
  $region4: #{dqn_forward.1} parent=0 // pred_region
    _
  $region5: #{dqn_forward.1} parent=0 // pred_fallthru
    _
  // Predicated region
  $region6: #{dqn_forward.1} parent=0 // pred_check
    _
  $region7: #{dqn_forward.1} parent=0 // pred_check_branch
    %21 = sbr.rel (0) target = $region9
  $region8: #{dqn_forward.1} parent=0 // pred_region
    _
  $region9: #{dqn_forward.1} parent=0 // pred_fallthru
    _
  // Predicated region
  $region10: #{dqn_forward.1} parent=0 // pred_check
    _
  $region11: #{dqn_forward.1} parent=0 // pred_check_branch
    %23 = sbr.rel (0) target = $region13
  $region12: #{dqn_forward.1} parent=0 // pred_region
    _
  $region13: #{dqn_forward.1} parent=0 // pred_fallthru
    _
  // Predicated region
  $region14: #{dqn_forward.1} parent=0 // pred_check
    _
  $region15: #{dqn_forward.1} parent=0 // pred_check_branch
    %25 = sbr.rel (0) target = $region17
  $region16: #{dqn_forward.1} parent=0 // pred_region
    _
  $region17: #{dqn_forward.1} parent=0 // pred_fallthru
    _
  // Predicated region
  $region18: #{dqn_forward.1} parent=0 // pred_check
    _
  $region19: #{dqn_forward.1} parent=0 // pred_check_branch
    %27 = sbr.rel (0) target = $region21
  $region20: #{dqn_forward.1} parent=0 // pred_region
    _
  $region21: #{dqn_forward.1} parent=0 // pred_fallthru
    _
  // Predicated region
  $region22: #{dqn_forward.1} parent=0 // pred_check
    _
  $region23: #{dqn_forward.1} parent=0 // pred_check_branch
    %29 = sbr.rel (0) target = $region25
  $region24: #{dqn_forward.1} parent=0 // pred_region
    _
  $region25: #{dqn_forward.1} parent=0 // pred_fallthru
    _
  // Predicated region
  $region26: #{dqn_forward.1} parent=0 // pred_check
    _
  $region27: #{dqn_forward.1} parent=0 // pred_check_branch
    %31 = sbr.rel (0) target = $region29
  $region28: #{dqn_forward.1} parent=0 // pred_region
    _
  $region29: #{dqn_forward.1} parent=0 // pred_fallthru
    _
  // Predicated region
  $region30: #{dqn_forward.1} parent=0 // pred_check
    _
  $region31: #{dqn_forward.1} parent=0 // pred_check_branch
    %33 = sbr.rel (0) target = $region33
  $region32: #{dqn_forward.1} parent=0 // pred_region
    _
  $region33: #{dqn_forward.1} parent=0 // pred_fallthru
    _
  // Predicated region
  $region34: #{dqn_forward.1} parent=0 // pred_check
    _
  $region35: #{dqn_forward.1} parent=0 // pred_check_branch
    %35 = sbr.rel (0) target = $region37
  $region36: #{dqn_forward.1} parent=0 // pred_region
    _
  $region37: #{dqn_forward.1} parent=0 // pred_fallthru
    _
  // Predicated region
  $region38: #{dqn_forward.1} parent=0 // pred_check
    _
  $region39: #{dqn_forward.1} parent=0 // pred_check_branch
    %37 = sbr.rel (0) target = $region41
  $region40: #{dqn_forward.1} parent=0 // pred_region
    _
  $region41: #{dqn_forward.1} parent=0 // pred_fallthru
    _
  // Predicated region
  $region42: #{dqn_forward.1} parent=0 // pred_check
    _
  $region43: #{dqn_forward.1} parent=0 // pred_check_branch
    %39 = sbr.rel (0) target = $region45
  $region44: #{dqn_forward.1} parent=0 // pred_region
    _
  $region45: #{dqn_forward.1} parent=0 // pred_fallthru
    _
  %v41 = vld [vmem:[%s0] sm:$0xff]
  %v42 = vld [vmem:[%s0 + $0x8] sm:$0xff]
  %v43 = vld [vmem:[%s0 + $0x10] sm:$0xff]
  %v44 = vld [vmem:[%s0 + $0x18] sm:$0xff]
  %v45 = vld [vmem:[%s0 + $0x20] sm:$0xff]
  %v46 = vld [vmem:[%s0 + $0x28] sm:$0xff]
  %v47 = vpack.c.bf16 %v43, %v41
  %v48 = vpack.c.bf16 %v44, %v42
  %v49 = vpack.c.bf16 %v45, %v45
  %v50 = vpack.c.bf16 %v46, %v46
  %v51 = vld [vmem:[%s1] sm:$0xff]
  %v52 = vld [vmem:[%s1 + $0x8] sm:$0xff]
  %v53 = vld [vmem:[%s1 + $0x10] sm:$0xff]
  %v54 = vld [vmem:[%s1 + $0x18] sm:$0xff]
  %v55 = vld [vmem:[%s1 + $0x20] sm:$0xff]
  %v56 = vld [vmem:[%s1 + $0x28] sm:$0xff]
  %v57 = vld [vmem:[%s1 + $0x30] sm:$0xff]
  %v58 = vld [vmem:[%s1 + $0x38] sm:$0xff]
  %v59 = vld [vmem:[%s1 + $0x40] sm:$0xff]
  %v60 = vld [vmem:[%s1 + $0x48] sm:$0xff]
  %v61 = vld [vmem:[%s1 + $0x50] sm:$0xff]
  %v62 = vld [vmem:[%s1 + $0x58] sm:$0xff]
  %v63 = vld [vmem:[%s1 + $0x60] sm:$0xff]
  %v64 = vld [vmem:[%s1 + $0x68] sm:$0xff]
  %v65 = vld [vmem:[%s1 + $0x70] sm:$0xff]
  %v66 = vld [vmem:[%s1 + $0x78] sm:$0xff]
  %v67 = vld [vmem:[%s1 + $0x80] sm:$0xff]
  %v68 = vld [vmem:[%s1 + $0x88] sm:$0xff]
  %v69 = vld [vmem:[%s1 + $0x90] sm:$0xff]
  %v70 = vld [vmem:[%s1 + $0x98] sm:$0xff]
  %v71 = vld [vmem:[%s1 + $0xa0] sm:$0xff]
  %v72 = vld [vmem:[%s1 + $0xa8] sm:$0xff]
  %v73 = vld [vmem:[%s1 + $0xb0] sm:$0xff]
  %v74 = vld [vmem:[%s1 + $0xb8] sm:$0xff]
  %v75 = vld [vmem:[%s1 + $0xc0] sm:$0xff]
  %v76 = vld [vmem:[%s1 + $0xc8] sm:$0xff]
  %v77 = vld [vmem:[%s1 + $0xd0] sm:$0xff]
  %v78 = vld [vmem:[%s1 + $0xd8] sm:$0xff]
  %v79 = vld [vmem:[%s1 + $0xe0] sm:$0xff]
  %v80 = vld [vmem:[%s1 + $0xe8] sm:$0xff]
  %v81 = vld [vmem:[%s1 + $0xf0] sm:$0xff]
  %v82 = vld [vmem:[%s1 + $0xf8] sm:$0xff]
  %v83 = vld [vmem:[%s1 + $0x100] sm:$0xff]
  %v84 = vld [vmem:[%s1 + $0x108] sm:$0xff]
  %v85 = vld [vmem:[%s1 + $0x110] sm:$0xff]
  %v86 = vld [vmem:[%s1 + $0x118] sm:$0xff]
  %v87 = vld [vmem:[%s1 + $0x120] sm:$0xff]
  %v88 = vld [vmem:[%s1 + $0x128] sm:$0xff]
  %v89 = vld [vmem:[%s1 + $0x130] sm:$0xff]
  %v90 = vld [vmem:[%s1 + $0x138] sm:$0xff]
  %v91 = vld [vmem:[%s1 + $0x140] sm:$0xff]
  %v92 = vld [vmem:[%s1 + $0x148] sm:$0xff]
  %v93 = vld [vmem:[%s1 + $0x150] sm:$0xff]
  %v94 = vld [vmem:[%s1 + $0x158] sm:$0xff]
  %v95 = vld [vmem:[%s1 + $0x160] sm:$0xff]
  %v96 = vld [vmem:[%s1 + $0x168] sm:$0xff]
  %v97 = vld [vmem:[%s1 + $0x170] sm:$0xff]
  %v98 = vld [vmem:[%s1 + $0x178] sm:$0xff]
  %v99 = vld [vmem:[%s1 + $0x180] sm:$0xff]
  %v100 = vld [vmem:[%s1 + $0x188] sm:$0xff]
  %v101 = vld [vmem:[%s1 + $0x190] sm:$0xff]
  %v102 = vld [vmem:[%s1 + $0x198] sm:$0xff]
  %v103 = vld [vmem:[%s1 + $0x1a0] sm:$0xff]
  %v104 = vld [vmem:[%s1 + $0x1a8] sm:$0xff]
  %v105 = vld [vmem:[%s1 + $0x1b0] sm:$0xff]
  %v106 = vld [vmem:[%s1 + $0x1b8] sm:$0xff]
  %v107 = vld [vmem:[%s1 + $0x1c0] sm:$0xff]
  %v108 = vld [vmem:[%s1 + $0x1c8] sm:$0xff]
  %v109 = vld [vmem:[%s1 + $0x1d0] sm:$0xff]
  %v110 = vld [vmem:[%s1 + $0x1d8] sm:$0xff]
  %v111 = vld [vmem:[%s1 + $0x1e0] sm:$0xff]
  %v112 = vld [vmem:[%s1 + $0x1e8] sm:$0xff]
  %v113 = vld [vmem:[%s1 + $0x1f0] sm:$0xff]
  %v114 = vld [vmem:[%s1 + $0x1f8] sm:$0xff]
  %v115 = vld [vmem:[%s1 + $0x200] sm:$0xff]
  %v116 = vld [vmem:[%s1 + $0x208] sm:$0xff]
  %v117 = vld [vmem:[%s1 + $0x210] sm:$0xff]
  %v118 = vld [vmem:[%s1 + $0x218] sm:$0xff]
  %v119 = vld [vmem:[%s1 + $0x220] sm:$0xff]
  %v120 = vld [vmem:[%s1 + $0x228] sm:$0xff]
  %v121 = vld [vmem:[%s1 + $0x230] sm:$0xff]
  %v122 = vld [vmem:[%s1 + $0x238] sm:$0xff]
  %v123 = vld [vmem:[%s1 + $0x240] sm:$0xff]
  %v124 = vld [vmem:[%s1 + $0x248] sm:$0xff]
  %v125 = vld [vmem:[%s1 + $0x250] sm:$0xff]
  %v126 = vld [vmem:[%s1 + $0x258] sm:$0xff]
  %v127 = vld [vmem:[%s1 + $0x260] sm:$0xff]
  %v128 = vld [vmem:[%s1 + $0x268] sm:$0xff]
  %v129 = vld [vmem:[%s1 + $0x270] sm:$0xff]
  %v130 = vld [vmem:[%s1 + $0x278] sm:$0xff]
  %v131 = vld [vmem:[%s1 + $0x280] sm:$0xff]
  %v132 = vld [vmem:[%s1 + $0x288] sm:$0xff]
  %v133 = vld [vmem:[%s1 + $0x290] sm:$0xff]
  %v134 = vld [vmem:[%s1 + $0x298] sm:$0xff]
  %v135 = vld [vmem:[%s1 + $0x2a0] sm:$0xff]
  %v136 = vld [vmem:[%s1 + $0x2a8] sm:$0xff]
  %v137 = vld [vmem:[%s1 + $0x2b0] sm:$0xff]
  %v138 = vld [vmem:[%s1 + $0x2b8] sm:$0xff]
  %v139 = vld [vmem:[%s1 + $0x2c0] sm:$0xff]
  %v140 = vld [vmem:[%s1 + $0x2c8] sm:$0xff]
  %v141 = vld [vmem:[%s1 + $0x2d0] sm:$0xff]
  %v142 = vld [vmem:[%s1 + $0x2d8] sm:$0xff]
  %v143 = vld [vmem:[%s1 + $0x2e0] sm:$0xff]
  %v144 = vld [vmem:[%s1 + $0x2e8] sm:$0xff]
  %v145 = vld [vmem:[%s1 + $0x2f0] sm:$0xff]
  %v146 = vld [vmem:[%s1 + $0x2f8] sm:$0xff]
  %v147 = vld [vmem:[%s1 + $0x300] sm:$0xff]
  %v148 = vld [vmem:[%s1 + $0x308] sm:$0xff]
  %v149 = vld [vmem:[%s1 + $0x310] sm:$0xff]
  %v150 = vld [vmem:[%s1 + $0x318] sm:$0xff]
  %v151 = vld [vmem:[%s1 + $0x320] sm:$0xff]
  %v152 = vld [vmem:[%s1 + $0x328] sm:$0xff]
  %v153 = vld [vmem:[%s1 + $0x330] sm:$0xff]
  %v154 = vld [vmem:[%s1 + $0x338] sm:$0xff]
  %v155 = vld [vmem:[%s1 + $0x340] sm:$0xff]
  %v156 = vld [vmem:[%s2] sm:$0xff]
  %v157 = vld [vmem:[%s2 + $0x8] sm:$0x3]
  %v160 = vlaneseq
  %v161 = vshrl.u32 %v160, 7
  %v162 = vsub.s32 0, %v161
  %v163 = vrot.slane %v156, %v162
  %v164 = vlaneseq
  %v165 = vshrl.u32 %v164, 7
  %v166 = vsub.s32 1, %v165
  %v167 = vrot.slane %v156, %v166
  %v168 = vlaneseq
  %v169 = vshrl.u32 %v168, 7
  %v170 = vsub.s32 2, %v169
  %v171 = vrot.slane %v156, %v170
  %v172 = vlaneseq
  %v173 = vshrl.u32 %v172, 7
  %v174 = vsub.s32 3, %v173
  %v175 = vrot.slane %v156, %v174
  %v176 = vlaneseq
  %v177 = vshrl.u32 %v176, 7
  %v178 = vsub.s32 4, %v177
  %v179 = vrot.slane %v156, %v178
  %v180 = vlaneseq
  %v181 = vshrl.u32 %v180, 7
  %v182 = vsub.s32 5, %v181
  %v183 = vrot.slane %v156, %v182
  %v184 = vlaneseq
  %v185 = vshrl.u32 %v184, 7
  %v186 = vsub.s32 6, %v185
  %v187 = vrot.slane %v156, %v186
  %v188 = vlaneseq
  %v189 = vshrl.u32 %v188, 7
  %v190 = vsub.s32 7, %v189
  %v191 = vrot.slane %v156, %v190
  %v192 = vlaneseq
  %v193 = vshrl.u32 %v192, 7
  %v194 = vsub.s32 0, %v193
  %v195 = vrot.slane %v157, %v194
  %v196 = vlaneseq
  %v197 = vshrl.u32 %v196, 7
  %v198 = vsub.s32 1, %v197
  %v199 = vrot.slane %v157, %v198
  %v315 = vunpack.c.l.b16 %v51
  %v316 = vunpack.c.h.b16 %v51
  %v317 = vunpack.c.l.b16 %v52
  %v318 = vunpack.c.h.b16 %v52
  %v319 = vunpack.c.l.b16 %v53
  %v320 = vunpack.c.h.b16 %v53
  %v321 = vunpack.c.l.b16 %v54
  %v322 = vunpack.c.h.b16 %v54
  %v323 = vunpack.c.l.b16 %v55
  %v324 = vunpack.c.h.b16 %v55
  %v325 = vunpack.c.l.b16 %v56
  %v326 = vunpack.c.h.b16 %v56
  %v327 = vunpack.c.l.b16 %v57
  %v328 = vunpack.c.h.b16 %v57
  %v329 = vunpack.c.l.b16 %v58
  %v330 = vunpack.c.h.b16 %v58
  %v331 = vunpack.c.l.b16 %v59
  %v332 = vunpack.c.h.b16 %v59
  %v333 = vunpack.c.l.b16 %v60
  %v334 = vunpack.c.h.b16 %v60
  %v335 = vunpack.c.l.b16 %v61
  %v336 = vunpack.c.h.b16 %v61
  %v337 = vunpack.c.l.b16 %v62
  %v338 = vunpack.c.h.b16 %v62
  %v339 = vunpack.c.l.b16 %v63
  %v340 = vunpack.c.h.b16 %v63
  %v341 = vunpack.c.l.b16 %v64
  %v342 = vunpack.c.h.b16 %v64
  %v343 = vunpack.c.l.b16 %v65
  %v344 = vunpack.c.h.b16 %v65
  %v345 = vunpack.c.l.b16 %v66
  %v346 = vunpack.c.h.b16 %v66
  %v347 = vunpack.c.l.b16 %v67
  %v348 = vunpack.c.h.b16 %v67
  %v349 = vunpack.c.l.b16 %v68
  %v350 = vunpack.c.h.b16 %v68
  %v351 = vunpack.c.l.b16 %v69
  %v352 = vunpack.c.h.b16 %v69
  %v353 = vunpack.c.l.b16 %v70
  %v354 = vunpack.c.h.b16 %v70
  %v355 = vunpack.c.l.b16 %v71
  %v356 = vunpack.c.h.b16 %v71
  %v357 = vunpack.c.l.b16 %v72
  %v358 = vunpack.c.h.b16 %v72
  %v359 = vunpack.c.l.b16 %v73
  %v360 = vunpack.c.h.b16 %v73
  %v361 = vunpack.c.l.b16 %v74
  %v362 = vunpack.c.h.b16 %v74
  %v363 = vunpack.c.l.b16 %v75
  %v364 = vunpack.c.h.b16 %v75
  %v365 = vunpack.c.l.b16 %v76
  %v366 = vunpack.c.h.b16 %v76
  %v367 = vunpack.c.l.b16 %v77
  %v368 = vunpack.c.h.b16 %v77
  %v369 = vunpack.c.l.b16 %v78
  %v370 = vunpack.c.h.b16 %v78
  %v371 = vunpack.c.l.b16 %v79
  %v372 = vunpack.c.h.b16 %v79
  %v373 = vunpack.c.l.b16 %v80
  %v374 = vunpack.c.h.b16 %v80
  %v375 = vunpack.c.l.b16 %v81
  %v376 = vunpack.c.h.b16 %v81
  %v377 = vunpack.c.l.b16 %v82
  %v378 = vunpack.c.h.b16 %v82
  %v379 = vunpack.c.l.b16 %v83
  %v380 = vunpack.c.h.b16 %v83
  %v381 = vunpack.c.l.b16 %v84
  %v382 = vunpack.c.h.b16 %v84
  %v383 = vunpack.c.l.b16 %v85
  %v384 = vunpack.c.h.b16 %v85
  %v385 = vunpack.c.l.b16 %v86
  %v386 = vunpack.c.h.b16 %v86
  %v387 = vunpack.c.l.b16 %v87
  %v388 = vunpack.c.h.b16 %v87
  %v389 = vunpack.c.l.b16 %v88
  %v390 = vunpack.c.h.b16 %v88
  %v391 = vunpack.c.l.b16 %v89
  %v392 = vunpack.c.h.b16 %v89
  %v393 = vunpack.c.l.b16 %v90
  %v394 = vunpack.c.h.b16 %v90
  %v395 = vunpack.c.l.b16 %v91
  %v396 = vunpack.c.h.b16 %v91
  %v397 = vunpack.c.l.b16 %v92
  %v398 = vunpack.c.h.b16 %v92
  %v399 = vunpack.c.l.b16 %v93
  %v400 = vunpack.c.h.b16 %v93
  %v401 = vunpack.c.l.b16 %v94
  %v402 = vunpack.c.h.b16 %v94
  %v403 = vunpack.c.l.b16 %v95
  %v404 = vunpack.c.h.b16 %v95
  %v405 = vunpack.c.l.b16 %v96
  %v406 = vunpack.c.h.b16 %v96
  %v407 = vunpack.c.l.b16 %v97
  %v408 = vunpack.c.h.b16 %v97
  %v409 = vunpack.c.l.b16 %v98
  %v410 = vunpack.c.h.b16 %v98
  %v411 = vunpack.c.l.b16 %v99
  %v412 = vunpack.c.h.b16 %v99
  %v413 = vunpack.c.l.b16 %v100
  %v414 = vunpack.c.h.b16 %v100
  %v415 = vunpack.c.l.b16 %v101
  %v416 = vunpack.c.h.b16 %v101
  %v417 = vunpack.c.l.b16 %v102
  %v418 = vunpack.c.h.b16 %v102
  %v419 = vunpack.c.l.b16 %v103
  %v420 = vunpack.c.h.b16 %v103
  %v421 = vunpack.c.l.b16 %v104
  %v422 = vunpack.c.h.b16 %v104
  %v423 = vunpack.c.l.b16 %v105
  %v424 = vunpack.c.h.b16 %v105
  %v425 = vunpack.c.l.b16 %v106
  %v426 = vunpack.c.h.b16 %v106
  %v427 = vunpack.c.l.b16 %v107
  %v428 = vunpack.c.h.b16 %v107
  %v429 = vunpack.c.l.b16 %v108
  %v430 = vunpack.c.h.b16 %v108
  %v431 = vunpack.c.l.b16 %v109
  %v432 = vunpack.c.h.b16 %v109
  %v433 = vunpack.c.l.b16 %v110
  %v434 = vunpack.c.h.b16 %v110
  %v435 = vunpack.c.l.b16 %v111
  %v436 = vunpack.c.h.b16 %v111
  %v437 = vunpack.c.l.b16 %v112
  %v438 = vunpack.c.h.b16 %v112
  %v439 = vunpack.c.l.b16 %v113
  %v440 = vunpack.c.h.b16 %v113
  %v441 = vunpack.c.l.b16 %v114
  %v442 = vunpack.c.h.b16 %v114
  %v443 = vunpack.c.l.b16 %v115
  %v444 = vunpack.c.h.b16 %v115
  %v445 = vunpack.c.l.b16 %v116
  %v446 = vunpack.c.h.b16 %v116
  %v447 = vunpack.c.l.b16 %v117
  %v448 = vunpack.c.h.b16 %v117
  %v449 = vunpack.c.l.b16 %v118
  %v450 = vunpack.c.h.b16 %v118
  %v451 = vunpack.c.l.b16 %v119
  %v452 = vunpack.c.h.b16 %v119
  %v453 = vunpack.c.l.b16 %v120
  %v454 = vunpack.c.h.b16 %v120
  %v455 = vunpack.c.l.b16 %v121
  %v456 = vunpack.c.h.b16 %v121
  %v457 = vunpack.c.l.b16 %v122
  %v458 = vunpack.c.h.b16 %v122
  %v459 = vunpack.c.l.b16 %v123
  %v460 = vunpack.c.h.b16 %v123
  %v461 = vunpack.c.l.b16 %v124
  %v462 = vunpack.c.h.b16 %v124
  %v463 = vunpack.c.l.b16 %v125
  %v464 = vunpack.c.h.b16 %v125
  %v465 = vunpack.c.l.b16 %v126
  %v466 = vunpack.c.h.b16 %v126
  %v467 = vunpack.c.l.b16 %v127
  %v468 = vunpack.c.h.b16 %v127
  %v469 = vunpack.c.l.b16 %v128
  %v470 = vunpack.c.h.b16 %v128
  %v471 = vunpack.c.l.b16 %v129
  %v472 = vunpack.c.h.b16 %v129
  %v473 = vunpack.c.l.b16 %v130
  %v474 = vunpack.c.h.b16 %v130
  %v475 = vunpack.c.l.b16 %v131
  %v476 = vunpack.c.h.b16 %v131
  %v477 = vunpack.c.l.b16 %v132
  %v478 = vunpack.c.h.b16 %v132
  %v479 = vunpack.c.l.b16 %v133
  %v480 = vunpack.c.h.b16 %v133
  %v481 = vunpack.c.l.b16 %v134
  %v482 = vunpack.c.h.b16 %v134
  %v483 = vunpack.c.l.b16 %v135
  %v484 = vunpack.c.h.b16 %v135
  %v485 = vunpack.c.l.b16 %v136
  %v486 = vunpack.c.h.b16 %v136
  %v487 = vunpack.c.l.b16 %v137
  %v488 = vunpack.c.h.b16 %v137
  %v489 = vunpack.c.l.b16 %v138
  %v490 = vunpack.c.h.b16 %v138
  %v491 = vunpack.c.l.b16 %v139
  %v492 = vunpack.c.h.b16 %v139
  %v493 = vunpack.c.l.b16 %v140
  %v494 = vunpack.c.h.b16 %v140
  %v495 = vunpack.c.l.b16 %v141
  %v496 = vunpack.c.h.b16 %v141
  %v497 = vunpack.c.l.b16 %v142
  %v498 = vunpack.c.h.b16 %v142
  %v499 = vunpack.c.l.b16 %v143
  %v500 = vunpack.c.h.b16 %v143
  %v501 = vunpack.c.l.b16 %v144
  %v502 = vunpack.c.h.b16 %v144
  %v503 = vunpack.c.l.b16 %v145
  %v504 = vunpack.c.h.b16 %v145
  %v505 = vunpack.c.l.b16 %v146
  %v506 = vunpack.c.h.b16 %v146
  %v507 = vunpack.c.l.b16 %v147
  %v508 = vunpack.c.h.b16 %v147
  %v509 = vunpack.c.l.b16 %v148
  %v510 = vunpack.c.h.b16 %v148
  %v511 = vunpack.c.l.b16 %v149
  %v512 = vunpack.c.h.b16 %v149
  %v513 = vunpack.c.l.b16 %v150
  %v514 = vunpack.c.h.b16 %v150
  %v515 = vunpack.c.l.b16 %v151
  %v516 = vunpack.c.h.b16 %v151
  %v517 = vunpack.c.l.b16 %v152
  %v518 = vunpack.c.h.b16 %v152
  %v519 = vunpack.c.l.b16 %v153
  %v520 = vunpack.c.h.b16 %v153
  %v521 = vunpack.c.l.b16 %v154
  %v522 = vunpack.c.h.b16 %v154
  %v523 = vunpack.c.l.b16 %v155
  %v524 = vunpack.c.h.b16 %v155
  %v525 = vpack.c.b16 %v325, %v315
  %v526 = vpack.c.b16 %v326, %v316
  %v527 = vpack.c.b16 %v327, %v317
  %v528 = vpack.c.b16 %v328, %v318
  %v529 = vpack.c.b16 %v329, %v319
  %v530 = vpack.c.b16 %v330, %v320
  %v531 = vpack.c.b16 %v331, %v321
  %v532 = vpack.c.b16 %v332, %v322
  %v533 = vpack.c.b16 %v333, %v323
  %v534 = vpack.c.b16 %v334, %v324
  %v535 = vpack.c.b16 %v345, %v335
  %v536 = vpack.c.b16 %v346, %v336
  %v537 = vpack.c.b16 %v347, %v337
  %v538 = vpack.c.b16 %v348, %v338
  %v539 = vpack.c.b16 %v349, %v339
  %v540 = vpack.c.b16 %v350, %v340
  %v541 = vpack.c.b16 %v351, %v341
  %v542 = vpack.c.b16 %v352, %v342
  %v543 = vpack.c.b16 %v353, %v343
  %v544 = vpack.c.b16 %v354, %v344
  %v545 = vpack.c.b16 %v365, %v355
  %v546 = vpack.c.b16 %v366, %v356
  %v547 = vpack.c.b16 %v367, %v357
  %v548 = vpack.c.b16 %v368, %v358
  %v549 = vpack.c.b16 %v369, %v359
  %v550 = vpack.c.b16 %v370, %v360
  %v551 = vpack.c.b16 %v371, %v361
  %v552 = vpack.c.b16 %v372, %v362
  %v553 = vpack.c.b16 %v373, %v363
  %v554 = vpack.c.b16 %v374, %v364
  %v555 = vpack.c.b16 %v385, %v375
  %v556 = vpack.c.b16 %v386, %v376
  %v557 = vpack.c.b16 %v387, %v377
  %v558 = vpack.c.b16 %v388, %v378
  %v559 = vpack.c.b16 %v389, %v379
  %v560 = vpack.c.b16 %v390, %v380
  %v561 = vpack.c.b16 %v391, %v381
  %v562 = vpack.c.b16 %v392, %v382
  %v563 = vpack.c.b16 %v393, %v383
  %v564 = vpack.c.b16 %v394, %v384
  %v565 = vpack.c.b16 %v405, %v395
  %v566 = vpack.c.b16 %v406, %v396
  %v567 = vpack.c.b16 %v407, %v397
  %v568 = vpack.c.b16 %v408, %v398
  %v569 = vpack.c.b16 %v409, %v399
  %v570 = vpack.c.b16 %v410, %v400
  %v571 = vpack.c.b16 %v411, %v401
  %v572 = vpack.c.b16 %v412, %v402
  %v573 = vpack.c.b16 %v413, %v403
  %v574 = vpack.c.b16 %v414, %v404
  %v575 = vpack.c.b16 %v425, %v415
  %v576 = vpack.c.b16 %v426, %v416
  %v577 = vpack.c.b16 %v427, %v417
  %v578 = vpack.c.b16 %v428, %v418
  %v579 = vpack.c.b16 %v429, %v419
  %v580 = vpack.c.b16 %v430, %v420
  %v581 = vpack.c.b16 %v431, %v421
  %v582 = vpack.c.b16 %v432, %v422
  %v583 = vpack.c.b16 %v433, %v423
  %v584 = vpack.c.b16 %v434, %v424
  %v585 = vpack.c.b16 %v445, %v435
  %v586 = vpack.c.b16 %v446, %v436
  %v587 = vpack.c.b16 %v447, %v437
  %v588 = vpack.c.b16 %v448, %v438
  %v589 = vpack.c.b16 %v449, %v439
  %v590 = vpack.c.b16 %v450, %v440
  %v591 = vpack.c.b16 %v451, %v441
  %v592 = vpack.c.b16 %v452, %v442
  %v593 = vpack.c.b16 %v453, %v443
  %v594 = vpack.c.b16 %v454, %v444
  %v595 = vpack.c.b16 %v465, %v455
  %v596 = vpack.c.b16 %v466, %v456
  %v597 = vpack.c.b16 %v467, %v457
  %v598 = vpack.c.b16 %v468, %v458
  %v599 = vpack.c.b16 %v469, %v459
  %v600 = vpack.c.b16 %v470, %v460
  %v601 = vpack.c.b16 %v471, %v461
  %v602 = vpack.c.b16 %v472, %v462
  %v603 = vpack.c.b16 %v473, %v463
  %v604 = vpack.c.b16 %v474, %v464
  %v605 = vpack.c.b16 %v485, %v475
  %v606 = vpack.c.b16 %v486, %v476
  %v607 = vpack.c.b16 %v487, %v477
  %v608 = vpack.c.b16 %v488, %v478
  %v609 = vpack.c.b16 %v489, %v479
  %v610 = vpack.c.b16 %v490, %v480
  %v611 = vpack.c.b16 %v491, %v481
  %v612 = vpack.c.b16 %v492, %v482
  %v613 = vpack.c.b16 %v493, %v483
  %v614 = vpack.c.b16 %v494, %v484
  %v615 = vpack.c.b16 %v505, %v495
  %v616 = vpack.c.b16 %v506, %v496
  %v617 = vpack.c.b16 %v507, %v497
  %v618 = vpack.c.b16 %v508, %v498
  %v619 = vpack.c.b16 %v509, %v499
  %v620 = vpack.c.b16 %v510, %v500
  %v621 = vpack.c.b16 %v511, %v501
  %v622 = vpack.c.b16 %v512, %v502
  %v623 = vpack.c.b16 %v513, %v503
  %v624 = vpack.c.b16 %v514, %v504
  %v625 = vpack.c.b16 %v515, %v515
  %v626 = vpack.c.b16 %v516, %v516
  %v627 = vpack.c.b16 %v517, %v517
  %v628 = vpack.c.b16 %v518, %v518
  %v629 = vpack.c.b16 %v519, %v519
  %v630 = vpack.c.b16 %v520, %v520
  %v631 = vpack.c.b16 %v521, %v521
  %v632 = vpack.c.b16 %v522, %v522
  %v633 = vpack.c.b16 %v523, %v523
  %v634 = vpack.c.b16 %v524, %v524
  %vm735 = vcmask 326656
  %v737 = vsel %vm735, %v48, 0
  %v740 = vsel %vm735, %v50, 0
  %vm742 = vcmask 1043456
  %v744 = vsel %vm742, %v625, 0
  %v747 = vsel %vm742, %v626, 0
  %v750 = vsel %vm742, %v627, 0
  %v753 = vsel %vm742, %v628, 0
  %v756 = vsel %vm742, %v629, 0
  %v759 = vsel %vm742, %v630, 0
  %v762 = vsel %vm742, %v631, 0
  %v765 = vsel %vm742, %v632, 0
  %v768 = vsel %vm742, %v633, 0
  %v771 = vsel %vm742, %v634, 0
  %773 = vmatprep.subr.bf16.mxu0 %v526
  %774 = vmatpush1.bf16.msra.mxu0 %v525
  %775 = vmatprep.subr.bf16.mxu0 %v536
  %776 = vmatpush1.bf16.msra.mxu0 %v535
  %777 = vmatprep.subr.bf16.mxu0 %v546
  %778 = vmatpush1.bf16.msra.mxu0 %v545
  %779 = vmatprep.subr.bf16.mxu0 %v556
  %780 = vmatpush1.bf16.msra.mxu0 %v555
  %781 = vmatprep.subr.bf16.mxu0 %v566
  %782 = vmatpush1.bf16.msra.mxu0 %v565
  %783 = vmatprep.subr.bf16.mxu0 %v576
  %784 = vmatpush1.bf16.msra.mxu0 %v575
  %785 = vmatprep.subr.bf16.mxu0 %v586
  %786 = vmatpush1.bf16.msra.mxu0 %v585
  %787 = vmatprep.subr.bf16.mxu0 %v596
  %788 = vmatpush1.bf16.msra.mxu0 %v595
  %789 = vmatprep.subr.bf16.mxu0 %v606
  %790 = vmatpush1.bf16.msra.mxu0 %v605
  %791 = vmatprep.subr.bf16.mxu0 %v616
  %792 = vmatpush1.bf16.msra.mxu0 %v615
  %793 = vmatprep.subr.bf16.mxu0 %v747
  %794 = vmatpush1.bf16.msra.mxu0 %v744
  %795 = vmatprep.subr.bf16.mxu0 0
  %796 = vmatpush1.bf16.msra.mxu0 0
  %797 = vmatprep.subr.bf16.mxu0 0
  %798 = vmatpush1.bf16.msra.mxu0 0
  %799 = vmatprep.subr.bf16.mxu0 0
  %800 = vmatpush1.bf16.msra.mxu0 0
  %801 = vmatprep.subr.bf16.mxu0 0
  %802 = vmatpush1.bf16.msra.mxu0 0
  %803 = vmatprep.subr.bf16.mxu0 0
  %804 = vmatpush1.bf16.msra.mxu0 0
  %805 = vmatprep.mubr.bf16.mxu0 %v737
  %806 = vmatmul.mubr.bf16.gmra.mrb[0].mxu0 %v47
  %v807 = vpop.f32.mrb[0].mxu0
  %v808 = vadd.f32 %v163, %v807
  %v809 = vpop.f32.mrb[0].mxu0
  %v810 = vadd.f32 %v167, %v809
  %v811 = vpop.f32.mrb[0].mxu0
  %v812 = vadd.f32 %v163, %v811
  %v813 = vpop.f32.mrb[0].mxu0
  %v814 = vadd.f32 %v167, %v813
  %815 = vmatprep.mubr.bf16.mxu0 %v740
  %816 = vmatmul.mubr.bf16.gmra.mrb[0].mxu0 %v49
  %v817 = vpop.f32.mrb[0].mxu0
  %v818 = vadd.f32 %v163, %v817
  %v819 = vpop.f32.mrb[0].mxu0
  %v820 = vadd.f32 %v167, %v819
  %v821 = vpop.f32.mrb[0].mxu0
  %v822 = vpop.f32.mrb[0].mxu0
  %823 = vdwg.mxu0
  %824 = vmatprep.subr.bf16.mxu0 %v528
  %825 = vmatpush1.bf16.msra.mxu0 %v527
  %826 = vmatprep.subr.bf16.mxu0 %v538
  %827 = vmatpush1.bf16.msra.mxu0 %v537
  %828 = vmatprep.subr.bf16.mxu0 %v548
  %829 = vmatpush1.bf16.msra.mxu0 %v547
  %830 = vmatprep.subr.bf16.mxu0 %v558
  %831 = vmatpush1.bf16.msra.mxu0 %v557
  %832 = vmatprep.subr.bf16.mxu0 %v568
  %833 = vmatpush1.bf16.msra.mxu0 %v567
  %834 = vmatprep.subr.bf16.mxu0 %v578
  %835 = vmatpush1.bf16.msra.mxu0 %v577
  %836 = vmatprep.subr.bf16.mxu0 %v588
  %837 = vmatpush1.bf16.msra.mxu0 %v587
  %838 = vmatprep.subr.bf16.mxu0 %v598
  %839 = vmatpush1.bf16.msra.mxu0 %v597
  %840 = vmatprep.subr.bf16.mxu0 %v608
  %841 = vmatpush1.bf16.msra.mxu0 %v607
  %842 = vmatprep.subr.bf16.mxu0 %v618
  %843 = vmatpush1.bf16.msra.mxu0 %v617
  %844 = vmatprep.subr.bf16.mxu0 %v753
  %845 = vmatpush1.bf16.msra.mxu0 %v750
  %846 = vmatprep.subr.bf16.mxu0 0
  %847 = vmatpush1.bf16.msra.mxu0 0
  %848 = vmatprep.subr.bf16.mxu0 0
  %849 = vmatpush1.bf16.msra.mxu0 0
  %850 = vmatprep.subr.bf16.mxu0 0
  %851 = vmatpush1.bf16.msra.mxu0 0
  %852 = vmatprep.subr.bf16.mxu0 0
  %853 = vmatpush1.bf16.msra.mxu0 0
  %854 = vmatprep.subr.bf16.mxu0 0
  %855 = vmatpush1.bf16.msra.mxu0 0
  %856 = vmatprep.mubr.bf16.mxu0 %v737
  %857 = vmatmul.mubr.bf16.gmra.mrb[0].mxu0 %v47
  %v858 = vpop.f32.mrb[0].mxu0
  %v859 = vadd.f32 %v171, %v858
  %v860 = vpop.f32.mrb[0].mxu0
  %v861 = vadd.f32 %v175, %v860
  %v862 = vpop.f32.mrb[0].mxu0
  %v863 = vadd.f32 %v171, %v862
  %v864 = vpop.f32.mrb[0].mxu0
  %v865 = vadd.f32 %v175, %v864
  %866 = vmatprep.mubr.bf16.mxu0 %v740
  %867 = vmatmul.mubr.bf16.gmra.mrb[0].mxu0 %v49
  %v868 = vpop.f32.mrb[0].mxu0
  %v869 = vadd.f32 %v171, %v868
  %v870 = vpop.f32.mrb[0].mxu0
  %v871 = vadd.f32 %v175, %v870
  %v872 = vpop.f32.mrb[0].mxu0
  %v873 = vpop.f32.mrb[0].mxu0
  %874 = vdwg.mxu0
  %875 = vmatprep.subr.bf16.mxu0 %v530
  %876 = vmatpush1.bf16.msra.mxu0 %v529
  %877 = vmatprep.subr.bf16.mxu0 %v540
  %878 = vmatpush1.bf16.msra.mxu0 %v539
  %879 = vmatprep.subr.bf16.mxu0 %v550
  %880 = vmatpush1.bf16.msra.mxu0 %v549
  %881 = vmatprep.subr.bf16.mxu0 %v560
  %882 = vmatpush1.bf16.msra.mxu0 %v559
  %883 = vmatprep.subr.bf16.mxu0 %v570
  %884 = vmatpush1.bf16.msra.mxu0 %v569
  %885 = vmatprep.subr.bf16.mxu0 %v580
  %886 = vmatpush1.bf16.msra.mxu0 %v579
  %887 = vmatprep.subr.bf16.mxu0 %v590
  %888 = vmatpush1.bf16.msra.mxu0 %v589
  %889 = vmatprep.subr.bf16.mxu0 %v600
  %890 = vmatpush1.bf16.msra.mxu0 %v599
  %891 = vmatprep.subr.bf16.mxu0 %v610
  %892 = vmatpush1.bf16.msra.mxu0 %v609
  %893 = vmatprep.subr.bf16.mxu0 %v620
  %894 = vmatpush1.bf16.msra.mxu0 %v619
  %895 = vmatprep.subr.bf16.mxu0 %v759
  %896 = vmatpush1.bf16.msra.mxu0 %v756
  %897 = vmatprep.subr.bf16.mxu0 0
  %898 = vmatpush1.bf16.msra.mxu0 0
  %899 = vmatprep.subr.bf16.mxu0 0
  %900 = vmatpush1.bf16.msra.mxu0 0
  %901 = vmatprep.subr.bf16.mxu0 0
  %902 = vmatpush1.bf16.msra.mxu0 0
  %903 = vmatprep.subr.bf16.mxu0 0
  %904 = vmatpush1.bf16.msra.mxu0 0
  %905 = vmatprep.subr.bf16.mxu0 0
  %906 = vmatpush1.bf16.msra.mxu0 0
  %907 = vmatprep.mubr.bf16.mxu0 %v737
  %908 = vmatmul.mubr.bf16.gmra.mrb[0].mxu0 %v47
  %v909 = vpop.f32.mrb[0].mxu0
  %v910 = vadd.f32 %v179, %v909
  %v911 = vpop.f32.mrb[0].mxu0
  %v912 = vadd.f32 %v183, %v911
  %v913 = vpop.f32.mrb[0].mxu0
  %v914 = vadd.f32 %v179, %v913
  %v915 = vpop.f32.mrb[0].mxu0
  %v916 = vadd.f32 %v183, %v915
  %917 = vmatprep.mubr.bf16.mxu0 %v740
  %918 = vmatmul.mubr.bf16.gmra.mrb[0].mxu0 %v49
  %v919 = vpop.f32.mrb[0].mxu0
  %v920 = vadd.f32 %v179, %v919
  %v921 = vpop.f32.mrb[0].mxu0
  %v922 = vadd.f32 %v183, %v921
  %v923 = vpop.f32.mrb[0].mxu0
  %v924 = vpop.f32.mrb[0].mxu0
  %925 = vdwg.mxu0
  %926 = vmatprep.subr.bf16.mxu0 %v532
  %927 = vmatpush1.bf16.msra.mxu0 %v531
  %928 = vmatprep.subr.bf16.mxu0 %v542
  %929 = vmatpush1.bf16.msra.mxu0 %v541
  %930 = vmatprep.subr.bf16.mxu0 %v552
  %931 = vmatpush1.bf16.msra.mxu0 %v551
  %932 = vmatprep.subr.bf16.mxu0 %v562
  %933 = vmatpush1.bf16.msra.mxu0 %v561
  %934 = vmatprep.subr.bf16.mxu0 %v572
  %935 = vmatpush1.bf16.msra.mxu0 %v571
  %936 = vmatprep.subr.bf16.mxu0 %v582
  %937 = vmatpush1.bf16.msra.mxu0 %v581
  %938 = vmatprep.subr.bf16.mxu0 %v592
  %939 = vmatpush1.bf16.msra.mxu0 %v591
  %940 = vmatprep.subr.bf16.mxu0 %v602
  %941 = vmatpush1.bf16.msra.mxu0 %v601
  %942 = vmatprep.subr.bf16.mxu0 %v612
  %943 = vmatpush1.bf16.msra.mxu0 %v611
  %944 = vmatprep.subr.bf16.mxu0 %v622
  %945 = vmatpush1.bf16.msra.mxu0 %v621
  %946 = vmatprep.subr.bf16.mxu0 %v765
  %947 = vmatpush1.bf16.msra.mxu0 %v762
  %948 = vmatprep.subr.bf16.mxu0 0
  %949 = vmatpush1.bf16.msra.mxu0 0
  %950 = vmatprep.subr.bf16.mxu0 0
  %951 = vmatpush1.bf16.msra.mxu0 0
  %952 = vmatprep.subr.bf16.mxu0 0
  %953 = vmatpush1.bf16.msra.mxu0 0
  %954 = vmatprep.subr.bf16.mxu0 0
  %955 = vmatpush1.bf16.msra.mxu0 0
  %956 = vmatprep.subr.bf16.mxu0 0
  %957 = vmatpush1.bf16.msra.mxu0 0
  %958 = vmatprep.mubr.bf16.mxu0 %v737
  %959 = vmatmul.mubr.bf16.gmra.mrb[0].mxu0 %v47
  %v960 = vpop.f32.mrb[0].mxu0
  %v961 = vadd.f32 %v187, %v960
  %v962 = vpop.f32.mrb[0].mxu0
  %v963 = vadd.f32 %v191, %v962
  %v964 = vpop.f32.mrb[0].mxu0
  %v965 = vadd.f32 %v187, %v964
  %v966 = vpop.f32.mrb[0].mxu0
  %v967 = vadd.f32 %v191, %v966
  %968 = vmatprep.mubr.bf16.mxu0 %v740
  %969 = vmatmul.mubr.bf16.gmra.mrb[0].mxu0 %v49
  %v970 = vpop.f32.mrb[0].mxu0
  %v971 = vadd.f32 %v187, %v970
  %v972 = vpop.f32.mrb[0].mxu0
  %v973 = vadd.f32 %v191, %v972
  %v974 = vpop.f32.mrb[0].mxu0
  %v975 = vpop.f32.mrb[0].mxu0
  %976 = vdwg.mxu0
  %977 = vmatprep.subr.bf16.mxu0 %v534
  %978 = vmatpush1.bf16.msra.mxu0 %v533
  %979 = vmatprep.subr.bf16.mxu0 %v544
  %980 = vmatpush1.bf16.msra.mxu0 %v543
  %981 = vmatprep.subr.bf16.mxu0 %v554
  %982 = vmatpush1.bf16.msra.mxu0 %v553
  %983 = vmatprep.subr.bf16.mxu0 %v564
  %984 = vmatpush1.bf16.msra.mxu0 %v563
  %985 = vmatprep.subr.bf16.mxu0 %v574
  %986 = vmatpush1.bf16.msra.mxu0 %v573
  %987 = vmatprep.subr.bf16.mxu0 %v584
  %988 = vmatpush1.bf16.msra.mxu0 %v583
  %989 = vmatprep.subr.bf16.mxu0 %v594
  %990 = vmatpush1.bf16.msra.mxu0 %v593
  %991 = vmatprep.subr.bf16.mxu0 %v604
  %992 = vmatpush1.bf16.msra.mxu0 %v603
  %993 = vmatprep.subr.bf16.mxu0 %v614
  %994 = vmatpush1.bf16.msra.mxu0 %v613
  %995 = vmatprep.subr.bf16.mxu0 %v624
  %996 = vmatpush1.bf16.msra.mxu0 %v623
  %997 = vmatprep.subr.bf16.mxu0 %v771
  %998 = vmatpush1.bf16.msra.mxu0 %v768
  %999 = vmatprep.subr.bf16.mxu0 0
  %1000 = vmatpush1.bf16.msra.mxu0 0
  %1001 = vmatprep.subr.bf16.mxu0 0
  %1002 = vmatpush1.bf16.msra.mxu0 0
  %1003 = vmatprep.subr.bf16.mxu0 0
  %1004 = vmatpush1.bf16.msra.mxu0 0
  %1005 = vmatprep.subr.bf16.mxu0 0
  %1006 = vmatpush1.bf16.msra.mxu0 0
  %1007 = vmatprep.subr.bf16.mxu0 0
  %1008 = vmatpush1.bf16.msra.mxu0 0
  %1009 = vmatprep.mubr.bf16.mxu0 %v737
  %1010 = vmatmul.mubr.bf16.gmra.mrb[0].mxu0 %v47
  %v1011 = vpop.f32.mrb[0].mxu0
  %v1012 = vadd.f32 %v195, %v1011
  %v1013 = vpop.f32.mrb[0].mxu0
  %v1014 = vadd.f32 %v199, %v1013
  %v1015 = vpop.f32.mrb[0].mxu0
  %v1016 = vadd.f32 %v195, %v1015
  %v1017 = vpop.f32.mrb[0].mxu0
  %v1018 = vadd.f32 %v199, %v1017
  %1019 = vmatprep.mubr.bf16.mxu0 %v740
  %1020 = vmatmul.mubr.bf16.gmra.mrb[0].mxu0 %v49
  %v1021 = vpop.f32.mrb[0].mxu0
  %v1022 = vadd.f32 %v195, %v1021
  %v1023 = vpop.f32.mrb[0].mxu0
  %v1024 = vadd.f32 %v199, %v1023
  %v1025 = vpop.f32.mrb[0].mxu0
  %v1026 = vpop.f32.mrb[0].mxu0
  %1027 = vdwg.mxu0
  %v1028 = vmax.f32 %v808, 0.0
  %v1029 = vmax.f32 %v810, 0.0
  %v1030 = vmax.f32 %v859, 0.0
  %v1031 = vmax.f32 %v861, 0.0
  %v1032 = vmax.f32 %v910, 0.0
  %v1033 = vmax.f32 %v912, 0.0
  %v1034 = vmax.f32 %v961, 0.0
  %v1035 = vmax.f32 %v963, 0.0
  %v1036 = vmax.f32 %v1012, 0.0
  %v1037 = vmax.f32 %v1014, 0.0
  %v1038 = vmax.f32 %v812, 0.0
  %v1039 = vmax.f32 %v814, 0.0
  %v1040 = vmax.f32 %v863, 0.0
  %v1041 = vmax.f32 %v865, 0.0
  %v1042 = vmax.f32 %v914, 0.0
  %v1043 = vmax.f32 %v916, 0.0
  %v1044 = vmax.f32 %v965, 0.0
  %v1045 = vmax.f32 %v967, 0.0
  %v1046 = vmax.f32 %v1016, 0.0
  %v1047 = vmax.f32 %v1018, 0.0
  %v1048 = vmax.f32 %v818, 0.0
  %v1049 = vmax.f32 %v820, 0.0
  %v1050 = vmax.f32 %v869, 0.0
  %v1051 = vmax.f32 %v871, 0.0
  %v1052 = vmax.f32 %v920, 0.0
  %v1053 = vmax.f32 %v922, 0.0
  %v1054 = vmax.f32 %v971, 0.0
  %v1055 = vmax.f32 %v973, 0.0
  %v1056 = vmax.f32 %v1022, 0.0
  %v1057 = vmax.f32 %v1024, 0.0
  %v1058 = vpack.c.bf16 %v1038, %v1028
  %v1059 = vpack.c.bf16 %v1039, %v1029
  %v1060 = vpack.c.bf16 %v1040, %v1030
  %v1061 = vpack.c.bf16 %v1041, %v1031
  %v1062 = vpack.c.bf16 %v1042, %v1032
  %v1063 = vpack.c.bf16 %v1043, %v1033
  %v1064 = vpack.c.bf16 %v1044, %v1034
  %v1065 = vpack.c.bf16 %v1045, %v1035
  %v1066 = vpack.c.bf16 %v1046, %v1036
  %v1067 = vpack.c.bf16 %v1047, %v1037
  %v1068 = vpack.c.bf16 %v1048, %v1048
  %v1069 = vpack.c.bf16 %v1049, %v1049
  %v1070 = vpack.c.bf16 %v1050, %v1050
  %v1071 = vpack.c.bf16 %v1051, %v1051
  %v1072 = vpack.c.bf16 %v1052, %v1052
  %v1073 = vpack.c.bf16 %v1053, %v1053
  %v1074 = vpack.c.bf16 %v1054, %v1054
  %v1075 = vpack.c.bf16 %v1055, %v1055
  %v1076 = vpack.c.bf16 %v1056, %v1056
  %v1077 = vpack.c.bf16 %v1057, %v1057
  %v1078 = vld [vmem:[%s3] sm:$0xff]
  %v1079 = vld [vmem:[%s3 + $0x8] sm:$0xff]
  %v1080 = vld [vmem:[%s3 + $0x10] sm:$0xff]
  %v1081 = vld [vmem:[%s3 + $0x18] sm:$0xff]
  %v1082 = vld [vmem:[%s3 + $0x20] sm:$0xf]
  %v1083 = vld [vmem:[%s3 + $0x24] sm:$0xff]
  %v1084 = vld [vmem:[%s3 + $0x2c] sm:$0xff]
  %v1085 = vld [vmem:[%s3 + $0x34] sm:$0xff]
  %v1086 = vld [vmem:[%s3 + $0x3c] sm:$0xff]
  %v1087 = vld [vmem:[%s3 + $0x44] sm:$0xf]
  %v1088 = vld [vmem:[%s3 + $0x48] sm:$0xff]
  %v1089 = vld [vmem:[%s3 + $0x50] sm:$0xff]
  %v1090 = vld [vmem:[%s3 + $0x58] sm:$0xff]
  %v1091 = vld [vmem:[%s3 + $0x60] sm:$0xff]
  %v1092 = vld [vmem:[%s3 + $0x68] sm:$0xf]
  %v1093 = vld [vmem:[%s3 + $0x6c] sm:$0xff]
  %v1094 = vld [vmem:[%s3 + $0x74] sm:$0xff]
  %v1095 = vld [vmem:[%s3 + $0x7c] sm:$0xff]
  %v1096 = vld [vmem:[%s3 + $0x84] sm:$0xff]
  %v1097 = vld [vmem:[%s3 + $0x8c] sm:$0xf]
  %v1098 = vld [vmem:[%s3 + $0x90] sm:$0xff]
  %v1099 = vld [vmem:[%s3 + $0x98] sm:$0xff]
  %v1100 = vld [vmem:[%s3 + $0xa0] sm:$0xff]
  %v1101 = vld [vmem:[%s3 + $0xa8] sm:$0xff]
  %v1102 = vld [vmem:[%s3 + $0xb0] sm:$0xf]
  %v1103 = vld [vmem:[%s3 + $0xb4] sm:$0xff]
  %v1104 = vld [vmem:[%s3 + $0xbc] sm:$0xff]
  %v1105 = vld [vmem:[%s3 + $0xc4] sm:$0xff]
  %v1106 = vld [vmem:[%s3 + $0xcc] sm:$0xff]
  %v1107 = vld [vmem:[%s3 + $0xd4] sm:$0xf]
  %v1108 = vld [vmem:[%s3 + $0xd8] sm:$0xff]
  %v1109 = vld [vmem:[%s3 + $0xe0] sm:$0xff]
  %v1110 = vld [vmem:[%s3 + $0xe8] sm:$0xff]
  %v1111 = vld [vmem:[%s3 + $0xf0] sm:$0xff]
  %v1112 = vld [vmem:[%s3 + $0xf8] sm:$0xf]
  %v1113 = vld [vmem:[%s3 + $0xfc] sm:$0xff]
  %v1114 = vld [vmem:[%s3 + $0x104] sm:$0xff]
  %v1115 = vld [vmem:[%s3 + $0x10c] sm:$0xff]
  %v1116 = vld [vmem:[%s3 + $0x114] sm:$0xff]
  %v1117 = vld [vmem:[%s3 + $0x11c] sm:$0xf]
  %v1118 = vld [vmem:[%s3 + $0x120] sm:$0xff]
  %v1119 = vld [vmem:[%s3 + $0x128] sm:$0xff]
  %v1120 = vld [vmem:[%s3 + $0x130] sm:$0xff]
  %v1121 = vld [vmem:[%s3 + $0x138] sm:$0xff]
  %v1122 = vld [vmem:[%s3 + $0x140] sm:$0xf]
  %v1123 = vld [vmem:[%s3 + $0x144] sm:$0xff]
  %v1124 = vld [vmem:[%s3 + $0x14c] sm:$0xff]
  %v1125 = vld [vmem:[%s3 + $0x154] sm:$0xff]
  %v1126 = vld [vmem:[%s3 + $0x15c] sm:$0xff]
  %v1127 = vld [vmem:[%s3 + $0x164] sm:$0xf]
  %v1128 = vld [vmem:[%s3 + $0x168] sm:$0xff]
  %v1129 = vld [vmem:[%s3 + $0x170] sm:$0xff]
  %v1130 = vld [vmem:[%s3 + $0x178] sm:$0xff]
  %v1131 = vld [vmem:[%s3 + $0x180] sm:$0xff]
  %v1132 = vld [vmem:[%s3 + $0x188] sm:$0xf]
  %v1133 = vld [vmem:[%s3 + $0x18c] sm:$0xff]
  %v1134 = vld [vmem:[%s3 + $0x194] sm:$0xff]
  %v1135 = vld [vmem:[%s3 + $0x19c] sm:$0xff]
  %v1136 = vld [vmem:[%s3 + $0x1a4] sm:$0xff]
  %v1137 = vld [vmem:[%s3 + $0x1ac] sm:$0xf]
  %v1138 = vld [vmem:[%s3 + $0x1b0] sm:$0xff]
  %v1139 = vld [vmem:[%s3 + $0x1b8] sm:$0xff]
  %v1140 = vld [vmem:[%s3 + $0x1c0] sm:$0xff]
  %v1141 = vld [vmem:[%s3 + $0x1c8] sm:$0xff]
  %v1142 = vld [vmem:[%s3 + $0x1d0] sm:$0xf]
  %v1143 = vld [vmem:[%s3 + $0x1d4] sm:$0xff]
  %v1144 = vld [vmem:[%s3 + $0x1dc] sm:$0xff]
  %v1145 = vld [vmem:[%s3 + $0x1e4] sm:$0xff]
  %v1146 = vld [vmem:[%s3 + $0x1ec] sm:$0xff]
  %v1147 = vld [vmem:[%s3 + $0x1f4] sm:$0xf]
  %v1148 = vld [vmem:[%s3 + $0x1f8] sm:$0xff]
  %v1149 = vld [vmem:[%s3 + $0x200] sm:$0xff]
  %v1150 = vld [vmem:[%s3 + $0x208] sm:$0xff]
  %v1151 = vld [vmem:[%s3 + $0x210] sm:$0xff]
  %v1152 = vld [vmem:[%s3 + $0x218] sm:$0xf]
  %v1153 = vld [vmem:[%s3 + $0x21c] sm:$0xff]
  %v1154 = vld [vmem:[%s3 + $0x224] sm:$0xff]
  %v1155 = vld [vmem:[%s3 + $0x22c] sm:$0xff]
  %v1156 = vld [vmem:[%s3 + $0x234] sm:$0xff]
  %v1157 = vld [vmem:[%s3 + $0x23c] sm:$0xf]
  %v1158 = vld [vmem:[%s3 + $0x240] sm:$0xff]
  %v1159 = vld [vmem:[%s3 + $0x248] sm:$0xff]
  %v1160 = vld [vmem:[%s3 + $0x250] sm:$0xff]
  %v1161 = vld [vmem:[%s3 + $0x258] sm:$0xff]
  %v1162 = vld [vmem:[%s3 + $0x260] sm:$0xf]
  %v1163 = vld [vmem:[%s3 + $0x264] sm:$0xff]
  %v1164 = vld [vmem:[%s3 + $0x26c] sm:$0xff]
  %v1165 = vld [vmem:[%s3 + $0x274] sm:$0xff]
  %v1166 = vld [vmem:[%s3 + $0x27c] sm:$0xff]
  %v1167 = vld [vmem:[%s3 + $0x284] sm:$0xf]
  %v1168 = vld [vmem:[%s3 + $0x288] sm:$0xff]
  %v1169 = vld [vmem:[%s3 + $0x290] sm:$0xff]
  %v1170 = vld [vmem:[%s3 + $0x298] sm:$0xff]
  %v1171 = vld [vmem:[%s3 + $0x2a0] sm:$0xff]
  %v1172 = vld [vmem:[%s3 + $0x2a8] sm:$0xf]
  %v1173 = vld [vmem:[%s3 + $0x2ac] sm:$0xff]
  %v1174 = vld [vmem:[%s3 + $0x2b4] sm:$0xff]
  %v1175 = vld [vmem:[%s3 + $0x2bc] sm:$0xff]
  %v1176 = vld [vmem:[%s3 + $0x2c4] sm:$0xff]
  %v1177 = vld [vmem:[%s3 + $0x2cc] sm:$0xf]
  %v1178 = vld [vmem:[%s3 + $0x2d0] sm:$0xff]
  %v1179 = vld [vmem:[%s3 + $0x2d8] sm:$0xff]
  %v1180 = vld [vmem:[%s3 + $0x2e0] sm:$0xff]
  %v1181 = vld [vmem:[%s3 + $0x2e8] sm:$0xff]
  %v1182 = vld [vmem:[%s3 + $0x2f0] sm:$0xf]
  %v1183 = vld [vmem:[%s3 + $0x2f4] sm:$0xff]
  %v1184 = vld [vmem:[%s3 + $0x2fc] sm:$0xff]
  %v1185 = vld [vmem:[%s3 + $0x304] sm:$0xff]
  %v1186 = vld [vmem:[%s3 + $0x30c] sm:$0xff]
  %v1187 = vld [vmem:[%s3 + $0x314] sm:$0xf]
  %v1188 = vld [vmem:[%s3 + $0x318] sm:$0xff]
  %v1189 = vld [vmem:[%s3 + $0x320] sm:$0xff]
  %v1190 = vld [vmem:[%s3 + $0x328] sm:$0xff]
  %v1191 = vld [vmem:[%s3 + $0x330] sm:$0xff]
  %v1192 = vld [vmem:[%s3 + $0x338] sm:$0xf]
  %v1193 = vld [vmem:[%s3 + $0x33c] sm:$0xff]
  %v1194 = vld [vmem:[%s3 + $0x344] sm:$0xff]
  %v1195 = vld [vmem:[%s3 + $0x34c] sm:$0xff]
  %v1196 = vld [vmem:[%s3 + $0x354] sm:$0xff]
  %v1197 = vld [vmem:[%s3 + $0x35c] sm:$0xf]
  %v1198 = vld [vmem:[%s3 + $0x360] sm:$0xff]
  %v1199 = vld [vmem:[%s3 + $0x368] sm:$0xff]
  %v1200 = vld [vmem:[%s3 + $0x370] sm:$0xff]
  %v1201 = vld [vmem:[%s3 + $0x378] sm:$0xff]
  %v1202 = vld [vmem:[%s3 + $0x380] sm:$0xf]
  %v1203 = vld [vmem:[%s3 + $0x384] sm:$0xff]
  %v1204 = vld [vmem:[%s3 + $0x38c] sm:$0xff]
  %v1205 = vld [vmem:[%s3 + $0x394] sm:$0xff]
  %v1206 = vld [vmem:[%s3 + $0x39c] sm:$0xff]
  %v1207 = vld [vmem:[%s3 + $0x3a4] sm:$0xf]
  %v1208 = vld [vmem:[%s3 + $0x3a8] sm:$0xff]
  %v1209 = vld [vmem:[%s3 + $0x3b0] sm:$0xff]
  %v1210 = vld [vmem:[%s3 + $0x3b8] sm:$0xff]
  %v1211 = vld [vmem:[%s3 + $0x3c0] sm:$0xff]
  %v1212 = vld [vmem:[%s3 + $0x3c8] sm:$0xf]
  %v1213 = vld [vmem:[%s3 + $0x3cc] sm:$0xff]
  %v1214 = vld [vmem:[%s3 + $0x3d4] sm:$0xff]
  %v1215 = vld [vmem:[%s3 + $0x3dc] sm:$0xff]
  %v1216 = vld [vmem:[%s3 + $0x3e4] sm:$0xff]
  %v1217 = vld [vmem:[%s3 + $0x3ec] sm:$0xf]
  %v1218 = vld [vmem:[%s3 + $0x3f0] sm:$0xff]
  %v1219 = vld [vmem:[%s3 + $0x3f8] sm:$0xff]
  %v1220 = vld [vmem:[%s3 + $0x400] sm:$0xff]
  %v1221 = vld [vmem:[%s3 + $0x408] sm:$0xff]
  %v1222 = vld [vmem:[%s3 + $0x410] sm:$0xf]
  %v1223 = vld [vmem:[%s3 + $0x414] sm:$0xff]
  %v1224 = vld [vmem:[%s3 + $0x41c] sm:$0xff]
  %v1225 = vld [vmem:[%s3 + $0x424] sm:$0xff]
  %v1226 = vld [vmem:[%s3 + $0x42c] sm:$0xff]
  %v1227 = vld [vmem:[%s3 + $0x434] sm:$0xf]
  %v1228 = vld [vmem:[%s3 + $0x438] sm:$0xff]
  %v1229 = vld [vmem:[%s3 + $0x440] sm:$0xff]
  %v1230 = vld [vmem:[%s3 + $0x448] sm:$0xff]
  %v1231 = vld [vmem:[%s3 + $0x450] sm:$0xff]
  %v1232 = vld [vmem:[%s3 + $0x458] sm:$0xf]
  %v1233 = vld [vmem:[%s3 + $0x45c] sm:$0xff]
  %v1234 = vld [vmem:[%s3 + $0x464] sm:$0xff]
  %v1235 = vld [vmem:[%s3 + $0x46c] sm:$0xff]
  %v1236 = vld [vmem:[%s3 + $0x474] sm:$0xff]
  %v1237 = vld [vmem:[%s3 + $0x47c] sm:$0xf]
  %v1238 = vld [vmem:[%s3 + $0x480] sm:$0xff]
  %v1239 = vld [vmem:[%s3 + $0x488] sm:$0xff]
  %v1240 = vld [vmem:[%s3 + $0x490] sm:$0xff]
  %v1241 = vld [vmem:[%s3 + $0x498] sm:$0xff]
  %v1242 = vld [vmem:[%s3 + $0x4a0] sm:$0xf]
  %v1243 = vld [vmem:[%s3 + $0x4a4] sm:$0xff]
  %v1244 = vld [vmem:[%s3 + $0x4ac] sm:$0xff]
  %v1245 = vld [vmem:[%s3 + $0x4b4] sm:$0xff]
  %v1246 = vld [vmem:[%s3 + $0x4bc] sm:$0xff]
  %v1247 = vld [vmem:[%s3 + $0x4c4] sm:$0xf]
  %v1248 = vld [vmem:[%s3 + $0x4c8] sm:$0xff]
  %v1249 = vld [vmem:[%s3 + $0x4d0] sm:$0xff]
  %v1250 = vld [vmem:[%s3 + $0x4d8] sm:$0xff]
  %v1251 = vld [vmem:[%s3 + $0x4e0] sm:$0xff]
  %v1252 = vld [vmem:[%s3 + $0x4e8] sm:$0xf]
  %v1253 = vld [vmem:[%s3 + $0x4ec] sm:$0xff]
  %v1254 = vld [vmem:[%s3 + $0x4f4] sm:$0xff]
  %v1255 = vld [vmem:[%s3 + $0x4fc] sm:$0xff]
  %v1256 = vld [vmem:[%s3 + $0x504] sm:$0xff]
  %v1257 = vld [vmem:[%s3 + $0x50c] sm:$0xf]
  %v1258 = vld [vmem:[%s3 + $0x510] sm:$0xff]
  %v1259 = vld [vmem:[%s3 + $0x518] sm:$0xff]
  %v1260 = vld [vmem:[%s3 + $0x520] sm:$0xff]
  %v1261 = vld [vmem:[%s3 + $0x528] sm:$0xff]
  %v1262 = vld [vmem:[%s3 + $0x530] sm:$0xf]
  %v1263 = vld [vmem:[%s3 + $0x534] sm:$0xff]
  %v1264 = vld [vmem:[%s3 + $0x53c] sm:$0xff]
  %v1265 = vld [vmem:[%s3 + $0x544] sm:$0xff]
  %v1266 = vld [vmem:[%s3 + $0x54c] sm:$0xff]
  %v1267 = vld [vmem:[%s3 + $0x554] sm:$0xf]
  %v1268 = vld [vmem:[%s3 + $0x558] sm:$0xff]
  %v1269 = vld [vmem:[%s3 + $0x560] sm:$0xff]
  %v1270 = vld [vmem:[%s3 + $0x568] sm:$0xff]
  %v1271 = vld [vmem:[%s3 + $0x570] sm:$0xff]
  %v1272 = vld [vmem:[%s3 + $0x578] sm:$0xf]
  %v1273 = vld [vmem:[%s3 + $0x57c] sm:$0xff]
  %v1274 = vld [vmem:[%s3 + $0x584] sm:$0xff]
  %v1275 = vld [vmem:[%s3 + $0x58c] sm:$0xff]
  %v1276 = vld [vmem:[%s3 + $0x594] sm:$0xff]
  %v1277 = vld [vmem:[%s3 + $0x59c] sm:$0xf]
  %v1278 = vld [vmem:[%s3 + $0x5a0] sm:$0xff]
  %v1279 = vld [vmem:[%s3 + $0x5a8] sm:$0xff]
  %v1280 = vld [vmem:[%s3 + $0x5b0] sm:$0xff]
  %v1281 = vld [vmem:[%s3 + $0x5b8] sm:$0xff]
  %v1282 = vld [vmem:[%s3 + $0x5c0] sm:$0xf]
  %v1283 = vld [vmem:[%s3 + $0x5c4] sm:$0xff]
  %v1284 = vld [vmem:[%s3 + $0x5cc] sm:$0xff]
  %v1285 = vld [vmem:[%s3 + $0x5d4] sm:$0xff]
  %v1286 = vld [vmem:[%s3 + $0x5dc] sm:$0xff]
  %v1287 = vld [vmem:[%s3 + $0x5e4] sm:$0xf]
  %v1288 = vld [vmem:[%s3 + $0x5e8] sm:$0xff]
  %v1289 = vld [vmem:[%s3 + $0x5f0] sm:$0xff]
  %v1290 = vld [vmem:[%s3 + $0x5f8] sm:$0xff]
  %v1291 = vld [vmem:[%s3 + $0x600] sm:$0xff]
  %v1292 = vld [vmem:[%s3 + $0x608] sm:$0xf]
  %v1293 = vld [vmem:[%s3 + $0x60c] sm:$0xff]
  %v1294 = vld [vmem:[%s3 + $0x614] sm:$0xff]
  %v1295 = vld [vmem:[%s3 + $0x61c] sm:$0xff]
  %v1296 = vld [vmem:[%s3 + $0x624] sm:$0xff]
  %v1297 = vld [vmem:[%s3 + $0x62c] sm:$0xf]
  %v1298 = vld [vmem:[%s3 + $0x630] sm:$0xff]
  %v1299 = vld [vmem:[%s3 + $0x638] sm:$0xff]
  %v1300 = vld [vmem:[%s3 + $0x640] sm:$0xff]
  %v1301 = vld [vmem:[%s3 + $0x648] sm:$0xff]
  %v1302 = vld [vmem:[%s3 + $0x650] sm:$0xf]
  %v1303 = vld [vmem:[%s3 + $0x654] sm:$0xff]
  %v1304 = vld [vmem:[%s3 + $0x65c] sm:$0xff]
  %v1305 = vld [vmem:[%s3 + $0x664] sm:$0xff]
  %v1306 = vld [vmem:[%s3 + $0x66c] sm:$0xff]
  %v1307 = vld [vmem:[%s3 + $0x674] sm:$0xf]
  %v1308 = vld [vmem:[%s3 + $0x678] sm:$0xff]
  %v1309 = vld [vmem:[%s3 + $0x680] sm:$0xff]
  %v1310 = vld [vmem:[%s3 + $0x688] sm:$0xff]
  %v1311 = vld [vmem:[%s3 + $0x690] sm:$0xff]
  %v1312 = vld [vmem:[%s3 + $0x698] sm:$0xf]
  %v1313 = vld [vmem:[%s3 + $0x69c] sm:$0xff]
  %v1314 = vld [vmem:[%s3 + $0x6a4] sm:$0xff]
  %v1315 = vld [vmem:[%s3 + $0x6ac] sm:$0xff]
  %v1316 = vld [vmem:[%s3 + $0x6b4] sm:$0xff]
  %v1317 = vld [vmem:[%s3 + $0x6bc] sm:$0xf]
  %v1318 = vld [vmem:[%s3 + $0x6c0] sm:$0xff]
  %v1319 = vld [vmem:[%s3 + $0x6c8] sm:$0xff]
  %v1320 = vld [vmem:[%s3 + $0x6d0] sm:$0xff]
  %v1321 = vld [vmem:[%s3 + $0x6d8] sm:$0xff]
  %v1322 = vld [vmem:[%s3 + $0x6e0] sm:$0xf]
  %v1323 = vld [vmem:[%s3 + $0x6e4] sm:$0xff]
  %v1324 = vld [vmem:[%s3 + $0x6ec] sm:$0xff]
  %v1325 = vld [vmem:[%s3 + $0x6f4] sm:$0xff]
  %v1326 = vld [vmem:[%s3 + $0x6fc] sm:$0xff]
  %v1327 = vld [vmem:[%s3 + $0x704] sm:$0xf]
  %v1328 = vld [vmem:[%s3 + $0x708] sm:$0xff]
  %v1329 = vld [vmem:[%s3 + $0x710] sm:$0xff]
  %v1330 = vld [vmem:[%s3 + $0x718] sm:$0xff]
  %v1331 = vld [vmem:[%s3 + $0x720] sm:$0xff]
  %v1332 = vld [vmem:[%s3 + $0x728] sm:$0xf]
  %v1333 = vld [vmem:[%s3 + $0x72c] sm:$0xff]
  %v1334 = vld [vmem:[%s3 + $0x734] sm:$0xff]
  %v1335 = vld [vmem:[%s3 + $0x73c] sm:$0xff]
  %v1336 = vld [vmem:[%s3 + $0x744] sm:$0xff]
  %v1337 = vld [vmem:[%s3 + $0x74c] sm:$0xf]
  %v1338 = vld [vmem:[%s3 + $0x750] sm:$0xff]
  %v1339 = vld [vmem:[%s3 + $0x758] sm:$0xff]
  %v1340 = vld [vmem:[%s3 + $0x760] sm:$0xff]
  %v1341 = vld [vmem:[%s3 + $0x768] sm:$0xff]
  %v1342 = vld [vmem:[%s3 + $0x770] sm:$0xf]
  %v1343 = vld [vmem:[%s3 + $0x774] sm:$0xff]
  %v1344 = vld [vmem:[%s3 + $0x77c] sm:$0xff]
  %v1345 = vld [vmem:[%s3 + $0x784] sm:$0xff]
  %v1346 = vld [vmem:[%s3 + $0x78c] sm:$0xff]
  %v1347 = vld [vmem:[%s3 + $0x794] sm:$0xf]
  %v1348 = vld [vmem:[%s3 + $0x798] sm:$0xff]
  %v1349 = vld [vmem:[%s3 + $0x7a0] sm:$0xff]
  %v1350 = vld [vmem:[%s3 + $0x7a8] sm:$0xff]
  %v1351 = vld [vmem:[%s3 + $0x7b0] sm:$0xff]
  %v1352 = vld [vmem:[%s3 + $0x7b8] sm:$0xf]
  %v1353 = vld [vmem:[%s3 + $0x7bc] sm:$0xff]
  %v1354 = vld [vmem:[%s3 + $0x7c4] sm:$0xff]
  %v1355 = vld [vmem:[%s3 + $0x7cc] sm:$0xff]
  %v1356 = vld [vmem:[%s3 + $0x7d4] sm:$0xff]
  %v1357 = vld [vmem:[%s3 + $0x7dc] sm:$0xf]
  %v1358 = vld [vmem:[%s3 + $0x7e0] sm:$0xff]
  %v1359 = vld [vmem:[%s3 + $0x7e8] sm:$0xff]
  %v1360 = vld [vmem:[%s3 + $0x7f0] sm:$0xff]
  %v1361 = vld [vmem:[%s3 + $0x7f8] sm:$0xff]
  %v1362 = vld [vmem:[%s3 + $0x800] sm:$0xf]
  %v1363 = vld [vmem:[%s3 + $0x804] sm:$0xff]
  %v1364 = vld [vmem:[%s3 + $0x80c] sm:$0xff]
  %v1365 = vld [vmem:[%s3 + $0x814] sm:$0xff]
  %v1366 = vld [vmem:[%s3 + $0x81c] sm:$0xff]
  %v1367 = vld [vmem:[%s3 + $0x824] sm:$0xf]
  %v1368 = vld [vmem:[%s3 + $0x828] sm:$0xff]
  %v1369 = vld [vmem:[%s3 + $0x830] sm:$0xff]
  %v1370 = vld [vmem:[%s3 + $0x838] sm:$0xff]
  %v1371 = vld [vmem:[%s3 + $0x840] sm:$0xff]
  %v1372 = vld [vmem:[%s3 + $0x848] sm:$0xf]
  %v1373 = vld [vmem:[%s3 + $0x84c] sm:$0xff]
  %v1374 = vld [vmem:[%s3 + $0x854] sm:$0xff]
  %v1375 = vld [vmem:[%s3 + $0x85c] sm:$0xff]
  %v1376 = vld [vmem:[%s3 + $0x864] sm:$0xff]
  %v1377 = vld [vmem:[%s3 + $0x86c] sm:$0xf]
  %v1378 = vld [vmem:[%s3 + $0x870] sm:$0xff]
  %v1379 = vld [vmem:[%s3 + $0x878] sm:$0xff]
  %v1380 = vld [vmem:[%s3 + $0x880] sm:$0xff]
  %v1381 = vld [vmem:[%s3 + $0x888] sm:$0xff]
  %v1382 = vld [vmem:[%s3 + $0x890] sm:$0xf]
  %v1383 = vld [vmem:[%s3 + $0x894] sm:$0xff]
  %v1384 = vld [vmem:[%s3 + $0x89c] sm:$0xff]
  %v1385 = vld [vmem:[%s3 + $0x8a4] sm:$0xff]
  %v1386 = vld [vmem:[%s3 + $0x8ac] sm:$0xff]
  %v1387 = vld [vmem:[%s3 + $0x8b4] sm:$0xf]
  %v1388 = vld [vmem:[%s3 + $0x8b8] sm:$0xff]
  %v1389 = vld [vmem:[%s3 + $0x8c0] sm:$0xff]
  %v1390 = vld [vmem:[%s3 + $0x8c8] sm:$0xff]
  %v1391 = vld [vmem:[%s3 + $0x8d0] sm:$0xff]
  %v1392 = vld [vmem:[%s3 + $0x8d8] sm:$0xf]
  %v1393 = vld [vmem:[%s3 + $0x8dc] sm:$0xff]
  %v1394 = vld [vmem:[%s3 + $0x8e4] sm:$0xff]
  %v1395 = vld [vmem:[%s3 + $0x8ec] sm:$0xff]
  %v1396 = vld [vmem:[%s3 + $0x8f4] sm:$0xff]
  %v1397 = vld [vmem:[%s3 + $0x8fc] sm:$0xf]
  %v1398 = vld [vmem:[%s3 + $0x900] sm:$0xff]
  %v1399 = vld [vmem:[%s3 + $0x908] sm:$0xff]
  %v1400 = vld [vmem:[%s3 + $0x910] sm:$0xff]
  %v1401 = vld [vmem:[%s3 + $0x918] sm:$0xff]
  %v1402 = vld [vmem:[%s3 + $0x920] sm:$0xf]
  %v1403 = vld [vmem:[%s3 + $0x924] sm:$0xff]
  %v1404 = vld [vmem:[%s3 + $0x92c] sm:$0xff]
  %v1405 = vld [vmem:[%s3 + $0x934] sm:$0xff]
  %v1406 = vld [vmem:[%s3 + $0x93c] sm:$0xff]
  %v1407 = vld [vmem:[%s3 + $0x944] sm:$0xf]
  %v1408 = vld [vmem:[%s3 + $0x948] sm:$0xff]
  %v1409 = vld [vmem:[%s3 + $0x950] sm:$0xff]
  %v1410 = vld [vmem:[%s3 + $0x958] sm:$0xff]
  %v1411 = vld [vmem:[%s3 + $0x960] sm:$0xff]
  %v1412 = vld [vmem:[%s3 + $0x968] sm:$0xf]
  %v1413 = vld [vmem:[%s3 + $0x96c] sm:$0xff]
  %v1414 = vld [vmem:[%s3 + $0x974] sm:$0xff]
  %v1415 = vld [vmem:[%s3 + $0x97c] sm:$0xff]
  %v1416 = vld [vmem:[%s3 + $0x984] sm:$0xff]
  %v1417 = vld [vmem:[%s3 + $0x98c] sm:$0xf]
  %v1418 = vld [vmem:[%s3 + $0x990] sm:$0xff]
  %v1419 = vld [vmem:[%s3 + $0x998] sm:$0xff]
  %v1420 = vld [vmem:[%s3 + $0x9a0] sm:$0xff]
  %v1421 = vld [vmem:[%s3 + $0x9a8] sm:$0xff]
  %v1422 = vld [vmem:[%s3 + $0x9b0] sm:$0xf]
  %v1423 = vld [vmem:[%s3 + $0x9b4] sm:$0xff]
  %v1424 = vld [vmem:[%s3 + $0x9bc] sm:$0xff]
  %v1425 = vld [vmem:[%s3 + $0x9c4] sm:$0xff]
  %v1426 = vld [vmem:[%s3 + $0x9cc] sm:$0xff]
  %v1427 = vld [vmem:[%s3 + $0x9d4] sm:$0xf]
  %v1428 = vld [vmem:[%s3 + $0x9d8] sm:$0xff]
  %v1429 = vld [vmem:[%s3 + $0x9e0] sm:$0xff]
  %v1430 = vld [vmem:[%s3 + $0x9e8] sm:$0xff]
  %v1431 = vld [vmem:[%s3 + $0x9f0] sm:$0xff]
  %v1432 = vld [vmem:[%s3 + $0x9f8] sm:$0xf]
  %v1433 = vld [vmem:[%s3 + $0x9fc] sm:$0xff]
  %v1434 = vld [vmem:[%s3 + $0xa04] sm:$0xff]
  %v1435 = vld [vmem:[%s3 + $0xa0c] sm:$0xff]
  %v1436 = vld [vmem:[%s3 + $0xa14] sm:$0xff]
  %v1437 = vld [vmem:[%s3 + $0xa1c] sm:$0xf]
  %v1438 = vld [vmem:[%s3 + $0xa20] sm:$0xff]
  %v1439 = vld [vmem:[%s3 + $0xa28] sm:$0xff]
  %v1440 = vld [vmem:[%s3 + $0xa30] sm:$0xff]
  %v1441 = vld [vmem:[%s3 + $0xa38] sm:$0xff]
  %v1442 = vld [vmem:[%s3 + $0xa40] sm:$0xf]
  %v1443 = vld [vmem:[%s3 + $0xa44] sm:$0xff]
  %v1444 = vld [vmem:[%s3 + $0xa4c] sm:$0xff]
  %v1445 = vld [vmem:[%s3 + $0xa54] sm:$0xff]
  %v1446 = vld [vmem:[%s3 + $0xa5c] sm:$0xff]
  %v1447 = vld [vmem:[%s3 + $0xa64] sm:$0xf]
  %v1448 = vld [vmem:[%s3 + $0xa68] sm:$0xff]
  %v1449 = vld [vmem:[%s3 + $0xa70] sm:$0xff]
  %v1450 = vld [vmem:[%s3 + $0xa78] sm:$0xff]
  %v1451 = vld [vmem:[%s3 + $0xa80] sm:$0xff]
  %v1452 = vld [vmem:[%s3 + $0xa88] sm:$0xf]
  %v1453 = vld [vmem:[%s3 + $0xa8c] sm:$0xff]
  %v1454 = vld [vmem:[%s3 + $0xa94] sm:$0xff]
  %v1455 = vld [vmem:[%s3 + $0xa9c] sm:$0xff]
  %v1456 = vld [vmem:[%s3 + $0xaa4] sm:$0xff]
  %v1457 = vld [vmem:[%s3 + $0xaac] sm:$0xf]
  %v1458 = vld [vmem:[%s3 + $0xab0] sm:$0xff]
  %v1459 = vld [vmem:[%s3 + $0xab8] sm:$0xff]
  %v1460 = vld [vmem:[%s3 + $0xac0] sm:$0xff]
  %v1461 = vld [vmem:[%s3 + $0xac8] sm:$0xff]
  %v1462 = vld [vmem:[%s3 + $0xad0] sm:$0xf]
  %v1463 = vld [vmem:[%s3 + $0xad4] sm:$0xff]
  %v1464 = vld [vmem:[%s3 + $0xadc] sm:$0xff]
  %v1465 = vld [vmem:[%s3 + $0xae4] sm:$0xff]
  %v1466 = vld [vmem:[%s3 + $0xaec] sm:$0xff]
  %v1467 = vld [vmem:[%s3 + $0xaf4] sm:$0xf]
  %v1468 = vld [vmem:[%s3 + $0xaf8] sm:$0xff]
  %v1469 = vld [vmem:[%s3 + $0xb00] sm:$0xff]
  %v1470 = vld [vmem:[%s3 + $0xb08] sm:$0xff]
  %v1471 = vld [vmem:[%s3 + $0xb10] sm:$0xff]
  %v1472 = vld [vmem:[%s3 + $0xb18] sm:$0xf]
  %v1473 = vld [vmem:[%s3 + $0xb1c] sm:$0xff]
  %v1474 = vld [vmem:[%s3 + $0xb24] sm:$0xff]
  %v1475 = vld [vmem:[%s3 + $0xb2c] sm:$0xff]
  %v1476 = vld [vmem:[%s3 + $0xb34] sm:$0xff]
  %v1477 = vld [vmem:[%s3 + $0xb3c] sm:$0xf]
  %v1478 = vld [vmem:[%s3 + $0xb40] sm:$0xff]
  %v1479 = vld [vmem:[%s3 + $0xb48] sm:$0xff]
  %v1480 = vld [vmem:[%s3 + $0xb50] sm:$0xff]
  %v1481 = vld [vmem:[%s3 + $0xb58] sm:$0xff]
  %v1482 = vld [vmem:[%s3 + $0xb60] sm:$0xf]
  %v1483 = vld [vmem:[%s3 + $0xb64] sm:$0xff]
  %v1484 = vld [vmem:[%s3 + $0xb6c] sm:$0xff]
  %v1485 = vld [vmem:[%s3 + $0xb74] sm:$0xff]
  %v1486 = vld [vmem:[%s3 + $0xb7c] sm:$0xff]
  %v1487 = vld [vmem:[%s3 + $0xb84] sm:$0xf]
  %v1488 = vld [vmem:[%s3 + $0xb88] sm:$0xff]
  %v1489 = vld [vmem:[%s3 + $0xb90] sm:$0xff]
  %v1490 = vld [vmem:[%s3 + $0xb98] sm:$0xff]
  %v1491 = vld [vmem:[%s3 + $0xba0] sm:$0xff]
  %v1492 = vld [vmem:[%s3 + $0xba8] sm:$0xf]
  %v1493 = vld [vmem:[%s3 + $0xbac] sm:$0xff]
  %v1494 = vld [vmem:[%s3 + $0xbb4] sm:$0xff]
  %v1495 = vld [vmem:[%s3 + $0xbbc] sm:$0xff]
  %v1496 = vld [vmem:[%s3 + $0xbc4] sm:$0xff]
  %v1497 = vld [vmem:[%s3 + $0xbcc] sm:$0xf]
  %v1498 = vld [vmem:[%s3 + $0xbd0] sm:$0xff]
  %v1499 = vld [vmem:[%s3 + $0xbd8] sm:$0xff]
  %v1500 = vld [vmem:[%s3 + $0xbe0] sm:$0xff]
  %v1501 = vld [vmem:[%s3 + $0xbe8] sm:$0xff]
  %v1502 = vld [vmem:[%s3 + $0xbf0] sm:$0xf]
  %v1503 = vld [vmem:[%s3 + $0xbf4] sm:$0xff]
  %v1504 = vld [vmem:[%s3 + $0xbfc] sm:$0xff]
  %v1505 = vld [vmem:[%s3 + $0xc04] sm:$0xff]
  %v1506 = vld [vmem:[%s3 + $0xc0c] sm:$0xff]
  %v1507 = vld [vmem:[%s3 + $0xc14] sm:$0xf]
  %v1508 = vld [vmem:[%s3 + $0xc18] sm:$0xff]
  %v1509 = vld [vmem:[%s3 + $0xc20] sm:$0xff]
  %v1510 = vld [vmem:[%s3 + $0xc28] sm:$0xff]
  %v1511 = vld [vmem:[%s3 + $0xc30] sm:$0xff]
  %v1512 = vld [vmem:[%s3 + $0xc38] sm:$0xf]
  %v1513 = vld [vmem:[%s3 + $0xc3c] sm:$0xff]
  %v1514 = vld [vmem:[%s3 + $0xc44] sm:$0xff]
  %v1515 = vld [vmem:[%s3 + $0xc4c] sm:$0xff]
  %v1516 = vld [vmem:[%s3 + $0xc54] sm:$0xff]
  %v1517 = vld [vmem:[%s3 + $0xc5c] sm:$0xf]
  %v1518 = vld [vmem:[%s3 + $0xc60] sm:$0xff]
  %v1519 = vld [vmem:[%s3 + $0xc68] sm:$0xff]
  %v1520 = vld [vmem:[%s3 + $0xc70] sm:$0xff]
  %v1521 = vld [vmem:[%s3 + $0xc78] sm:$0xff]
  %v1522 = vld [vmem:[%s3 + $0xc80] sm:$0xf]
  %v1523 = vld [vmem:[%s3 + $0xc84] sm:$0xff]
  %v1524 = vld [vmem:[%s3 + $0xc8c] sm:$0xff]
  %v1525 = vld [vmem:[%s3 + $0xc94] sm:$0xff]
  %v1526 = vld [vmem:[%s3 + $0xc9c] sm:$0xff]
  %v1527 = vld [vmem:[%s3 + $0xca4] sm:$0xf]
  %v1528 = vld [vmem:[%s3 + $0xca8] sm:$0xff]
  %v1529 = vld [vmem:[%s3 + $0xcb0] sm:$0xff]
  %v1530 = vld [vmem:[%s3 + $0xcb8] sm:$0xff]
  %v1531 = vld [vmem:[%s3 + $0xcc0] sm:$0xff]
  %v1532 = vld [vmem:[%s3 + $0xcc8] sm:$0xf]
  %v1533 = vld [vmem:[%s3 + $0xccc] sm:$0xff]
  %v1534 = vld [vmem:[%s3 + $0xcd4] sm:$0xff]
  %v1535 = vld [vmem:[%s3 + $0xcdc] sm:$0xff]
  %v1536 = vld [vmem:[%s3 + $0xce4] sm:$0xff]
  %v1537 = vld [vmem:[%s3 + $0xcec] sm:$0xf]
  %v1538 = vld [vmem:[%s3 + $0xcf0] sm:$0xff]
  %v1539 = vld [vmem:[%s3 + $0xcf8] sm:$0xff]
  %v1540 = vld [vmem:[%s3 + $0xd00] sm:$0xff]
  %v1541 = vld [vmem:[%s3 + $0xd08] sm:$0xff]
  %v1542 = vld [vmem:[%s3 + $0xd10] sm:$0xf]
  %v1543 = vld [vmem:[%s3 + $0xd14] sm:$0xff]
  %v1544 = vld [vmem:[%s3 + $0xd1c] sm:$0xff]
  %v1545 = vld [vmem:[%s3 + $0xd24] sm:$0xff]
  %v1546 = vld [vmem:[%s3 + $0xd2c] sm:$0xff]
  %v1547 = vld [vmem:[%s3 + $0xd34] sm:$0xf]
  %v1548 = vld [vmem:[%s3 + $0xd38] sm:$0xff]
  %v1549 = vld [vmem:[%s3 + $0xd40] sm:$0xff]
  %v1550 = vld [vmem:[%s3 + $0xd48] sm:$0xff]
  %v1551 = vld [vmem:[%s3 + $0xd50] sm:$0xff]
  %v1552 = vld [vmem:[%s3 + $0xd58] sm:$0xf]
  %v1553 = vld [vmem:[%s3 + $0xd5c] sm:$0xff]
  %v1554 = vld [vmem:[%s3 + $0xd64] sm:$0xff]
  %v1555 = vld [vmem:[%s3 + $0xd6c] sm:$0xff]
  %v1556 = vld [vmem:[%s3 + $0xd74] sm:$0xff]
  %v1557 = vld [vmem:[%s3 + $0xd7c] sm:$0xf]
  %v1558 = vld [vmem:[%s3 + $0xd80] sm:$0xff]
  %v1559 = vld [vmem:[%s3 + $0xd88] sm:$0xff]
  %v1560 = vld [vmem:[%s3 + $0xd90] sm:$0xff]
  %v1561 = vld [vmem:[%s3 + $0xd98] sm:$0xff]
  %v1562 = vld [vmem:[%s3 + $0xda0] sm:$0xf]
  %v1563 = vld [vmem:[%s3 + $0xda4] sm:$0xff]
  %v1564 = vld [vmem:[%s3 + $0xdac] sm:$0xff]
  %v1565 = vld [vmem:[%s3 + $0xdb4] sm:$0xff]
  %v1566 = vld [vmem:[%s3 + $0xdbc] sm:$0xff]
  %v1567 = vld [vmem:[%s3 + $0xdc4] sm:$0xf]
  %v1568 = vld [vmem:[%s3 + $0xdc8] sm:$0xff]
  %v1569 = vld [vmem:[%s3 + $0xdd0] sm:$0xff]
  %v1570 = vld [vmem:[%s3 + $0xdd8] sm:$0xff]
  %v1571 = vld [vmem:[%s3 + $0xde0] sm:$0xff]
  %v1572 = vld [vmem:[%s3 + $0xde8] sm:$0xf]
  %v1573 = vld [vmem:[%s3 + $0xdec] sm:$0xff]
  %v1574 = vld [vmem:[%s3 + $0xdf4] sm:$0xff]
  %v1575 = vld [vmem:[%s3 + $0xdfc] sm:$0xff]
  %v1576 = vld [vmem:[%s3 + $0xe04] sm:$0xff]
  %v1577 = vld [vmem:[%s3 + $0xe0c] sm:$0xf]
  %v1578 = vld [vmem:[%s3 + $0xe10] sm:$0xff]
  %v1579 = vld [vmem:[%s3 + $0xe18] sm:$0xff]
  %v1580 = vld [vmem:[%s3 + $0xe20] sm:$0xff]
  %v1581 = vld [vmem:[%s3 + $0xe28] sm:$0xff]
  %v1582 = vld [vmem:[%s3 + $0xe30] sm:$0xf]
  %v1583 = vld [vmem:[%s3 + $0xe34] sm:$0xff]
  %v1584 = vld [vmem:[%s3 + $0xe3c] sm:$0xff]
  %v1585 = vld [vmem:[%s3 + $0xe44] sm:$0xff]
  %v1586 = vld [vmem:[%s3 + $0xe4c] sm:$0xff]
  %v1587 = vld [vmem:[%s3 + $0xe54] sm:$0xf]
  %v1588 = vld [vmem:[%s3 + $0xe58] sm:$0xff]
  %v1589 = vld [vmem:[%s3 + $0xe60] sm:$0xff]
  %v1590 = vld [vmem:[%s3 + $0xe68] sm:$0xff]
  %v1591 = vld [vmem:[%s3 + $0xe70] sm:$0xff]
  %v1592 = vld [vmem:[%s3 + $0xe78] sm:$0xf]
  %v1593 = vld [vmem:[%s3 + $0xe7c] sm:$0xff]
  %v1594 = vld [vmem:[%s3 + $0xe84] sm:$0xff]
  %v1595 = vld [vmem:[%s3 + $0xe8c] sm:$0xff]
  %v1596 = vld [vmem:[%s3 + $0xe94] sm:$0xff]
  %v1597 = vld [vmem:[%s3 + $0xe9c] sm:$0xf]
  %v1598 = vld [vmem:[%s3 + $0xea0] sm:$0xff]
  %v1599 = vld [vmem:[%s3 + $0xea8] sm:$0xff]
  %v1600 = vld [vmem:[%s3 + $0xeb0] sm:$0xff]
  %v1601 = vld [vmem:[%s3 + $0xeb8] sm:$0xff]
  %v1602 = vld [vmem:[%s3 + $0xec0] sm:$0xf]
  %v1603 = vld [vmem:[%s3 + $0xec4] sm:$0xff]
  %v1604 = vld [vmem:[%s3 + $0xecc] sm:$0xff]
  %v1605 = vld [vmem:[%s3 + $0xed4] sm:$0xff]
  %v1606 = vld [vmem:[%s3 + $0xedc] sm:$0xff]
  %v1607 = vld [vmem:[%s3 + $0xee4] sm:$0xf]
  %v1608 = vld [vmem:[%s3 + $0xee8] sm:$0xff]
  %v1609 = vld [vmem:[%s3 + $0xef0] sm:$0xff]
  %v1610 = vld [vmem:[%s3 + $0xef8] sm:$0xff]
  %v1611 = vld [vmem:[%s3 + $0xf00] sm:$0xff]
  %v1612 = vld [vmem:[%s3 + $0xf08] sm:$0xf]
  %v1613 = vld [vmem:[%s3 + $0xf0c] sm:$0xff]
  %v1614 = vld [vmem:[%s3 + $0xf14] sm:$0xff]
  %v1615 = vld [vmem:[%s3 + $0xf1c] sm:$0xff]
  %v1616 = vld [vmem:[%s3 + $0xf24] sm:$0xff]
  %v1617 = vld [vmem:[%s3 + $0xf2c] sm:$0xf]
  %v1618 = vld [vmem:[%s3 + $0xf30] sm:$0xff]
  %v1619 = vld [vmem:[%s3 + $0xf38] sm:$0xff]
  %v1620 = vld [vmem:[%s3 + $0xf40] sm:$0xff]
  %v1621 = vld [vmem:[%s3 + $0xf48] sm:$0xff]
  %v1622 = vld [vmem:[%s3 + $0xf50] sm:$0xf]
  %v1623 = vld [vmem:[%s3 + $0xf54] sm:$0xff]
  %v1624 = vld [vmem:[%s3 + $0xf5c] sm:$0xff]
  %v1625 = vld [vmem:[%s3 + $0xf64] sm:$0xff]
  %v1626 = vld [vmem:[%s3 + $0xf6c] sm:$0xff]
  %v1627 = vld [vmem:[%s3 + $0xf74] sm:$0xf]
  %v1628 = vld [vmem:[%s3 + $0xf78] sm:$0xff]
  %v1629 = vld [vmem:[%s3 + $0xf80] sm:$0xff]
  %v1630 = vld [vmem:[%s3 + $0xf88] sm:$0xff]
  %v1631 = vld [vmem:[%s3 + $0xf90] sm:$0xff]
  %v1632 = vld [vmem:[%s3 + $0xf98] sm:$0xf]
  %v1633 = vld [vmem:[%s3 + $0xf9c] sm:$0xff]
  %v1634 = vld [vmem:[%s3 + $0xfa4] sm:$0xff]
  %v1635 = vld [vmem:[%s3 + $0xfac] sm:$0xff]
  %v1636 = vld [vmem:[%s3 + $0xfb4] sm:$0xff]
  %v1637 = vld [vmem:[%s3 + $0xfbc] sm:$0xf]
  %v1638 = vld [vmem:[%s3 + $0xfc0] sm:$0xff]
  %v1639 = vld [vmem:[%s3 + $0xfc8] sm:$0xff]
  %v1640 = vld [vmem:[%s3 + $0xfd0] sm:$0xff]
  %v1641 = vld [vmem:[%s3 + $0xfd8] sm:$0xff]
  %v1642 = vld [vmem:[%s3 + $0xfe0] sm:$0xf]
  %v1643 = vld [vmem:[%s3 + $0xfe4] sm:$0xff]
  %v1644 = vld [vmem:[%s3 + $0xfec] sm:$0xff]
  %v1645 = vld [vmem:[%s3 + $0xff4] sm:$0xff]
  %v1646 = vld [vmem:[%s3 + $0xffc] sm:$0xff]
  %v1647 = vld [vmem:[%s3 + $0x1004] sm:$0xf]
  %v1648 = vld [vmem:[%s3 + $0x1008] sm:$0xff]
  %v1649 = vld [vmem:[%s3 + $0x1010] sm:$0xff]
  %v1650 = vld [vmem:[%s3 + $0x1018] sm:$0xff]
  %v1651 = vld [vmem:[%s3 + $0x1020] sm:$0xff]
  %v1652 = vld [vmem:[%s3 + $0x1028] sm:$0xf]
  %v1653 = vld [vmem:[%s3 + $0x102c] sm:$0xff]
  %v1654 = vld [vmem:[%s3 + $0x1034] sm:$0xff]
  %v1655 = vld [vmem:[%s3 + $0x103c] sm:$0xff]
  %v1656 = vld [vmem:[%s3 + $0x1044] sm:$0xff]
  %v1657 = vld [vmem:[%s3 + $0x104c] sm:$0xf]
  %v1658 = vld [vmem:[%s3 + $0x1050] sm:$0xff]
  %v1659 = vld [vmem:[%s3 + $0x1058] sm:$0xff]
  %v1660 = vld [vmem:[%s3 + $0x1060] sm:$0xff]
  %v1661 = vld [vmem:[%s3 + $0x1068] sm:$0xff]
  %v1662 = vld [vmem:[%s3 + $0x1070] sm:$0xf]
  %v1663 = vld [vmem:[%s3 + $0x1074] sm:$0xff]
  %v1664 = vld [vmem:[%s3 + $0x107c] sm:$0xff]
  %v1665 = vld [vmem:[%s3 + $0x1084] sm:$0xff]
  %v1666 = vld [vmem:[%s3 + $0x108c] sm:$0xff]
  %v1667 = vld [vmem:[%s3 + $0x1094] sm:$0xf]
  %v1668 = vld [vmem:[%s3 + $0x1098] sm:$0xff]
  %v1669 = vld [vmem:[%s3 + $0x10a0] sm:$0xff]
  %v1670 = vld [vmem:[%s3 + $0x10a8] sm:$0xff]
  %v1671 = vld [vmem:[%s3 + $0x10b0] sm:$0xff]
  %v1672 = vld [vmem:[%s3 + $0x10b8] sm:$0xf]
  %v1673 = vld [vmem:[%s3 + $0x10bc] sm:$0xff]
  %v1674 = vld [vmem:[%s3 + $0x10c4] sm:$0xff]
  %v1675 = vld [vmem:[%s3 + $0x10cc] sm:$0xff]
  %v1676 = vld [vmem:[%s3 + $0x10d4] sm:$0xff]
  %v1677 = vld [vmem:[%s3 + $0x10dc] sm:$0xf]
  %v1678 = vld [vmem:[%s3 + $0x10e0] sm:$0xff]
  %v1679 = vld [vmem:[%s3 + $0x10e8] sm:$0xff]
  %v1680 = vld [vmem:[%s3 + $0x10f0] sm:$0xff]
  %v1681 = vld [vmem:[%s3 + $0x10f8] sm:$0xff]
  %v1682 = vld [vmem:[%s3 + $0x1100] sm:$0xf]
  %v1683 = vld [vmem:[%s3 + $0x1104] sm:$0xff]
  %v1684 = vld [vmem:[%s3 + $0x110c] sm:$0xff]
  %v1685 = vld [vmem:[%s3 + $0x1114] sm:$0xff]
  %v1686 = vld [vmem:[%s3 + $0x111c] sm:$0xff]
  %v1687 = vld [vmem:[%s3 + $0x1124] sm:$0xf]
  %v1688 = vld [vmem:[%s3 + $0x1128] sm:$0xff]
  %v1689 = vld [vmem:[%s3 + $0x1130] sm:$0xff]
  %v1690 = vld [vmem:[%s3 + $0x1138] sm:$0xff]
  %v1691 = vld [vmem:[%s3 + $0x1140] sm:$0xff]
  %v1692 = vld [vmem:[%s3 + $0x1148] sm:$0xf]
  %v1693 = vld [vmem:[%s3 + $0x114c] sm:$0xff]
  %v1694 = vld [vmem:[%s3 + $0x1154] sm:$0xff]
  %v1695 = vld [vmem:[%s3 + $0x115c] sm:$0xff]
  %v1696 = vld [vmem:[%s3 + $0x1164] sm:$0xff]
  %v1697 = vld [vmem:[%s3 + $0x116c] sm:$0xf]
  %v1698 = vld [vmem:[%s3 + $0x1170] sm:$0xff]
  %v1699 = vld [vmem:[%s3 + $0x1178] sm:$0xff]
  %v1700 = vld [vmem:[%s3 + $0x1180] sm:$0xff]
  %v1701 = vld [vmem:[%s3 + $0x1188] sm:$0xff]
  %v1702 = vld [vmem:[%s3 + $0x1190] sm:$0xf]
  %v1703 = vld [vmem:[%s3 + $0x1194] sm:$0xff]
  %v1704 = vld [vmem:[%s3 + $0x119c] sm:$0xff]
  %v1705 = vld [vmem:[%s3 + $0x11a4] sm:$0xff]
  %v1706 = vld [vmem:[%s3 + $0x11ac] sm:$0xff]
  %v1707 = vld [vmem:[%s3 + $0x11b4] sm:$0xf]
  %v1708 = vld [vmem:[%s3 + $0x11b8] sm:$0xff]
  %v1709 = vld [vmem:[%s3 + $0x11c0] sm:$0xff]
  %v1710 = vld [vmem:[%s3 + $0x11c8] sm:$0xff]
  %v1711 = vld [vmem:[%s3 + $0x11d0] sm:$0xff]
  %v1712 = vld [vmem:[%s3 + $0x11d8] sm:$0xf]
  %v1713 = vld [vmem:[%s3 + $0x11dc] sm:$0xff]
  %v1714 = vld [vmem:[%s3 + $0x11e4] sm:$0xff]
  %v1715 = vld [vmem:[%s3 + $0x11ec] sm:$0xff]
  %v1716 = vld [vmem:[%s3 + $0x11f4] sm:$0xff]
  %v1717 = vld [vmem:[%s3 + $0x11fc] sm:$0xf]
  %v1718 = vld [vmem:[%s3 + $0x1200] sm:$0xff]
  %v1719 = vld [vmem:[%s3 + $0x1208] sm:$0xff]
  %v1720 = vld [vmem:[%s3 + $0x1210] sm:$0xff]
  %v1721 = vld [vmem:[%s3 + $0x1218] sm:$0xff]
  %v1722 = vld [vmem:[%s3 + $0x1220] sm:$0xf]
  %v1723 = vld [vmem:[%s3 + $0x1224] sm:$0xff]
  %v1724 = vld [vmem:[%s3 + $0x122c] sm:$0xff]
  %v1725 = vld [vmem:[%s3 + $0x1234] sm:$0xff]
  %v1726 = vld [vmem:[%s3 + $0x123c] sm:$0xff]
  %v1727 = vld [vmem:[%s3 + $0x1244] sm:$0xf]
  %v1728 = vld [vmem:[%s3 + $0x1248] sm:$0xff]
  %v1729 = vld [vmem:[%s3 + $0x1250] sm:$0xff]
  %v1730 = vld [vmem:[%s3 + $0x1258] sm:$0xff]
  %v1731 = vld [vmem:[%s3 + $0x1260] sm:$0xff]
  %v1732 = vld [vmem:[%s3 + $0x1268] sm:$0xf]
  %v1733 = vld [vmem:[%s3 + $0x126c] sm:$0xff]
  %v1734 = vld [vmem:[%s3 + $0x1274] sm:$0xff]
  %v1735 = vld [vmem:[%s3 + $0x127c] sm:$0xff]
  %v1736 = vld [vmem:[%s3 + $0x1284] sm:$0xff]
  %v1737 = vld [vmem:[%s3 + $0x128c] sm:$0xf]
  %v1738 = vld [vmem:[%s3 + $0x1290] sm:$0xff]
  %v1739 = vld [vmem:[%s3 + $0x1298] sm:$0xff]
  %v1740 = vld [vmem:[%s3 + $0x12a0] sm:$0xff]
  %v1741 = vld [vmem:[%s3 + $0x12a8] sm:$0xff]
  %v1742 = vld [vmem:[%s3 + $0x12b0] sm:$0xf]
  %v1743 = vld [vmem:[%s3 + $0x12b4] sm:$0xff]
  %v1744 = vld [vmem:[%s3 + $0x12bc] sm:$0xff]
  %v1745 = vld [vmem:[%s3 + $0x12c4] sm:$0xff]
  %v1746 = vld [vmem:[%s3 + $0x12cc] sm:$0xff]
  %v1747 = vld [vmem:[%s3 + $0x12d4] sm:$0xf]
  %v1748 = vld [vmem:[%s3 + $0x12d8] sm:$0xff]
  %v1749 = vld [vmem:[%s3 + $0x12e0] sm:$0xff]
  %v1750 = vld [vmem:[%s3 + $0x12e8] sm:$0xff]
  %v1751 = vld [vmem:[%s3 + $0x12f0] sm:$0xff]
  %v1752 = vld [vmem:[%s3 + $0x12f8] sm:$0xf]
  %v1753 = vld [vmem:[%s3 + $0x12fc] sm:$0xff]
  %v1754 = vld [vmem:[%s3 + $0x1304] sm:$0xff]
  %v1755 = vld [vmem:[%s3 + $0x130c] sm:$0xff]
  %v1756 = vld [vmem:[%s3 + $0x1314] sm:$0xff]
  %v1757 = vld [vmem:[%s3 + $0x131c] sm:$0xf]
  %v1758 = vld [vmem:[%s3 + $0x1320] sm:$0xff]
  %v1759 = vld [vmem:[%s3 + $0x1328] sm:$0xff]
  %v1760 = vld [vmem:[%s3 + $0x1330] sm:$0xff]
  %v1761 = vld [vmem:[%s3 + $0x1338] sm:$0xff]
  %v1762 = vld [vmem:[%s3 + $0x1340] sm:$0xf]
  %v1763 = vld [vmem:[%s3 + $0x1344] sm:$0xff]
  %v1764 = vld [vmem:[%s3 + $0x134c] sm:$0xff]
  %v1765 = vld [vmem:[%s3 + $0x1354] sm:$0xff]
  %v1766 = vld [vmem:[%s3 + $0x135c] sm:$0xff]
  %v1767 = vld [vmem:[%s3 + $0x1364] sm:$0xf]
  %v1768 = vld [vmem:[%s3 + $0x1368] sm:$0xff]
  %v1769 = vld [vmem:[%s3 + $0x1370] sm:$0xff]
  %v1770 = vld [vmem:[%s3 + $0x1378] sm:$0xff]
  %v1771 = vld [vmem:[%s3 + $0x1380] sm:$0xff]
  %v1772 = vld [vmem:[%s3 + $0x1388] sm:$0xf]
  %v1773 = vld [vmem:[%s3 + $0x138c] sm:$0xff]
  %v1774 = vld [vmem:[%s3 + $0x1394] sm:$0xff]
  %v1775 = vld [vmem:[%s3 + $0x139c] sm:$0xff]
  %v1776 = vld [vmem:[%s3 + $0x13a4] sm:$0xff]
  %v1777 = vld [vmem:[%s3 + $0x13ac] sm:$0xf]
  %v1778 = vld [vmem:[%s3 + $0x13b0] sm:$0xff]
  %v1779 = vld [vmem:[%s3 + $0x13b8] sm:$0xff]
  %v1780 = vld [vmem:[%s3 + $0x13c0] sm:$0xff]
  %v1781 = vld [vmem:[%s3 + $0x13c8] sm:$0xff]
  %v1782 = vld [vmem:[%s3 + $0x13d0] sm:$0xf]
  %v1783 = vld [vmem:[%s3 + $0x13d4] sm:$0xff]
  %v1784 = vld [vmem:[%s3 + $0x13dc] sm:$0xff]
  %v1785 = vld [vmem:[%s3 + $0x13e4] sm:$0xff]
  %v1786 = vld [vmem:[%s3 + $0x13ec] sm:$0xff]
  %v1787 = vld [vmem:[%s3 + $0x13f4] sm:$0xf]
  %v1788 = vld [vmem:[%s3 + $0x13f8] sm:$0xff]
  %v1789 = vld [vmem:[%s3 + $0x1400] sm:$0xff]
  %v1790 = vld [vmem:[%s3 + $0x1408] sm:$0xff]
  %v1791 = vld [vmem:[%s3 + $0x1410] sm:$0xff]
  %v1792 = vld [vmem:[%s3 + $0x1418] sm:$0xf]
  %v1793 = vld [vmem:[%s3 + $0x141c] sm:$0xff]
  %v1794 = vld [vmem:[%s3 + $0x1424] sm:$0xff]
  %v1795 = vld [vmem:[%s3 + $0x142c] sm:$0xff]
  %v1796 = vld [vmem:[%s3 + $0x1434] sm:$0xff]
  %v1797 = vld [vmem:[%s3 + $0x143c] sm:$0xf]
  %v1798 = vld [vmem:[%s3 + $0x1440] sm:$0xff]
  %v1799 = vld [vmem:[%s3 + $0x1448] sm:$0xff]
  %v1800 = vld [vmem:[%s3 + $0x1450] sm:$0xff]
  %v1801 = vld [vmem:[%s3 + $0x1458] sm:$0xff]
  %v1802 = vld [vmem:[%s3 + $0x1460] sm:$0xf]
  %v1803 = vld [vmem:[%s3 + $0x1464] sm:$0xff]
  %v1804 = vld [vmem:[%s3 + $0x146c] sm:$0xff]
  %v1805 = vld [vmem:[%s3 + $0x1474] sm:$0xff]
  %v1806 = vld [vmem:[%s3 + $0x147c] sm:$0xff]
  %v1807 = vld [vmem:[%s3 + $0x1484] sm:$0xf]
  %v1808 = vld [vmem:[%s3 + $0x1488] sm:$0xff]
  %v1809 = vld [vmem:[%s3 + $0x1490] sm:$0xff]
  %v1810 = vld [vmem:[%s3 + $0x1498] sm:$0xff]
  %v1811 = vld [vmem:[%s3 + $0x14a0] sm:$0xff]
  %v1812 = vld [vmem:[%s3 + $0x14a8] sm:$0xf]
  %v1813 = vld [vmem:[%s3 + $0x14ac] sm:$0xff]
  %v1814 = vld [vmem:[%s3 + $0x14b4] sm:$0xff]
  %v1815 = vld [vmem:[%s3 + $0x14bc] sm:$0xff]
  %v1816 = vld [vmem:[%s3 + $0x14c4] sm:$0xff]
  %v1817 = vld [vmem:[%s3 + $0x14cc] sm:$0xf]
  %v1818 = vld [vmem:[%s3 + $0x14d0] sm:$0xff]
  %v1819 = vld [vmem:[%s3 + $0x14d8] sm:$0xff]
  %v1820 = vld [vmem:[%s3 + $0x14e0] sm:$0xff]
  %v1821 = vld [vmem:[%s3 + $0x14e8] sm:$0xff]
  %v1822 = vld [vmem:[%s3 + $0x14f0] sm:$0xf]
  %v1823 = vld [vmem:[%s3 + $0x14f4] sm:$0xff]
  %v1824 = vld [vmem:[%s3 + $0x14fc] sm:$0xff]
  %v1825 = vld [vmem:[%s3 + $0x1504] sm:$0xff]
  %v1826 = vld [vmem:[%s3 + $0x150c] sm:$0xff]
  %v1827 = vld [vmem:[%s3 + $0x1514] sm:$0xf]
  %v1828 = vld [vmem:[%s3 + $0x1518] sm:$0xff]
  %v1829 = vld [vmem:[%s3 + $0x1520] sm:$0xff]
  %v1830 = vld [vmem:[%s3 + $0x1528] sm:$0xff]
  %v1831 = vld [vmem:[%s3 + $0x1530] sm:$0xff]
  %v1832 = vld [vmem:[%s3 + $0x1538] sm:$0xf]
  %v1833 = vld [vmem:[%s3 + $0x153c] sm:$0xff]
  %v1834 = vld [vmem:[%s3 + $0x1544] sm:$0xff]
  %v1835 = vld [vmem:[%s3 + $0x154c] sm:$0xff]
  %v1836 = vld [vmem:[%s3 + $0x1554] sm:$0xff]
  %v1837 = vld [vmem:[%s3 + $0x155c] sm:$0xf]
  %v1838 = vld [vmem:[%s3 + $0x1560] sm:$0xff]
  %v1839 = vld [vmem:[%s3 + $0x1568] sm:$0xff]
  %v1840 = vld [vmem:[%s3 + $0x1570] sm:$0xff]
  %v1841 = vld [vmem:[%s3 + $0x1578] sm:$0xff]
  %v1842 = vld [vmem:[%s3 + $0x1580] sm:$0xf]
  %v1843 = vld [vmem:[%s3 + $0x1584] sm:$0xff]
  %v1844 = vld [vmem:[%s3 + $0x158c] sm:$0xff]
  %v1845 = vld [vmem:[%s3 + $0x1594] sm:$0xff]
  %v1846 = vld [vmem:[%s3 + $0x159c] sm:$0xff]
  %v1847 = vld [vmem:[%s3 + $0x15a4] sm:$0xf]
  %v1848 = vld [vmem:[%s3 + $0x15a8] sm:$0xff]
  %v1849 = vld [vmem:[%s3 + $0x15b0] sm:$0xff]
  %v1850 = vld [vmem:[%s3 + $0x15b8] sm:$0xff]
  %v1851 = vld [vmem:[%s3 + $0x15c0] sm:$0xff]
  %v1852 = vld [vmem:[%s3 + $0x15c8] sm:$0xf]
  %v1853 = vld [vmem:[%s3 + $0x15cc] sm:$0xff]
  %v1854 = vld [vmem:[%s3 + $0x15d4] sm:$0xff]
  %v1855 = vld [vmem:[%s3 + $0x15dc] sm:$0xff]
  %v1856 = vld [vmem:[%s3 + $0x15e4] sm:$0xff]
  %v1857 = vld [vmem:[%s3 + $0x15ec] sm:$0xf]
  %v1858 = vld [vmem:[%s3 + $0x15f0] sm:$0xff]
  %v1859 = vld [vmem:[%s3 + $0x15f8] sm:$0xff]
  %v1860 = vld [vmem:[%s3 + $0x1600] sm:$0xff]
  %v1861 = vld [vmem:[%s3 + $0x1608] sm:$0xff]
  %v1862 = vld [vmem:[%s3 + $0x1610] sm:$0xf]
  %v1863 = vld [vmem:[%s3 + $0x1614] sm:$0xff]
  %v1864 = vld [vmem:[%s3 + $0x161c] sm:$0xff]
  %v1865 = vld [vmem:[%s3 + $0x1624] sm:$0xff]
  %v1866 = vld [vmem:[%s3 + $0x162c] sm:$0xff]
  %v1867 = vld [vmem:[%s3 + $0x1634] sm:$0xf]
  %v1868 = vld [vmem:[%s3 + $0x1638] sm:$0xff]
  %v1869 = vld [vmem:[%s3 + $0x1640] sm:$0xff]
  %v1870 = vld [vmem:[%s3 + $0x1648] sm:$0xff]
  %v1871 = vld [vmem:[%s3 + $0x1650] sm:$0xff]
  %v1872 = vld [vmem:[%s3 + $0x1658] sm:$0xf]
  %v1873 = vld [vmem:[%s3 + $0x165c] sm:$0xff]
  %v1874 = vld [vmem:[%s3 + $0x1664] sm:$0xff]
  %v1875 = vld [vmem:[%s3 + $0x166c] sm:$0xff]
  %v1876 = vld [vmem:[%s3 + $0x1674] sm:$0xff]
  %v1877 = vld [vmem:[%s3 + $0x167c] sm:$0xf]
  %v1878 = vld [vmem:[%s4] sm:$0xff]
  %v1879 = vld [vmem:[%s4 + $0x8] sm:$0x1]
  %v1882 = vlaneseq
  %v1883 = vshrl.u32 %v1882, 7
  %v1884 = vsub.s32 0, %v1883
  %v1885 = vrot.slane %v1878, %v1884
  %v1886 = vlaneseq
  %v1887 = vshrl.u32 %v1886, 7
  %v1888 = vsub.s32 1, %v1887
  %v1889 = vrot.slane %v1878, %v1888
  %v1890 = vlaneseq
  %v1891 = vshrl.u32 %v1890, 7
  %v1892 = vsub.s32 2, %v1891
  %v1893 = vrot.slane %v1878, %v1892
  %v1894 = vlaneseq
  %v1895 = vshrl.u32 %v1894, 7
  %v1896 = vsub.s32 3, %v1895
  %v1897 = vrot.slane %v1878, %v1896
  %v1898 = vlaneseq
  %v1899 = vshrl.u32 %v1898, 7
  %v1900 = vsub.s32 4, %v1899
  %v1901 = vrot.slane %v1878, %v1900
  %v1902 = vlaneseq
  %v1903 = vshrl.u32 %v1902, 7
  %v1904 = vsub.s32 5, %v1903
  %v1905 = vrot.slane %v1878, %v1904
  %v1906 = vlaneseq
  %v1907 = vshrl.u32 %v1906, 7
  %v1908 = vsub.s32 6, %v1907
  %v1909 = vrot.slane %v1878, %v1908
  %v1910 = vlaneseq
  %v1911 = vshrl.u32 %v1910, 7
  %v1912 = vsub.s32 7, %v1911
  %v1913 = vrot.slane %v1878, %v1912
  %v1914 = vlaneseq
  %v1915 = vshrl.u32 %v1914, 7
  %v1916 = vsub.s32 0, %v1915
  %v1917 = vrot.slane %v1879, %v1916
  %v2727 = vunpack.c.l.b16 %v1078
  %v2728 = vunpack.c.h.b16 %v1078
  %v2729 = vunpack.c.l.b16 %v1079
  %v2730 = vunpack.c.h.b16 %v1079
  %v2731 = vunpack.c.l.b16 %v1080
  %v2732 = vunpack.c.h.b16 %v1080
  %v2733 = vunpack.c.l.b16 %v1081
  %v2734 = vunpack.c.h.b16 %v1081
  %v2735 = vunpack.c.l.b16 %v1082
  %v2736 = vunpack.c.l.b16 %v1083
  %v2737 = vunpack.c.h.b16 %v1083
  %v2738 = vunpack.c.l.b16 %v1084
  %v2739 = vunpack.c.h.b16 %v1084
  %v2740 = vunpack.c.l.b16 %v1085
  %v2741 = vunpack.c.h.b16 %v1085
  %v2742 = vunpack.c.l.b16 %v1086
  %v2743 = vunpack.c.h.b16 %v1086
  %v2744 = vunpack.c.l.b16 %v1087
  %v2745 = vunpack.c.l.b16 %v1088
  %v2746 = vunpack.c.h.b16 %v1088
  %v2747 = vunpack.c.l.b16 %v1089
  %v2748 = vunpack.c.h.b16 %v1089
  %v2749 = vunpack.c.l.b16 %v1090
  %v2750 = vunpack.c.h.b16 %v1090
  %v2751 = vunpack.c.l.b16 %v1091
  %v2752 = vunpack.c.h.b16 %v1091
  %v2753 = vunpack.c.l.b16 %v1092
  %v2754 = vunpack.c.l.b16 %v1093
  %v2755 = vunpack.c.h.b16 %v1093
  %v2756 = vunpack.c.l.b16 %v1094
  %v2757 = vunpack.c.h.b16 %v1094
  %v2758 = vunpack.c.l.b16 %v1095
  %v2759 = vunpack.c.h.b16 %v1095
  %v2760 = vunpack.c.l.b16 %v1096
  %v2761 = vunpack.c.h.b16 %v1096
  %v2762 = vunpack.c.l.b16 %v1097
  %v2763 = vunpack.c.l.b16 %v1098
  %v2764 = vunpack.c.h.b16 %v1098
  %v2765 = vunpack.c.l.b16 %v1099
  %v2766 = vunpack.c.h.b16 %v1099
  %v2767 = vunpack.c.l.b16 %v1100
  %v2768 = vunpack.c.h.b16 %v1100
  %v2769 = vunpack.c.l.b16 %v1101
  %v2770 = vunpack.c.h.b16 %v1101
  %v2771 = vunpack.c.l.b16 %v1102
  %v2772 = vunpack.c.l.b16 %v1103
  %v2773 = vunpack.c.h.b16 %v1103
  %v2774 = vunpack.c.l.b16 %v1104
  %v2775 = vunpack.c.h.b16 %v1104
  %v2776 = vunpack.c.l.b16 %v1105
  %v2777 = vunpack.c.h.b16 %v1105
  %v2778 = vunpack.c.l.b16 %v1106
  %v2779 = vunpack.c.h.b16 %v1106
  %v2780 = vunpack.c.l.b16 %v1107
  %v2781 = vunpack.c.l.b16 %v1108
  %v2782 = vunpack.c.h.b16 %v1108
  %v2783 = vunpack.c.l.b16 %v1109
  %v2784 = vunpack.c.h.b16 %v1109
  %v2785 = vunpack.c.l.b16 %v1110
  %v2786 = vunpack.c.h.b16 %v1110
  %v2787 = vunpack.c.l.b16 %v1111
  %v2788 = vunpack.c.h.b16 %v1111
  %v2789 = vunpack.c.l.b16 %v1112
  %v2790 = vunpack.c.l.b16 %v1113
  %v2791 = vunpack.c.h.b16 %v1113
  %v2792 = vunpack.c.l.b16 %v1114
  %v2793 = vunpack.c.h.b16 %v1114
  %v2794 = vunpack.c.l.b16 %v1115
  %v2795 = vunpack.c.h.b16 %v1115
  %v2796 = vunpack.c.l.b16 %v1116
  %v2797 = vunpack.c.h.b16 %v1116
  %v2798 = vunpack.c.l.b16 %v1117
  %v2799 = vunpack.c.l.b16 %v1118
  %v2800 = vunpack.c.h.b16 %v1118
  %v2801 = vunpack.c.l.b16 %v1119
  %v2802 = vunpack.c.h.b16 %v1119
  %v2803 = vunpack.c.l.b16 %v1120
  %v2804 = vunpack.c.h.b16 %v1120
  %v2805 = vunpack.c.l.b16 %v1121
  %v2806 = vunpack.c.h.b16 %v1121
  %v2807 = vunpack.c.l.b16 %v1122
  %v2808 = vunpack.c.l.b16 %v1123
  %v2809 = vunpack.c.h.b16 %v1123
  %v2810 = vunpack.c.l.b16 %v1124
  %v2811 = vunpack.c.h.b16 %v1124
  %v2812 = vunpack.c.l.b16 %v1125
  %v2813 = vunpack.c.h.b16 %v1125
  %v2814 = vunpack.c.l.b16 %v1126
  %v2815 = vunpack.c.h.b16 %v1126
  %v2816 = vunpack.c.l.b16 %v1127
  %v2817 = vunpack.c.l.b16 %v1128
  %v2818 = vunpack.c.h.b16 %v1128
  %v2819 = vunpack.c.l.b16 %v1129
  %v2820 = vunpack.c.h.b16 %v1129
  %v2821 = vunpack.c.l.b16 %v1130
  %v2822 = vunpack.c.h.b16 %v1130
  %v2823 = vunpack.c.l.b16 %v1131
  %v2824 = vunpack.c.h.b16 %v1131
  %v2825 = vunpack.c.l.b16 %v1132
  %v2826 = vunpack.c.l.b16 %v1133
  %v2827 = vunpack.c.h.b16 %v1133
  %v2828 = vunpack.c.l.b16 %v1134
  %v2829 = vunpack.c.h.b16 %v1134
  %v2830 = vunpack.c.l.b16 %v1135
  %v2831 = vunpack.c.h.b16 %v1135
  %v2832 = vunpack.c.l.b16 %v1136
  %v2833 = vunpack.c.h.b16 %v1136
  %v2834 = vunpack.c.l.b16 %v1137
  %v2835 = vunpack.c.l.b16 %v1138
  %v2836 = vunpack.c.h.b16 %v1138
  %v2837 = vunpack.c.l.b16 %v1139
  %v2838 = vunpack.c.h.b16 %v1139
  %v2839 = vunpack.c.l.b16 %v1140
  %v2840 = vunpack.c.h.b16 %v1140
  %v2841 = vunpack.c.l.b16 %v1141
  %v2842 = vunpack.c.h.b16 %v1141
  %v2843 = vunpack.c.l.b16 %v1142
  %v2844 = vunpack.c.l.b16 %v1143
  %v2845 = vunpack.c.h.b16 %v1143
  %v2846 = vunpack.c.l.b16 %v1144
  %v2847 = vunpack.c.h.b16 %v1144
  %v2848 = vunpack.c.l.b16 %v1145
  %v2849 = vunpack.c.h.b16 %v1145
  %v2850 = vunpack.c.l.b16 %v1146
  %v2851 = vunpack.c.h.b16 %v1146
  %v2852 = vunpack.c.l.b16 %v1147
  %v2853 = vunpack.c.l.b16 %v1148
  %v2854 = vunpack.c.h.b16 %v1148
  %v2855 = vunpack.c.l.b16 %v1149
  %v2856 = vunpack.c.h.b16 %v1149
  %v2857 = vunpack.c.l.b16 %v1150
  %v2858 = vunpack.c.h.b16 %v1150
  %v2859 = vunpack.c.l.b16 %v1151
  %v2860 = vunpack.c.h.b16 %v1151
  %v2861 = vunpack.c.l.b16 %v1152
  %v2862 = vunpack.c.l.b16 %v1153
  %v2863 = vunpack.c.h.b16 %v1153
  %v2864 = vunpack.c.l.b16 %v1154
  %v2865 = vunpack.c.h.b16 %v1154
  %v2866 = vunpack.c.l.b16 %v1155
  %v2867 = vunpack.c.h.b16 %v1155
  %v2868 = vunpack.c.l.b16 %v1156
  %v2869 = vunpack.c.h.b16 %v1156
  %v2870 = vunpack.c.l.b16 %v1157
  %v2871 = vunpack.c.l.b16 %v1158
  %v2872 = vunpack.c.h.b16 %v1158
  %v2873 = vunpack.c.l.b16 %v1159
  %v2874 = vunpack.c.h.b16 %v1159
  %v2875 = vunpack.c.l.b16 %v1160
  %v2876 = vunpack.c.h.b16 %v1160
  %v2877 = vunpack.c.l.b16 %v1161
  %v2878 = vunpack.c.h.b16 %v1161
  %v2879 = vunpack.c.l.b16 %v1162
  %v2880 = vunpack.c.l.b16 %v1163
  %v2881 = vunpack.c.h.b16 %v1163
  %v2882 = vunpack.c.l.b16 %v1164
  %v2883 = vunpack.c.h.b16 %v1164
  %v2884 = vunpack.c.l.b16 %v1165
  %v2885 = vunpack.c.h.b16 %v1165
  %v2886 = vunpack.c.l.b16 %v1166
  %v2887 = vunpack.c.h.b16 %v1166
  %v2888 = vunpack.c.l.b16 %v1167
  %v2889 = vunpack.c.l.b16 %v1168
  %v2890 = vunpack.c.h.b16 %v1168
  %v2891 = vunpack.c.l.b16 %v1169
  %v2892 = vunpack.c.h.b16 %v1169
  %v2893 = vunpack.c.l.b16 %v1170
  %v2894 = vunpack.c.h.b16 %v1170
  %v2895 = vunpack.c.l.b16 %v1171
  %v2896 = vunpack.c.h.b16 %v1171
  %v2897 = vunpack.c.l.b16 %v1172
  %v2898 = vunpack.c.l.b16 %v1173
  %v2899 = vunpack.c.h.b16 %v1173
  %v2900 = vunpack.c.l.b16 %v1174
  %v2901 = vunpack.c.h.b16 %v1174
  %v2902 = vunpack.c.l.b16 %v1175
  %v2903 = vunpack.c.h.b16 %v1175
  %v2904 = vunpack.c.l.b16 %v1176
  %v2905 = vunpack.c.h.b16 %v1176
  %v2906 = vunpack.c.l.b16 %v1177
  %v2907 = vunpack.c.l.b16 %v1178
  %v2908 = vunpack.c.h.b16 %v1178
  %v2909 = vunpack.c.l.b16 %v1179
  %v2910 = vunpack.c.h.b16 %v1179
  %v2911 = vunpack.c.l.b16 %v1180
  %v2912 = vunpack.c.h.b16 %v1180
  %v2913 = vunpack.c.l.b16 %v1181
  %v2914 = vunpack.c.h.b16 %v1181
  %v2915 = vunpack.c.l.b16 %v1182
  %v2916 = vunpack.c.l.b16 %v1183
  %v2917 = vunpack.c.h.b16 %v1183
  %v2918 = vunpack.c.l.b16 %v1184
  %v2919 = vunpack.c.h.b16 %v1184
  %v2920 = vunpack.c.l.b16 %v1185
  %v2921 = vunpack.c.h.b16 %v1185
  %v2922 = vunpack.c.l.b16 %v1186
  %v2923 = vunpack.c.h.b16 %v1186
  %v2924 = vunpack.c.l.b16 %v1187
  %v2925 = vunpack.c.l.b16 %v1188
  %v2926 = vunpack.c.h.b16 %v1188
  %v2927 = vunpack.c.l.b16 %v1189
  %v2928 = vunpack.c.h.b16 %v1189
  %v2929 = vunpack.c.l.b16 %v1190
  %v2930 = vunpack.c.h.b16 %v1190
  %v2931 = vunpack.c.l.b16 %v1191
  %v2932 = vunpack.c.h.b16 %v1191
  %v2933 = vunpack.c.l.b16 %v1192
  %v2934 = vunpack.c.l.b16 %v1193
  %v2935 = vunpack.c.h.b16 %v1193
  %v2936 = vunpack.c.l.b16 %v1194
  %v2937 = vunpack.c.h.b16 %v1194
  %v2938 = vunpack.c.l.b16 %v1195
  %v2939 = vunpack.c.h.b16 %v1195
  %v2940 = vunpack.c.l.b16 %v1196
  %v2941 = vunpack.c.h.b16 %v1196
  %v2942 = vunpack.c.l.b16 %v1197
  %v2943 = vunpack.c.l.b16 %v1198
  %v2944 = vunpack.c.h.b16 %v1198
  %v2945 = vunpack.c.l.b16 %v1199
  %v2946 = vunpack.c.h.b16 %v1199
  %v2947 = vunpack.c.l.b16 %v1200
  %v2948 = vunpack.c.h.b16 %v1200
  %v2949 = vunpack.c.l.b16 %v1201
  %v2950 = vunpack.c.h.b16 %v1201
  %v2951 = vunpack.c.l.b16 %v1202
  %v2952 = vunpack.c.l.b16 %v1203
  %v2953 = vunpack.c.h.b16 %v1203
  %v2954 = vunpack.c.l.b16 %v1204
  %v2955 = vunpack.c.h.b16 %v1204
  %v2956 = vunpack.c.l.b16 %v1205
  %v2957 = vunpack.c.h.b16 %v1205
  %v2958 = vunpack.c.l.b16 %v1206
  %v2959 = vunpack.c.h.b16 %v1206
  %v2960 = vunpack.c.l.b16 %v1207
  %v2961 = vunpack.c.l.b16 %v1208
  %v2962 = vunpack.c.h.b16 %v1208
  %v2963 = vunpack.c.l.b16 %v1209
  %v2964 = vunpack.c.h.b16 %v1209
  %v2965 = vunpack.c.l.b16 %v1210
  %v2966 = vunpack.c.h.b16 %v1210
  %v2967 = vunpack.c.l.b16 %v1211
  %v2968 = vunpack.c.h.b16 %v1211
  %v2969 = vunpack.c.l.b16 %v1212
  %v2970 = vunpack.c.l.b16 %v1213
  %v2971 = vunpack.c.h.b16 %v1213
  %v2972 = vunpack.c.l.b16 %v1214
  %v2973 = vunpack.c.h.b16 %v1214
  %v2974 = vunpack.c.l.b16 %v1215
  %v2975 = vunpack.c.h.b16 %v1215
  %v2976 = vunpack.c.l.b16 %v1216
  %v2977 = vunpack.c.h.b16 %v1216
  %v2978 = vunpack.c.l.b16 %v1217
  %v2979 = vunpack.c.l.b16 %v1218
  %v2980 = vunpack.c.h.b16 %v1218
  %v2981 = vunpack.c.l.b16 %v1219
  %v2982 = vunpack.c.h.b16 %v1219
  %v2983 = vunpack.c.l.b16 %v1220
  %v2984 = vunpack.c.h.b16 %v1220
  %v2985 = vunpack.c.l.b16 %v1221
  %v2986 = vunpack.c.h.b16 %v1221
  %v2987 = vunpack.c.l.b16 %v1222
  %v2988 = vunpack.c.l.b16 %v1223
  %v2989 = vunpack.c.h.b16 %v1223
  %v2990 = vunpack.c.l.b16 %v1224
  %v2991 = vunpack.c.h.b16 %v1224
  %v2992 = vunpack.c.l.b16 %v1225
  %v2993 = vunpack.c.h.b16 %v1225
  %v2994 = vunpack.c.l.b16 %v1226
  %v2995 = vunpack.c.h.b16 %v1226
  %v2996 = vunpack.c.l.b16 %v1227
  %v2997 = vunpack.c.l.b16 %v1228
  %v2998 = vunpack.c.h.b16 %v1228
  %v2999 = vunpack.c.l.b16 %v1229
  %v3000 = vunpack.c.h.b16 %v1229
  %v3001 = vunpack.c.l.b16 %v1230
  %v3002 = vunpack.c.h.b16 %v1230
  %v3003 = vunpack.c.l.b16 %v1231
  %v3004 = vunpack.c.h.b16 %v1231
  %v3005 = vunpack.c.l.b16 %v1232
  %v3006 = vunpack.c.l.b16 %v1233
  %v3007 = vunpack.c.h.b16 %v1233
  %v3008 = vunpack.c.l.b16 %v1234
  %v3009 = vunpack.c.h.b16 %v1234
  %v3010 = vunpack.c.l.b16 %v1235
  %v3011 = vunpack.c.h.b16 %v1235
  %v3012 = vunpack.c.l.b16 %v1236
  %v3013 = vunpack.c.h.b16 %v1236
  %v3014 = vunpack.c.l.b16 %v1237
  %v3015 = vunpack.c.l.b16 %v1238
  %v3016 = vunpack.c.h.b16 %v1238
  %v3017 = vunpack.c.l.b16 %v1239
  %v3018 = vunpack.c.h.b16 %v1239
  %v3019 = vunpack.c.l.b16 %v1240
  %v3020 = vunpack.c.h.b16 %v1240
  %v3021 = vunpack.c.l.b16 %v1241
  %v3022 = vunpack.c.h.b16 %v1241
  %v3023 = vunpack.c.l.b16 %v1242
  %v3024 = vunpack.c.l.b16 %v1243
  %v3025 = vunpack.c.h.b16 %v1243
  %v3026 = vunpack.c.l.b16 %v1244
  %v3027 = vunpack.c.h.b16 %v1244
  %v3028 = vunpack.c.l.b16 %v1245
  %v3029 = vunpack.c.h.b16 %v1245
  %v3030 = vunpack.c.l.b16 %v1246
  %v3031 = vunpack.c.h.b16 %v1246
  %v3032 = vunpack.c.l.b16 %v1247
  %v3033 = vunpack.c.l.b16 %v1248
  %v3034 = vunpack.c.h.b16 %v1248
  %v3035 = vunpack.c.l.b16 %v1249
  %v3036 = vunpack.c.h.b16 %v1249
  %v3037 = vunpack.c.l.b16 %v1250
  %v3038 = vunpack.c.h.b16 %v1250
  %v3039 = vunpack.c.l.b16 %v1251
  %v3040 = vunpack.c.h.b16 %v1251
  %v3041 = vunpack.c.l.b16 %v1252
  %v3042 = vunpack.c.l.b16 %v1253
  %v3043 = vunpack.c.h.b16 %v1253
  %v3044 = vunpack.c.l.b16 %v1254
  %v3045 = vunpack.c.h.b16 %v1254
  %v3046 = vunpack.c.l.b16 %v1255
  %v3047 = vunpack.c.h.b16 %v1255
  %v3048 = vunpack.c.l.b16 %v1256
  %v3049 = vunpack.c.h.b16 %v1256
  %v3050 = vunpack.c.l.b16 %v1257
  %v3051 = vunpack.c.l.b16 %v1258
  %v3052 = vunpack.c.h.b16 %v1258
  %v3053 = vunpack.c.l.b16 %v1259
  %v3054 = vunpack.c.h.b16 %v1259
  %v3055 = vunpack.c.l.b16 %v1260
  %v3056 = vunpack.c.h.b16 %v1260
  %v3057 = vunpack.c.l.b16 %v1261
  %v3058 = vunpack.c.h.b16 %v1261
  %v3059 = vunpack.c.l.b16 %v1262
  %v3060 = vunpack.c.l.b16 %v1263
  %v3061 = vunpack.c.h.b16 %v1263
  %v3062 = vunpack.c.l.b16 %v1264
  %v3063 = vunpack.c.h.b16 %v1264
  %v3064 = vunpack.c.l.b16 %v1265
  %v3065 = vunpack.c.h.b16 %v1265
  %v3066 = vunpack.c.l.b16 %v1266
  %v3067 = vunpack.c.h.b16 %v1266
  %v3068 = vunpack.c.l.b16 %v1267
  %v3069 = vunpack.c.l.b16 %v1268
  %v3070 = vunpack.c.h.b16 %v1268
  %v3071 = vunpack.c.l.b16 %v1269
  %v3072 = vunpack.c.h.b16 %v1269
  %v3073 = vunpack.c.l.b16 %v1270
  %v3074 = vunpack.c.h.b16 %v1270
  %v3075 = vunpack.c.l.b16 %v1271
  %v3076 = vunpack.c.h.b16 %v1271
  %v3077 = vunpack.c.l.b16 %v1272
  %v3078 = vunpack.c.l.b16 %v1273
  %v3079 = vunpack.c.h.b16 %v1273
  %v3080 = vunpack.c.l.b16 %v1274
  %v3081 = vunpack.c.h.b16 %v1274
  %v3082 = vunpack.c.l.b16 %v1275
  %v3083 = vunpack.c.h.b16 %v1275
  %v3084 = vunpack.c.l.b16 %v1276
  %v3085 = vunpack.c.h.b16 %v1276
  %v3086 = vunpack.c.l.b16 %v1277
  %v3087 = vunpack.c.l.b16 %v1278
  %v3088 = vunpack.c.h.b16 %v1278
  %v3089 = vunpack.c.l.b16 %v1279
  %v3090 = vunpack.c.h.b16 %v1279
  %v3091 = vunpack.c.l.b16 %v1280
  %v3092 = vunpack.c.h.b16 %v1280
  %v3093 = vunpack.c.l.b16 %v1281
  %v3094 = vunpack.c.h.b16 %v1281
  %v3095 = vunpack.c.l.b16 %v1282
  %v3096 = vunpack.c.l.b16 %v1283
  %v3097 = vunpack.c.h.b16 %v1283
  %v3098 = vunpack.c.l.b16 %v1284
  %v3099 = vunpack.c.h.b16 %v1284
  %v3100 = vunpack.c.l.b16 %v1285
  %v3101 = vunpack.c.h.b16 %v1285
  %v3102 = vunpack.c.l.b16 %v1286
  %v3103 = vunpack.c.h.b16 %v1286
  %v3104 = vunpack.c.l.b16 %v1287
  %v3105 = vunpack.c.l.b16 %v1288
  %v3106 = vunpack.c.h.b16 %v1288
  %v3107 = vunpack.c.l.b16 %v1289
  %v3108 = vunpack.c.h.b16 %v1289
  %v3109 = vunpack.c.l.b16 %v1290
  %v3110 = vunpack.c.h.b16 %v1290
  %v3111 = vunpack.c.l.b16 %v1291
  %v3112 = vunpack.c.h.b16 %v1291
  %v3113 = vunpack.c.l.b16 %v1292
  %v3114 = vunpack.c.l.b16 %v1293
  %v3115 = vunpack.c.h.b16 %v1293
  %v3116 = vunpack.c.l.b16 %v1294
  %v3117 = vunpack.c.h.b16 %v1294
  %v3118 = vunpack.c.l.b16 %v1295
  %v3119 = vunpack.c.h.b16 %v1295
  %v3120 = vunpack.c.l.b16 %v1296
  %v3121 = vunpack.c.h.b16 %v1296
  %v3122 = vunpack.c.l.b16 %v1297
  %v3123 = vunpack.c.l.b16 %v1298
  %v3124 = vunpack.c.h.b16 %v1298
  %v3125 = vunpack.c.l.b16 %v1299
  %v3126 = vunpack.c.h.b16 %v1299
  %v3127 = vunpack.c.l.b16 %v1300
  %v3128 = vunpack.c.h.b16 %v1300
  %v3129 = vunpack.c.l.b16 %v1301
  %v3130 = vunpack.c.h.b16 %v1301
  %v3131 = vunpack.c.l.b16 %v1302
  %v3132 = vunpack.c.l.b16 %v1303
  %v3133 = vunpack.c.h.b16 %v1303
  %v3134 = vunpack.c.l.b16 %v1304
  %v3135 = vunpack.c.h.b16 %v1304
  %v3136 = vunpack.c.l.b16 %v1305
  %v3137 = vunpack.c.h.b16 %v1305
  %v3138 = vunpack.c.l.b16 %v1306
  %v3139 = vunpack.c.h.b16 %v1306
  %v3140 = vunpack.c.l.b16 %v1307
  %v3141 = vunpack.c.l.b16 %v1308
  %v3142 = vunpack.c.h.b16 %v1308
  %v3143 = vunpack.c.l.b16 %v1309
  %v3144 = vunpack.c.h.b16 %v1309
  %v3145 = vunpack.c.l.b16 %v1310
  %v3146 = vunpack.c.h.b16 %v1310
  %v3147 = vunpack.c.l.b16 %v1311
  %v3148 = vunpack.c.h.b16 %v1311
  %v3149 = vunpack.c.l.b16 %v1312
  %v3150 = vunpack.c.l.b16 %v1313
  %v3151 = vunpack.c.h.b16 %v1313
  %v3152 = vunpack.c.l.b16 %v1314
  %v3153 = vunpack.c.h.b16 %v1314
  %v3154 = vunpack.c.l.b16 %v1315
  %v3155 = vunpack.c.h.b16 %v1315
  %v3156 = vunpack.c.l.b16 %v1316
  %v3157 = vunpack.c.h.b16 %v1316
  %v3158 = vunpack.c.l.b16 %v1317
  %v3159 = vunpack.c.l.b16 %v1318
  %v3160 = vunpack.c.h.b16 %v1318
  %v3161 = vunpack.c.l.b16 %v1319
  %v3162 = vunpack.c.h.b16 %v1319
  %v3163 = vunpack.c.l.b16 %v1320
  %v3164 = vunpack.c.h.b16 %v1320
  %v3165 = vunpack.c.l.b16 %v1321
  %v3166 = vunpack.c.h.b16 %v1321
  %v3167 = vunpack.c.l.b16 %v1322
  %v3168 = vunpack.c.l.b16 %v1323
  %v3169 = vunpack.c.h.b16 %v1323
  %v3170 = vunpack.c.l.b16 %v1324
  %v3171 = vunpack.c.h.b16 %v1324
  %v3172 = vunpack.c.l.b16 %v1325
  %v3173 = vunpack.c.h.b16 %v1325
  %v3174 = vunpack.c.l.b16 %v1326
  %v3175 = vunpack.c.h.b16 %v1326
  %v3176 = vunpack.c.l.b16 %v1327
  %v3177 = vunpack.c.l.b16 %v1328
  %v3178 = vunpack.c.h.b16 %v1328
  %v3179 = vunpack.c.l.b16 %v1329
  %v3180 = vunpack.c.h.b16 %v1329
  %v3181 = vunpack.c.l.b16 %v1330
  %v3182 = vunpack.c.h.b16 %v1330
  %v3183 = vunpack.c.l.b16 %v1331
  %v3184 = vunpack.c.h.b16 %v1331
  %v3185 = vunpack.c.l.b16 %v1332
  %v3186 = vunpack.c.l.b16 %v1333
  %v3187 = vunpack.c.h.b16 %v1333
  %v3188 = vunpack.c.l.b16 %v1334
  %v3189 = vunpack.c.h.b16 %v1334
  %v3190 = vunpack.c.l.b16 %v1335
  %v3191 = vunpack.c.h.b16 %v1335
  %v3192 = vunpack.c.l.b16 %v1336
  %v3193 = vunpack.c.h.b16 %v1336
  %v3194 = vunpack.c.l.b16 %v1337
  %v3195 = vunpack.c.l.b16 %v1338
  %v3196 = vunpack.c.h.b16 %v1338
  %v3197 = vunpack.c.l.b16 %v1339
  %v3198 = vunpack.c.h.b16 %v1339
  %v3199 = vunpack.c.l.b16 %v1340
  %v3200 = vunpack.c.h.b16 %v1340
  %v3201 = vunpack.c.l.b16 %v1341
  %v3202 = vunpack.c.h.b16 %v1341
  %v3203 = vunpack.c.l.b16 %v1342
  %v3204 = vunpack.c.l.b16 %v1343
  %v3205 = vunpack.c.h.b16 %v1343
  %v3206 = vunpack.c.l.b16 %v1344
  %v3207 = vunpack.c.h.b16 %v1344
  %v3208 = vunpack.c.l.b16 %v1345
  %v3209 = vunpack.c.h.b16 %v1345
  %v3210 = vunpack.c.l.b16 %v1346
  %v3211 = vunpack.c.h.b16 %v1346
  %v3212 = vunpack.c.l.b16 %v1347
  %v3213 = vunpack.c.l.b16 %v1348
  %v3214 = vunpack.c.h.b16 %v1348
  %v3215 = vunpack.c.l.b16 %v1349
  %v3216 = vunpack.c.h.b16 %v1349
  %v3217 = vunpack.c.l.b16 %v1350
  %v3218 = vunpack.c.h.b16 %v1350
  %v3219 = vunpack.c.l.b16 %v1351
  %v3220 = vunpack.c.h.b16 %v1351
  %v3221 = vunpack.c.l.b16 %v1352
  %v3222 = vunpack.c.l.b16 %v1353
  %v3223 = vunpack.c.h.b16 %v1353
  %v3224 = vunpack.c.l.b16 %v1354
  %v3225 = vunpack.c.h.b16 %v1354
  %v3226 = vunpack.c.l.b16 %v1355
  %v3227 = vunpack.c.h.b16 %v1355
  %v3228 = vunpack.c.l.b16 %v1356
  %v3229 = vunpack.c.h.b16 %v1356
  %v3230 = vunpack.c.l.b16 %v1357
  %v3231 = vunpack.c.l.b16 %v1358
  %v3232 = vunpack.c.h.b16 %v1358
  %v3233 = vunpack.c.l.b16 %v1359
  %v3234 = vunpack.c.h.b16 %v1359
  %v3235 = vunpack.c.l.b16 %v1360
  %v3236 = vunpack.c.h.b16 %v1360
  %v3237 = vunpack.c.l.b16 %v1361
  %v3238 = vunpack.c.h.b16 %v1361
  %v3239 = vunpack.c.l.b16 %v1362
  %v3240 = vunpack.c.l.b16 %v1363
  %v3241 = vunpack.c.h.b16 %v1363
  %v3242 = vunpack.c.l.b16 %v1364
  %v3243 = vunpack.c.h.b16 %v1364
  %v3244 = vunpack.c.l.b16 %v1365
  %v3245 = vunpack.c.h.b16 %v1365
  %v3246 = vunpack.c.l.b16 %v1366
  %v3247 = vunpack.c.h.b16 %v1366
  %v3248 = vunpack.c.l.b16 %v1367
  %v3249 = vunpack.c.l.b16 %v1368
  %v3250 = vunpack.c.h.b16 %v1368
  %v3251 = vunpack.c.l.b16 %v1369
  %v3252 = vunpack.c.h.b16 %v1369
  %v3253 = vunpack.c.l.b16 %v1370
  %v3254 = vunpack.c.h.b16 %v1370
  %v3255 = vunpack.c.l.b16 %v1371
  %v3256 = vunpack.c.h.b16 %v1371
  %v3257 = vunpack.c.l.b16 %v1372
  %v3258 = vunpack.c.l.b16 %v1373
  %v3259 = vunpack.c.h.b16 %v1373
  %v3260 = vunpack.c.l.b16 %v1374
  %v3261 = vunpack.c.h.b16 %v1374
  %v3262 = vunpack.c.l.b16 %v1375
  %v3263 = vunpack.c.h.b16 %v1375
  %v3264 = vunpack.c.l.b16 %v1376
  %v3265 = vunpack.c.h.b16 %v1376
  %v3266 = vunpack.c.l.b16 %v1377
  %v3267 = vunpack.c.l.b16 %v1378
  %v3268 = vunpack.c.h.b16 %v1378
  %v3269 = vunpack.c.l.b16 %v1379
  %v3270 = vunpack.c.h.b16 %v1379
  %v3271 = vunpack.c.l.b16 %v1380
  %v3272 = vunpack.c.h.b16 %v1380
  %v3273 = vunpack.c.l.b16 %v1381
  %v3274 = vunpack.c.h.b16 %v1381
  %v3275 = vunpack.c.l.b16 %v1382
  %v3276 = vunpack.c.l.b16 %v1383
  %v3277 = vunpack.c.h.b16 %v1383
  %v3278 = vunpack.c.l.b16 %v1384
  %v3279 = vunpack.c.h.b16 %v1384
  %v3280 = vunpack.c.l.b16 %v1385
  %v3281 = vunpack.c.h.b16 %v1385
  %v3282 = vunpack.c.l.b16 %v1386
  %v3283 = vunpack.c.h.b16 %v1386
  %v3284 = vunpack.c.l.b16 %v1387
  %v3285 = vunpack.c.l.b16 %v1388
  %v3286 = vunpack.c.h.b16 %v1388
  %v3287 = vunpack.c.l.b16 %v1389
  %v3288 = vunpack.c.h.b16 %v1389
  %v3289 = vunpack.c.l.b16 %v1390
  %v3290 = vunpack.c.h.b16 %v1390
  %v3291 = vunpack.c.l.b16 %v1391
  %v3292 = vunpack.c.h.b16 %v1391
  %v3293 = vunpack.c.l.b16 %v1392
  %v3294 = vunpack.c.l.b16 %v1393
  %v3295 = vunpack.c.h.b16 %v1393
  %v3296 = vunpack.c.l.b16 %v1394
  %v3297 = vunpack.c.h.b16 %v1394
  %v3298 = vunpack.c.l.b16 %v1395
  %v3299 = vunpack.c.h.b16 %v1395
  %v3300 = vunpack.c.l.b16 %v1396
  %v3301 = vunpack.c.h.b16 %v1396
  %v3302 = vunpack.c.l.b16 %v1397
  %v3303 = vunpack.c.l.b16 %v1398
  %v3304 = vunpack.c.h.b16 %v1398
  %v3305 = vunpack.c.l.b16 %v1399
  %v3306 = vunpack.c.h.b16 %v1399
  %v3307 = vunpack.c.l.b16 %v1400
  %v3308 = vunpack.c.h.b16 %v1400
  %v3309 = vunpack.c.l.b16 %v1401
  %v3310 = vunpack.c.h.b16 %v1401
  %v3311 = vunpack.c.l.b16 %v1402
  %v3312 = vunpack.c.l.b16 %v1403
  %v3313 = vunpack.c.h.b16 %v1403
  %v3314 = vunpack.c.l.b16 %v1404
  %v3315 = vunpack.c.h.b16 %v1404
  %v3316 = vunpack.c.l.b16 %v1405
  %v3317 = vunpack.c.h.b16 %v1405
  %v3318 = vunpack.c.l.b16 %v1406
  %v3319 = vunpack.c.h.b16 %v1406
  %v3320 = vunpack.c.l.b16 %v1407
  %v3321 = vunpack.c.l.b16 %v1408
  %v3322 = vunpack.c.h.b16 %v1408
  %v3323 = vunpack.c.l.b16 %v1409
  %v3324 = vunpack.c.h.b16 %v1409
  %v3325 = vunpack.c.l.b16 %v1410
  %v3326 = vunpack.c.h.b16 %v1410
  %v3327 = vunpack.c.l.b16 %v1411
  %v3328 = vunpack.c.h.b16 %v1411
  %v3329 = vunpack.c.l.b16 %v1412
  %v3330 = vunpack.c.l.b16 %v1413
  %v3331 = vunpack.c.h.b16 %v1413
  %v3332 = vunpack.c.l.b16 %v1414
  %v3333 = vunpack.c.h.b16 %v1414
  %v3334 = vunpack.c.l.b16 %v1415
  %v3335 = vunpack.c.h.b16 %v1415
  %v3336 = vunpack.c.l.b16 %v1416
  %v3337 = vunpack.c.h.b16 %v1416
  %v3338 = vunpack.c.l.b16 %v1417
  %v3339 = vunpack.c.l.b16 %v1418
  %v3340 = vunpack.c.h.b16 %v1418
  %v3341 = vunpack.c.l.b16 %v1419
  %v3342 = vunpack.c.h.b16 %v1419
  %v3343 = vunpack.c.l.b16 %v1420
  %v3344 = vunpack.c.h.b16 %v1420
  %v3345 = vunpack.c.l.b16 %v1421
  %v3346 = vunpack.c.h.b16 %v1421
  %v3347 = vunpack.c.l.b16 %v1422
  %v3348 = vunpack.c.l.b16 %v1423
  %v3349 = vunpack.c.h.b16 %v1423
  %v3350 = vunpack.c.l.b16 %v1424
  %v3351 = vunpack.c.h.b16 %v1424
  %v3352 = vunpack.c.l.b16 %v1425
  %v3353 = vunpack.c.h.b16 %v1425
  %v3354 = vunpack.c.l.b16 %v1426
  %v3355 = vunpack.c.h.b16 %v1426
  %v3356 = vunpack.c.l.b16 %v1427
  %v3357 = vunpack.c.l.b16 %v1428
  %v3358 = vunpack.c.h.b16 %v1428
  %v3359 = vunpack.c.l.b16 %v1429
  %v3360 = vunpack.c.h.b16 %v1429
  %v3361 = vunpack.c.l.b16 %v1430
  %v3362 = vunpack.c.h.b16 %v1430
  %v3363 = vunpack.c.l.b16 %v1431
  %v3364 = vunpack.c.h.b16 %v1431
  %v3365 = vunpack.c.l.b16 %v1432
  %v3366 = vunpack.c.l.b16 %v1433
  %v3367 = vunpack.c.h.b16 %v1433
  %v3368 = vunpack.c.l.b16 %v1434
  %v3369 = vunpack.c.h.b16 %v1434
  %v3370 = vunpack.c.l.b16 %v1435
  %v3371 = vunpack.c.h.b16 %v1435
  %v3372 = vunpack.c.l.b16 %v1436
  %v3373 = vunpack.c.h.b16 %v1436
  %v3374 = vunpack.c.l.b16 %v1437
  %v3375 = vunpack.c.l.b16 %v1438
  %v3376 = vunpack.c.h.b16 %v1438
  %v3377 = vunpack.c.l.b16 %v1439
  %v3378 = vunpack.c.h.b16 %v1439
  %v3379 = vunpack.c.l.b16 %v1440
  %v3380 = vunpack.c.h.b16 %v1440
  %v3381 = vunpack.c.l.b16 %v1441
  %v3382 = vunpack.c.h.b16 %v1441
  %v3383 = vunpack.c.l.b16 %v1442
  %v3384 = vunpack.c.l.b16 %v1443
  %v3385 = vunpack.c.h.b16 %v1443
  %v3386 = vunpack.c.l.b16 %v1444
  %v3387 = vunpack.c.h.b16 %v1444
  %v3388 = vunpack.c.l.b16 %v1445
  %v3389 = vunpack.c.h.b16 %v1445
  %v3390 = vunpack.c.l.b16 %v1446
  %v3391 = vunpack.c.h.b16 %v1446
  %v3392 = vunpack.c.l.b16 %v1447
  %v3393 = vunpack.c.l.b16 %v1448
  %v3394 = vunpack.c.h.b16 %v1448
  %v3395 = vunpack.c.l.b16 %v1449
  %v3396 = vunpack.c.h.b16 %v1449
  %v3397 = vunpack.c.l.b16 %v1450
  %v3398 = vunpack.c.h.b16 %v1450
  %v3399 = vunpack.c.l.b16 %v1451
  %v3400 = vunpack.c.h.b16 %v1451
  %v3401 = vunpack.c.l.b16 %v1452
  %v3402 = vunpack.c.l.b16 %v1453
  %v3403 = vunpack.c.h.b16 %v1453
  %v3404 = vunpack.c.l.b16 %v1454
  %v3405 = vunpack.c.h.b16 %v1454
  %v3406 = vunpack.c.l.b16 %v1455
  %v3407 = vunpack.c.h.b16 %v1455
  %v3408 = vunpack.c.l.b16 %v1456
  %v3409 = vunpack.c.h.b16 %v1456
  %v3410 = vunpack.c.l.b16 %v1457
  %v3411 = vunpack.c.l.b16 %v1458
  %v3412 = vunpack.c.h.b16 %v1458
  %v3413 = vunpack.c.l.b16 %v1459
  %v3414 = vunpack.c.h.b16 %v1459
  %v3415 = vunpack.c.l.b16 %v1460
  %v3416 = vunpack.c.h.b16 %v1460
  %v3417 = vunpack.c.l.b16 %v1461
  %v3418 = vunpack.c.h.b16 %v1461
  %v3419 = vunpack.c.l.b16 %v1462
  %v3420 = vunpack.c.l.b16 %v1463
  %v3421 = vunpack.c.h.b16 %v1463
  %v3422 = vunpack.c.l.b16 %v1464
  %v3423 = vunpack.c.h.b16 %v1464
  %v3424 = vunpack.c.l.b16 %v1465
  %v3425 = vunpack.c.h.b16 %v1465
  %v3426 = vunpack.c.l.b16 %v1466
  %v3427 = vunpack.c.h.b16 %v1466
  %v3428 = vunpack.c.l.b16 %v1467
  %v3429 = vunpack.c.l.b16 %v1468
  %v3430 = vunpack.c.h.b16 %v1468
  %v3431 = vunpack.c.l.b16 %v1469
  %v3432 = vunpack.c.h.b16 %v1469
  %v3433 = vunpack.c.l.b16 %v1470
  %v3434 = vunpack.c.h.b16 %v1470
  %v3435 = vunpack.c.l.b16 %v1471
  %v3436 = vunpack.c.h.b16 %v1471
  %v3437 = vunpack.c.l.b16 %v1472
  %v3438 = vunpack.c.l.b16 %v1473
  %v3439 = vunpack.c.h.b16 %v1473
  %v3440 = vunpack.c.l.b16 %v1474
  %v3441 = vunpack.c.h.b16 %v1474
  %v3442 = vunpack.c.l.b16 %v1475
  %v3443 = vunpack.c.h.b16 %v1475
  %v3444 = vunpack.c.l.b16 %v1476
  %v3445 = vunpack.c.h.b16 %v1476
  %v3446 = vunpack.c.l.b16 %v1477
  %v3447 = vunpack.c.l.b16 %v1478
  %v3448 = vunpack.c.h.b16 %v1478
  %v3449 = vunpack.c.l.b16 %v1479
  %v3450 = vunpack.c.h.b16 %v1479
  %v3451 = vunpack.c.l.b16 %v1480
  %v3452 = vunpack.c.h.b16 %v1480
  %v3453 = vunpack.c.l.b16 %v1481
  %v3454 = vunpack.c.h.b16 %v1481
  %v3455 = vunpack.c.l.b16 %v1482
  %v3456 = vunpack.c.l.b16 %v1483
  %v3457 = vunpack.c.h.b16 %v1483
  %v3458 = vunpack.c.l.b16 %v1484
  %v3459 = vunpack.c.h.b16 %v1484
  %v3460 = vunpack.c.l.b16 %v1485
  %v3461 = vunpack.c.h.b16 %v1485
  %v3462 = vunpack.c.l.b16 %v1486
  %v3463 = vunpack.c.h.b16 %v1486
  %v3464 = vunpack.c.l.b16 %v1487
  %v3465 = vunpack.c.l.b16 %v1488
  %v3466 = vunpack.c.h.b16 %v1488
  %v3467 = vunpack.c.l.b16 %v1489
  %v3468 = vunpack.c.h.b16 %v1489
  %v3469 = vunpack.c.l.b16 %v1490
  %v3470 = vunpack.c.h.b16 %v1490
  %v3471 = vunpack.c.l.b16 %v1491
  %v3472 = vunpack.c.h.b16 %v1491
  %v3473 = vunpack.c.l.b16 %v1492
  %v3474 = vunpack.c.l.b16 %v1493
  %v3475 = vunpack.c.h.b16 %v1493
  %v3476 = vunpack.c.l.b16 %v1494
  %v3477 = vunpack.c.h.b16 %v1494
  %v3478 = vunpack.c.l.b16 %v1495
  %v3479 = vunpack.c.h.b16 %v1495
  %v3480 = vunpack.c.l.b16 %v1496
  %v3481 = vunpack.c.h.b16 %v1496
  %v3482 = vunpack.c.l.b16 %v1497
  %v3483 = vunpack.c.l.b16 %v1498
  %v3484 = vunpack.c.h.b16 %v1498
  %v3485 = vunpack.c.l.b16 %v1499
  %v3486 = vunpack.c.h.b16 %v1499
  %v3487 = vunpack.c.l.b16 %v1500
  %v3488 = vunpack.c.h.b16 %v1500
  %v3489 = vunpack.c.l.b16 %v1501
  %v3490 = vunpack.c.h.b16 %v1501
  %v3491 = vunpack.c.l.b16 %v1502
  %v3492 = vunpack.c.l.b16 %v1503
  %v3493 = vunpack.c.h.b16 %v1503
  %v3494 = vunpack.c.l.b16 %v1504
  %v3495 = vunpack.c.h.b16 %v1504
  %v3496 = vunpack.c.l.b16 %v1505
  %v3497 = vunpack.c.h.b16 %v1505
  %v3498 = vunpack.c.l.b16 %v1506
  %v3499 = vunpack.c.h.b16 %v1506
  %v3500 = vunpack.c.l.b16 %v1507
  %v3501 = vunpack.c.l.b16 %v1508
  %v3502 = vunpack.c.h.b16 %v1508
  %v3503 = vunpack.c.l.b16 %v1509
  %v3504 = vunpack.c.h.b16 %v1509
  %v3505 = vunpack.c.l.b16 %v1510
  %v3506 = vunpack.c.h.b16 %v1510
  %v3507 = vunpack.c.l.b16 %v1511
  %v3508 = vunpack.c.h.b16 %v1511
  %v3509 = vunpack.c.l.b16 %v1512
  %v3510 = vunpack.c.l.b16 %v1513
  %v3511 = vunpack.c.h.b16 %v1513
  %v3512 = vunpack.c.l.b16 %v1514
  %v3513 = vunpack.c.h.b16 %v1514
  %v3514 = vunpack.c.l.b16 %v1515
  %v3515 = vunpack.c.h.b16 %v1515
  %v3516 = vunpack.c.l.b16 %v1516
  %v3517 = vunpack.c.h.b16 %v1516
  %v3518 = vunpack.c.l.b16 %v1517
  %v3519 = vunpack.c.l.b16 %v1518
  %v3520 = vunpack.c.h.b16 %v1518
  %v3521 = vunpack.c.l.b16 %v1519
  %v3522 = vunpack.c.h.b16 %v1519
  %v3523 = vunpack.c.l.b16 %v1520
  %v3524 = vunpack.c.h.b16 %v1520
  %v3525 = vunpack.c.l.b16 %v1521
  %v3526 = vunpack.c.h.b16 %v1521
  %v3527 = vunpack.c.l.b16 %v1522
  %v3528 = vunpack.c.l.b16 %v1523
  %v3529 = vunpack.c.h.b16 %v1523
  %v3530 = vunpack.c.l.b16 %v1524
  %v3531 = vunpack.c.h.b16 %v1524
  %v3532 = vunpack.c.l.b16 %v1525
  %v3533 = vunpack.c.h.b16 %v1525
  %v3534 = vunpack.c.l.b16 %v1526
  %v3535 = vunpack.c.h.b16 %v1526
  %v3536 = vunpack.c.l.b16 %v1527
  %v3537 = vunpack.c.l.b16 %v1528
  %v3538 = vunpack.c.h.b16 %v1528
  %v3539 = vunpack.c.l.b16 %v1529
  %v3540 = vunpack.c.h.b16 %v1529
  %v3541 = vunpack.c.l.b16 %v1530
  %v3542 = vunpack.c.h.b16 %v1530
  %v3543 = vunpack.c.l.b16 %v1531
  %v3544 = vunpack.c.h.b16 %v1531
  %v3545 = vunpack.c.l.b16 %v1532
  %v3546 = vunpack.c.l.b16 %v1533
  %v3547 = vunpack.c.h.b16 %v1533
  %v3548 = vunpack.c.l.b16 %v1534
  %v3549 = vunpack.c.h.b16 %v1534
  %v3550 = vunpack.c.l.b16 %v1535
  %v3551 = vunpack.c.h.b16 %v1535
  %v3552 = vunpack.c.l.b16 %v1536
  %v3553 = vunpack.c.h.b16 %v1536
  %v3554 = vunpack.c.l.b16 %v1537
  %v3555 = vunpack.c.l.b16 %v1538
  %v3556 = vunpack.c.h.b16 %v1538
  %v3557 = vunpack.c.l.b16 %v1539
  %v3558 = vunpack.c.h.b16 %v1539
  %v3559 = vunpack.c.l.b16 %v1540
  %v3560 = vunpack.c.h.b16 %v1540
  %v3561 = vunpack.c.l.b16 %v1541
  %v3562 = vunpack.c.h.b16 %v1541
  %v3563 = vunpack.c.l.b16 %v1542
  %v3564 = vunpack.c.l.b16 %v1543
  %v3565 = vunpack.c.h.b16 %v1543
  %v3566 = vunpack.c.l.b16 %v1544
  %v3567 = vunpack.c.h.b16 %v1544
  %v3568 = vunpack.c.l.b16 %v1545
  %v3569 = vunpack.c.h.b16 %v1545
  %v3570 = vunpack.c.l.b16 %v1546
  %v3571 = vunpack.c.h.b16 %v1546
  %v3572 = vunpack.c.l.b16 %v1547
  %v3573 = vunpack.c.l.b16 %v1548
  %v3574 = vunpack.c.h.b16 %v1548
  %v3575 = vunpack.c.l.b16 %v1549
  %v3576 = vunpack.c.h.b16 %v1549
  %v3577 = vunpack.c.l.b16 %v1550
  %v3578 = vunpack.c.h.b16 %v1550
  %v3579 = vunpack.c.l.b16 %v1551
  %v3580 = vunpack.c.h.b16 %v1551
  %v3581 = vunpack.c.l.b16 %v1552
  %v3582 = vunpack.c.l.b16 %v1553
  %v3583 = vunpack.c.h.b16 %v1553
  %v3584 = vunpack.c.l.b16 %v1554
  %v3585 = vunpack.c.h.b16 %v1554
  %v3586 = vunpack.c.l.b16 %v1555
  %v3587 = vunpack.c.h.b16 %v1555
  %v3588 = vunpack.c.l.b16 %v1556
  %v3589 = vunpack.c.h.b16 %v1556
  %v3590 = vunpack.c.l.b16 %v1557
  %v3591 = vunpack.c.l.b16 %v1558
  %v3592 = vunpack.c.h.b16 %v1558
  %v3593 = vunpack.c.l.b16 %v1559
  %v3594 = vunpack.c.h.b16 %v1559
  %v3595 = vunpack.c.l.b16 %v1560
  %v3596 = vunpack.c.h.b16 %v1560
  %v3597 = vunpack.c.l.b16 %v1561
  %v3598 = vunpack.c.h.b16 %v1561
  %v3599 = vunpack.c.l.b16 %v1562
  %v3600 = vunpack.c.l.b16 %v1563
  %v3601 = vunpack.c.h.b16 %v1563
  %v3602 = vunpack.c.l.b16 %v1564
  %v3603 = vunpack.c.h.b16 %v1564
  %v3604 = vunpack.c.l.b16 %v1565
  %v3605 = vunpack.c.h.b16 %v1565
  %v3606 = vunpack.c.l.b16 %v1566
  %v3607 = vunpack.c.h.b16 %v1566
  %v3608 = vunpack.c.l.b16 %v1567
  %v3609 = vunpack.c.l.b16 %v1568
  %v3610 = vunpack.c.h.b16 %v1568
  %v3611 = vunpack.c.l.b16 %v1569
  %v3612 = vunpack.c.h.b16 %v1569
  %v3613 = vunpack.c.l.b16 %v1570
  %v3614 = vunpack.c.h.b16 %v1570
  %v3615 = vunpack.c.l.b16 %v1571
  %v3616 = vunpack.c.h.b16 %v1571
  %v3617 = vunpack.c.l.b16 %v1572
  %v3618 = vunpack.c.l.b16 %v1573
  %v3619 = vunpack.c.h.b16 %v1573
  %v3620 = vunpack.c.l.b16 %v1574
  %v3621 = vunpack.c.h.b16 %v1574
  %v3622 = vunpack.c.l.b16 %v1575
  %v3623 = vunpack.c.h.b16 %v1575
  %v3624 = vunpack.c.l.b16 %v1576
  %v3625 = vunpack.c.h.b16 %v1576
  %v3626 = vunpack.c.l.b16 %v1577
  %v3627 = vunpack.c.l.b16 %v1578
  %v3628 = vunpack.c.h.b16 %v1578
  %v3629 = vunpack.c.l.b16 %v1579
  %v3630 = vunpack.c.h.b16 %v1579
  %v3631 = vunpack.c.l.b16 %v1580
  %v3632 = vunpack.c.h.b16 %v1580
  %v3633 = vunpack.c.l.b16 %v1581
  %v3634 = vunpack.c.h.b16 %v1581
  %v3635 = vunpack.c.l.b16 %v1582
  %v3636 = vunpack.c.l.b16 %v1583
  %v3637 = vunpack.c.h.b16 %v1583
  %v3638 = vunpack.c.l.b16 %v1584
  %v3639 = vunpack.c.h.b16 %v1584
  %v3640 = vunpack.c.l.b16 %v1585
  %v3641 = vunpack.c.h.b16 %v1585
  %v3642 = vunpack.c.l.b16 %v1586
  %v3643 = vunpack.c.h.b16 %v1586
  %v3644 = vunpack.c.l.b16 %v1587
  %v3645 = vunpack.c.l.b16 %v1588
  %v3646 = vunpack.c.h.b16 %v1588
  %v3647 = vunpack.c.l.b16 %v1589
  %v3648 = vunpack.c.h.b16 %v1589
  %v3649 = vunpack.c.l.b16 %v1590
  %v3650 = vunpack.c.h.b16 %v1590
  %v3651 = vunpack.c.l.b16 %v1591
  %v3652 = vunpack.c.h.b16 %v1591
  %v3653 = vunpack.c.l.b16 %v1592
  %v3654 = vunpack.c.l.b16 %v1593
  %v3655 = vunpack.c.h.b16 %v1593
  %v3656 = vunpack.c.l.b16 %v1594
  %v3657 = vunpack.c.h.b16 %v1594
  %v3658 = vunpack.c.l.b16 %v1595
  %v3659 = vunpack.c.h.b16 %v1595
  %v3660 = vunpack.c.l.b16 %v1596
  %v3661 = vunpack.c.h.b16 %v1596
  %v3662 = vunpack.c.l.b16 %v1597
  %v3663 = vunpack.c.l.b16 %v1598
  %v3664 = vunpack.c.h.b16 %v1598
  %v3665 = vunpack.c.l.b16 %v1599
  %v3666 = vunpack.c.h.b16 %v1599
  %v3667 = vunpack.c.l.b16 %v1600
  %v3668 = vunpack.c.h.b16 %v1600
  %v3669 = vunpack.c.l.b16 %v1601
  %v3670 = vunpack.c.h.b16 %v1601
  %v3671 = vunpack.c.l.b16 %v1602
  %v3672 = vunpack.c.l.b16 %v1603
  %v3673 = vunpack.c.h.b16 %v1603
  %v3674 = vunpack.c.l.b16 %v1604
  %v3675 = vunpack.c.h.b16 %v1604
  %v3676 = vunpack.c.l.b16 %v1605
  %v3677 = vunpack.c.h.b16 %v1605
  %v3678 = vunpack.c.l.b16 %v1606
  %v3679 = vunpack.c.h.b16 %v1606
  %v3680 = vunpack.c.l.b16 %v1607
  %v3681 = vunpack.c.l.b16 %v1608
  %v3682 = vunpack.c.h.b16 %v1608
  %v3683 = vunpack.c.l.b16 %v1609
  %v3684 = vunpack.c.h.b16 %v1609
  %v3685 = vunpack.c.l.b16 %v1610
  %v3686 = vunpack.c.h.b16 %v1610
  %v3687 = vunpack.c.l.b16 %v1611
  %v3688 = vunpack.c.h.b16 %v1611
  %v3689 = vunpack.c.l.b16 %v1612
  %v3690 = vunpack.c.l.b16 %v1613
  %v3691 = vunpack.c.h.b16 %v1613
  %v3692 = vunpack.c.l.b16 %v1614
  %v3693 = vunpack.c.h.b16 %v1614
  %v3694 = vunpack.c.l.b16 %v1615
  %v3695 = vunpack.c.h.b16 %v1615
  %v3696 = vunpack.c.l.b16 %v1616
  %v3697 = vunpack.c.h.b16 %v1616
  %v3698 = vunpack.c.l.b16 %v1617
  %v3699 = vunpack.c.l.b16 %v1618
  %v3700 = vunpack.c.h.b16 %v1618
  %v3701 = vunpack.c.l.b16 %v1619
  %v3702 = vunpack.c.h.b16 %v1619
  %v3703 = vunpack.c.l.b16 %v1620
  %v3704 = vunpack.c.h.b16 %v1620
  %v3705 = vunpack.c.l.b16 %v1621
  %v3706 = vunpack.c.h.b16 %v1621
  %v3707 = vunpack.c.l.b16 %v1622
  %v3708 = vunpack.c.l.b16 %v1623
  %v3709 = vunpack.c.h.b16 %v1623
  %v3710 = vunpack.c.l.b16 %v1624
  %v3711 = vunpack.c.h.b16 %v1624
  %v3712 = vunpack.c.l.b16 %v1625
  %v3713 = vunpack.c.h.b16 %v1625
  %v3714 = vunpack.c.l.b16 %v1626
  %v3715 = vunpack.c.h.b16 %v1626
  %v3716 = vunpack.c.l.b16 %v1627
  %v3717 = vunpack.c.l.b16 %v1628
  %v3718 = vunpack.c.h.b16 %v1628
  %v3719 = vunpack.c.l.b16 %v1629
  %v3720 = vunpack.c.h.b16 %v1629
  %v3721 = vunpack.c.l.b16 %v1630
  %v3722 = vunpack.c.h.b16 %v1630
  %v3723 = vunpack.c.l.b16 %v1631
  %v3724 = vunpack.c.h.b16 %v1631
  %v3725 = vunpack.c.l.b16 %v1632
  %v3726 = vunpack.c.l.b16 %v1633
  %v3727 = vunpack.c.h.b16 %v1633
  %v3728 = vunpack.c.l.b16 %v1634
  %v3729 = vunpack.c.h.b16 %v1634
  %v3730 = vunpack.c.l.b16 %v1635
  %v3731 = vunpack.c.h.b16 %v1635
  %v3732 = vunpack.c.l.b16 %v1636
  %v3733 = vunpack.c.h.b16 %v1636
  %v3734 = vunpack.c.l.b16 %v1637
  %v3735 = vunpack.c.l.b16 %v1638
  %v3736 = vunpack.c.h.b16 %v1638
  %v3737 = vunpack.c.l.b16 %v1639
  %v3738 = vunpack.c.h.b16 %v1639
  %v3739 = vunpack.c.l.b16 %v1640
  %v3740 = vunpack.c.h.b16 %v1640
  %v3741 = vunpack.c.l.b16 %v1641
  %v3742 = vunpack.c.h.b16 %v1641
  %v3743 = vunpack.c.l.b16 %v1642
  %v3744 = vunpack.c.l.b16 %v1643
  %v3745 = vunpack.c.h.b16 %v1643
  %v3746 = vunpack.c.l.b16 %v1644
  %v3747 = vunpack.c.h.b16 %v1644
  %v3748 = vunpack.c.l.b16 %v1645
  %v3749 = vunpack.c.h.b16 %v1645
  %v3750 = vunpack.c.l.b16 %v1646
  %v3751 = vunpack.c.h.b16 %v1646
  %v3752 = vunpack.c.l.b16 %v1647
  %v3753 = vunpack.c.l.b16 %v1648
  %v3754 = vunpack.c.h.b16 %v1648
  %v3755 = vunpack.c.l.b16 %v1649
  %v3756 = vunpack.c.h.b16 %v1649
  %v3757 = vunpack.c.l.b16 %v1650
  %v3758 = vunpack.c.h.b16 %v1650
  %v3759 = vunpack.c.l.b16 %v1651
  %v3760 = vunpack.c.h.b16 %v1651
  %v3761 = vunpack.c.l.b16 %v1652
  %v3762 = vunpack.c.l.b16 %v1653
  %v3763 = vunpack.c.h.b16 %v1653
  %v3764 = vunpack.c.l.b16 %v1654
  %v3765 = vunpack.c.h.b16 %v1654
  %v3766 = vunpack.c.l.b16 %v1655
  %v3767 = vunpack.c.h.b16 %v1655
  %v3768 = vunpack.c.l.b16 %v1656
  %v3769 = vunpack.c.h.b16 %v1656
  %v3770 = vunpack.c.l.b16 %v1657
  %v3771 = vunpack.c.l.b16 %v1658
  %v3772 = vunpack.c.h.b16 %v1658
  %v3773 = vunpack.c.l.b16 %v1659
  %v3774 = vunpack.c.h.b16 %v1659
  %v3775 = vunpack.c.l.b16 %v1660
  %v3776 = vunpack.c.h.b16 %v1660
  %v3777 = vunpack.c.l.b16 %v1661
  %v3778 = vunpack.c.h.b16 %v1661
  %v3779 = vunpack.c.l.b16 %v1662
  %v3780 = vunpack.c.l.b16 %v1663
  %v3781 = vunpack.c.h.b16 %v1663
  %v3782 = vunpack.c.l.b16 %v1664
  %v3783 = vunpack.c.h.b16 %v1664
  %v3784 = vunpack.c.l.b16 %v1665
  %v3785 = vunpack.c.h.b16 %v1665
  %v3786 = vunpack.c.l.b16 %v1666
  %v3787 = vunpack.c.h.b16 %v1666
  %v3788 = vunpack.c.l.b16 %v1667
  %v3789 = vunpack.c.l.b16 %v1668
  %v3790 = vunpack.c.h.b16 %v1668
  %v3791 = vunpack.c.l.b16 %v1669
  %v3792 = vunpack.c.h.b16 %v1669
  %v3793 = vunpack.c.l.b16 %v1670
  %v3794 = vunpack.c.h.b16 %v1670
  %v3795 = vunpack.c.l.b16 %v1671
  %v3796 = vunpack.c.h.b16 %v1671
  %v3797 = vunpack.c.l.b16 %v1672
  %v3798 = vunpack.c.l.b16 %v1673
  %v3799 = vunpack.c.h.b16 %v1673
  %v3800 = vunpack.c.l.b16 %v1674
  %v3801 = vunpack.c.h.b16 %v1674
  %v3802 = vunpack.c.l.b16 %v1675
  %v3803 = vunpack.c.h.b16 %v1675
  %v3804 = vunpack.c.l.b16 %v1676
  %v3805 = vunpack.c.h.b16 %v1676
  %v3806 = vunpack.c.l.b16 %v1677
  %v3807 = vunpack.c.l.b16 %v1678
  %v3808 = vunpack.c.h.b16 %v1678
  %v3809 = vunpack.c.l.b16 %v1679
  %v3810 = vunpack.c.h.b16 %v1679
  %v3811 = vunpack.c.l.b16 %v1680
  %v3812 = vunpack.c.h.b16 %v1680
  %v3813 = vunpack.c.l.b16 %v1681
  %v3814 = vunpack.c.h.b16 %v1681
  %v3815 = vunpack.c.l.b16 %v1682
  %v3816 = vunpack.c.l.b16 %v1683
  %v3817 = vunpack.c.h.b16 %v1683
  %v3818 = vunpack.c.l.b16 %v1684
  %v3819 = vunpack.c.h.b16 %v1684
  %v3820 = vunpack.c.l.b16 %v1685
  %v3821 = vunpack.c.h.b16 %v1685
  %v3822 = vunpack.c.l.b16 %v1686
  %v3823 = vunpack.c.h.b16 %v1686
  %v3824 = vunpack.c.l.b16 %v1687
  %v3825 = vunpack.c.l.b16 %v1688
  %v3826 = vunpack.c.h.b16 %v1688
  %v3827 = vunpack.c.l.b16 %v1689
  %v3828 = vunpack.c.h.b16 %v1689
  %v3829 = vunpack.c.l.b16 %v1690
  %v3830 = vunpack.c.h.b16 %v1690
  %v3831 = vunpack.c.l.b16 %v1691
  %v3832 = vunpack.c.h.b16 %v1691
  %v3833 = vunpack.c.l.b16 %v1692
  %v3834 = vunpack.c.l.b16 %v1693
  %v3835 = vunpack.c.h.b16 %v1693
  %v3836 = vunpack.c.l.b16 %v1694
  %v3837 = vunpack.c.h.b16 %v1694
  %v3838 = vunpack.c.l.b16 %v1695
  %v3839 = vunpack.c.h.b16 %v1695
  %v3840 = vunpack.c.l.b16 %v1696
  %v3841 = vunpack.c.h.b16 %v1696
  %v3842 = vunpack.c.l.b16 %v1697
  %v3843 = vunpack.c.l.b16 %v1698
  %v3844 = vunpack.c.h.b16 %v1698
  %v3845 = vunpack.c.l.b16 %v1699
  %v3846 = vunpack.c.h.b16 %v1699
  %v3847 = vunpack.c.l.b16 %v1700
  %v3848 = vunpack.c.h.b16 %v1700
  %v3849 = vunpack.c.l.b16 %v1701
  %v3850 = vunpack.c.h.b16 %v1701
  %v3851 = vunpack.c.l.b16 %v1702
  %v3852 = vunpack.c.l.b16 %v1703
  %v3853 = vunpack.c.h.b16 %v1703
  %v3854 = vunpack.c.l.b16 %v1704
  %v3855 = vunpack.c.h.b16 %v1704
  %v3856 = vunpack.c.l.b16 %v1705
  %v3857 = vunpack.c.h.b16 %v1705
  %v3858 = vunpack.c.l.b16 %v1706
  %v3859 = vunpack.c.h.b16 %v1706
  %v3860 = vunpack.c.l.b16 %v1707
  %v3861 = vunpack.c.l.b16 %v1708
  %v3862 = vunpack.c.h.b16 %v1708
  %v3863 = vunpack.c.l.b16 %v1709
  %v3864 = vunpack.c.h.b16 %v1709
  %v3865 = vunpack.c.l.b16 %v1710
  %v3866 = vunpack.c.h.b16 %v1710
  %v3867 = vunpack.c.l.b16 %v1711
  %v3868 = vunpack.c.h.b16 %v1711
  %v3869 = vunpack.c.l.b16 %v1712
  %v3870 = vunpack.c.l.b16 %v1713
  %v3871 = vunpack.c.h.b16 %v1713
  %v3872 = vunpack.c.l.b16 %v1714
  %v3873 = vunpack.c.h.b16 %v1714
  %v3874 = vunpack.c.l.b16 %v1715
  %v3875 = vunpack.c.h.b16 %v1715
  %v3876 = vunpack.c.l.b16 %v1716
  %v3877 = vunpack.c.h.b16 %v1716
  %v3878 = vunpack.c.l.b16 %v1717
  %v3879 = vunpack.c.l.b16 %v1718
  %v3880 = vunpack.c.h.b16 %v1718
  %v3881 = vunpack.c.l.b16 %v1719
  %v3882 = vunpack.c.h.b16 %v1719
  %v3883 = vunpack.c.l.b16 %v1720
  %v3884 = vunpack.c.h.b16 %v1720
  %v3885 = vunpack.c.l.b16 %v1721
  %v3886 = vunpack.c.h.b16 %v1721
  %v3887 = vunpack.c.l.b16 %v1722
  %v3888 = vunpack.c.l.b16 %v1723
  %v3889 = vunpack.c.h.b16 %v1723
  %v3890 = vunpack.c.l.b16 %v1724
  %v3891 = vunpack.c.h.b16 %v1724
  %v3892 = vunpack.c.l.b16 %v1725
  %v3893 = vunpack.c.h.b16 %v1725
  %v3894 = vunpack.c.l.b16 %v1726
  %v3895 = vunpack.c.h.b16 %v1726
  %v3896 = vunpack.c.l.b16 %v1727
  %v3897 = vunpack.c.l.b16 %v1728
  %v3898 = vunpack.c.h.b16 %v1728
  %v3899 = vunpack.c.l.b16 %v1729
  %v3900 = vunpack.c.h.b16 %v1729
  %v3901 = vunpack.c.l.b16 %v1730
  %v3902 = vunpack.c.h.b16 %v1730
  %v3903 = vunpack.c.l.b16 %v1731
  %v3904 = vunpack.c.h.b16 %v1731
  %v3905 = vunpack.c.l.b16 %v1732
  %v3906 = vunpack.c.l.b16 %v1733
  %v3907 = vunpack.c.h.b16 %v1733
  %v3908 = vunpack.c.l.b16 %v1734
  %v3909 = vunpack.c.h.b16 %v1734
  %v3910 = vunpack.c.l.b16 %v1735
  %v3911 = vunpack.c.h.b16 %v1735
  %v3912 = vunpack.c.l.b16 %v1736
  %v3913 = vunpack.c.h.b16 %v1736
  %v3914 = vunpack.c.l.b16 %v1737
  %v3915 = vunpack.c.l.b16 %v1738
  %v3916 = vunpack.c.h.b16 %v1738
  %v3917 = vunpack.c.l.b16 %v1739
  %v3918 = vunpack.c.h.b16 %v1739
  %v3919 = vunpack.c.l.b16 %v1740
  %v3920 = vunpack.c.h.b16 %v1740
  %v3921 = vunpack.c.l.b16 %v1741
  %v3922 = vunpack.c.h.b16 %v1741
  %v3923 = vunpack.c.l.b16 %v1742
  %v3924 = vunpack.c.l.b16 %v1743
  %v3925 = vunpack.c.h.b16 %v1743
  %v3926 = vunpack.c.l.b16 %v1744
  %v3927 = vunpack.c.h.b16 %v1744
  %v3928 = vunpack.c.l.b16 %v1745
  %v3929 = vunpack.c.h.b16 %v1745
  %v3930 = vunpack.c.l.b16 %v1746
  %v3931 = vunpack.c.h.b16 %v1746
  %v3932 = vunpack.c.l.b16 %v1747
  %v3933 = vunpack.c.l.b16 %v1748
  %v3934 = vunpack.c.h.b16 %v1748
  %v3935 = vunpack.c.l.b16 %v1749
  %v3936 = vunpack.c.h.b16 %v1749
  %v3937 = vunpack.c.l.b16 %v1750
  %v3938 = vunpack.c.h.b16 %v1750
  %v3939 = vunpack.c.l.b16 %v1751
  %v3940 = vunpack.c.h.b16 %v1751
  %v3941 = vunpack.c.l.b16 %v1752
  %v3942 = vunpack.c.l.b16 %v1753
  %v3943 = vunpack.c.h.b16 %v1753
  %v3944 = vunpack.c.l.b16 %v1754
  %v3945 = vunpack.c.h.b16 %v1754
  %v3946 = vunpack.c.l.b16 %v1755
  %v3947 = vunpack.c.h.b16 %v1755
  %v3948 = vunpack.c.l.b16 %v1756
  %v3949 = vunpack.c.h.b16 %v1756
  %v3950 = vunpack.c.l.b16 %v1757
  %v3951 = vunpack.c.l.b16 %v1758
  %v3952 = vunpack.c.h.b16 %v1758
  %v3953 = vunpack.c.l.b16 %v1759
  %v3954 = vunpack.c.h.b16 %v1759
  %v3955 = vunpack.c.l.b16 %v1760
  %v3956 = vunpack.c.h.b16 %v1760
  %v3957 = vunpack.c.l.b16 %v1761
  %v3958 = vunpack.c.h.b16 %v1761
  %v3959 = vunpack.c.l.b16 %v1762
  %v3960 = vunpack.c.l.b16 %v1763
  %v3961 = vunpack.c.h.b16 %v1763
  %v3962 = vunpack.c.l.b16 %v1764
  %v3963 = vunpack.c.h.b16 %v1764
  %v3964 = vunpack.c.l.b16 %v1765
  %v3965 = vunpack.c.h.b16 %v1765
  %v3966 = vunpack.c.l.b16 %v1766
  %v3967 = vunpack.c.h.b16 %v1766
  %v3968 = vunpack.c.l.b16 %v1767
  %v3969 = vunpack.c.l.b16 %v1768
  %v3970 = vunpack.c.h.b16 %v1768
  %v3971 = vunpack.c.l.b16 %v1769
  %v3972 = vunpack.c.h.b16 %v1769
  %v3973 = vunpack.c.l.b16 %v1770
  %v3974 = vunpack.c.h.b16 %v1770
  %v3975 = vunpack.c.l.b16 %v1771
  %v3976 = vunpack.c.h.b16 %v1771
  %v3977 = vunpack.c.l.b16 %v1772
  %v3978 = vunpack.c.l.b16 %v1773
  %v3979 = vunpack.c.h.b16 %v1773
  %v3980 = vunpack.c.l.b16 %v1774
  %v3981 = vunpack.c.h.b16 %v1774
  %v3982 = vunpack.c.l.b16 %v1775
  %v3983 = vunpack.c.h.b16 %v1775
  %v3984 = vunpack.c.l.b16 %v1776
  %v3985 = vunpack.c.h.b16 %v1776
  %v3986 = vunpack.c.l.b16 %v1777
  %v3987 = vunpack.c.l.b16 %v1778
  %v3988 = vunpack.c.h.b16 %v1778
  %v3989 = vunpack.c.l.b16 %v1779
  %v3990 = vunpack.c.h.b16 %v1779
  %v3991 = vunpack.c.l.b16 %v1780
  %v3992 = vunpack.c.h.b16 %v1780
  %v3993 = vunpack.c.l.b16 %v1781
  %v3994 = vunpack.c.h.b16 %v1781
  %v3995 = vunpack.c.l.b16 %v1782
  %v3996 = vunpack.c.l.b16 %v1783
  %v3997 = vunpack.c.h.b16 %v1783
  %v3998 = vunpack.c.l.b16 %v1784
  %v3999 = vunpack.c.h.b16 %v1784
  %v4000 = vunpack.c.l.b16 %v1785
  %v4001 = vunpack.c.h.b16 %v1785
  %v4002 = vunpack.c.l.b16 %v1786
  %v4003 = vunpack.c.h.b16 %v1786
  %v4004 = vunpack.c.l.b16 %v1787
  %v4005 = vunpack.c.l.b16 %v1788
  %v4006 = vunpack.c.h.b16 %v1788
  %v4007 = vunpack.c.l.b16 %v1789
  %v4008 = vunpack.c.h.b16 %v1789
  %v4009 = vunpack.c.l.b16 %v1790
  %v4010 = vunpack.c.h.b16 %v1790
  %v4011 = vunpack.c.l.b16 %v1791
  %v4012 = vunpack.c.h.b16 %v1791
  %v4013 = vunpack.c.l.b16 %v1792
  %v4014 = vunpack.c.l.b16 %v1793
  %v4015 = vunpack.c.h.b16 %v1793
  %v4016 = vunpack.c.l.b16 %v1794
  %v4017 = vunpack.c.h.b16 %v1794
  %v4018 = vunpack.c.l.b16 %v1795
  %v4019 = vunpack.c.h.b16 %v1795
  %v4020 = vunpack.c.l.b16 %v1796
  %v4021 = vunpack.c.h.b16 %v1796
  %v4022 = vunpack.c.l.b16 %v1797
  %v4023 = vunpack.c.l.b16 %v1798
  %v4024 = vunpack.c.h.b16 %v1798
  %v4025 = vunpack.c.l.b16 %v1799
  %v4026 = vunpack.c.h.b16 %v1799
  %v4027 = vunpack.c.l.b16 %v1800
  %v4028 = vunpack.c.h.b16 %v1800
  %v4029 = vunpack.c.l.b16 %v1801
  %v4030 = vunpack.c.h.b16 %v1801
  %v4031 = vunpack.c.l.b16 %v1802
  %v4032 = vunpack.c.l.b16 %v1803
  %v4033 = vunpack.c.h.b16 %v1803
  %v4034 = vunpack.c.l.b16 %v1804
  %v4035 = vunpack.c.h.b16 %v1804
  %v4036 = vunpack.c.l.b16 %v1805
  %v4037 = vunpack.c.h.b16 %v1805
  %v4038 = vunpack.c.l.b16 %v1806
  %v4039 = vunpack.c.h.b16 %v1806
  %v4040 = vunpack.c.l.b16 %v1807
  %v4041 = vunpack.c.l.b16 %v1808
  %v4042 = vunpack.c.h.b16 %v1808
  %v4043 = vunpack.c.l.b16 %v1809
  %v4044 = vunpack.c.h.b16 %v1809
  %v4045 = vunpack.c.l.b16 %v1810
  %v4046 = vunpack.c.h.b16 %v1810
  %v4047 = vunpack.c.l.b16 %v1811
  %v4048 = vunpack.c.h.b16 %v1811
  %v4049 = vunpack.c.l.b16 %v1812
  %v4050 = vunpack.c.l.b16 %v1813
  %v4051 = vunpack.c.h.b16 %v1813
  %v4052 = vunpack.c.l.b16 %v1814
  %v4053 = vunpack.c.h.b16 %v1814
  %v4054 = vunpack.c.l.b16 %v1815
  %v4055 = vunpack.c.h.b16 %v1815
  %v4056 = vunpack.c.l.b16 %v1816
  %v4057 = vunpack.c.h.b16 %v1816
  %v4058 = vunpack.c.l.b16 %v1817
  %v4059 = vunpack.c.l.b16 %v1818
  %v4060 = vunpack.c.h.b16 %v1818
  %v4061 = vunpack.c.l.b16 %v1819
  %v4062 = vunpack.c.h.b16 %v1819
  %v4063 = vunpack.c.l.b16 %v1820
  %v4064 = vunpack.c.h.b16 %v1820
  %v4065 = vunpack.c.l.b16 %v1821
  %v4066 = vunpack.c.h.b16 %v1821
  %v4067 = vunpack.c.l.b16 %v1822
  %v4068 = vunpack.c.l.b16 %v1823
  %v4069 = vunpack.c.h.b16 %v1823
  %v4070 = vunpack.c.l.b16 %v1824
  %v4071 = vunpack.c.h.b16 %v1824
  %v4072 = vunpack.c.l.b16 %v1825
  %v4073 = vunpack.c.h.b16 %v1825
  %v4074 = vunpack.c.l.b16 %v1826
  %v4075 = vunpack.c.h.b16 %v1826
  %v4076 = vunpack.c.l.b16 %v1827
  %v4077 = vunpack.c.l.b16 %v1828
  %v4078 = vunpack.c.h.b16 %v1828
  %v4079 = vunpack.c.l.b16 %v1829
  %v4080 = vunpack.c.h.b16 %v1829
  %v4081 = vunpack.c.l.b16 %v1830
  %v4082 = vunpack.c.h.b16 %v1830
  %v4083 = vunpack.c.l.b16 %v1831
  %v4084 = vunpack.c.h.b16 %v1831
  %v4085 = vunpack.c.l.b16 %v1832
  %v4086 = vunpack.c.l.b16 %v1833
  %v4087 = vunpack.c.h.b16 %v1833
  %v4088 = vunpack.c.l.b16 %v1834
  %v4089 = vunpack.c.h.b16 %v1834
  %v4090 = vunpack.c.l.b16 %v1835
  %v4091 = vunpack.c.h.b16 %v1835
  %v4092 = vunpack.c.l.b16 %v1836
  %v4093 = vunpack.c.h.b16 %v1836
  %v4094 = vunpack.c.l.b16 %v1837
  %v4095 = vunpack.c.l.b16 %v1838
  %v4096 = vunpack.c.h.b16 %v1838
  %v4097 = vunpack.c.l.b16 %v1839
  %v4098 = vunpack.c.h.b16 %v1839
  %v4099 = vunpack.c.l.b16 %v1840
  %v4100 = vunpack.c.h.b16 %v1840
  %v4101 = vunpack.c.l.b16 %v1841
  %v4102 = vunpack.c.h.b16 %v1841
  %v4103 = vunpack.c.l.b16 %v1842
  %v4104 = vunpack.c.l.b16 %v1843
  %v4105 = vunpack.c.h.b16 %v1843
  %v4106 = vunpack.c.l.b16 %v1844
  %v4107 = vunpack.c.h.b16 %v1844
  %v4108 = vunpack.c.l.b16 %v1845
  %v4109 = vunpack.c.h.b16 %v1845
  %v4110 = vunpack.c.l.b16 %v1846
  %v4111 = vunpack.c.h.b16 %v1846
  %v4112 = vunpack.c.l.b16 %v1847
  %v4113 = vunpack.c.l.b16 %v1848
  %v4114 = vunpack.c.h.b16 %v1848
  %v4115 = vunpack.c.l.b16 %v1849
  %v4116 = vunpack.c.h.b16 %v1849
  %v4117 = vunpack.c.l.b16 %v1850
  %v4118 = vunpack.c.h.b16 %v1850
  %v4119 = vunpack.c.l.b16 %v1851
  %v4120 = vunpack.c.h.b16 %v1851
  %v4121 = vunpack.c.l.b16 %v1852
  %v4122 = vunpack.c.l.b16 %v1853
  %v4123 = vunpack.c.h.b16 %v1853
  %v4124 = vunpack.c.l.b16 %v1854
  %v4125 = vunpack.c.h.b16 %v1854
  %v4126 = vunpack.c.l.b16 %v1855
  %v4127 = vunpack.c.h.b16 %v1855
  %v4128 = vunpack.c.l.b16 %v1856
  %v4129 = vunpack.c.h.b16 %v1856
  %v4130 = vunpack.c.l.b16 %v1857
  %v4131 = vunpack.c.l.b16 %v1858
  %v4132 = vunpack.c.h.b16 %v1858
  %v4133 = vunpack.c.l.b16 %v1859
  %v4134 = vunpack.c.h.b16 %v1859
  %v4135 = vunpack.c.l.b16 %v1860
  %v4136 = vunpack.c.h.b16 %v1860
  %v4137 = vunpack.c.l.b16 %v1861
  %v4138 = vunpack.c.h.b16 %v1861
  %v4139 = vunpack.c.l.b16 %v1862
  %v4140 = vunpack.c.l.b16 %v1863
  %v4141 = vunpack.c.h.b16 %v1863
  %v4142 = vunpack.c.l.b16 %v1864
  %v4143 = vunpack.c.h.b16 %v1864
  %v4144 = vunpack.c.l.b16 %v1865
  %v4145 = vunpack.c.h.b16 %v1865
  %v4146 = vunpack.c.l.b16 %v1866
  %v4147 = vunpack.c.h.b16 %v1866
  %v4148 = vunpack.c.l.b16 %v1867
  %v4149 = vunpack.c.l.b16 %v1868
  %v4150 = vunpack.c.h.b16 %v1868
  %v4151 = vunpack.c.l.b16 %v1869
  %v4152 = vunpack.c.h.b16 %v1869
  %v4153 = vunpack.c.l.b16 %v1870
  %v4154 = vunpack.c.h.b16 %v1870
  %v4155 = vunpack.c.l.b16 %v1871
  %v4156 = vunpack.c.h.b16 %v1871
  %v4157 = vunpack.c.l.b16 %v1872
  %v4158 = vunpack.c.l.b16 %v1873
  %v4159 = vunpack.c.h.b16 %v1873
  %v4160 = vunpack.c.l.b16 %v1874
  %v4161 = vunpack.c.h.b16 %v1874
  %v4162 = vunpack.c.l.b16 %v1875
  %v4163 = vunpack.c.h.b16 %v1875
  %v4164 = vunpack.c.l.b16 %v1876
  %v4165 = vunpack.c.h.b16 %v1876
  %v4166 = vunpack.c.l.b16 %v1877
  %v4167 = vpack.c.b16 %v2736, %v2727
  %v4168 = vpack.c.b16 %v2737, %v2728
  %v4169 = vpack.c.b16 %v2738, %v2729
  %v4170 = vpack.c.b16 %v2739, %v2730
  %v4171 = vpack.c.b16 %v2740, %v2731
  %v4172 = vpack.c.b16 %v2741, %v2732
  %v4173 = vpack.c.b16 %v2742, %v2733
  %v4174 = vpack.c.b16 %v2743, %v2734
  %v4175 = vpack.c.b16 %v2744, %v2735
  %v4176 = vpack.c.b16 %v2754, %v2745
  %v4177 = vpack.c.b16 %v2755, %v2746
  %v4178 = vpack.c.b16 %v2756, %v2747
  %v4179 = vpack.c.b16 %v2757, %v2748
  %v4180 = vpack.c.b16 %v2758, %v2749
  %v4181 = vpack.c.b16 %v2759, %v2750
  %v4182 = vpack.c.b16 %v2760, %v2751
  %v4183 = vpack.c.b16 %v2761, %v2752
  %v4184 = vpack.c.b16 %v2762, %v2753
  %v4185 = vpack.c.b16 %v2772, %v2763
  %v4186 = vpack.c.b16 %v2773, %v2764
  %v4187 = vpack.c.b16 %v2774, %v2765
  %v4188 = vpack.c.b16 %v2775, %v2766
  %v4189 = vpack.c.b16 %v2776, %v2767
  %v4190 = vpack.c.b16 %v2777, %v2768
  %v4191 = vpack.c.b16 %v2778, %v2769
  %v4192 = vpack.c.b16 %v2779, %v2770
  %v4193 = vpack.c.b16 %v2780, %v2771
  %v4194 = vpack.c.b16 %v2790, %v2781
  %v4195 = vpack.c.b16 %v2791, %v2782
  %v4196 = vpack.c.b16 %v2792, %v2783
  %v4197 = vpack.c.b16 %v2793, %v2784
  %v4198 = vpack.c.b16 %v2794, %v2785
  %v4199 = vpack.c.b16 %v2795, %v2786
  %v4200 = vpack.c.b16 %v2796, %v2787
  %v4201 = vpack.c.b16 %v2797, %v2788
  %v4202 = vpack.c.b16 %v2798, %v2789
  %v4203 = vpack.c.b16 %v2808, %v2799
  %v4204 = vpack.c.b16 %v2809, %v2800
  %v4205 = vpack.c.b16 %v2810, %v2801
  %v4206 = vpack.c.b16 %v2811, %v2802
  %v4207 = vpack.c.b16 %v2812, %v2803
  %v4208 = vpack.c.b16 %v2813, %v2804
  %v4209 = vpack.c.b16 %v2814, %v2805
  %v4210 = vpack.c.b16 %v2815, %v2806
  %v4211 = vpack.c.b16 %v2816, %v2807
  %v4212 = vpack.c.b16 %v2826, %v2817
  %v4213 = vpack.c.b16 %v2827, %v2818
  %v4214 = vpack.c.b16 %v2828, %v2819
  %v4215 = vpack.c.b16 %v2829, %v2820
  %v4216 = vpack.c.b16 %v2830, %v2821
  %v4217 = vpack.c.b16 %v2831, %v2822
  %v4218 = vpack.c.b16 %v2832, %v2823
  %v4219 = vpack.c.b16 %v2833, %v2824
  %v4220 = vpack.c.b16 %v2834, %v2825
  %v4221 = vpack.c.b16 %v2844, %v2835
  %v4222 = vpack.c.b16 %v2845, %v2836
  %v4223 = vpack.c.b16 %v2846, %v2837
  %v4224 = vpack.c.b16 %v2847, %v2838
  %v4225 = vpack.c.b16 %v2848, %v2839
  %v4226 = vpack.c.b16 %v2849, %v2840
  %v4227 = vpack.c.b16 %v2850, %v2841
  %v4228 = vpack.c.b16 %v2851, %v2842
  %v4229 = vpack.c.b16 %v2852, %v2843
  %v4230 = vpack.c.b16 %v2862, %v2853
  %v4231 = vpack.c.b16 %v2863, %v2854
  %v4232 = vpack.c.b16 %v2864, %v2855
  %v4233 = vpack.c.b16 %v2865, %v2856
  %v4234 = vpack.c.b16 %v2866, %v2857
  %v4235 = vpack.c.b16 %v2867, %v2858
  %v4236 = vpack.c.b16 %v2868, %v2859
  %v4237 = vpack.c.b16 %v2869, %v2860
  %v4238 = vpack.c.b16 %v2870, %v2861
  %v4239 = vpack.c.b16 %v2880, %v2871
  %v4240 = vpack.c.b16 %v2881, %v2872
  %v4241 = vpack.c.b16 %v2882, %v2873
  %v4242 = vpack.c.b16 %v2883, %v2874
  %v4243 = vpack.c.b16 %v2884, %v2875
  %v4244 = vpack.c.b16 %v2885, %v2876
  %v4245 = vpack.c.b16 %v2886, %v2877
  %v4246 = vpack.c.b16 %v2887, %v2878
  %v4247 = vpack.c.b16 %v2888, %v2879
  %v4248 = vpack.c.b16 %v2898, %v2889
  %v4249 = vpack.c.b16 %v2899, %v2890
  %v4250 = vpack.c.b16 %v2900, %v2891
  %v4251 = vpack.c.b16 %v2901, %v2892
  %v4252 = vpack.c.b16 %v2902, %v2893
  %v4253 = vpack.c.b16 %v2903, %v2894
  %v4254 = vpack.c.b16 %v2904, %v2895
  %v4255 = vpack.c.b16 %v2905, %v2896
  %v4256 = vpack.c.b16 %v2906, %v2897
  %v4257 = vpack.c.b16 %v2916, %v2907
  %v4258 = vpack.c.b16 %v2917, %v2908
  %v4259 = vpack.c.b16 %v2918, %v2909
  %v4260 = vpack.c.b16 %v2919, %v2910
  %v4261 = vpack.c.b16 %v2920, %v2911
  %v4262 = vpack.c.b16 %v2921, %v2912
  %v4263 = vpack.c.b16 %v2922, %v2913
  %v4264 = vpack.c.b16 %v2923, %v2914
  %v4265 = vpack.c.b16 %v2924, %v2915
  %v4266 = vpack.c.b16 %v2934, %v2925
  %v4267 = vpack.c.b16 %v2935, %v2926
  %v4268 = vpack.c.b16 %v2936, %v2927
  %v4269 = vpack.c.b16 %v2937, %v2928
  %v4270 = vpack.c.b16 %v2938, %v2929
  %v4271 = vpack.c.b16 %v2939, %v2930
  %v4272 = vpack.c.b16 %v2940, %v2931
  %v4273 = vpack.c.b16 %v2941, %v2932
  %v4274 = vpack.c.b16 %v2942, %v2933
  %v4275 = vpack.c.b16 %v2952, %v2943
  %v4276 = vpack.c.b16 %v2953, %v2944
  %v4277 = vpack.c.b16 %v2954, %v2945
  %v4278 = vpack.c.b16 %v2955, %v2946
  %v4279 = vpack.c.b16 %v2956, %v2947
  %v4280 = vpack.c.b16 %v2957, %v2948
  %v4281 = vpack.c.b16 %v2958, %v2949
  %v4282 = vpack.c.b16 %v2959, %v2950
  %v4283 = vpack.c.b16 %v2960, %v2951
  %v4284 = vpack.c.b16 %v2970, %v2961
  %v4285 = vpack.c.b16 %v2971, %v2962
  %v4286 = vpack.c.b16 %v2972, %v2963
  %v4287 = vpack.c.b16 %v2973, %v2964
  %v4288 = vpack.c.b16 %v2974, %v2965
  %v4289 = vpack.c.b16 %v2975, %v2966
  %v4290 = vpack.c.b16 %v2976, %v2967
  %v4291 = vpack.c.b16 %v2977, %v2968
  %v4292 = vpack.c.b16 %v2978, %v2969
  %v4293 = vpack.c.b16 %v2988, %v2979
  %v4294 = vpack.c.b16 %v2989, %v2980
  %v4295 = vpack.c.b16 %v2990, %v2981
  %v4296 = vpack.c.b16 %v2991, %v2982
  %v4297 = vpack.c.b16 %v2992, %v2983
  %v4298 = vpack.c.b16 %v2993, %v2984
  %v4299 = vpack.c.b16 %v2994, %v2985
  %v4300 = vpack.c.b16 %v2995, %v2986
  %v4301 = vpack.c.b16 %v2996, %v2987
  %v4302 = vpack.c.b16 %v3006, %v2997
  %v4303 = vpack.c.b16 %v3007, %v2998
  %v4304 = vpack.c.b16 %v3008, %v2999
  %v4305 = vpack.c.b16 %v3009, %v3000
  %v4306 = vpack.c.b16 %v3010, %v3001
  %v4307 = vpack.c.b16 %v3011, %v3002
  %v4308 = vpack.c.b16 %v3012, %v3003
  %v4309 = vpack.c.b16 %v3013, %v3004
  %v4310 = vpack.c.b16 %v3014, %v3005
  %v4311 = vpack.c.b16 %v3024, %v3015
  %v4312 = vpack.c.b16 %v3025, %v3016
  %v4313 = vpack.c.b16 %v3026, %v3017
  %v4314 = vpack.c.b16 %v3027, %v3018
  %v4315 = vpack.c.b16 %v3028, %v3019
  %v4316 = vpack.c.b16 %v3029, %v3020
  %v4317 = vpack.c.b16 %v3030, %v3021
  %v4318 = vpack.c.b16 %v3031, %v3022
  %v4319 = vpack.c.b16 %v3032, %v3023
  %v4320 = vpack.c.b16 %v3042, %v3033
  %v4321 = vpack.c.b16 %v3043, %v3034
  %v4322 = vpack.c.b16 %v3044, %v3035
  %v4323 = vpack.c.b16 %v3045, %v3036
  %v4324 = vpack.c.b16 %v3046, %v3037
  %v4325 = vpack.c.b16 %v3047, %v3038
  %v4326 = vpack.c.b16 %v3048, %v3039
  %v4327 = vpack.c.b16 %v3049, %v3040
  %v4328 = vpack.c.b16 %v3050, %v3041
  %v4329 = vpack.c.b16 %v3060, %v3051
  %v4330 = vpack.c.b16 %v3061, %v3052
  %v4331 = vpack.c.b16 %v3062, %v3053
  %v4332 = vpack.c.b16 %v3063, %v3054
  %v4333 = vpack.c.b16 %v3064, %v3055
  %v4334 = vpack.c.b16 %v3065, %v3056
  %v4335 = vpack.c.b16 %v3066, %v3057
  %v4336 = vpack.c.b16 %v3067, %v3058
  %v4337 = vpack.c.b16 %v3068, %v3059
  %v4338 = vpack.c.b16 %v3078, %v3069
  %v4339 = vpack.c.b16 %v3079, %v3070
  %v4340 = vpack.c.b16 %v3080, %v3071
  %v4341 = vpack.c.b16 %v3081, %v3072
  %v4342 = vpack.c.b16 %v3082, %v3073
  %v4343 = vpack.c.b16 %v3083, %v3074
  %v4344 = vpack.c.b16 %v3084, %v3075
  %v4345 = vpack.c.b16 %v3085, %v3076
  %v4346 = vpack.c.b16 %v3086, %v3077
  %v4347 = vpack.c.b16 %v3096, %v3087
  %v4348 = vpack.c.b16 %v3097, %v3088
  %v4349 = vpack.c.b16 %v3098, %v3089
  %v4350 = vpack.c.b16 %v3099, %v3090
  %v4351 = vpack.c.b16 %v3100, %v3091
  %v4352 = vpack.c.b16 %v3101, %v3092
  %v4353 = vpack.c.b16 %v3102, %v3093
  %v4354 = vpack.c.b16 %v3103, %v3094
  %v4355 = vpack.c.b16 %v3104, %v3095
  %v4356 = vpack.c.b16 %v3114, %v3105
  %v4357 = vpack.c.b16 %v3115, %v3106
  %v4358 = vpack.c.b16 %v3116, %v3107
  %v4359 = vpack.c.b16 %v3117, %v3108
  %v4360 = vpack.c.b16 %v3118, %v3109
  %v4361 = vpack.c.b16 %v3119, %v3110
  %v4362 = vpack.c.b16 %v3120, %v3111
  %v4363 = vpack.c.b16 %v3121, %v3112
  %v4364 = vpack.c.b16 %v3122, %v3113
  %v4365 = vpack.c.b16 %v3132, %v3123
  %v4366 = vpack.c.b16 %v3133, %v3124
  %v4367 = vpack.c.b16 %v3134, %v3125
  %v4368 = vpack.c.b16 %v3135, %v3126
  %v4369 = vpack.c.b16 %v3136, %v3127
  %v4370 = vpack.c.b16 %v3137, %v3128
  %v4371 = vpack.c.b16 %v3138, %v3129
  %v4372 = vpack.c.b16 %v3139, %v3130
  %v4373 = vpack.c.b16 %v3140, %v3131
  %v4374 = vpack.c.b16 %v3150, %v3141
  %v4375 = vpack.c.b16 %v3151, %v3142
  %v4376 = vpack.c.b16 %v3152, %v3143
  %v4377 = vpack.c.b16 %v3153, %v3144
  %v4378 = vpack.c.b16 %v3154, %v3145
  %v4379 = vpack.c.b16 %v3155, %v3146
  %v4380 = vpack.c.b16 %v3156, %v3147
  %v4381 = vpack.c.b16 %v3157, %v3148
  %v4382 = vpack.c.b16 %v3158, %v3149
  %v4383 = vpack.c.b16 %v3168, %v3159
  %v4384 = vpack.c.b16 %v3169, %v3160
  %v4385 = vpack.c.b16 %v3170, %v3161
  %v4386 = vpack.c.b16 %v3171, %v3162
  %v4387 = vpack.c.b16 %v3172, %v3163
  %v4388 = vpack.c.b16 %v3173, %v3164
  %v4389 = vpack.c.b16 %v3174, %v3165
  %v4390 = vpack.c.b16 %v3175, %v3166
  %v4391 = vpack.c.b16 %v3176, %v3167
  %v4392 = vpack.c.b16 %v3186, %v3177
  %v4393 = vpack.c.b16 %v3187, %v3178
  %v4394 = vpack.c.b16 %v3188, %v3179
  %v4395 = vpack.c.b16 %v3189, %v3180
  %v4396 = vpack.c.b16 %v3190, %v3181
  %v4397 = vpack.c.b16 %v3191, %v3182
  %v4398 = vpack.c.b16 %v3192, %v3183
  %v4399 = vpack.c.b16 %v3193, %v3184
  %v4400 = vpack.c.b16 %v3194, %v3185
  %v4401 = vpack.c.b16 %v3204, %v3195
  %v4402 = vpack.c.b16 %v3205, %v3196
  %v4403 = vpack.c.b16 %v3206, %v3197
  %v4404 = vpack.c.b16 %v3207, %v3198
  %v4405 = vpack.c.b16 %v3208, %v3199
  %v4406 = vpack.c.b16 %v3209, %v3200
  %v4407 = vpack.c.b16 %v3210, %v3201
  %v4408 = vpack.c.b16 %v3211, %v3202
  %v4409 = vpack.c.b16 %v3212, %v3203
  %v4410 = vpack.c.b16 %v3222, %v3213
  %v4411 = vpack.c.b16 %v3223, %v3214
  %v4412 = vpack.c.b16 %v3224, %v3215
  %v4413 = vpack.c.b16 %v3225, %v3216
  %v4414 = vpack.c.b16 %v3226, %v3217
  %v4415 = vpack.c.b16 %v3227, %v3218
  %v4416 = vpack.c.b16 %v3228, %v3219
  %v4417 = vpack.c.b16 %v3229, %v3220
  %v4418 = vpack.c.b16 %v3230, %v3221
  %v4419 = vpack.c.b16 %v3240, %v3231
  %v4420 = vpack.c.b16 %v3241, %v3232
  %v4421 = vpack.c.b16 %v3242, %v3233
  %v4422 = vpack.c.b16 %v3243, %v3234
  %v4423 = vpack.c.b16 %v3244, %v3235
  %v4424 = vpack.c.b16 %v3245, %v3236
  %v4425 = vpack.c.b16 %v3246, %v3237
  %v4426 = vpack.c.b16 %v3247, %v3238
  %v4427 = vpack.c.b16 %v3248, %v3239
  %v4428 = vpack.c.b16 %v3258, %v3249
  %v4429 = vpack.c.b16 %v3259, %v3250
  %v4430 = vpack.c.b16 %v3260, %v3251
  %v4431 = vpack.c.b16 %v3261, %v3252
  %v4432 = vpack.c.b16 %v3262, %v3253
  %v4433 = vpack.c.b16 %v3263, %v3254
  %v4434 = vpack.c.b16 %v3264, %v3255
  %v4435 = vpack.c.b16 %v3265, %v3256
  %v4436 = vpack.c.b16 %v3266, %v3257
  %v4437 = vpack.c.b16 %v3276, %v3267
  %v4438 = vpack.c.b16 %v3277, %v3268
  %v4439 = vpack.c.b16 %v3278, %v3269
  %v4440 = vpack.c.b16 %v3279, %v3270
  %v4441 = vpack.c.b16 %v3280, %v3271
  %v4442 = vpack.c.b16 %v3281, %v3272
  %v4443 = vpack.c.b16 %v3282, %v3273
  %v4444 = vpack.c.b16 %v3283, %v3274
  %v4445 = vpack.c.b16 %v3284, %v3275
  %v4446 = vpack.c.b16 %v3294, %v3285
  %v4447 = vpack.c.b16 %v3295, %v3286
  %v4448 = vpack.c.b16 %v3296, %v3287
  %v4449 = vpack.c.b16 %v3297, %v3288
  %v4450 = vpack.c.b16 %v3298, %v3289
  %v4451 = vpack.c.b16 %v3299, %v3290
  %v4452 = vpack.c.b16 %v3300, %v3291
  %v4453 = vpack.c.b16 %v3301, %v3292
  %v4454 = vpack.c.b16 %v3302, %v3293
  %v4455 = vpack.c.b16 %v3312, %v3303
  %v4456 = vpack.c.b16 %v3313, %v3304
  %v4457 = vpack.c.b16 %v3314, %v3305
  %v4458 = vpack.c.b16 %v3315, %v3306
  %v4459 = vpack.c.b16 %v3316, %v3307
  %v4460 = vpack.c.b16 %v3317, %v3308
  %v4461 = vpack.c.b16 %v3318, %v3309
  %v4462 = vpack.c.b16 %v3319, %v3310
  %v4463 = vpack.c.b16 %v3320, %v3311
  %v4464 = vpack.c.b16 %v3330, %v3321
  %v4465 = vpack.c.b16 %v3331, %v3322
  %v4466 = vpack.c.b16 %v3332, %v3323
  %v4467 = vpack.c.b16 %v3333, %v3324
  %v4468 = vpack.c.b16 %v3334, %v3325
  %v4469 = vpack.c.b16 %v3335, %v3326
  %v4470 = vpack.c.b16 %v3336, %v3327
  %v4471 = vpack.c.b16 %v3337, %v3328
  %v4472 = vpack.c.b16 %v3338, %v3329
  %v4473 = vpack.c.b16 %v3348, %v3339
  %v4474 = vpack.c.b16 %v3349, %v3340
  %v4475 = vpack.c.b16 %v3350, %v3341
  %v4476 = vpack.c.b16 %v3351, %v3342
  %v4477 = vpack.c.b16 %v3352, %v3343
  %v4478 = vpack.c.b16 %v3353, %v3344
  %v4479 = vpack.c.b16 %v3354, %v3345
  %v4480 = vpack.c.b16 %v3355, %v3346
  %v4481 = vpack.c.b16 %v3356, %v3347
  %v4482 = vpack.c.b16 %v3366, %v3357
  %v4483 = vpack.c.b16 %v3367, %v3358
  %v4484 = vpack.c.b16 %v3368, %v3359
  %v4485 = vpack.c.b16 %v3369, %v3360
  %v4486 = vpack.c.b16 %v3370, %v3361
  %v4487 = vpack.c.b16 %v3371, %v3362
  %v4488 = vpack.c.b16 %v3372, %v3363
  %v4489 = vpack.c.b16 %v3373, %v3364
  %v4490 = vpack.c.b16 %v3374, %v3365
  %v4491 = vpack.c.b16 %v3384, %v3375
  %v4492 = vpack.c.b16 %v3385, %v3376
  %v4493 = vpack.c.b16 %v3386, %v3377
  %v4494 = vpack.c.b16 %v3387, %v3378
  %v4495 = vpack.c.b16 %v3388, %v3379
  %v4496 = vpack.c.b16 %v3389, %v3380
  %v4497 = vpack.c.b16 %v3390, %v3381
  %v4498 = vpack.c.b16 %v3391, %v3382
  %v4499 = vpack.c.b16 %v3392, %v3383
  %v4500 = vpack.c.b16 %v3402, %v3393
  %v4501 = vpack.c.b16 %v3403, %v3394
  %v4502 = vpack.c.b16 %v3404, %v3395
  %v4503 = vpack.c.b16 %v3405, %v3396
  %v4504 = vpack.c.b16 %v3406, %v3397
  %v4505 = vpack.c.b16 %v3407, %v3398
  %v4506 = vpack.c.b16 %v3408, %v3399
  %v4507 = vpack.c.b16 %v3409, %v3400
  %v4508 = vpack.c.b16 %v3410, %v3401
  %v4509 = vpack.c.b16 %v3420, %v3411
  %v4510 = vpack.c.b16 %v3421, %v3412
  %v4511 = vpack.c.b16 %v3422, %v3413
  %v4512 = vpack.c.b16 %v3423, %v3414
  %v4513 = vpack.c.b16 %v3424, %v3415
  %v4514 = vpack.c.b16 %v3425, %v3416
  %v4515 = vpack.c.b16 %v3426, %v3417
  %v4516 = vpack.c.b16 %v3427, %v3418
  %v4517 = vpack.c.b16 %v3428, %v3419
  %v4518 = vpack.c.b16 %v3438, %v3429
  %v4519 = vpack.c.b16 %v3439, %v3430
  %v4520 = vpack.c.b16 %v3440, %v3431
  %v4521 = vpack.c.b16 %v3441, %v3432
  %v4522 = vpack.c.b16 %v3442, %v3433
  %v4523 = vpack.c.b16 %v3443, %v3434
  %v4524 = vpack.c.b16 %v3444, %v3435
  %v4525 = vpack.c.b16 %v3445, %v3436
  %v4526 = vpack.c.b16 %v3446, %v3437
  %v4527 = vpack.c.b16 %v3456, %v3447
  %v4528 = vpack.c.b16 %v3457, %v3448
  %v4529 = vpack.c.b16 %v3458, %v3449
  %v4530 = vpack.c.b16 %v3459, %v3450
  %v4531 = vpack.c.b16 %v3460, %v3451
  %v4532 = vpack.c.b16 %v3461, %v3452
  %v4533 = vpack.c.b16 %v3462, %v3453
  %v4534 = vpack.c.b16 %v3463, %v3454
  %v4535 = vpack.c.b16 %v3464, %v3455
  %v4536 = vpack.c.b16 %v3474, %v3465
  %v4537 = vpack.c.b16 %v3475, %v3466
  %v4538 = vpack.c.b16 %v3476, %v3467
  %v4539 = vpack.c.b16 %v3477, %v3468
  %v4540 = vpack.c.b16 %v3478, %v3469
  %v4541 = vpack.c.b16 %v3479, %v3470
  %v4542 = vpack.c.b16 %v3480, %v3471
  %v4543 = vpack.c.b16 %v3481, %v3472
  %v4544 = vpack.c.b16 %v3482, %v3473
  %v4545 = vpack.c.b16 %v3492, %v3483
  %v4546 = vpack.c.b16 %v3493, %v3484
  %v4547 = vpack.c.b16 %v3494, %v3485
  %v4548 = vpack.c.b16 %v3495, %v3486
  %v4549 = vpack.c.b16 %v3496, %v3487
  %v4550 = vpack.c.b16 %v3497, %v3488
  %v4551 = vpack.c.b16 %v3498, %v3489
  %v4552 = vpack.c.b16 %v3499, %v3490
  %v4553 = vpack.c.b16 %v3500, %v3491
  %v4554 = vpack.c.b16 %v3510, %v3501
  %v4555 = vpack.c.b16 %v3511, %v3502
  %v4556 = vpack.c.b16 %v3512, %v3503
  %v4557 = vpack.c.b16 %v3513, %v3504
  %v4558 = vpack.c.b16 %v3514, %v3505
  %v4559 = vpack.c.b16 %v3515, %v3506
  %v4560 = vpack.c.b16 %v3516, %v3507
  %v4561 = vpack.c.b16 %v3517, %v3508
  %v4562 = vpack.c.b16 %v3518, %v3509
  %v4563 = vpack.c.b16 %v3528, %v3519
  %v4564 = vpack.c.b16 %v3529, %v3520
  %v4565 = vpack.c.b16 %v3530, %v3521
  %v4566 = vpack.c.b16 %v3531, %v3522
  %v4567 = vpack.c.b16 %v3532, %v3523
  %v4568 = vpack.c.b16 %v3533, %v3524
  %v4569 = vpack.c.b16 %v3534, %v3525
  %v4570 = vpack.c.b16 %v3535, %v3526
  %v4571 = vpack.c.b16 %v3536, %v3527
  %v4572 = vpack.c.b16 %v3546, %v3537
  %v4573 = vpack.c.b16 %v3547, %v3538
  %v4574 = vpack.c.b16 %v3548, %v3539
  %v4575 = vpack.c.b16 %v3549, %v3540
  %v4576 = vpack.c.b16 %v3550, %v3541
  %v4577 = vpack.c.b16 %v3551, %v3542
  %v4578 = vpack.c.b16 %v3552, %v3543
  %v4579 = vpack.c.b16 %v3553, %v3544
  %v4580 = vpack.c.b16 %v3554, %v3545
  %v4581 = vpack.c.b16 %v3564, %v3555
  %v4582 = vpack.c.b16 %v3565, %v3556
  %v4583 = vpack.c.b16 %v3566, %v3557
  %v4584 = vpack.c.b16 %v3567, %v3558
  %v4585 = vpack.c.b16 %v3568, %v3559
  %v4586 = vpack.c.b16 %v3569, %v3560
  %v4587 = vpack.c.b16 %v3570, %v3561
  %v4588 = vpack.c.b16 %v3571, %v3562
  %v4589 = vpack.c.b16 %v3572, %v3563
  %v4590 = vpack.c.b16 %v3582, %v3573
  %v4591 = vpack.c.b16 %v3583, %v3574
  %v4592 = vpack.c.b16 %v3584, %v3575
  %v4593 = vpack.c.b16 %v3585, %v3576
  %v4594 = vpack.c.b16 %v3586, %v3577
  %v4595 = vpack.c.b16 %v3587, %v3578
  %v4596 = vpack.c.b16 %v3588, %v3579
  %v4597 = vpack.c.b16 %v3589, %v3580
  %v4598 = vpack.c.b16 %v3590, %v3581
  %v4599 = vpack.c.b16 %v3600, %v3591
  %v4600 = vpack.c.b16 %v3601, %v3592
  %v4601 = vpack.c.b16 %v3602, %v3593
  %v4602 = vpack.c.b16 %v3603, %v3594
  %v4603 = vpack.c.b16 %v3604, %v3595
  %v4604 = vpack.c.b16 %v3605, %v3596
  %v4605 = vpack.c.b16 %v3606, %v3597
  %v4606 = vpack.c.b16 %v3607, %v3598
  %v4607 = vpack.c.b16 %v3608, %v3599
  %v4608 = vpack.c.b16 %v3618, %v3609
  %v4609 = vpack.c.b16 %v3619, %v3610
  %v4610 = vpack.c.b16 %v3620, %v3611
  %v4611 = vpack.c.b16 %v3621, %v3612
  %v4612 = vpack.c.b16 %v3622, %v3613
  %v4613 = vpack.c.b16 %v3623, %v3614
  %v4614 = vpack.c.b16 %v3624, %v3615
  %v4615 = vpack.c.b16 %v3625, %v3616
  %v4616 = vpack.c.b16 %v3626, %v3617
  %v4617 = vpack.c.b16 %v3636, %v3627
  %v4618 = vpack.c.b16 %v3637, %v3628
  %v4619 = vpack.c.b16 %v3638, %v3629
  %v4620 = vpack.c.b16 %v3639, %v3630
  %v4621 = vpack.c.b16 %v3640, %v3631
  %v4622 = vpack.c.b16 %v3641, %v3632
  %v4623 = vpack.c.b16 %v3642, %v3633
  %v4624 = vpack.c.b16 %v3643, %v3634
  %v4625 = vpack.c.b16 %v3644, %v3635
  %v4626 = vpack.c.b16 %v3654, %v3645
  %v4627 = vpack.c.b16 %v3655, %v3646
  %v4628 = vpack.c.b16 %v3656, %v3647
  %v4629 = vpack.c.b16 %v3657, %v3648
  %v4630 = vpack.c.b16 %v3658, %v3649
  %v4631 = vpack.c.b16 %v3659, %v3650
  %v4632 = vpack.c.b16 %v3660, %v3651
  %v4633 = vpack.c.b16 %v3661, %v3652
  %v4634 = vpack.c.b16 %v3662, %v3653
  %v4635 = vpack.c.b16 %v3672, %v3663
  %v4636 = vpack.c.b16 %v3673, %v3664
  %v4637 = vpack.c.b16 %v3674, %v3665
  %v4638 = vpack.c.b16 %v3675, %v3666
  %v4639 = vpack.c.b16 %v3676, %v3667
  %v4640 = vpack.c.b16 %v3677, %v3668
  %v4641 = vpack.c.b16 %v3678, %v3669
  %v4642 = vpack.c.b16 %v3679, %v3670
  %v4643 = vpack.c.b16 %v3680, %v3671
  %v4644 = vpack.c.b16 %v3690, %v3681
  %v4645 = vpack.c.b16 %v3691, %v3682
  %v4646 = vpack.c.b16 %v3692, %v3683
  %v4647 = vpack.c.b16 %v3693, %v3684
  %v4648 = vpack.c.b16 %v3694, %v3685
  %v4649 = vpack.c.b16 %v3695, %v3686
  %v4650 = vpack.c.b16 %v3696, %v3687
  %v4651 = vpack.c.b16 %v3697, %v3688
  %v4652 = vpack.c.b16 %v3698, %v3689
  %v4653 = vpack.c.b16 %v3708, %v3699
  %v4654 = vpack.c.b16 %v3709, %v3700
  %v4655 = vpack.c.b16 %v3710, %v3701
  %v4656 = vpack.c.b16 %v3711, %v3702
  %v4657 = vpack.c.b16 %v3712, %v3703
  %v4658 = vpack.c.b16 %v3713, %v3704
  %v4659 = vpack.c.b16 %v3714, %v3705
  %v4660 = vpack.c.b16 %v3715, %v3706
  %v4661 = vpack.c.b16 %v3716, %v3707
  %v4662 = vpack.c.b16 %v3726, %v3717
  %v4663 = vpack.c.b16 %v3727, %v3718
  %v4664 = vpack.c.b16 %v3728, %v3719
  %v4665 = vpack.c.b16 %v3729, %v3720
  %v4666 = vpack.c.b16 %v3730, %v3721
  %v4667 = vpack.c.b16 %v3731, %v3722
  %v4668 = vpack.c.b16 %v3732, %v3723
  %v4669 = vpack.c.b16 %v3733, %v3724
  %v4670 = vpack.c.b16 %v3734, %v3725
  %v4671 = vpack.c.b16 %v3744, %v3735
  %v4672 = vpack.c.b16 %v3745, %v3736
  %v4673 = vpack.c.b16 %v3746, %v3737
  %v4674 = vpack.c.b16 %v3747, %v3738
  %v4675 = vpack.c.b16 %v3748, %v3739
  %v4676 = vpack.c.b16 %v3749, %v3740
  %v4677 = vpack.c.b16 %v3750, %v3741
  %v4678 = vpack.c.b16 %v3751, %v3742
  %v4679 = vpack.c.b16 %v3752, %v3743
  %v4680 = vpack.c.b16 %v3762, %v3753
  %v4681 = vpack.c.b16 %v3763, %v3754
  %v4682 = vpack.c.b16 %v3764, %v3755
  %v4683 = vpack.c.b16 %v3765, %v3756
  %v4684 = vpack.c.b16 %v3766, %v3757
  %v4685 = vpack.c.b16 %v3767, %v3758
  %v4686 = vpack.c.b16 %v3768, %v3759
  %v4687 = vpack.c.b16 %v3769, %v3760
  %v4688 = vpack.c.b16 %v3770, %v3761
  %v4689 = vpack.c.b16 %v3780, %v3771
  %v4690 = vpack.c.b16 %v3781, %v3772
  %v4691 = vpack.c.b16 %v3782, %v3773
  %v4692 = vpack.c.b16 %v3783, %v3774
  %v4693 = vpack.c.b16 %v3784, %v3775
  %v4694 = vpack.c.b16 %v3785, %v3776
  %v4695 = vpack.c.b16 %v3786, %v3777
  %v4696 = vpack.c.b16 %v3787, %v3778
  %v4697 = vpack.c.b16 %v3788, %v3779
  %v4698 = vpack.c.b16 %v3798, %v3789
  %v4699 = vpack.c.b16 %v3799, %v3790
  %v4700 = vpack.c.b16 %v3800, %v3791
  %v4701 = vpack.c.b16 %v3801, %v3792
  %v4702 = vpack.c.b16 %v3802, %v3793
  %v4703 = vpack.c.b16 %v3803, %v3794
  %v4704 = vpack.c.b16 %v3804, %v3795
  %v4705 = vpack.c.b16 %v3805, %v3796
  %v4706 = vpack.c.b16 %v3806, %v3797
  %v4707 = vpack.c.b16 %v3816, %v3807
  %v4708 = vpack.c.b16 %v3817, %v3808
  %v4709 = vpack.c.b16 %v3818, %v3809
  %v4710 = vpack.c.b16 %v3819, %v3810
  %v4711 = vpack.c.b16 %v3820, %v3811
  %v4712 = vpack.c.b16 %v3821, %v3812
  %v4713 = vpack.c.b16 %v3822, %v3813
  %v4714 = vpack.c.b16 %v3823, %v3814
  %v4715 = vpack.c.b16 %v3824, %v3815
  %v4716 = vpack.c.b16 %v3834, %v3825
  %v4717 = vpack.c.b16 %v3835, %v3826
  %v4718 = vpack.c.b16 %v3836, %v3827
  %v4719 = vpack.c.b16 %v3837, %v3828
  %v4720 = vpack.c.b16 %v3838, %v3829
  %v4721 = vpack.c.b16 %v3839, %v3830
  %v4722 = vpack.c.b16 %v3840, %v3831
  %v4723 = vpack.c.b16 %v3841, %v3832
  %v4724 = vpack.c.b16 %v3842, %v3833
  %v4725 = vpack.c.b16 %v3852, %v3843
  %v4726 = vpack.c.b16 %v3853, %v3844
  %v4727 = vpack.c.b16 %v3854, %v3845
  %v4728 = vpack.c.b16 %v3855, %v3846
  %v4729 = vpack.c.b16 %v3856, %v3847
  %v4730 = vpack.c.b16 %v3857, %v3848
  %v4731 = vpack.c.b16 %v3858, %v3849
  %v4732 = vpack.c.b16 %v3859, %v3850
  %v4733 = vpack.c.b16 %v3860, %v3851
  %v4734 = vpack.c.b16 %v3870, %v3861
  %v4735 = vpack.c.b16 %v3871, %v3862
  %v4736 = vpack.c.b16 %v3872, %v3863
  %v4737 = vpack.c.b16 %v3873, %v3864
  %v4738 = vpack.c.b16 %v3874, %v3865
  %v4739 = vpack.c.b16 %v3875, %v3866
  %v4740 = vpack.c.b16 %v3876, %v3867
  %v4741 = vpack.c.b16 %v3877, %v3868
  %v4742 = vpack.c.b16 %v3878, %v3869
  %v4743 = vpack.c.b16 %v3888, %v3879
  %v4744 = vpack.c.b16 %v3889, %v3880
  %v4745 = vpack.c.b16 %v3890, %v3881
  %v4746 = vpack.c.b16 %v3891, %v3882
  %v4747 = vpack.c.b16 %v3892, %v3883
  %v4748 = vpack.c.b16 %v3893, %v3884
  %v4749 = vpack.c.b16 %v3894, %v3885
  %v4750 = vpack.c.b16 %v3895, %v3886
  %v4751 = vpack.c.b16 %v3896, %v3887
  %v4752 = vpack.c.b16 %v3906, %v3897
  %v4753 = vpack.c.b16 %v3907, %v3898
  %v4754 = vpack.c.b16 %v3908, %v3899
  %v4755 = vpack.c.b16 %v3909, %v3900
  %v4756 = vpack.c.b16 %v3910, %v3901
  %v4757 = vpack.c.b16 %v3911, %v3902
  %v4758 = vpack.c.b16 %v3912, %v3903
  %v4759 = vpack.c.b16 %v3913, %v3904
  %v4760 = vpack.c.b16 %v3914, %v3905
  %v4761 = vpack.c.b16 %v3924, %v3915
  %v4762 = vpack.c.b16 %v3925, %v3916
  %v4763 = vpack.c.b16 %v3926, %v3917
  %v4764 = vpack.c.b16 %v3927, %v3918
  %v4765 = vpack.c.b16 %v3928, %v3919
  %v4766 = vpack.c.b16 %v3929, %v3920
  %v4767 = vpack.c.b16 %v3930, %v3921
  %v4768 = vpack.c.b16 %v3931, %v3922
  %v4769 = vpack.c.b16 %v3932, %v3923
  %v4770 = vpack.c.b16 %v3942, %v3933
  %v4771 = vpack.c.b16 %v3943, %v3934
  %v4772 = vpack.c.b16 %v3944, %v3935
  %v4773 = vpack.c.b16 %v3945, %v3936
  %v4774 = vpack.c.b16 %v3946, %v3937
  %v4775 = vpack.c.b16 %v3947, %v3938
  %v4776 = vpack.c.b16 %v3948, %v3939
  %v4777 = vpack.c.b16 %v3949, %v3940
  %v4778 = vpack.c.b16 %v3950, %v3941
  %v4779 = vpack.c.b16 %v3960, %v3951
  %v4780 = vpack.c.b16 %v3961, %v3952
  %v4781 = vpack.c.b16 %v3962, %v3953
  %v4782 = vpack.c.b16 %v3963, %v3954
  %v4783 = vpack.c.b16 %v3964, %v3955
  %v4784 = vpack.c.b16 %v3965, %v3956
  %v4785 = vpack.c.b16 %v3966, %v3957
  %v4786 = vpack.c.b16 %v3967, %v3958
  %v4787 = vpack.c.b16 %v3968, %v3959
  %v4788 = vpack.c.b16 %v3978, %v3969
  %v4789 = vpack.c.b16 %v3979, %v3970
  %v4790 = vpack.c.b16 %v3980, %v3971
  %v4791 = vpack.c.b16 %v3981, %v3972
  %v4792 = vpack.c.b16 %v3982, %v3973
  %v4793 = vpack.c.b16 %v3983, %v3974
  %v4794 = vpack.c.b16 %v3984, %v3975
  %v4795 = vpack.c.b16 %v3985, %v3976
  %v4796 = vpack.c.b16 %v3986, %v3977
  %v4797 = vpack.c.b16 %v3996, %v3987
  %v4798 = vpack.c.b16 %v3997, %v3988
  %v4799 = vpack.c.b16 %v3998, %v3989
  %v4800 = vpack.c.b16 %v3999, %v3990
  %v4801 = vpack.c.b16 %v4000, %v3991
  %v4802 = vpack.c.b16 %v4001, %v3992
  %v4803 = vpack.c.b16 %v4002, %v3993
  %v4804 = vpack.c.b16 %v4003, %v3994
  %v4805 = vpack.c.b16 %v4004, %v3995
  %v4806 = vpack.c.b16 %v4014, %v4005
  %v4807 = vpack.c.b16 %v4015, %v4006
  %v4808 = vpack.c.b16 %v4016, %v4007
  %v4809 = vpack.c.b16 %v4017, %v4008
  %v4810 = vpack.c.b16 %v4018, %v4009
  %v4811 = vpack.c.b16 %v4019, %v4010
  %v4812 = vpack.c.b16 %v4020, %v4011
  %v4813 = vpack.c.b16 %v4021, %v4012
  %v4814 = vpack.c.b16 %v4022, %v4013
  %v4815 = vpack.c.b16 %v4032, %v4023
  %v4816 = vpack.c.b16 %v4033, %v4024
  %v4817 = vpack.c.b16 %v4034, %v4025
  %v4818 = vpack.c.b16 %v4035, %v4026
  %v4819 = vpack.c.b16 %v4036, %v4027
  %v4820 = vpack.c.b16 %v4037, %v4028
  %v4821 = vpack.c.b16 %v4038, %v4029
  %v4822 = vpack.c.b16 %v4039, %v4030
  %v4823 = vpack.c.b16 %v4040, %v4031
  %v4824 = vpack.c.b16 %v4050, %v4041
  %v4825 = vpack.c.b16 %v4051, %v4042
  %v4826 = vpack.c.b16 %v4052, %v4043
  %v4827 = vpack.c.b16 %v4053, %v4044
  %v4828 = vpack.c.b16 %v4054, %v4045
  %v4829 = vpack.c.b16 %v4055, %v4046
  %v4830 = vpack.c.b16 %v4056, %v4047
  %v4831 = vpack.c.b16 %v4057, %v4048
  %v4832 = vpack.c.b16 %v4058, %v4049
  %v4833 = vpack.c.b16 %v4068, %v4059
  %v4834 = vpack.c.b16 %v4069, %v4060
  %v4835 = vpack.c.b16 %v4070, %v4061
  %v4836 = vpack.c.b16 %v4071, %v4062
  %v4837 = vpack.c.b16 %v4072, %v4063
  %v4838 = vpack.c.b16 %v4073, %v4064
  %v4839 = vpack.c.b16 %v4074, %v4065
  %v4840 = vpack.c.b16 %v4075, %v4066
  %v4841 = vpack.c.b16 %v4076, %v4067
  %v4842 = vpack.c.b16 %v4086, %v4077
  %v4843 = vpack.c.b16 %v4087, %v4078
  %v4844 = vpack.c.b16 %v4088, %v4079
  %v4845 = vpack.c.b16 %v4089, %v4080
  %v4846 = vpack.c.b16 %v4090, %v4081
  %v4847 = vpack.c.b16 %v4091, %v4082
  %v4848 = vpack.c.b16 %v4092, %v4083
  %v4849 = vpack.c.b16 %v4093, %v4084
  %v4850 = vpack.c.b16 %v4094, %v4085
  %v4851 = vpack.c.b16 %v4104, %v4095
  %v4852 = vpack.c.b16 %v4105, %v4096
  %v4853 = vpack.c.b16 %v4106, %v4097
  %v4854 = vpack.c.b16 %v4107, %v4098
  %v4855 = vpack.c.b16 %v4108, %v4099
  %v4856 = vpack.c.b16 %v4109, %v4100
  %v4857 = vpack.c.b16 %v4110, %v4101
  %v4858 = vpack.c.b16 %v4111, %v4102
  %v4859 = vpack.c.b16 %v4112, %v4103
  %v4860 = vpack.c.b16 %v4122, %v4113
  %v4861 = vpack.c.b16 %v4123, %v4114
  %v4862 = vpack.c.b16 %v4124, %v4115
  %v4863 = vpack.c.b16 %v4125, %v4116
  %v4864 = vpack.c.b16 %v4126, %v4117
  %v4865 = vpack.c.b16 %v4127, %v4118
  %v4866 = vpack.c.b16 %v4128, %v4119
  %v4867 = vpack.c.b16 %v4129, %v4120
  %v4868 = vpack.c.b16 %v4130, %v4121
  %v4869 = vpack.c.b16 %v4140, %v4131
  %v4870 = vpack.c.b16 %v4141, %v4132
  %v4871 = vpack.c.b16 %v4142, %v4133
  %v4872 = vpack.c.b16 %v4143, %v4134
  %v4873 = vpack.c.b16 %v4144, %v4135
  %v4874 = vpack.c.b16 %v4145, %v4136
  %v4875 = vpack.c.b16 %v4146, %v4137
  %v4876 = vpack.c.b16 %v4147, %v4138
  %v4877 = vpack.c.b16 %v4148, %v4139
  %v4878 = vpack.c.b16 %v4158, %v4149
  %v4879 = vpack.c.b16 %v4159, %v4150
  %v4880 = vpack.c.b16 %v4160, %v4151
  %v4881 = vpack.c.b16 %v4161, %v4152
  %v4882 = vpack.c.b16 %v4162, %v4153
  %v4883 = vpack.c.b16 %v4163, %v4154
  %v4884 = vpack.c.b16 %v4164, %v4155
  %v4885 = vpack.c.b16 %v4165, %v4156
  %v4886 = vpack.c.b16 %v4166, %v4157
  %5607 = vmatprep.subr.bf16.mxu0 %v4168
  %5608 = vmatpush1.bf16.msra.mxu0 %v4167
  %5609 = vmatprep.subr.bf16.mxu0 %v4177
  %5610 = vmatpush1.bf16.msra.mxu0 %v4176
  %5611 = vmatprep.subr.bf16.mxu0 %v4186
  %5612 = vmatpush1.bf16.msra.mxu0 %v4185
  %5613 = vmatprep.subr.bf16.mxu0 %v4195
  %5614 = vmatpush1.bf16.msra.mxu0 %v4194
  %5615 = vmatprep.subr.bf16.mxu0 %v4204
  %5616 = vmatpush1.bf16.msra.mxu0 %v4203
  %5617 = vmatprep.subr.bf16.mxu0 %v4213
  %5618 = vmatpush1.bf16.msra.mxu0 %v4212
  %5619 = vmatprep.subr.bf16.mxu0 %v4222
  %5620 = vmatpush1.bf16.msra.mxu0 %v4221
  %5621 = vmatprep.subr.bf16.mxu0 %v4231
  %5622 = vmatpush1.bf16.msra.mxu0 %v4230
  %5623 = vmatprep.subr.bf16.mxu0 %v4240
  %5624 = vmatpush1.bf16.msra.mxu0 %v4239
  %5625 = vmatprep.subr.bf16.mxu0 %v4249
  %5626 = vmatpush1.bf16.msra.mxu0 %v4248
  %5627 = vmatprep.subr.bf16.mxu0 %v4258
  %5628 = vmatpush1.bf16.msra.mxu0 %v4257
  %5629 = vmatprep.subr.bf16.mxu0 %v4267
  %5630 = vmatpush1.bf16.msra.mxu0 %v4266
  %5631 = vmatprep.subr.bf16.mxu0 %v4276
  %5632 = vmatpush1.bf16.msra.mxu0 %v4275
  %5633 = vmatprep.subr.bf16.mxu0 %v4285
  %5634 = vmatpush1.bf16.msra.mxu0 %v4284
  %5635 = vmatprep.subr.bf16.mxu0 %v4294
  %5636 = vmatpush1.bf16.msra.mxu0 %v4293
  %5637 = vmatprep.subr.bf16.mxu0 %v4303
  %5638 = vmatpush1.bf16.msra.mxu0 %v4302
  %5639 = vmatprep.mubr.bf16.mxu0 %v1059
  %5640 = vmatmul.mubr.bf16.gmra.mrb[0].mxu0 %v1058
  %v5641 = vpop.f32.mrb[0].mxu0
  %v5642 = vadd.f32 %v1885, %v5641
  %v5643 = vpop.f32.mrb[0].mxu0
  %v5644 = vadd.f32 %v1889, %v5643
  %v5645 = vpop.f32.mrb[0].mxu0
  %v5646 = vadd.f32 %v1885, %v5645
  %v5647 = vpop.f32.mrb[0].mxu0
  %v5648 = vadd.f32 %v1889, %v5647
  %5649 = vmatprep.mubr.bf16.mxu0 %v1069
  %5650 = vmatmul.mubr.bf16.gmra.mrb[0].mxu0 %v1068
  %v5651 = vpop.f32.mrb[0].mxu0
  %v5652 = vadd.f32 %v1885, %v5651
  %v5653 = vpop.f32.mrb[0].mxu0
  %v5654 = vadd.f32 %v1889, %v5653
  %v5655 = vpop.f32.mrb[0].mxu0
  %v5656 = vpop.f32.mrb[0].mxu0
  %5657 = vdwg.mxu0
  %5658 = vmatprep.subr.bf16.mxu0 %v4312
  %5659 = vmatpush1.bf16.msra.mxu0 %v4311
  %5660 = vmatprep.subr.bf16.mxu0 %v4321
  %5661 = vmatpush1.bf16.msra.mxu0 %v4320
  %5662 = vmatprep.subr.bf16.mxu0 %v4330
  %5663 = vmatpush1.bf16.msra.mxu0 %v4329
  %5664 = vmatprep.subr.bf16.mxu0 %v4339
  %5665 = vmatpush1.bf16.msra.mxu0 %v4338
  %5666 = vmatprep.subr.bf16.mxu0 %v4348
  %5667 = vmatpush1.bf16.msra.mxu0 %v4347
  %5668 = vmatprep.subr.bf16.mxu0 %v4357
  %5669 = vmatpush1.bf16.msra.mxu0 %v4356
  %5670 = vmatprep.subr.bf16.mxu0 %v4366
  %5671 = vmatpush1.bf16.msra.mxu0 %v4365
  %5672 = vmatprep.subr.bf16.mxu0 %v4375
  %5673 = vmatpush1.bf16.msra.mxu0 %v4374
  %5674 = vmatprep.subr.bf16.mxu0 %v4384
  %5675 = vmatpush1.bf16.msra.mxu0 %v4383
  %5676 = vmatprep.subr.bf16.mxu0 %v4393
  %5677 = vmatpush1.bf16.msra.mxu0 %v4392
  %5678 = vmatprep.subr.bf16.mxu0 %v4402
  %5679 = vmatpush1.bf16.msra.mxu0 %v4401
  %5680 = vmatprep.subr.bf16.mxu0 %v4411
  %5681 = vmatpush1.bf16.msra.mxu0 %v4410
  %5682 = vmatprep.subr.bf16.mxu0 %v4420
  %5683 = vmatpush1.bf16.msra.mxu0 %v4419
  %5684 = vmatprep.subr.bf16.mxu0 %v4429
  %5685 = vmatpush1.bf16.msra.mxu0 %v4428
  %5686 = vmatprep.subr.bf16.mxu0 %v4438
  %5687 = vmatpush1.bf16.msra.mxu0 %v4437
  %5688 = vmatprep.subr.bf16.mxu0 %v4447
  %5689 = vmatpush1.bf16.msra.mxu0 %v4446
  %5690 = vmatprep.mubr.bf16.mxu0 %v1061
  %5691 = vmatmul.mubr.bf16.gmra.mrb[0].mxu0 %v1060
  %v5692 = vpop.f32.mrb[0].mxu0
  %v5693 = vadd.f32 %v5642, %v5692
  %v5694 = vpop.f32.mrb[0].mxu0
  %v5695 = vadd.f32 %v5644, %v5694
  %v5696 = vpop.f32.mrb[0].mxu0
  %v5697 = vadd.f32 %v5646, %v5696
  %v5698 = vpop.f32.mrb[0].mxu0
  %v5699 = vadd.f32 %v5648, %v5698
  %5700 = vmatprep.mubr.bf16.mxu0 %v1071
  %5701 = vmatmul.mubr.bf16.gmra.mrb[0].mxu0 %v1070
  %v5702 = vpop.f32.mrb[0].mxu0
  %v5703 = vadd.f32 %v5652, %v5702
  %v5704 = vpop.f32.mrb[0].mxu0
  %v5705 = vadd.f32 %v5654, %v5704
  %v5706 = vpop.f32.mrb[0].mxu0
  %v5707 = vpop.f32.mrb[0].mxu0
  %5708 = vdwg.mxu0
  %5709 = vmatprep.subr.bf16.mxu0 %v4456
  %5710 = vmatpush1.bf16.msra.mxu0 %v4455
  %5711 = vmatprep.subr.bf16.mxu0 %v4465
  %5712 = vmatpush1.bf16.msra.mxu0 %v4464
  %5713 = vmatprep.subr.bf16.mxu0 %v4474
  %5714 = vmatpush1.bf16.msra.mxu0 %v4473
  %5715 = vmatprep.subr.bf16.mxu0 %v4483
  %5716 = vmatpush1.bf16.msra.mxu0 %v4482
  %5717 = vmatprep.subr.bf16.mxu0 %v4492
  %5718 = vmatpush1.bf16.msra.mxu0 %v4491
  %5719 = vmatprep.subr.bf16.mxu0 %v4501
  %5720 = vmatpush1.bf16.msra.mxu0 %v4500
  %5721 = vmatprep.subr.bf16.mxu0 %v4510
  %5722 = vmatpush1.bf16.msra.mxu0 %v4509
  %5723 = vmatprep.subr.bf16.mxu0 %v4519
  %5724 = vmatpush1.bf16.msra.mxu0 %v4518
  %5725 = vmatprep.subr.bf16.mxu0 %v4528
  %5726 = vmatpush1.bf16.msra.mxu0 %v4527
  %5727 = vmatprep.subr.bf16.mxu0 %v4537
  %5728 = vmatpush1.bf16.msra.mxu0 %v4536
  %5729 = vmatprep.subr.bf16.mxu0 %v4546
  %5730 = vmatpush1.bf16.msra.mxu0 %v4545
  %5731 = vmatprep.subr.bf16.mxu0 %v4555
  %5732 = vmatpush1.bf16.msra.mxu0 %v4554
  %5733 = vmatprep.subr.bf16.mxu0 %v4564
  %5734 = vmatpush1.bf16.msra.mxu0 %v4563
  %5735 = vmatprep.subr.bf16.mxu0 %v4573
  %5736 = vmatpush1.bf16.msra.mxu0 %v4572
  %5737 = vmatprep.subr.bf16.mxu0 %v4582
  %5738 = vmatpush1.bf16.msra.mxu0 %v4581
  %5739 = vmatprep.subr.bf16.mxu0 %v4591
  %5740 = vmatpush1.bf16.msra.mxu0 %v4590
  %5741 = vmatprep.mubr.bf16.mxu0 %v1063
  %5742 = vmatmul.mubr.bf16.gmra.mrb[0].mxu0 %v1062
  %v5743 = vpop.f32.mrb[0].mxu0
  %v5744 = vadd.f32 %v5693, %v5743
  %v5745 = vpop.f32.mrb[0].mxu0
  %v5746 = vadd.f32 %v5695, %v5745
  %v5747 = vpop.f32.mrb[0].mxu0
  %v5748 = vadd.f32 %v5697, %v5747
  %v5749 = vpop.f32.mrb[0].mxu0
  %v5750 = vadd.f32 %v5699, %v5749
  %5751 = vmatprep.mubr.bf16.mxu0 %v1073
  %5752 = vmatmul.mubr.bf16.gmra.mrb[0].mxu0 %v1072
  %v5753 = vpop.f32.mrb[0].mxu0
  %v5754 = vadd.f32 %v5703, %v5753
  %v5755 = vpop.f32.mrb[0].mxu0
  %v5756 = vadd.f32 %v5705, %v5755
  %v5757 = vpop.f32.mrb[0].mxu0
  %v5758 = vpop.f32.mrb[0].mxu0
  %5759 = vdwg.mxu0
  %5760 = vmatprep.subr.bf16.mxu0 %v4600
  %5761 = vmatpush1.bf16.msra.mxu0 %v4599
  %5762 = vmatprep.subr.bf16.mxu0 %v4609
  %5763 = vmatpush1.bf16.msra.mxu0 %v4608
  %5764 = vmatprep.subr.bf16.mxu0 %v4618
  %5765 = vmatpush1.bf16.msra.mxu0 %v4617
  %5766 = vmatprep.subr.bf16.mxu0 %v4627
  %5767 = vmatpush1.bf16.msra.mxu0 %v4626
  %5768 = vmatprep.subr.bf16.mxu0 %v4636
  %5769 = vmatpush1.bf16.msra.mxu0 %v4635
  %5770 = vmatprep.subr.bf16.mxu0 %v4645
  %5771 = vmatpush1.bf16.msra.mxu0 %v4644
  %5772 = vmatprep.subr.bf16.mxu0 %v4654
  %5773 = vmatpush1.bf16.msra.mxu0 %v4653
  %5774 = vmatprep.subr.bf16.mxu0 %v4663
  %5775 = vmatpush1.bf16.msra.mxu0 %v4662
  %5776 = vmatprep.subr.bf16.mxu0 %v4672
  %5777 = vmatpush1.bf16.msra.mxu0 %v4671
  %5778 = vmatprep.subr.bf16.mxu0 %v4681
  %5779 = vmatpush1.bf16.msra.mxu0 %v4680
  %5780 = vmatprep.subr.bf16.mxu0 %v4690
  %5781 = vmatpush1.bf16.msra.mxu0 %v4689
  %5782 = vmatprep.subr.bf16.mxu0 %v4699
  %5783 = vmatpush1.bf16.msra.mxu0 %v4698
  %5784 = vmatprep.subr.bf16.mxu0 %v4708
  %5785 = vmatpush1.bf16.msra.mxu0 %v4707
  %5786 = vmatprep.subr.bf16.mxu0 %v4717
  %5787 = vmatpush1.bf16.msra.mxu0 %v4716
  %5788 = vmatprep.subr.bf16.mxu0 %v4726
  %5789 = vmatpush1.bf16.msra.mxu0 %v4725
  %5790 = vmatprep.subr.bf16.mxu0 %v4735
  %5791 = vmatpush1.bf16.msra.mxu0 %v4734
  %5792 = vmatprep.mubr.bf16.mxu0 %v1065
  %5793 = vmatmul.mubr.bf16.gmra.mrb[0].mxu0 %v1064
  %v5794 = vpop.f32.mrb[0].mxu0
  %v5795 = vadd.f32 %v5744, %v5794
  %v5796 = vpop.f32.mrb[0].mxu0
  %v5797 = vadd.f32 %v5746, %v5796
  %v5798 = vpop.f32.mrb[0].mxu0
  %v5799 = vadd.f32 %v5748, %v5798
  %v5800 = vpop.f32.mrb[0].mxu0
  %v5801 = vadd.f32 %v5750, %v5800
  %5802 = vmatprep.mubr.bf16.mxu0 %v1075
  %5803 = vmatmul.mubr.bf16.gmra.mrb[0].mxu0 %v1074
  %v5804 = vpop.f32.mrb[0].mxu0
  %v5805 = vadd.f32 %v5754, %v5804
  %v5806 = vpop.f32.mrb[0].mxu0
  %v5807 = vadd.f32 %v5756, %v5806
  %v5808 = vpop.f32.mrb[0].mxu0
  %v5809 = vpop.f32.mrb[0].mxu0
  %5810 = vdwg.mxu0
  %5811 = vmatprep.subr.bf16.mxu0 %v4744
  %5812 = vmatpush1.bf16.msra.mxu0 %v4743
  %5813 = vmatprep.subr.bf16.mxu0 %v4753
  %5814 = vmatpush1.bf16.msra.mxu0 %v4752
  %5815 = vmatprep.subr.bf16.mxu0 %v4762
  %5816 = vmatpush1.bf16.msra.mxu0 %v4761
  %5817 = vmatprep.subr.bf16.mxu0 %v4771
  %5818 = vmatpush1.bf16.msra.mxu0 %v4770
  %5819 = vmatprep.subr.bf16.mxu0 %v4780
  %5820 = vmatpush1.bf16.msra.mxu0 %v4779
  %5821 = vmatprep.subr.bf16.mxu0 %v4789
  %5822 = vmatpush1.bf16.msra.mxu0 %v4788
  %5823 = vmatprep.subr.bf16.mxu0 %v4798
  %5824 = vmatpush1.bf16.msra.mxu0 %v4797
  %5825 = vmatprep.subr.bf16.mxu0 %v4807
  %5826 = vmatpush1.bf16.msra.mxu0 %v4806
  %5827 = vmatprep.subr.bf16.mxu0 %v4816
  %5828 = vmatpush1.bf16.msra.mxu0 %v4815
  %5829 = vmatprep.subr.bf16.mxu0 %v4825
  %5830 = vmatpush1.bf16.msra.mxu0 %v4824
  %5831 = vmatprep.subr.bf16.mxu0 %v4834
  %5832 = vmatpush1.bf16.msra.mxu0 %v4833
  %5833 = vmatprep.subr.bf16.mxu0 %v4843
  %5834 = vmatpush1.bf16.msra.mxu0 %v4842
  %5835 = vmatprep.subr.bf16.mxu0 %v4852
  %5836 = vmatpush1.bf16.msra.mxu0 %v4851
  %5837 = vmatprep.subr.bf16.mxu0 %v4861
  %5838 = vmatpush1.bf16.msra.mxu0 %v4860
  %5839 = vmatprep.subr.bf16.mxu0 %v4870
  %5840 = vmatpush1.bf16.msra.mxu0 %v4869
  %5841 = vmatprep.subr.bf16.mxu0 %v4879
  %5842 = vmatpush1.bf16.msra.mxu0 %v4878
  %5843 = vmatprep.mubr.bf16.mxu0 %v1067
  %5844 = vmatmul.mubr.bf16.gmra.mrb[0].mxu0 %v1066
  %v5845 = vpop.f32.mrb[0].mxu0
  %v5846 = vadd.f32 %v5795, %v5845
  %v5847 = vpop.f32.mrb[0].mxu0
  %v5848 = vadd.f32 %v5797, %v5847
  %v5849 = vpop.f32.mrb[0].mxu0
  %v5850 = vadd.f32 %v5799, %v5849
  %v5851 = vpop.f32.mrb[0].mxu0
  %v5852 = vadd.f32 %v5801, %v5851
  %5853 = vmatprep.mubr.bf16.mxu0 %v1077
  %5854 = vmatmul.mubr.bf16.gmra.mrb[0].mxu0 %v1076
  %v5855 = vpop.f32.mrb[0].mxu0
  %v5856 = vadd.f32 %v5805, %v5855
  %v5857 = vpop.f32.mrb[0].mxu0
  %v5858 = vadd.f32 %v5807, %v5857
  %v5859 = vpop.f32.mrb[0].mxu0
  %v5860 = vpop.f32.mrb[0].mxu0
  %5861 = vdwg.mxu0
  %5862 = vmatprep.subr.bf16.mxu0 %v4170
  %5863 = vmatpush1.bf16.msra.mxu0 %v4169
  %5864 = vmatprep.subr.bf16.mxu0 %v4179
  %5865 = vmatpush1.bf16.msra.mxu0 %v4178
  %5866 = vmatprep.subr.bf16.mxu0 %v4188
  %5867 = vmatpush1.bf16.msra.mxu0 %v4187
  %5868 = vmatprep.subr.bf16.mxu0 %v4197
  %5869 = vmatpush1.bf16.msra.mxu0 %v4196
  %5870 = vmatprep.subr.bf16.mxu0 %v4206
  %5871 = vmatpush1.bf16.msra.mxu0 %v4205
  %5872 = vmatprep.subr.bf16.mxu0 %v4215
  %5873 = vmatpush1.bf16.msra.mxu0 %v4214
  %5874 = vmatprep.subr.bf16.mxu0 %v4224
  %5875 = vmatpush1.bf16.msra.mxu0 %v4223
  %5876 = vmatprep.subr.bf16.mxu0 %v4233
  %5877 = vmatpush1.bf16.msra.mxu0 %v4232
  %5878 = vmatprep.subr.bf16.mxu0 %v4242
  %5879 = vmatpush1.bf16.msra.mxu0 %v4241
  %5880 = vmatprep.subr.bf16.mxu0 %v4251
  %5881 = vmatpush1.bf16.msra.mxu0 %v4250
  %5882 = vmatprep.subr.bf16.mxu0 %v4260
  %5883 = vmatpush1.bf16.msra.mxu0 %v4259
  %5884 = vmatprep.subr.bf16.mxu0 %v4269
  %5885 = vmatpush1.bf16.msra.mxu0 %v4268
  %5886 = vmatprep.subr.bf16.mxu0 %v4278
  %5887 = vmatpush1.bf16.msra.mxu0 %v4277
  %5888 = vmatprep.subr.bf16.mxu0 %v4287
  %5889 = vmatpush1.bf16.msra.mxu0 %v4286
  %5890 = vmatprep.subr.bf16.mxu0 %v4296
  %5891 = vmatpush1.bf16.msra.mxu0 %v4295
  %5892 = vmatprep.subr.bf16.mxu0 %v4305
  %5893 = vmatpush1.bf16.msra.mxu0 %v4304
  %5894 = vmatprep.mubr.bf16.mxu0 %v1059
  %5895 = vmatmul.mubr.bf16.gmra.mrb[0].mxu0 %v1058
  %v5896 = vpop.f32.mrb[0].mxu0
  %v5897 = vadd.f32 %v1893, %v5896
  %v5898 = vpop.f32.mrb[0].mxu0
  %v5899 = vadd.f32 %v1897, %v5898
  %v5900 = vpop.f32.mrb[0].mxu0
  %v5901 = vadd.f32 %v1893, %v5900
  %v5902 = vpop.f32.mrb[0].mxu0
  %v5903 = vadd.f32 %v1897, %v5902
  %5904 = vmatprep.mubr.bf16.mxu0 %v1069
  %5905 = vmatmul.mubr.bf16.gmra.mrb[0].mxu0 %v1068
  %v5906 = vpop.f32.mrb[0].mxu0
  %v5907 = vadd.f32 %v1893, %v5906
  %v5908 = vpop.f32.mrb[0].mxu0
  %v5909 = vadd.f32 %v1897, %v5908
  %v5910 = vpop.f32.mrb[0].mxu0
  %v5911 = vpop.f32.mrb[0].mxu0
  %5912 = vdwg.mxu0
  %5913 = vmatprep.subr.bf16.mxu0 %v4314
  %5914 = vmatpush1.bf16.msra.mxu0 %v4313
  %5915 = vmatprep.subr.bf16.mxu0 %v4323
  %5916 = vmatpush1.bf16.msra.mxu0 %v4322
  %5917 = vmatprep.subr.bf16.mxu0 %v4332
  %5918 = vmatpush1.bf16.msra.mxu0 %v4331
  %5919 = vmatprep.subr.bf16.mxu0 %v4341
  %5920 = vmatpush1.bf16.msra.mxu0 %v4340
  %5921 = vmatprep.subr.bf16.mxu0 %v4350
  %5922 = vmatpush1.bf16.msra.mxu0 %v4349
  %5923 = vmatprep.subr.bf16.mxu0 %v4359
  %5924 = vmatpush1.bf16.msra.mxu0 %v4358
  %5925 = vmatprep.subr.bf16.mxu0 %v4368
  %5926 = vmatpush1.bf16.msra.mxu0 %v4367
  %5927 = vmatprep.subr.bf16.mxu0 %v4377
  %5928 = vmatpush1.bf16.msra.mxu0 %v4376
  %5929 = vmatprep.subr.bf16.mxu0 %v4386
  %5930 = vmatpush1.bf16.msra.mxu0 %v4385
  %5931 = vmatprep.subr.bf16.mxu0 %v4395
  %5932 = vmatpush1.bf16.msra.mxu0 %v4394
  %5933 = vmatprep.subr.bf16.mxu0 %v4404
  %5934 = vmatpush1.bf16.msra.mxu0 %v4403
  %5935 = vmatprep.subr.bf16.mxu0 %v4413
  %5936 = vmatpush1.bf16.msra.mxu0 %v4412
  %5937 = vmatprep.subr.bf16.mxu0 %v4422
  %5938 = vmatpush1.bf16.msra.mxu0 %v4421
  %5939 = vmatprep.subr.bf16.mxu0 %v4431
  %5940 = vmatpush1.bf16.msra.mxu0 %v4430
  %5941 = vmatprep.subr.bf16.mxu0 %v4440
  %5942 = vmatpush1.bf16.msra.mxu0 %v4439
  %5943 = vmatprep.subr.bf16.mxu0 %v4449
  %5944 = vmatpush1.bf16.msra.mxu0 %v4448
  %5945 = vmatprep.mubr.bf16.mxu0 %v1061
  %5946 = vmatmul.mubr.bf16.gmra.mrb[0].mxu0 %v1060
  %v5947 = vpop.f32.mrb[0].mxu0
  %v5948 = vadd.f32 %v5897, %v5947
  %v5949 = vpop.f32.mrb[0].mxu0
  %v5950 = vadd.f32 %v5899, %v5949
  %v5951 = vpop.f32.mrb[0].mxu0
  %v5952 = vadd.f32 %v5901, %v5951
  %v5953 = vpop.f32.mrb[0].mxu0
  %v5954 = vadd.f32 %v5903, %v5953
  %5955 = vmatprep.mubr.bf16.mxu0 %v1071
  %5956 = vmatmul.mubr.bf16.gmra.mrb[0].mxu0 %v1070
  %v5957 = vpop.f32.mrb[0].mxu0
  %v5958 = vadd.f32 %v5907, %v5957
  %v5959 = vpop.f32.mrb[0].mxu0
  %v5960 = vadd.f32 %v5909, %v5959
  %v5961 = vpop.f32.mrb[0].mxu0
  %v5962 = vpop.f32.mrb[0].mxu0
  %5963 = vdwg.mxu0
  %5964 = vmatprep.subr.bf16.mxu0 %v4458
  %5965 = vmatpush1.bf16.msra.mxu0 %v4457
  %5966 = vmatprep.subr.bf16.mxu0 %v4467
  %5967 = vmatpush1.bf16.msra.mxu0 %v4466
  %5968 = vmatprep.subr.bf16.mxu0 %v4476
  %5969 = vmatpush1.bf16.msra.mxu0 %v4475
  %5970 = vmatprep.subr.bf16.mxu0 %v4485
  %5971 = vmatpush1.bf16.msra.mxu0 %v4484
  %5972 = vmatprep.subr.bf16.mxu0 %v4494
  %5973 = vmatpush1.bf16.msra.mxu0 %v4493
  %5974 = vmatprep.subr.bf16.mxu0 %v4503
  %5975 = vmatpush1.bf16.msra.mxu0 %v4502
  %5976 = vmatprep.subr.bf16.mxu0 %v4512
  %5977 = vmatpush1.bf16.msra.mxu0 %v4511
  %5978 = vmatprep.subr.bf16.mxu0 %v4521
  %5979 = vmatpush1.bf16.msra.mxu0 %v4520
  %5980 = vmatprep.subr.bf16.mxu0 %v4530
  %5981 = vmatpush1.bf16.msra.mxu0 %v4529
  %5982 = vmatprep.subr.bf16.mxu0 %v4539
  %5983 = vmatpush1.bf16.msra.mxu0 %v4538
  %5984 = vmatprep.subr.bf16.mxu0 %v4548
  %5985 = vmatpush1.bf16.msra.mxu0 %v4547
  %5986 = vmatprep.subr.bf16.mxu0 %v4557
  %5987 = vmatpush1.bf16.msra.mxu0 %v4556
  %5988 = vmatprep.subr.bf16.mxu0 %v4566
  %5989 = vmatpush1.bf16.msra.mxu0 %v4565
  %5990 = vmatprep.subr.bf16.mxu0 %v4575
  %5991 = vmatpush1.bf16.msra.mxu0 %v4574
  %5992 = vmatprep.subr.bf16.mxu0 %v4584
  %5993 = vmatpush1.bf16.msra.mxu0 %v4583
  %5994 = vmatprep.subr.bf16.mxu0 %v4593
  %5995 = vmatpush1.bf16.msra.mxu0 %v4592
  %5996 = vmatprep.mubr.bf16.mxu0 %v1063
  %5997 = vmatmul.mubr.bf16.gmra.mrb[0].mxu0 %v1062
  %v5998 = vpop.f32.mrb[0].mxu0
  %v5999 = vadd.f32 %v5948, %v5998
  %v6000 = vpop.f32.mrb[0].mxu0
  %v6001 = vadd.f32 %v5950, %v6000
  %v6002 = vpop.f32.mrb[0].mxu0
  %v6003 = vadd.f32 %v5952, %v6002
  %v6004 = vpop.f32.mrb[0].mxu0
  %v6005 = vadd.f32 %v5954, %v6004
  %6006 = vmatprep.mubr.bf16.mxu0 %v1073
  %6007 = vmatmul.mubr.bf16.gmra.mrb[0].mxu0 %v1072
  %v6008 = vpop.f32.mrb[0].mxu0
  %v6009 = vadd.f32 %v5958, %v6008
  %v6010 = vpop.f32.mrb[0].mxu0
  %v6011 = vadd.f32 %v5960, %v6010
  %v6012 = vpop.f32.mrb[0].mxu0
  %v6013 = vpop.f32.mrb[0].mxu0
  %6014 = vdwg.mxu0
  %6015 = vmatprep.subr.bf16.mxu0 %v4602
  %6016 = vmatpush1.bf16.msra.mxu0 %v4601
  %6017 = vmatprep.subr.bf16.mxu0 %v4611
  %6018 = vmatpush1.bf16.msra.mxu0 %v4610
  %6019 = vmatprep.subr.bf16.mxu0 %v4620
  %6020 = vmatpush1.bf16.msra.mxu0 %v4619
  %6021 = vmatprep.subr.bf16.mxu0 %v4629
  %6022 = vmatpush1.bf16.msra.mxu0 %v4628
  %6023 = vmatprep.subr.bf16.mxu0 %v4638
  %6024 = vmatpush1.bf16.msra.mxu0 %v4637
  %6025 = vmatprep.subr.bf16.mxu0 %v4647
  %6026 = vmatpush1.bf16.msra.mxu0 %v4646
  %6027 = vmatprep.subr.bf16.mxu0 %v4656
  %6028 = vmatpush1.bf16.msra.mxu0 %v4655
  %6029 = vmatprep.subr.bf16.mxu0 %v4665
  %6030 = vmatpush1.bf16.msra.mxu0 %v4664
  %6031 = vmatprep.subr.bf16.mxu0 %v4674
  %6032 = vmatpush1.bf16.msra.mxu0 %v4673
  %6033 = vmatprep.subr.bf16.mxu0 %v4683
  %6034 = vmatpush1.bf16.msra.mxu0 %v4682
  %6035 = vmatprep.subr.bf16.mxu0 %v4692
  %6036 = vmatpush1.bf16.msra.mxu0 %v4691
  %6037 = vmatprep.subr.bf16.mxu0 %v4701
  %6038 = vmatpush1.bf16.msra.mxu0 %v4700
  %6039 = vmatprep.subr.bf16.mxu0 %v4710
  %6040 = vmatpush1.bf16.msra.mxu0 %v4709
  %6041 = vmatprep.subr.bf16.mxu0 %v4719
  %6042 = vmatpush1.bf16.msra.mxu0 %v4718
  %6043 = vmatprep.subr.bf16.mxu0 %v4728
  %6044 = vmatpush1.bf16.msra.mxu0 %v4727
  %6045 = vmatprep.subr.bf16.mxu0 %v4737
  %6046 = vmatpush1.bf16.msra.mxu0 %v4736
  %6047 = vmatprep.mubr.bf16.mxu0 %v1065
  %6048 = vmatmul.mubr.bf16.gmra.mrb[0].mxu0 %v1064
  %v6049 = vpop.f32.mrb[0].mxu0
  %v6050 = vadd.f32 %v5999, %v6049
  %v6051 = vpop.f32.mrb[0].mxu0
  %v6052 = vadd.f32 %v6001, %v6051
  %v6053 = vpop.f32.mrb[0].mxu0
  %v6054 = vadd.f32 %v6003, %v6053
  %v6055 = vpop.f32.mrb[0].mxu0
  %v6056 = vadd.f32 %v6005, %v6055
  %6057 = vmatprep.mubr.bf16.mxu0 %v1075
  %6058 = vmatmul.mubr.bf16.gmra.mrb[0].mxu0 %v1074
  %v6059 = vpop.f32.mrb[0].mxu0
  %v6060 = vadd.f32 %v6009, %v6059
  %v6061 = vpop.f32.mrb[0].mxu0
  %v6062 = vadd.f32 %v6011, %v6061
  %v6063 = vpop.f32.mrb[0].mxu0
  %v6064 = vpop.f32.mrb[0].mxu0
  %6065 = vdwg.mxu0
  %6066 = vmatprep.subr.bf16.mxu0 %v4746
  %6067 = vmatpush1.bf16.msra.mxu0 %v4745
  %6068 = vmatprep.subr.bf16.mxu0 %v4755
  %6069 = vmatpush1.bf16.msra.mxu0 %v4754
  %6070 = vmatprep.subr.bf16.mxu0 %v4764
  %6071 = vmatpush1.bf16.msra.mxu0 %v4763
  %6072 = vmatprep.subr.bf16.mxu0 %v4773
  %6073 = vmatpush1.bf16.msra.mxu0 %v4772
  %6074 = vmatprep.subr.bf16.mxu0 %v4782
  %6075 = vmatpush1.bf16.msra.mxu0 %v4781
  %6076 = vmatprep.subr.bf16.mxu0 %v4791
  %6077 = vmatpush1.bf16.msra.mxu0 %v4790
  %6078 = vmatprep.subr.bf16.mxu0 %v4800
  %6079 = vmatpush1.bf16.msra.mxu0 %v4799
  %6080 = vmatprep.subr.bf16.mxu0 %v4809
  %6081 = vmatpush1.bf16.msra.mxu0 %v4808
  %6082 = vmatprep.subr.bf16.mxu0 %v4818
  %6083 = vmatpush1.bf16.msra.mxu0 %v4817
  %6084 = vmatprep.subr.bf16.mxu0 %v4827
  %6085 = vmatpush1.bf16.msra.mxu0 %v4826
  %6086 = vmatprep.subr.bf16.mxu0 %v4836
  %6087 = vmatpush1.bf16.msra.mxu0 %v4835
  %6088 = vmatprep.subr.bf16.mxu0 %v4845
  %6089 = vmatpush1.bf16.msra.mxu0 %v4844
  %6090 = vmatprep.subr.bf16.mxu0 %v4854
  %6091 = vmatpush1.bf16.msra.mxu0 %v4853
  %6092 = vmatprep.subr.bf16.mxu0 %v4863
  %6093 = vmatpush1.bf16.msra.mxu0 %v4862
  %6094 = vmatprep.subr.bf16.mxu0 %v4872
  %6095 = vmatpush1.bf16.msra.mxu0 %v4871
  %6096 = vmatprep.subr.bf16.mxu0 %v4881
  %6097 = vmatpush1.bf16.msra.mxu0 %v4880
  %6098 = vmatprep.mubr.bf16.mxu0 %v1067
  %6099 = vmatmul.mubr.bf16.gmra.mrb[0].mxu0 %v1066
  %v6100 = vpop.f32.mrb[0].mxu0
  %v6101 = vadd.f32 %v6050, %v6100
  %v6102 = vpop.f32.mrb[0].mxu0
  %v6103 = vadd.f32 %v6052, %v6102
  %v6104 = vpop.f32.mrb[0].mxu0
  %v6105 = vadd.f32 %v6054, %v6104
  %v6106 = vpop.f32.mrb[0].mxu0
  %v6107 = vadd.f32 %v6056, %v6106
  %6108 = vmatprep.mubr.bf16.mxu0 %v1077
  %6109 = vmatmul.mubr.bf16.gmra.mrb[0].mxu0 %v1076
  %v6110 = vpop.f32.mrb[0].mxu0
  %v6111 = vadd.f32 %v6060, %v6110
  %v6112 = vpop.f32.mrb[0].mxu0
  %v6113 = vadd.f32 %v6062, %v6112
  %v6114 = vpop.f32.mrb[0].mxu0
  %v6115 = vpop.f32.mrb[0].mxu0
  %6116 = vdwg.mxu0
  %6117 = vmatprep.subr.bf16.mxu0 %v4172
  %6118 = vmatpush1.bf16.msra.mxu0 %v4171
  %6119 = vmatprep.subr.bf16.mxu0 %v4181
  %6120 = vmatpush1.bf16.msra.mxu0 %v4180
  %6121 = vmatprep.subr.bf16.mxu0 %v4190
  %6122 = vmatpush1.bf16.msra.mxu0 %v4189
  %6123 = vmatprep.subr.bf16.mxu0 %v4199
  %6124 = vmatpush1.bf16.msra.mxu0 %v4198
  %6125 = vmatprep.subr.bf16.mxu0 %v4208
  %6126 = vmatpush1.bf16.msra.mxu0 %v4207
  %6127 = vmatprep.subr.bf16.mxu0 %v4217
  %6128 = vmatpush1.bf16.msra.mxu0 %v4216
  %6129 = vmatprep.subr.bf16.mxu0 %v4226
  %6130 = vmatpush1.bf16.msra.mxu0 %v4225
  %6131 = vmatprep.subr.bf16.mxu0 %v4235
  %6132 = vmatpush1.bf16.msra.mxu0 %v4234
  %6133 = vmatprep.subr.bf16.mxu0 %v4244
  %6134 = vmatpush1.bf16.msra.mxu0 %v4243
  %6135 = vmatprep.subr.bf16.mxu0 %v4253
  %6136 = vmatpush1.bf16.msra.mxu0 %v4252
  %6137 = vmatprep.subr.bf16.mxu0 %v4262
  %6138 = vmatpush1.bf16.msra.mxu0 %v4261
  %6139 = vmatprep.subr.bf16.mxu0 %v4271
  %6140 = vmatpush1.bf16.msra.mxu0 %v4270
  %6141 = vmatprep.subr.bf16.mxu0 %v4280
  %6142 = vmatpush1.bf16.msra.mxu0 %v4279
  %6143 = vmatprep.subr.bf16.mxu0 %v4289
  %6144 = vmatpush1.bf16.msra.mxu0 %v4288
  %6145 = vmatprep.subr.bf16.mxu0 %v4298
  %6146 = vmatpush1.bf16.msra.mxu0 %v4297
  %6147 = vmatprep.subr.bf16.mxu0 %v4307
  %6148 = vmatpush1.bf16.msra.mxu0 %v4306
  %6149 = vmatprep.mubr.bf16.mxu0 %v1059
  %6150 = vmatmul.mubr.bf16.gmra.mrb[0].mxu0 %v1058
  %v6151 = vpop.f32.mrb[0].mxu0
  %v6152 = vadd.f32 %v1901, %v6151
  %v6153 = vpop.f32.mrb[0].mxu0
  %v6154 = vadd.f32 %v1905, %v6153
  %v6155 = vpop.f32.mrb[0].mxu0
  %v6156 = vadd.f32 %v1901, %v6155
  %v6157 = vpop.f32.mrb[0].mxu0
  %v6158 = vadd.f32 %v1905, %v6157
  %6159 = vmatprep.mubr.bf16.mxu0 %v1069
  %6160 = vmatmul.mubr.bf16.gmra.mrb[0].mxu0 %v1068
  %v6161 = vpop.f32.mrb[0].mxu0
  %v6162 = vadd.f32 %v1901, %v6161
  %v6163 = vpop.f32.mrb[0].mxu0
  %v6164 = vadd.f32 %v1905, %v6163
  %v6165 = vpop.f32.mrb[0].mxu0
  %v6166 = vpop.f32.mrb[0].mxu0
  %6167 = vdwg.mxu0
  %6168 = vmatprep.subr.bf16.mxu0 %v4316
  %6169 = vmatpush1.bf16.msra.mxu0 %v4315
  %6170 = vmatprep.subr.bf16.mxu0 %v4325
  %6171 = vmatpush1.bf16.msra.mxu0 %v4324
  %6172 = vmatprep.subr.bf16.mxu0 %v4334
  %6173 = vmatpush1.bf16.msra.mxu0 %v4333
  %6174 = vmatprep.subr.bf16.mxu0 %v4343
  %6175 = vmatpush1.bf16.msra.mxu0 %v4342
  %6176 = vmatprep.subr.bf16.mxu0 %v4352
  %6177 = vmatpush1.bf16.msra.mxu0 %v4351
  %6178 = vmatprep.subr.bf16.mxu0 %v4361
  %6179 = vmatpush1.bf16.msra.mxu0 %v4360
  %6180 = vmatprep.subr.bf16.mxu0 %v4370
  %6181 = vmatpush1.bf16.msra.mxu0 %v4369
  %6182 = vmatprep.subr.bf16.mxu0 %v4379
  %6183 = vmatpush1.bf16.msra.mxu0 %v4378
  %6184 = vmatprep.subr.bf16.mxu0 %v4388
  %6185 = vmatpush1.bf16.msra.mxu0 %v4387
  %6186 = vmatprep.subr.bf16.mxu0 %v4397
  %6187 = vmatpush1.bf16.msra.mxu0 %v4396
  %6188 = vmatprep.subr.bf16.mxu0 %v4406
  %6189 = vmatpush1.bf16.msra.mxu0 %v4405
  %6190 = vmatprep.subr.bf16.mxu0 %v4415
  %6191 = vmatpush1.bf16.msra.mxu0 %v4414
  %6192 = vmatprep.subr.bf16.mxu0 %v4424
  %6193 = vmatpush1.bf16.msra.mxu0 %v4423
  %6194 = vmatprep.subr.bf16.mxu0 %v4433
  %6195 = vmatpush1.bf16.msra.mxu0 %v4432
  %6196 = vmatprep.subr.bf16.mxu0 %v4442
  %6197 = vmatpush1.bf16.msra.mxu0 %v4441
  %6198 = vmatprep.subr.bf16.mxu0 %v4451
  %6199 = vmatpush1.bf16.msra.mxu0 %v4450
  %6200 = vmatprep.mubr.bf16.mxu0 %v1061
  %6201 = vmatmul.mubr.bf16.gmra.mrb[0].mxu0 %v1060
  %v6202 = vpop.f32.mrb[0].mxu0
  %v6203 = vadd.f32 %v6152, %v6202
  %v6204 = vpop.f32.mrb[0].mxu0
  %v6205 = vadd.f32 %v6154, %v6204
  %v6206 = vpop.f32.mrb[0].mxu0
  %v6207 = vadd.f32 %v6156, %v6206
  %v6208 = vpop.f32.mrb[0].mxu0
  %v6209 = vadd.f32 %v6158, %v6208
  %6210 = vmatprep.mubr.bf16.mxu0 %v1071
  %6211 = vmatmul.mubr.bf16.gmra.mrb[0].mxu0 %v1070
  %v6212 = vpop.f32.mrb[0].mxu0
  %v6213 = vadd.f32 %v6162, %v6212
  %v6214 = vpop.f32.mrb[0].mxu0
  %v6215 = vadd.f32 %v6164, %v6214
  %v6216 = vpop.f32.mrb[0].mxu0
  %v6217 = vpop.f32.mrb[0].mxu0
  %6218 = vdwg.mxu0
  %6219 = vmatprep.subr.bf16.mxu0 %v4460
  %6220 = vmatpush1.bf16.msra.mxu0 %v4459
  %6221 = vmatprep.subr.bf16.mxu0 %v4469
  %6222 = vmatpush1.bf16.msra.mxu0 %v4468
  %6223 = vmatprep.subr.bf16.mxu0 %v4478
  %6224 = vmatpush1.bf16.msra.mxu0 %v4477
  %6225 = vmatprep.subr.bf16.mxu0 %v4487
  %6226 = vmatpush1.bf16.msra.mxu0 %v4486
  %6227 = vmatprep.subr.bf16.mxu0 %v4496
  %6228 = vmatpush1.bf16.msra.mxu0 %v4495
  %6229 = vmatprep.subr.bf16.mxu0 %v4505
  %6230 = vmatpush1.bf16.msra.mxu0 %v4504
  %6231 = vmatprep.subr.bf16.mxu0 %v4514
  %6232 = vmatpush1.bf16.msra.mxu0 %v4513
  %6233 = vmatprep.subr.bf16.mxu0 %v4523
  %6234 = vmatpush1.bf16.msra.mxu0 %v4522
  %6235 = vmatprep.subr.bf16.mxu0 %v4532
  %6236 = vmatpush1.bf16.msra.mxu0 %v4531
  %6237 = vmatprep.subr.bf16.mxu0 %v4541
  %6238 = vmatpush1.bf16.msra.mxu0 %v4540
  %6239 = vmatprep.subr.bf16.mxu0 %v4550
  %6240 = vmatpush1.bf16.msra.mxu0 %v4549
  %6241 = vmatprep.subr.bf16.mxu0 %v4559
  %6242 = vmatpush1.bf16.msra.mxu0 %v4558
  %6243 = vmatprep.subr.bf16.mxu0 %v4568
  %6244 = vmatpush1.bf16.msra.mxu0 %v4567
  %6245 = vmatprep.subr.bf16.mxu0 %v4577
  %6246 = vmatpush1.bf16.msra.mxu0 %v4576
  %6247 = vmatprep.subr.bf16.mxu0 %v4586
  %6248 = vmatpush1.bf16.msra.mxu0 %v4585
  %6249 = vmatprep.subr.bf16.mxu0 %v4595
  %6250 = vmatpush1.bf16.msra.mxu0 %v4594
  %6251 = vmatprep.mubr.bf16.mxu0 %v1063
  %6252 = vmatmul.mubr.bf16.gmra.mrb[0].mxu0 %v1062
  %v6253 = vpop.f32.mrb[0].mxu0
  %v6254 = vadd.f32 %v6203, %v6253
  %v6255 = vpop.f32.mrb[0].mxu0
  %v6256 = vadd.f32 %v6205, %v6255
  %v6257 = vpop.f32.mrb[0].mxu0
  %v6258 = vadd.f32 %v6207, %v6257
  %v6259 = vpop.f32.mrb[0].mxu0
  %v6260 = vadd.f32 %v6209, %v6259
  %6261 = vmatprep.mubr.bf16.mxu0 %v1073
  %6262 = vmatmul.mubr.bf16.gmra.mrb[0].mxu0 %v1072
  %v6263 = vpop.f32.mrb[0].mxu0
  %v6264 = vadd.f32 %v6213, %v6263
  %v6265 = vpop.f32.mrb[0].mxu0
  %v6266 = vadd.f32 %v6215, %v6265
  %v6267 = vpop.f32.mrb[0].mxu0
  %v6268 = vpop.f32.mrb[0].mxu0
  %6269 = vdwg.mxu0
  %6270 = vmatprep.subr.bf16.mxu0 %v4604
  %6271 = vmatpush1.bf16.msra.mxu0 %v4603
  %6272 = vmatprep.subr.bf16.mxu0 %v4613
  %6273 = vmatpush1.bf16.msra.mxu0 %v4612
  %6274 = vmatprep.subr.bf16.mxu0 %v4622
  %6275 = vmatpush1.bf16.msra.mxu0 %v4621
  %6276 = vmatprep.subr.bf16.mxu0 %v4631
  %6277 = vmatpush1.bf16.msra.mxu0 %v4630
  %6278 = vmatprep.subr.bf16.mxu0 %v4640
  %6279 = vmatpush1.bf16.msra.mxu0 %v4639
  %6280 = vmatprep.subr.bf16.mxu0 %v4649
  %6281 = vmatpush1.bf16.msra.mxu0 %v4648
  %6282 = vmatprep.subr.bf16.mxu0 %v4658
  %6283 = vmatpush1.bf16.msra.mxu0 %v4657
  %6284 = vmatprep.subr.bf16.mxu0 %v4667
  %6285 = vmatpush1.bf16.msra.mxu0 %v4666
  %6286 = vmatprep.subr.bf16.mxu0 %v4676
  %6287 = vmatpush1.bf16.msra.mxu0 %v4675
  %6288 = vmatprep.subr.bf16.mxu0 %v4685
  %6289 = vmatpush1.bf16.msra.mxu0 %v4684
  %6290 = vmatprep.subr.bf16.mxu0 %v4694
  %6291 = vmatpush1.bf16.msra.mxu0 %v4693
  %6292 = vmatprep.subr.bf16.mxu0 %v4703
  %6293 = vmatpush1.bf16.msra.mxu0 %v4702
  %6294 = vmatprep.subr.bf16.mxu0 %v4712
  %6295 = vmatpush1.bf16.msra.mxu0 %v4711
  %6296 = vmatprep.subr.bf16.mxu0 %v4721
  %6297 = vmatpush1.bf16.msra.mxu0 %v4720
  %6298 = vmatprep.subr.bf16.mxu0 %v4730
  %6299 = vmatpush1.bf16.msra.mxu0 %v4729
  %6300 = vmatprep.subr.bf16.mxu0 %v4739
  %6301 = vmatpush1.bf16.msra.mxu0 %v4738
  %6302 = vmatprep.mubr.bf16.mxu0 %v1065
  %6303 = vmatmul.mubr.bf16.gmra.mrb[0].mxu0 %v1064
  %v6304 = vpop.f32.mrb[0].mxu0
  %v6305 = vadd.f32 %v6254, %v6304
  %v6306 = vpop.f32.mrb[0].mxu0
  %v6307 = vadd.f32 %v6256, %v6306
  %v6308 = vpop.f32.mrb[0].mxu0
  %v6309 = vadd.f32 %v6258, %v6308
  %v6310 = vpop.f32.mrb[0].mxu0
  %v6311 = vadd.f32 %v6260, %v6310
  %6312 = vmatprep.mubr.bf16.mxu0 %v1075
  %6313 = vmatmul.mubr.bf16.gmra.mrb[0].mxu0 %v1074
  %v6314 = vpop.f32.mrb[0].mxu0
  %v6315 = vadd.f32 %v6264, %v6314
  %v6316 = vpop.f32.mrb[0].mxu0
  %v6317 = vadd.f32 %v6266, %v6316
  %v6318 = vpop.f32.mrb[0].mxu0
  %v6319 = vpop.f32.mrb[0].mxu0
  %6320 = vdwg.mxu0
  %6321 = vmatprep.subr.bf16.mxu0 %v4748
  %6322 = vmatpush1.bf16.msra.mxu0 %v4747
  %6323 = vmatprep.subr.bf16.mxu0 %v4757
  %6324 = vmatpush1.bf16.msra.mxu0 %v4756
  %6325 = vmatprep.subr.bf16.mxu0 %v4766
  %6326 = vmatpush1.bf16.msra.mxu0 %v4765
  %6327 = vmatprep.subr.bf16.mxu0 %v4775
  %6328 = vmatpush1.bf16.msra.mxu0 %v4774
  %6329 = vmatprep.subr.bf16.mxu0 %v4784
  %6330 = vmatpush1.bf16.msra.mxu0 %v4783
  %6331 = vmatprep.subr.bf16.mxu0 %v4793
  %6332 = vmatpush1.bf16.msra.mxu0 %v4792
  %6333 = vmatprep.subr.bf16.mxu0 %v4802
  %6334 = vmatpush1.bf16.msra.mxu0 %v4801
  %6335 = vmatprep.subr.bf16.mxu0 %v4811
  %6336 = vmatpush1.bf16.msra.mxu0 %v4810
  %6337 = vmatprep.subr.bf16.mxu0 %v4820
  %6338 = vmatpush1.bf16.msra.mxu0 %v4819
  %6339 = vmatprep.subr.bf16.mxu0 %v4829
  %6340 = vmatpush1.bf16.msra.mxu0 %v4828
  %6341 = vmatprep.subr.bf16.mxu0 %v4838
  %6342 = vmatpush1.bf16.msra.mxu0 %v4837
  %6343 = vmatprep.subr.bf16.mxu0 %v4847
  %6344 = vmatpush1.bf16.msra.mxu0 %v4846
  %6345 = vmatprep.subr.bf16.mxu0 %v4856
  %6346 = vmatpush1.bf16.msra.mxu0 %v4855
  %6347 = vmatprep.subr.bf16.mxu0 %v4865
  %6348 = vmatpush1.bf16.msra.mxu0 %v4864
  %6349 = vmatprep.subr.bf16.mxu0 %v4874
  %6350 = vmatpush1.bf16.msra.mxu0 %v4873
  %6351 = vmatprep.subr.bf16.mxu0 %v4883
  %6352 = vmatpush1.bf16.msra.mxu0 %v4882
  %6353 = vmatprep.mubr.bf16.mxu0 %v1067
  %6354 = vmatmul.mubr.bf16.gmra.mrb[0].mxu0 %v1066
  %v6355 = vpop.f32.mrb[0].mxu0
  %v6356 = vadd.f32 %v6305, %v6355
  %v6357 = vpop.f32.mrb[0].mxu0
  %v6358 = vadd.f32 %v6307, %v6357
  %v6359 = vpop.f32.mrb[0].mxu0
  %v6360 = vadd.f32 %v6309, %v6359
  %v6361 = vpop.f32.mrb[0].mxu0
  %v6362 = vadd.f32 %v6311, %v6361
  %6363 = vmatprep.mubr.bf16.mxu0 %v1077
  %6364 = vmatmul.mubr.bf16.gmra.mrb[0].mxu0 %v1076
  %v6365 = vpop.f32.mrb[0].mxu0
  %v6366 = vadd.f32 %v6315, %v6365
  %v6367 = vpop.f32.mrb[0].mxu0
  %v6368 = vadd.f32 %v6317, %v6367
  %v6369 = vpop.f32.mrb[0].mxu0
  %v6370 = vpop.f32.mrb[0].mxu0
  %6371 = vdwg.mxu0
  %6372 = vmatprep.subr.bf16.mxu0 %v4174
  %6373 = vmatpush1.bf16.msra.mxu0 %v4173
  %6374 = vmatprep.subr.bf16.mxu0 %v4183
  %6375 = vmatpush1.bf16.msra.mxu0 %v4182
  %6376 = vmatprep.subr.bf16.mxu0 %v4192
  %6377 = vmatpush1.bf16.msra.mxu0 %v4191
  %6378 = vmatprep.subr.bf16.mxu0 %v4201
  %6379 = vmatpush1.bf16.msra.mxu0 %v4200
  %6380 = vmatprep.subr.bf16.mxu0 %v4210
  %6381 = vmatpush1.bf16.msra.mxu0 %v4209
  %6382 = vmatprep.subr.bf16.mxu0 %v4219
  %6383 = vmatpush1.bf16.msra.mxu0 %v4218
  %6384 = vmatprep.subr.bf16.mxu0 %v4228
  %6385 = vmatpush1.bf16.msra.mxu0 %v4227
  %6386 = vmatprep.subr.bf16.mxu0 %v4237
  %6387 = vmatpush1.bf16.msra.mxu0 %v4236
  %6388 = vmatprep.subr.bf16.mxu0 %v4246
  %6389 = vmatpush1.bf16.msra.mxu0 %v4245
  %6390 = vmatprep.subr.bf16.mxu0 %v4255
  %6391 = vmatpush1.bf16.msra.mxu0 %v4254
  %6392 = vmatprep.subr.bf16.mxu0 %v4264
  %6393 = vmatpush1.bf16.msra.mxu0 %v4263
  %6394 = vmatprep.subr.bf16.mxu0 %v4273
  %6395 = vmatpush1.bf16.msra.mxu0 %v4272
  %6396 = vmatprep.subr.bf16.mxu0 %v4282
  %6397 = vmatpush1.bf16.msra.mxu0 %v4281
  %6398 = vmatprep.subr.bf16.mxu0 %v4291
  %6399 = vmatpush1.bf16.msra.mxu0 %v4290
  %6400 = vmatprep.subr.bf16.mxu0 %v4300
  %6401 = vmatpush1.bf16.msra.mxu0 %v4299
  %6402 = vmatprep.subr.bf16.mxu0 %v4309
  %6403 = vmatpush1.bf16.msra.mxu0 %v4308
  %6404 = vmatprep.mubr.bf16.mxu0 %v1059
  %6405 = vmatmul.mubr.bf16.gmra.mrb[0].mxu0 %v1058
  %v6406 = vpop.f32.mrb[0].mxu0
  %v6407 = vadd.f32 %v1909, %v6406
  %v6408 = vpop.f32.mrb[0].mxu0
  %v6409 = vadd.f32 %v1913, %v6408
  %v6410 = vpop.f32.mrb[0].mxu0
  %v6411 = vadd.f32 %v1909, %v6410
  %v6412 = vpop.f32.mrb[0].mxu0
  %v6413 = vadd.f32 %v1913, %v6412
  %6414 = vmatprep.mubr.bf16.mxu0 %v1069
  %6415 = vmatmul.mubr.bf16.gmra.mrb[0].mxu0 %v1068
  %v6416 = vpop.f32.mrb[0].mxu0
  %v6417 = vadd.f32 %v1909, %v6416
  %v6418 = vpop.f32.mrb[0].mxu0
  %v6419 = vadd.f32 %v1913, %v6418
  %v6420 = vpop.f32.mrb[0].mxu0
  %v6421 = vpop.f32.mrb[0].mxu0
  %6422 = vdwg.mxu0
  %6423 = vmatprep.subr.bf16.mxu0 %v4318
  %6424 = vmatpush1.bf16.msra.mxu0 %v4317
  %6425 = vmatprep.subr.bf16.mxu0 %v4327
  %6426 = vmatpush1.bf16.msra.mxu0 %v4326
  %6427 = vmatprep.subr.bf16.mxu0 %v4336
  %6428 = vmatpush1.bf16.msra.mxu0 %v4335
  %6429 = vmatprep.subr.bf16.mxu0 %v4345
  %6430 = vmatpush1.bf16.msra.mxu0 %v4344
  %6431 = vmatprep.subr.bf16.mxu0 %v4354
  %6432 = vmatpush1.bf16.msra.mxu0 %v4353
  %6433 = vmatprep.subr.bf16.mxu0 %v4363
  %6434 = vmatpush1.bf16.msra.mxu0 %v4362
  %6435 = vmatprep.subr.bf16.mxu0 %v4372
  %6436 = vmatpush1.bf16.msra.mxu0 %v4371
  %6437 = vmatprep.subr.bf16.mxu0 %v4381
  %6438 = vmatpush1.bf16.msra.mxu0 %v4380
  %6439 = vmatprep.subr.bf16.mxu0 %v4390
  %6440 = vmatpush1.bf16.msra.mxu0 %v4389
  %6441 = vmatprep.subr.bf16.mxu0 %v4399
  %6442 = vmatpush1.bf16.msra.mxu0 %v4398
  %6443 = vmatprep.subr.bf16.mxu0 %v4408
  %6444 = vmatpush1.bf16.msra.mxu0 %v4407
  %6445 = vmatprep.subr.bf16.mxu0 %v4417
  %6446 = vmatpush1.bf16.msra.mxu0 %v4416
  %6447 = vmatprep.subr.bf16.mxu0 %v4426
  %6448 = vmatpush1.bf16.msra.mxu0 %v4425
  %6449 = vmatprep.subr.bf16.mxu0 %v4435
  %6450 = vmatpush1.bf16.msra.mxu0 %v4434
  %6451 = vmatprep.subr.bf16.mxu0 %v4444
  %6452 = vmatpush1.bf16.msra.mxu0 %v4443
  %6453 = vmatprep.subr.bf16.mxu0 %v4453
  %6454 = vmatpush1.bf16.msra.mxu0 %v4452
  %6455 = vmatprep.mubr.bf16.mxu0 %v1061
  %6456 = vmatmul.mubr.bf16.gmra.mrb[0].mxu0 %v1060
  %v6457 = vpop.f32.mrb[0].mxu0
  %v6458 = vadd.f32 %v6407, %v6457
  %v6459 = vpop.f32.mrb[0].mxu0
  %v6460 = vadd.f32 %v6409, %v6459
  %v6461 = vpop.f32.mrb[0].mxu0
  %v6462 = vadd.f32 %v6411, %v6461
  %v6463 = vpop.f32.mrb[0].mxu0
  %v6464 = vadd.f32 %v6413, %v6463
  %6465 = vmatprep.mubr.bf16.mxu0 %v1071
  %6466 = vmatmul.mubr.bf16.gmra.mrb[0].mxu0 %v1070
  %v6467 = vpop.f32.mrb[0].mxu0
  %v6468 = vadd.f32 %v6417, %v6467
  %v6469 = vpop.f32.mrb[0].mxu0
  %v6470 = vadd.f32 %v6419, %v6469
  %v6471 = vpop.f32.mrb[0].mxu0
  %v6472 = vpop.f32.mrb[0].mxu0
  %6473 = vdwg.mxu0
  %6474 = vmatprep.subr.bf16.mxu0 %v4462
  %6475 = vmatpush1.bf16.msra.mxu0 %v4461
  %6476 = vmatprep.subr.bf16.mxu0 %v4471
  %6477 = vmatpush1.bf16.msra.mxu0 %v4470
  %6478 = vmatprep.subr.bf16.mxu0 %v4480
  %6479 = vmatpush1.bf16.msra.mxu0 %v4479
  %6480 = vmatprep.subr.bf16.mxu0 %v4489
  %6481 = vmatpush1.bf16.msra.mxu0 %v4488
  %6482 = vmatprep.subr.bf16.mxu0 %v4498
  %6483 = vmatpush1.bf16.msra.mxu0 %v4497
  %6484 = vmatprep.subr.bf16.mxu0 %v4507
  %6485 = vmatpush1.bf16.msra.mxu0 %v4506
  %6486 = vmatprep.subr.bf16.mxu0 %v4516
  %6487 = vmatpush1.bf16.msra.mxu0 %v4515
  %6488 = vmatprep.subr.bf16.mxu0 %v4525
  %6489 = vmatpush1.bf16.msra.mxu0 %v4524
  %6490 = vmatprep.subr.bf16.mxu0 %v4534
  %6491 = vmatpush1.bf16.msra.mxu0 %v4533
  %6492 = vmatprep.subr.bf16.mxu0 %v4543
  %6493 = vmatpush1.bf16.msra.mxu0 %v4542
  %6494 = vmatprep.subr.bf16.mxu0 %v4552
  %6495 = vmatpush1.bf16.msra.mxu0 %v4551
  %6496 = vmatprep.subr.bf16.mxu0 %v4561
  %6497 = vmatpush1.bf16.msra.mxu0 %v4560
  %6498 = vmatprep.subr.bf16.mxu0 %v4570
  %6499 = vmatpush1.bf16.msra.mxu0 %v4569
  %6500 = vmatprep.subr.bf16.mxu0 %v4579
  %6501 = vmatpush1.bf16.msra.mxu0 %v4578
  %6502 = vmatprep.subr.bf16.mxu0 %v4588
  %6503 = vmatpush1.bf16.msra.mxu0 %v4587
  %6504 = vmatprep.subr.bf16.mxu0 %v4597
  %6505 = vmatpush1.bf16.msra.mxu0 %v4596
  %6506 = vmatprep.mubr.bf16.mxu0 %v1063
  %6507 = vmatmul.mubr.bf16.gmra.mrb[0].mxu0 %v1062
  %v6508 = vpop.f32.mrb[0].mxu0
  %v6509 = vadd.f32 %v6458, %v6508
  %v6510 = vpop.f32.mrb[0].mxu0
  %v6511 = vadd.f32 %v6460, %v6510
  %v6512 = vpop.f32.mrb[0].mxu0
  %v6513 = vadd.f32 %v6462, %v6512
  %v6514 = vpop.f32.mrb[0].mxu0
  %v6515 = vadd.f32 %v6464, %v6514
  %6516 = vmatprep.mubr.bf16.mxu0 %v1073
  %6517 = vmatmul.mubr.bf16.gmra.mrb[0].mxu0 %v1072
  %v6518 = vpop.f32.mrb[0].mxu0
  %v6519 = vadd.f32 %v6468, %v6518
  %v6520 = vpop.f32.mrb[0].mxu0
  %v6521 = vadd.f32 %v6470, %v6520
  %v6522 = vpop.f32.mrb[0].mxu0
  %v6523 = vpop.f32.mrb[0].mxu0
  %6524 = vdwg.mxu0
  %6525 = vmatprep.subr.bf16.mxu0 %v4606
  %6526 = vmatpush1.bf16.msra.mxu0 %v4605
  %6527 = vmatprep.subr.bf16.mxu0 %v4615
  %6528 = vmatpush1.bf16.msra.mxu0 %v4614
  %6529 = vmatprep.subr.bf16.mxu0 %v4624
  %6530 = vmatpush1.bf16.msra.mxu0 %v4623
  %6531 = vmatprep.subr.bf16.mxu0 %v4633
  %6532 = vmatpush1.bf16.msra.mxu0 %v4632
  %6533 = vmatprep.subr.bf16.mxu0 %v4642
  %6534 = vmatpush1.bf16.msra.mxu0 %v4641
  %6535 = vmatprep.subr.bf16.mxu0 %v4651
  %6536 = vmatpush1.bf16.msra.mxu0 %v4650
  %6537 = vmatprep.subr.bf16.mxu0 %v4660
  %6538 = vmatpush1.bf16.msra.mxu0 %v4659
  %6539 = vmatprep.subr.bf16.mxu0 %v4669
  %6540 = vmatpush1.bf16.msra.mxu0 %v4668
  %6541 = vmatprep.subr.bf16.mxu0 %v4678
  %6542 = vmatpush1.bf16.msra.mxu0 %v4677
  %6543 = vmatprep.subr.bf16.mxu0 %v4687
  %6544 = vmatpush1.bf16.msra.mxu0 %v4686
  %6545 = vmatprep.subr.bf16.mxu0 %v4696
  %6546 = vmatpush1.bf16.msra.mxu0 %v4695
  %6547 = vmatprep.subr.bf16.mxu0 %v4705
  %6548 = vmatpush1.bf16.msra.mxu0 %v4704
  %6549 = vmatprep.subr.bf16.mxu0 %v4714
  %6550 = vmatpush1.bf16.msra.mxu0 %v4713
  %6551 = vmatprep.subr.bf16.mxu0 %v4723
  %6552 = vmatpush1.bf16.msra.mxu0 %v4722
  %6553 = vmatprep.subr.bf16.mxu0 %v4732
  %6554 = vmatpush1.bf16.msra.mxu0 %v4731
  %6555 = vmatprep.subr.bf16.mxu0 %v4741
  %6556 = vmatpush1.bf16.msra.mxu0 %v4740
  %6557 = vmatprep.mubr.bf16.mxu0 %v1065
  %6558 = vmatmul.mubr.bf16.gmra.mrb[0].mxu0 %v1064
  %v6559 = vpop.f32.mrb[0].mxu0
  %v6560 = vadd.f32 %v6509, %v6559
  %v6561 = vpop.f32.mrb[0].mxu0
  %v6562 = vadd.f32 %v6511, %v6561
  %v6563 = vpop.f32.mrb[0].mxu0
  %v6564 = vadd.f32 %v6513, %v6563
  %v6565 = vpop.f32.mrb[0].mxu0
  %v6566 = vadd.f32 %v6515, %v6565
  %6567 = vmatprep.mubr.bf16.mxu0 %v1075
  %6568 = vmatmul.mubr.bf16.gmra.mrb[0].mxu0 %v1074
  %v6569 = vpop.f32.mrb[0].mxu0
  %v6570 = vadd.f32 %v6519, %v6569
  %v6571 = vpop.f32.mrb[0].mxu0
  %v6572 = vadd.f32 %v6521, %v6571
  %v6573 = vpop.f32.mrb[0].mxu0
  %v6574 = vpop.f32.mrb[0].mxu0
  %6575 = vdwg.mxu0
  %6576 = vmatprep.subr.bf16.mxu0 %v4750
  %6577 = vmatpush1.bf16.msra.mxu0 %v4749
  %6578 = vmatprep.subr.bf16.mxu0 %v4759
  %6579 = vmatpush1.bf16.msra.mxu0 %v4758
  %6580 = vmatprep.subr.bf16.mxu0 %v4768
  %6581 = vmatpush1.bf16.msra.mxu0 %v4767
  %6582 = vmatprep.subr.bf16.mxu0 %v4777
  %6583 = vmatpush1.bf16.msra.mxu0 %v4776
  %6584 = vmatprep.subr.bf16.mxu0 %v4786
  %6585 = vmatpush1.bf16.msra.mxu0 %v4785
  %6586 = vmatprep.subr.bf16.mxu0 %v4795
  %6587 = vmatpush1.bf16.msra.mxu0 %v4794
  %6588 = vmatprep.subr.bf16.mxu0 %v4804
  %6589 = vmatpush1.bf16.msra.mxu0 %v4803
  %6590 = vmatprep.subr.bf16.mxu0 %v4813
  %6591 = vmatpush1.bf16.msra.mxu0 %v4812
  %6592 = vmatprep.subr.bf16.mxu0 %v4822
  %6593 = vmatpush1.bf16.msra.mxu0 %v4821
  %6594 = vmatprep.subr.bf16.mxu0 %v4831
  %6595 = vmatpush1.bf16.msra.mxu0 %v4830
  %6596 = vmatprep.subr.bf16.mxu0 %v4840
  %6597 = vmatpush1.bf16.msra.mxu0 %v4839
  %6598 = vmatprep.subr.bf16.mxu0 %v4849
  %6599 = vmatpush1.bf16.msra.mxu0 %v4848
  %6600 = vmatprep.subr.bf16.mxu0 %v4858
  %6601 = vmatpush1.bf16.msra.mxu0 %v4857
  %6602 = vmatprep.subr.bf16.mxu0 %v4867
  %6603 = vmatpush1.bf16.msra.mxu0 %v4866
  %6604 = vmatprep.subr.bf16.mxu0 %v4876
  %6605 = vmatpush1.bf16.msra.mxu0 %v4875
  %6606 = vmatprep.subr.bf16.mxu0 %v4885
  %6607 = vmatpush1.bf16.msra.mxu0 %v4884
  %6608 = vmatprep.mubr.bf16.mxu0 %v1067
  %6609 = vmatmul.mubr.bf16.gmra.mrb[0].mxu0 %v1066
  %v6610 = vpop.f32.mrb[0].mxu0
  %v6611 = vadd.f32 %v6560, %v6610
  %v6612 = vpop.f32.mrb[0].mxu0
  %v6613 = vadd.f32 %v6562, %v6612
  %v6614 = vpop.f32.mrb[0].mxu0
  %v6615 = vadd.f32 %v6564, %v6614
  %v6616 = vpop.f32.mrb[0].mxu0
  %v6617 = vadd.f32 %v6566, %v6616
  %6618 = vmatprep.mubr.bf16.mxu0 %v1077
  %6619 = vmatmul.mubr.bf16.gmra.mrb[0].mxu0 %v1076
  %v6620 = vpop.f32.mrb[0].mxu0
  %v6621 = vadd.f32 %v6570, %v6620
  %v6622 = vpop.f32.mrb[0].mxu0
  %v6623 = vadd.f32 %v6572, %v6622
  %v6624 = vpop.f32.mrb[0].mxu0
  %v6625 = vpop.f32.mrb[0].mxu0
  %6626 = vdwg.mxu0
  %6627 = vmatprep.subr.bf16.mxu0 0
  %6628 = vmatpush1.bf16.msra.mxu0 %v4175
  %6629 = vmatprep.subr.bf16.mxu0 0
  %6630 = vmatpush1.bf16.msra.mxu0 %v4184
  %6631 = vmatprep.subr.bf16.mxu0 0
  %6632 = vmatpush1.bf16.msra.mxu0 %v4193
  %6633 = vmatprep.subr.bf16.mxu0 0
  %6634 = vmatpush1.bf16.msra.mxu0 %v4202
  %6635 = vmatprep.subr.bf16.mxu0 0
  %6636 = vmatpush1.bf16.msra.mxu0 %v4211
  %6637 = vmatprep.subr.bf16.mxu0 0
  %6638 = vmatpush1.bf16.msra.mxu0 %v4220
  %6639 = vmatprep.subr.bf16.mxu0 0
  %6640 = vmatpush1.bf16.msra.mxu0 %v4229
  %6641 = vmatprep.subr.bf16.mxu0 0
  %6642 = vmatpush1.bf16.msra.mxu0 %v4238
  %6643 = vmatprep.subr.bf16.mxu0 0
  %6644 = vmatpush1.bf16.msra.mxu0 %v4247
  %6645 = vmatprep.subr.bf16.mxu0 0
  %6646 = vmatpush1.bf16.msra.mxu0 %v4256
  %6647 = vmatprep.subr.bf16.mxu0 0
  %6648 = vmatpush1.bf16.msra.mxu0 %v4265
  %6649 = vmatprep.subr.bf16.mxu0 0
  %6650 = vmatpush1.bf16.msra.mxu0 %v4274
  %6651 = vmatprep.subr.bf16.mxu0 0
  %6652 = vmatpush1.bf16.msra.mxu0 %v4283
  %6653 = vmatprep.subr.bf16.mxu0 0
  %6654 = vmatpush1.bf16.msra.mxu0 %v4292
  %6655 = vmatprep.subr.bf16.mxu0 0
  %6656 = vmatpush1.bf16.msra.mxu0 %v4301
  %6657 = vmatprep.subr.bf16.mxu0 0
  %6658 = vmatpush1.bf16.msra.mxu0 %v4310
  %6659 = vmatprep.mubr.bf16.mxu0 %v1059
  %6660 = vmatmul.mubr.bf16.gmra.mrb[0].mxu0 %v1058
  %v6661 = vpop.f32.mrb[0].mxu0
  %v6662 = vadd.f32 %v1917, %v6661
  %v6663 = vpop.f32.mrb[0].mxu0
  %v6664 = vpop.f32.mrb[0].mxu0
  %v6665 = vadd.f32 %v1917, %v6664
  %v6666 = vpop.f32.mrb[0].mxu0
  %6667 = vmatprep.mubr.bf16.mxu0 %v1069
  %6668 = vmatmul.mubr.bf16.gmra.mrb[0].mxu0 %v1068
  %v6669 = vpop.f32.mrb[0].mxu0
  %v6670 = vadd.f32 %v1917, %v6669
  %v6671 = vpop.f32.mrb[0].mxu0
  %v6672 = vpop.f32.mrb[0].mxu0
  %v6673 = vpop.f32.mrb[0].mxu0
  %6674 = vdwg.mxu0
  %6675 = vmatprep.subr.bf16.mxu0 0
  %6676 = vmatpush1.bf16.msra.mxu0 %v4319
  %6677 = vmatprep.subr.bf16.mxu0 0
  %6678 = vmatpush1.bf16.msra.mxu0 %v4328
  %6679 = vmatprep.subr.bf16.mxu0 0
  %6680 = vmatpush1.bf16.msra.mxu0 %v4337
  %6681 = vmatprep.subr.bf16.mxu0 0
  %6682 = vmatpush1.bf16.msra.mxu0 %v4346
  %6683 = vmatprep.subr.bf16.mxu0 0
  %6684 = vmatpush1.bf16.msra.mxu0 %v4355
  %6685 = vmatprep.subr.bf16.mxu0 0
  %6686 = vmatpush1.bf16.msra.mxu0 %v4364
  %6687 = vmatprep.subr.bf16.mxu0 0
  %6688 = vmatpush1.bf16.msra.mxu0 %v4373
  %6689 = vmatprep.subr.bf16.mxu0 0
  %6690 = vmatpush1.bf16.msra.mxu0 %v4382
  %6691 = vmatprep.subr.bf16.mxu0 0
  %6692 = vmatpush1.bf16.msra.mxu0 %v4391
  %6693 = vmatprep.subr.bf16.mxu0 0
  %6694 = vmatpush1.bf16.msra.mxu0 %v4400
  %6695 = vmatprep.subr.bf16.mxu0 0
  %6696 = vmatpush1.bf16.msra.mxu0 %v4409
  %6697 = vmatprep.subr.bf16.mxu0 0
  %6698 = vmatpush1.bf16.msra.mxu0 %v4418
  %6699 = vmatprep.subr.bf16.mxu0 0
  %6700 = vmatpush1.bf16.msra.mxu0 %v4427
  %6701 = vmatprep.subr.bf16.mxu0 0
  %6702 = vmatpush1.bf16.msra.mxu0 %v4436
  %6703 = vmatprep.subr.bf16.mxu0 0
  %6704 = vmatpush1.bf16.msra.mxu0 %v4445
  %6705 = vmatprep.subr.bf16.mxu0 0
  %6706 = vmatpush1.bf16.msra.mxu0 %v4454
  %6707 = vmatprep.mubr.bf16.mxu0 %v1061
  %6708 = vmatmul.mubr.bf16.gmra.mrb[0].mxu0 %v1060
  %v6709 = vpop.f32.mrb[0].mxu0
  %v6710 = vadd.f32 %v6662, %v6709
  %v6711 = vpop.f32.mrb[0].mxu0
  %v6712 = vpop.f32.mrb[0].mxu0
  %v6713 = vadd.f32 %v6665, %v6712
  %v6714 = vpop.f32.mrb[0].mxu0
  %6715 = vmatprep.mubr.bf16.mxu0 %v1071
  %6716 = vmatmul.mubr.bf16.gmra.mrb[0].mxu0 %v1070
  %v6717 = vpop.f32.mrb[0].mxu0
  %v6718 = vadd.f32 %v6670, %v6717
  %v6719 = vpop.f32.mrb[0].mxu0
  %v6720 = vpop.f32.mrb[0].mxu0
  %v6721 = vpop.f32.mrb[0].mxu0
  %6722 = vdwg.mxu0
  %6723 = vmatprep.subr.bf16.mxu0 0
  %6724 = vmatpush1.bf16.msra.mxu0 %v4463
  %6725 = vmatprep.subr.bf16.mxu0 0
  %6726 = vmatpush1.bf16.msra.mxu0 %v4472
  %6727 = vmatprep.subr.bf16.mxu0 0
  %6728 = vmatpush1.bf16.msra.mxu0 %v4481
  %6729 = vmatprep.subr.bf16.mxu0 0
  %6730 = vmatpush1.bf16.msra.mxu0 %v4490
  %6731 = vmatprep.subr.bf16.mxu0 0
  %6732 = vmatpush1.bf16.msra.mxu0 %v4499
  %6733 = vmatprep.subr.bf16.mxu0 0
  %6734 = vmatpush1.bf16.msra.mxu0 %v4508
  %6735 = vmatprep.subr.bf16.mxu0 0
  %6736 = vmatpush1.bf16.msra.mxu0 %v4517
  %6737 = vmatprep.subr.bf16.mxu0 0
  %6738 = vmatpush1.bf16.msra.mxu0 %v4526
  %6739 = vmatprep.subr.bf16.mxu0 0
  %6740 = vmatpush1.bf16.msra.mxu0 %v4535
  %6741 = vmatprep.subr.bf16.mxu0 0
  %6742 = vmatpush1.bf16.msra.mxu0 %v4544
  %6743 = vmatprep.subr.bf16.mxu0 0
  %6744 = vmatpush1.bf16.msra.mxu0 %v4553
  %6745 = vmatprep.subr.bf16.mxu0 0
  %6746 = vmatpush1.bf16.msra.mxu0 %v4562
  %6747 = vmatprep.subr.bf16.mxu0 0
  %6748 = vmatpush1.bf16.msra.mxu0 %v4571
  %6749 = vmatprep.subr.bf16.mxu0 0
  %6750 = vmatpush1.bf16.msra.mxu0 %v4580
  %6751 = vmatprep.subr.bf16.mxu0 0
  %6752 = vmatpush1.bf16.msra.mxu0 %v4589
  %6753 = vmatprep.subr.bf16.mxu0 0
  %6754 = vmatpush1.bf16.msra.mxu0 %v4598
  %6755 = vmatprep.mubr.bf16.mxu0 %v1063
  %6756 = vmatmul.mubr.bf16.gmra.mrb[0].mxu0 %v1062
  %v6757 = vpop.f32.mrb[0].mxu0
  %v6758 = vadd.f32 %v6710, %v6757
  %v6759 = vpop.f32.mrb[0].mxu0
  %v6760 = vpop.f32.mrb[0].mxu0
  %v6761 = vadd.f32 %v6713, %v6760
  %v6762 = vpop.f32.mrb[0].mxu0
  %6763 = vmatprep.mubr.bf16.mxu0 %v1073
  %6764 = vmatmul.mubr.bf16.gmra.mrb[0].mxu0 %v1072
  %v6765 = vpop.f32.mrb[0].mxu0
  %v6766 = vadd.f32 %v6718, %v6765
  %v6767 = vpop.f32.mrb[0].mxu0
  %v6768 = vpop.f32.mrb[0].mxu0
  %v6769 = vpop.f32.mrb[0].mxu0
  %6770 = vdwg.mxu0
  %6771 = vmatprep.subr.bf16.mxu0 0
  %6772 = vmatpush1.bf16.msra.mxu0 %v4607
  %6773 = vmatprep.subr.bf16.mxu0 0
  %6774 = vmatpush1.bf16.msra.mxu0 %v4616
  %6775 = vmatprep.subr.bf16.mxu0 0
  %6776 = vmatpush1.bf16.msra.mxu0 %v4625
  %6777 = vmatprep.subr.bf16.mxu0 0
  %6778 = vmatpush1.bf16.msra.mxu0 %v4634
  %6779 = vmatprep.subr.bf16.mxu0 0
  %6780 = vmatpush1.bf16.msra.mxu0 %v4643
  %6781 = vmatprep.subr.bf16.mxu0 0
  %6782 = vmatpush1.bf16.msra.mxu0 %v4652
  %6783 = vmatprep.subr.bf16.mxu0 0
  %6784 = vmatpush1.bf16.msra.mxu0 %v4661
  %6785 = vmatprep.subr.bf16.mxu0 0
  %6786 = vmatpush1.bf16.msra.mxu0 %v4670
  %6787 = vmatprep.subr.bf16.mxu0 0
  %6788 = vmatpush1.bf16.msra.mxu0 %v4679
  %6789 = vmatprep.subr.bf16.mxu0 0
  %6790 = vmatpush1.bf16.msra.mxu0 %v4688
  %6791 = vmatprep.subr.bf16.mxu0 0
  %6792 = vmatpush1.bf16.msra.mxu0 %v4697
  %6793 = vmatprep.subr.bf16.mxu0 0
  %6794 = vmatpush1.bf16.msra.mxu0 %v4706
  %6795 = vmatprep.subr.bf16.mxu0 0
  %6796 = vmatpush1.bf16.msra.mxu0 %v4715
  %6797 = vmatprep.subr.bf16.mxu0 0
  %6798 = vmatpush1.bf16.msra.mxu0 %v4724
  %6799 = vmatprep.subr.bf16.mxu0 0
  %6800 = vmatpush1.bf16.msra.mxu0 %v4733
  %6801 = vmatprep.subr.bf16.mxu0 0
  %6802 = vmatpush1.bf16.msra.mxu0 %v4742
  %6803 = vmatprep.mubr.bf16.mxu0 %v1065
  %6804 = vmatmul.mubr.bf16.gmra.mrb[0].mxu0 %v1064
  %v6805 = vpop.f32.mrb[0].mxu0
  %v6806 = vadd.f32 %v6758, %v6805
  %v6807 = vpop.f32.mrb[0].mxu0
  %v6808 = vpop.f32.mrb[0].mxu0
  %v6809 = vadd.f32 %v6761, %v6808
  %v6810 = vpop.f32.mrb[0].mxu0
  %6811 = vmatprep.mubr.bf16.mxu0 %v1075
  %6812 = vmatmul.mubr.bf16.gmra.mrb[0].mxu0 %v1074
  %v6813 = vpop.f32.mrb[0].mxu0
  %v6814 = vadd.f32 %v6766, %v6813
  %v6815 = vpop.f32.mrb[0].mxu0
  %v6816 = vpop.f32.mrb[0].mxu0
  %v6817 = vpop.f32.mrb[0].mxu0
  %6818 = vdwg.mxu0
  %6819 = vmatprep.subr.bf16.mxu0 0
  %6820 = vmatpush1.bf16.msra.mxu0 %v4751
  %6821 = vmatprep.subr.bf16.mxu0 0
  %6822 = vmatpush1.bf16.msra.mxu0 %v4760
  %6823 = vmatprep.subr.bf16.mxu0 0
  %6824 = vmatpush1.bf16.msra.mxu0 %v4769
  %6825 = vmatprep.subr.bf16.mxu0 0
  %6826 = vmatpush1.bf16.msra.mxu0 %v4778
  %6827 = vmatprep.subr.bf16.mxu0 0
  %6828 = vmatpush1.bf16.msra.mxu0 %v4787
  %6829 = vmatprep.subr.bf16.mxu0 0
  %6830 = vmatpush1.bf16.msra.mxu0 %v4796
  %6831 = vmatprep.subr.bf16.mxu0 0
  %6832 = vmatpush1.bf16.msra.mxu0 %v4805
  %6833 = vmatprep.subr.bf16.mxu0 0
  %6834 = vmatpush1.bf16.msra.mxu0 %v4814
  %6835 = vmatprep.subr.bf16.mxu0 0
  %6836 = vmatpush1.bf16.msra.mxu0 %v4823
  %6837 = vmatprep.subr.bf16.mxu0 0
  %6838 = vmatpush1.bf16.msra.mxu0 %v4832
  %6839 = vmatprep.subr.bf16.mxu0 0
  %6840 = vmatpush1.bf16.msra.mxu0 %v4841
  %6841 = vmatprep.subr.bf16.mxu0 0
  %6842 = vmatpush1.bf16.msra.mxu0 %v4850
  %6843 = vmatprep.subr.bf16.mxu0 0
  %6844 = vmatpush1.bf16.msra.mxu0 %v4859
  %6845 = vmatprep.subr.bf16.mxu0 0
  %6846 = vmatpush1.bf16.msra.mxu0 %v4868
  %6847 = vmatprep.subr.bf16.mxu0 0
  %6848 = vmatpush1.bf16.msra.mxu0 %v4877
  %6849 = vmatprep.subr.bf16.mxu0 0
  %6850 = vmatpush1.bf16.msra.mxu0 %v4886
  %6851 = vmatprep.mubr.bf16.mxu0 %v1067
  %6852 = vmatmul.mubr.bf16.gmra.mrb[0].mxu0 %v1066
  %v6853 = vpop.f32.mrb[0].mxu0
  %v6854 = vadd.f32 %v6806, %v6853
  %v6855 = vpop.f32.mrb[0].mxu0
  %v6856 = vpop.f32.mrb[0].mxu0
  %v6857 = vadd.f32 %v6809, %v6856
  %v6858 = vpop.f32.mrb[0].mxu0
  %6859 = vmatprep.mubr.bf16.mxu0 %v1077
  %6860 = vmatmul.mubr.bf16.gmra.mrb[0].mxu0 %v1076
  %v6861 = vpop.f32.mrb[0].mxu0
  %v6862 = vadd.f32 %v6814, %v6861
  %v6863 = vpop.f32.mrb[0].mxu0
  %v6864 = vpop.f32.mrb[0].mxu0
  %v6865 = vpop.f32.mrb[0].mxu0
  %6866 = vdwg.mxu0
  %v6867 = vmax.f32 %v5846, 0.0
  %v6868 = vmax.f32 %v5848, 0.0
  %v6869 = vmax.f32 %v6101, 0.0
  %v6870 = vmax.f32 %v6103, 0.0
  %v6871 = vmax.f32 %v6356, 0.0
  %v6872 = vmax.f32 %v6358, 0.0
  %v6873 = vmax.f32 %v6611, 0.0
  %v6874 = vmax.f32 %v6613, 0.0
  %v6875 = vmax.f32 %v6854, 0.0
  %v6876 = vmax.f32 %v5850, 0.0
  %v6877 = vmax.f32 %v5852, 0.0
  %v6878 = vmax.f32 %v6105, 0.0
  %v6879 = vmax.f32 %v6107, 0.0
  %v6880 = vmax.f32 %v6360, 0.0
  %v6881 = vmax.f32 %v6362, 0.0
  %v6882 = vmax.f32 %v6615, 0.0
  %v6883 = vmax.f32 %v6617, 0.0
  %v6884 = vmax.f32 %v6857, 0.0
  %v6885 = vmax.f32 %v5856, 0.0
  %v6886 = vmax.f32 %v5858, 0.0
  %v6887 = vmax.f32 %v6111, 0.0
  %v6888 = vmax.f32 %v6113, 0.0
  %v6889 = vmax.f32 %v6366, 0.0
  %v6890 = vmax.f32 %v6368, 0.0
  %v6891 = vmax.f32 %v6621, 0.0
  %v6892 = vmax.f32 %v6623, 0.0
  %v6893 = vmax.f32 %v6862, 0.0
  %v6894 = vpack.c.bf16 %v6876, %v6867
  %v6895 = vpack.c.bf16 %v6877, %v6868
  %v6896 = vpack.c.bf16 %v6878, %v6869
  %v6897 = vpack.c.bf16 %v6879, %v6870
  %v6898 = vpack.c.bf16 %v6880, %v6871
  %v6899 = vpack.c.bf16 %v6881, %v6872
  %v6900 = vpack.c.bf16 %v6882, %v6873
  %v6901 = vpack.c.bf16 %v6883, %v6874
  %v6902 = vpack.c.bf16 %v6884, %v6875
  %v6903 = vpack.c.bf16 %v6885, %v6885
  %v6904 = vpack.c.bf16 %v6886, %v6886
  %v6905 = vpack.c.bf16 %v6887, %v6887
  %v6906 = vpack.c.bf16 %v6888, %v6888
  %v6907 = vpack.c.bf16 %v6889, %v6889
  %v6908 = vpack.c.bf16 %v6890, %v6890
  %v6909 = vpack.c.bf16 %v6891, %v6891
  %v6910 = vpack.c.bf16 %v6892, %v6892
  %v6911 = vpack.c.bf16 %v6893, %v6893
  %v6912 = vld [vmem:[%s5] sm:$0xff]
  %v6913 = vld [vmem:[%s5 + $0x8] sm:$0xff]
  %v6914 = vld [vmem:[%s5 + $0x10] sm:$0xff]
  %v6915 = vld [vmem:[%s5 + $0x18] sm:$0xff]
  %v6916 = vld [vmem:[%s5 + $0x20] sm:$0xff]
  %v6917 = vld [vmem:[%s5 + $0x28] sm:$0xff]
  %v6918 = vld [vmem:[%s5 + $0x30] sm:$0xff]
  %v6919 = vld [vmem:[%s5 + $0x38] sm:$0xff]
  %v6920 = vld [vmem:[%s5 + $0x40] sm:$0xff]
  %v6921 = vld [vmem:[%s5 + $0x48] sm:$0xff]
  %v6922 = vld [vmem:[%s5 + $0x50] sm:$0xff]
  %v6923 = vld [vmem:[%s5 + $0x58] sm:$0xff]
  %v6924 = vld [vmem:[%s5 + $0x60] sm:$0xff]
  %v6925 = vld [vmem:[%s5 + $0x68] sm:$0xff]
  %v6926 = vld [vmem:[%s5 + $0x70] sm:$0xff]
  %v6927 = vld [vmem:[%s5 + $0x78] sm:$0xff]
  %v6928 = vld [vmem:[%s5 + $0x80] sm:$0xff]
  %v6929 = vld [vmem:[%s5 + $0x88] sm:$0xff]
  %v6930 = vld [vmem:[%s5 + $0x90] sm:$0xff]
  %v6931 = vld [vmem:[%s5 + $0x98] sm:$0xff]
  %v6932 = vld [vmem:[%s5 + $0xa0] sm:$0xff]
  %v6933 = vld [vmem:[%s5 + $0xa8] sm:$0xff]
  %v6934 = vld [vmem:[%s5 + $0xb0] sm:$0xff]
  %v6935 = vld [vmem:[%s5 + $0xb8] sm:$0xff]
  %v6936 = vld [vmem:[%s5 + $0xc0] sm:$0xff]
  %v6937 = vld [vmem:[%s5 + $0xc8] sm:$0xff]
  %v6938 = vld [vmem:[%s5 + $0xd0] sm:$0xff]
  %v6939 = vld [vmem:[%s5 + $0xd8] sm:$0xff]
  %v6940 = vld [vmem:[%s5 + $0xe0] sm:$0xff]
  %v6941 = vld [vmem:[%s5 + $0xe8] sm:$0xff]
  %v6942 = vld [vmem:[%s5 + $0xf0] sm:$0xff]
  %v6943 = vld [vmem:[%s5 + $0xf8] sm:$0xff]
  %v6944 = vld [vmem:[%s5 + $0x100] sm:$0xff]
  %v6945 = vld [vmem:[%s5 + $0x108] sm:$0xff]
  %v6946 = vld [vmem:[%s5 + $0x110] sm:$0xff]
  %v6947 = vld [vmem:[%s5 + $0x118] sm:$0xff]
  %v6948 = vld [vmem:[%s5 + $0x120] sm:$0xff]
  %v6949 = vld [vmem:[%s5 + $0x128] sm:$0xff]
  %v6950 = vld [vmem:[%s5 + $0x130] sm:$0xff]
  %v6951 = vld [vmem:[%s5 + $0x138] sm:$0xff]
  %v6952 = vld [vmem:[%s5 + $0x140] sm:$0xff]
  %v6953 = vld [vmem:[%s5 + $0x148] sm:$0xff]
  %v6954 = vld [vmem:[%s5 + $0x150] sm:$0xff]
  %v6955 = vld [vmem:[%s5 + $0x158] sm:$0xff]
  %v6956 = vld [vmem:[%s5 + $0x160] sm:$0xff]
  %v6957 = vld [vmem:[%s5 + $0x168] sm:$0xff]
  %v6958 = vld [vmem:[%s5 + $0x170] sm:$0xff]
  %v6959 = vld [vmem:[%s5 + $0x178] sm:$0xff]
  %v6960 = vld [vmem:[%s5 + $0x180] sm:$0xff]
  %v6961 = vld [vmem:[%s5 + $0x188] sm:$0xff]
  %v6962 = vld [vmem:[%s5 + $0x190] sm:$0xff]
  %v6963 = vld [vmem:[%s5 + $0x198] sm:$0xff]
  %v6964 = vld [vmem:[%s5 + $0x1a0] sm:$0xff]
  %v6965 = vld [vmem:[%s5 + $0x1a8] sm:$0xff]
  %v6966 = vld [vmem:[%s5 + $0x1b0] sm:$0xff]
  %v6967 = vld [vmem:[%s5 + $0x1b8] sm:$0xff]
  %v6968 = vld [vmem:[%s5 + $0x1c0] sm:$0xff]
  %v6969 = vld [vmem:[%s5 + $0x1c8] sm:$0xff]
  %v6970 = vld [vmem:[%s5 + $0x1d0] sm:$0xff]
  %v6971 = vld [vmem:[%s5 + $0x1d8] sm:$0xff]
  %v6972 = vld [vmem:[%s5 + $0x1e0] sm:$0xff]
  %v6973 = vld [vmem:[%s5 + $0x1e8] sm:$0xff]
  %v6974 = vld [vmem:[%s5 + $0x1f0] sm:$0xff]
  %v6975 = vld [vmem:[%s5 + $0x1f8] sm:$0xff]
  %v6976 = vld [vmem:[%s5 + $0x200] sm:$0xff]
  %v6977 = vld [vmem:[%s5 + $0x208] sm:$0xff]
  %v6978 = vld [vmem:[%s5 + $0x210] sm:$0xff]
  %v6979 = vld [vmem:[%s5 + $0x218] sm:$0xff]
  %v6980 = vld [vmem:[%s5 + $0x220] sm:$0xff]
  %v6981 = vld [vmem:[%s5 + $0x228] sm:$0xff]
  %v6982 = vld [vmem:[%s5 + $0x230] sm:$0xff]
  %v6983 = vld [vmem:[%s5 + $0x238] sm:$0xff]
  %v6984 = vld [vmem:[%s5 + $0x240] sm:$0xff]
  %v6985 = vld [vmem:[%s5 + $0x248] sm:$0xff]
  %v6986 = vld [vmem:[%s5 + $0x250] sm:$0xff]
  %v6987 = vld [vmem:[%s5 + $0x258] sm:$0xff]
  %v6988 = vld [vmem:[%s5 + $0x260] sm:$0xff]
  %v6989 = vld [vmem:[%s5 + $0x268] sm:$0xff]
  %v6990 = vld [vmem:[%s5 + $0x270] sm:$0xff]
  %v6991 = vld [vmem:[%s5 + $0x278] sm:$0xff]
  %v6992 = vld [vmem:[%s5 + $0x280] sm:$0xff]
  %v6993 = vld [vmem:[%s5 + $0x288] sm:$0xff]
  %v6994 = vld [vmem:[%s5 + $0x290] sm:$0xff]
  %v6995 = vld [vmem:[%s5 + $0x298] sm:$0xff]
  %v6996 = vld [vmem:[%s5 + $0x2a0] sm:$0xff]
  %v6997 = vld [vmem:[%s5 + $0x2a8] sm:$0xff]
  %v6998 = vld [vmem:[%s5 + $0x2b0] sm:$0xff]
  %v6999 = vld [vmem:[%s5 + $0x2b8] sm:$0xff]
  %v7000 = vld [vmem:[%s5 + $0x2c0] sm:$0xff]
  %v7001 = vld [vmem:[%s5 + $0x2c8] sm:$0xff]
  %v7002 = vld [vmem:[%s5 + $0x2d0] sm:$0xff]
  %v7003 = vld [vmem:[%s5 + $0x2d8] sm:$0xff]
  %v7004 = vld [vmem:[%s5 + $0x2e0] sm:$0xff]
  %v7005 = vld [vmem:[%s5 + $0x2e8] sm:$0xff]
  %v7006 = vld [vmem:[%s5 + $0x2f0] sm:$0xff]
  %v7007 = vld [vmem:[%s5 + $0x2f8] sm:$0xff]
  %v7008 = vld [vmem:[%s5 + $0x300] sm:$0xff]
  %v7009 = vld [vmem:[%s5 + $0x308] sm:$0xff]
  %v7010 = vld [vmem:[%s5 + $0x310] sm:$0xff]
  %v7011 = vld [vmem:[%s5 + $0x318] sm:$0xff]
  %v7012 = vld [vmem:[%s5 + $0x320] sm:$0xff]
  %v7013 = vld [vmem:[%s5 + $0x328] sm:$0xff]
  %v7014 = vld [vmem:[%s5 + $0x330] sm:$0xff]
  %v7015 = vld [vmem:[%s5 + $0x338] sm:$0xff]
  %v7016 = vld [vmem:[%s5 + $0x340] sm:$0xff]
  %v7017 = vld [vmem:[%s5 + $0x348] sm:$0xff]
  %v7018 = vld [vmem:[%s5 + $0x350] sm:$0xff]
  %v7019 = vld [vmem:[%s5 + $0x358] sm:$0xff]
  %v7020 = vld [vmem:[%s5 + $0x360] sm:$0xff]
  %v7021 = vld [vmem:[%s5 + $0x368] sm:$0xff]
  %v7022 = vld [vmem:[%s5 + $0x370] sm:$0xff]
  %v7023 = vld [vmem:[%s5 + $0x378] sm:$0xff]
  %v7024 = vld [vmem:[%s5 + $0x380] sm:$0xff]
  %v7025 = vld [vmem:[%s5 + $0x388] sm:$0xff]
  %v7026 = vld [vmem:[%s5 + $0x390] sm:$0xff]
  %v7027 = vld [vmem:[%s5 + $0x398] sm:$0xff]
  %v7028 = vld [vmem:[%s5 + $0x3a0] sm:$0xff]
  %v7029 = vld [vmem:[%s5 + $0x3a8] sm:$0xff]
  %v7030 = vld [vmem:[%s5 + $0x3b0] sm:$0xff]
  %v7031 = vld [vmem:[%s5 + $0x3b8] sm:$0xff]
  %v7032 = vld [vmem:[%s5 + $0x3c0] sm:$0xff]
  %v7033 = vld [vmem:[%s5 + $0x3c8] sm:$0xff]
  %v7034 = vld [vmem:[%s5 + $0x3d0] sm:$0xff]
  %v7035 = vld [vmem:[%s5 + $0x3d8] sm:$0xff]
  %v7036 = vld [vmem:[%s5 + $0x3e0] sm:$0xff]
  %v7037 = vld [vmem:[%s5 + $0x3e8] sm:$0xff]
  %v7038 = vld [vmem:[%s5 + $0x3f0] sm:$0xff]
  %v7039 = vld [vmem:[%s5 + $0x3f8] sm:$0xff]
  %v7040 = vld [vmem:[%s5 + $0x400] sm:$0xff]
  %v7041 = vld [vmem:[%s5 + $0x408] sm:$0xff]
  %v7042 = vld [vmem:[%s5 + $0x410] sm:$0xff]
  %v7043 = vld [vmem:[%s5 + $0x418] sm:$0xff]
  %v7044 = vld [vmem:[%s5 + $0x420] sm:$0xff]
  %v7045 = vld [vmem:[%s5 + $0x428] sm:$0xff]
  %v7046 = vld [vmem:[%s5 + $0x430] sm:$0xff]
  %v7047 = vld [vmem:[%s5 + $0x438] sm:$0xff]
  %v7048 = vld [vmem:[%s5 + $0x440] sm:$0xff]
  %v7049 = vld [vmem:[%s5 + $0x448] sm:$0xff]
  %v7050 = vld [vmem:[%s5 + $0x450] sm:$0xff]
  %v7051 = vld [vmem:[%s5 + $0x458] sm:$0xff]
  %v7052 = vld [vmem:[%s5 + $0x460] sm:$0xff]
  %v7053 = vld [vmem:[%s5 + $0x468] sm:$0xff]
  %v7054 = vld [vmem:[%s5 + $0x470] sm:$0xff]
  %v7055 = vld [vmem:[%s5 + $0x478] sm:$0xff]
  %v7056 = vld [vmem:[%s5 + $0x480] sm:$0xff]
  %v7057 = vld [vmem:[%s5 + $0x488] sm:$0xff]
  %v7058 = vld [vmem:[%s5 + $0x490] sm:$0xff]
  %v7059 = vld [vmem:[%s5 + $0x498] sm:$0xff]
  %v7060 = vld [vmem:[%s5 + $0x4a0] sm:$0xff]
  %v7061 = vld [vmem:[%s5 + $0x4a8] sm:$0xff]
  %v7062 = vld [vmem:[%s5 + $0x4b0] sm:$0xff]
  %v7063 = vld [vmem:[%s5 + $0x4b8] sm:$0xff]
  %v7064 = vld [vmem:[%s5 + $0x4c0] sm:$0xff]
  %v7065 = vld [vmem:[%s5 + $0x4c8] sm:$0xff]
  %v7066 = vld [vmem:[%s5 + $0x4d0] sm:$0xff]
  %v7067 = vld [vmem:[%s5 + $0x4d8] sm:$0xff]
  %v7068 = vld [vmem:[%s5 + $0x4e0] sm:$0xff]
  %v7069 = vld [vmem:[%s5 + $0x4e8] sm:$0xff]
  %v7070 = vld [vmem:[%s5 + $0x4f0] sm:$0xff]
  %v7071 = vld [vmem:[%s5 + $0x4f8] sm:$0xff]
  %v7072 = vld [vmem:[%s5 + $0x500] sm:$0xff]
  %v7073 = vld [vmem:[%s5 + $0x508] sm:$0xff]
  %v7074 = vld [vmem:[%s5 + $0x510] sm:$0xff]
  %v7075 = vld [vmem:[%s5 + $0x518] sm:$0xff]
  %v7076 = vld [vmem:[%s5 + $0x520] sm:$0xff]
  %v7077 = vld [vmem:[%s5 + $0x528] sm:$0xff]
  %v7078 = vld [vmem:[%s5 + $0x530] sm:$0xff]
  %v7079 = vld [vmem:[%s5 + $0x538] sm:$0xff]
  %v7080 = vld [vmem:[%s5 + $0x540] sm:$0xff]
  %v7081 = vld [vmem:[%s5 + $0x548] sm:$0xff]
  %v7082 = vld [vmem:[%s5 + $0x550] sm:$0xff]
  %v7083 = vld [vmem:[%s5 + $0x558] sm:$0xff]
  %v7084 = vld [vmem:[%s5 + $0x560] sm:$0xff]
  %v7085 = vld [vmem:[%s5 + $0x568] sm:$0xff]
  %v7086 = vld [vmem:[%s5 + $0x570] sm:$0xff]
  %v7087 = vld [vmem:[%s5 + $0x578] sm:$0xff]
  %v7088 = vld [vmem:[%s5 + $0x580] sm:$0xff]
  %v7089 = vld [vmem:[%s5 + $0x588] sm:$0xff]
  %v7090 = vld [vmem:[%s5 + $0x590] sm:$0xff]
  %v7091 = vld [vmem:[%s5 + $0x598] sm:$0xff]
  %v7092 = vld [vmem:[%s5 + $0x5a0] sm:$0xff]
  %v7093 = vld [vmem:[%s5 + $0x5a8] sm:$0xff]
  %v7094 = vld [vmem:[%s5 + $0x5b0] sm:$0xff]
  %v7095 = vld [vmem:[%s5 + $0x5b8] sm:$0xff]
  %v7096 = vld [vmem:[%s5 + $0x5c0] sm:$0xff]
  %v7097 = vld [vmem:[%s5 + $0x5c8] sm:$0xff]
  %v7098 = vld [vmem:[%s5 + $0x5d0] sm:$0xff]
  %v7099 = vld [vmem:[%s5 + $0x5d8] sm:$0xff]
  %v7100 = vld [vmem:[%s5 + $0x5e0] sm:$0xff]
  %v7101 = vld [vmem:[%s5 + $0x5e8] sm:$0xff]
  %v7102 = vld [vmem:[%s5 + $0x5f0] sm:$0xff]
  %v7103 = vld [vmem:[%s5 + $0x5f8] sm:$0xff]
  %v7104 = vld [vmem:[%s5 + $0x600] sm:$0xff]
  %v7105 = vld [vmem:[%s5 + $0x608] sm:$0xff]
  %v7106 = vld [vmem:[%s5 + $0x610] sm:$0xff]
  %v7107 = vld [vmem:[%s5 + $0x618] sm:$0xff]
  %v7108 = vld [vmem:[%s5 + $0x620] sm:$0xff]
  %v7109 = vld [vmem:[%s5 + $0x628] sm:$0xff]
  %v7110 = vld [vmem:[%s5 + $0x630] sm:$0xff]
  %v7111 = vld [vmem:[%s5 + $0x638] sm:$0xff]
  %v7112 = vld [vmem:[%s5 + $0x640] sm:$0xff]
  %v7113 = vld [vmem:[%s5 + $0x648] sm:$0xff]
  %v7114 = vld [vmem:[%s5 + $0x650] sm:$0xff]
  %v7115 = vld [vmem:[%s5 + $0x658] sm:$0xff]
  %v7116 = vld [vmem:[%s5 + $0x660] sm:$0xff]
  %v7117 = vld [vmem:[%s5 + $0x668] sm:$0xff]
  %v7118 = vld [vmem:[%s5 + $0x670] sm:$0xff]
  %v7119 = vld [vmem:[%s5 + $0x678] sm:$0xff]
  %v7120 = vld [vmem:[%s5 + $0x680] sm:$0xff]
  %v7121 = vld [vmem:[%s5 + $0x688] sm:$0xff]
  %v7122 = vld [vmem:[%s5 + $0x690] sm:$0xff]
  %v7123 = vld [vmem:[%s5 + $0x698] sm:$0xff]
  %v7124 = vld [vmem:[%s5 + $0x6a0] sm:$0xff]
  %v7125 = vld [vmem:[%s5 + $0x6a8] sm:$0xff]
  %v7126 = vld [vmem:[%s5 + $0x6b0] sm:$0xff]
  %v7127 = vld [vmem:[%s5 + $0x6b8] sm:$0xff]
  %v7128 = vld [vmem:[%s5 + $0x6c0] sm:$0xff]
  %v7129 = vld [vmem:[%s5 + $0x6c8] sm:$0xff]
  %v7130 = vld [vmem:[%s5 + $0x6d0] sm:$0xff]
  %v7131 = vld [vmem:[%s5 + $0x6d8] sm:$0xff]
  %v7132 = vld [vmem:[%s5 + $0x6e0] sm:$0xff]
  %v7133 = vld [vmem:[%s5 + $0x6e8] sm:$0xff]
  %v7134 = vld [vmem:[%s5 + $0x6f0] sm:$0xff]
  %v7135 = vld [vmem:[%s5 + $0x6f8] sm:$0xff]
  %v7136 = vld [vmem:[%s5 + $0x700] sm:$0xff]
  %v7137 = vld [vmem:[%s5 + $0x708] sm:$0xff]
  %v7138 = vld [vmem:[%s5 + $0x710] sm:$0xff]
  %v7139 = vld [vmem:[%s5 + $0x718] sm:$0xff]
  %v7140 = vld [vmem:[%s5 + $0x720] sm:$0xff]
  %v7141 = vld [vmem:[%s5 + $0x728] sm:$0xff]
  %v7142 = vld [vmem:[%s5 + $0x730] sm:$0xff]
  %v7143 = vld [vmem:[%s5 + $0x738] sm:$0xff]
  %v7144 = vld [vmem:[%s5 + $0x740] sm:$0xff]
  %v7145 = vld [vmem:[%s5 + $0x748] sm:$0xff]
  %v7146 = vld [vmem:[%s5 + $0x750] sm:$0xff]
  %v7147 = vld [vmem:[%s5 + $0x758] sm:$0xff]
  %v7148 = vld [vmem:[%s5 + $0x760] sm:$0xff]
  %v7149 = vld [vmem:[%s5 + $0x768] sm:$0xff]
  %v7150 = vld [vmem:[%s5 + $0x770] sm:$0xff]
  %v7151 = vld [vmem:[%s5 + $0x778] sm:$0xff]
  %v7152 = vld [vmem:[%s5 + $0x780] sm:$0xff]
  %v7153 = vld [vmem:[%s5 + $0x788] sm:$0xff]
  %v7154 = vld [vmem:[%s5 + $0x790] sm:$0xff]
  %v7155 = vld [vmem:[%s5 + $0x798] sm:$0xff]
  %v7156 = vld [vmem:[%s5 + $0x7a0] sm:$0xff]
  %v7157 = vld [vmem:[%s5 + $0x7a8] sm:$0xff]
  %v7158 = vld [vmem:[%s5 + $0x7b0] sm:$0xff]
  %v7159 = vld [vmem:[%s5 + $0x7b8] sm:$0xff]
  %v7160 = vld [vmem:[%s5 + $0x7c0] sm:$0xff]
  %v7161 = vld [vmem:[%s5 + $0x7c8] sm:$0xff]
  %v7162 = vld [vmem:[%s5 + $0x7d0] sm:$0xff]
  %v7163 = vld [vmem:[%s5 + $0x7d8] sm:$0xff]
  %v7164 = vld [vmem:[%s5 + $0x7e0] sm:$0xff]
  %v7165 = vld [vmem:[%s5 + $0x7e8] sm:$0xff]
  %v7166 = vld [vmem:[%s5 + $0x7f0] sm:$0xff]
  %v7167 = vld [vmem:[%s5 + $0x7f8] sm:$0xff]
  %v7168 = vld [vmem:[%s5 + $0x800] sm:$0xff]
  %v7169 = vld [vmem:[%s5 + $0x808] sm:$0xff]
  %v7170 = vld [vmem:[%s5 + $0x810] sm:$0xff]
  %v7171 = vld [vmem:[%s5 + $0x818] sm:$0xff]
  %v7172 = vld [vmem:[%s5 + $0x820] sm:$0xff]
  %v7173 = vld [vmem:[%s5 + $0x828] sm:$0xff]
  %v7174 = vld [vmem:[%s5 + $0x830] sm:$0xff]
  %v7175 = vld [vmem:[%s5 + $0x838] sm:$0xff]
  %v7176 = vld [vmem:[%s5 + $0x840] sm:$0xff]
  %v7177 = vld [vmem:[%s5 + $0x848] sm:$0xff]
  %v7178 = vld [vmem:[%s5 + $0x850] sm:$0xff]
  %v7179 = vld [vmem:[%s5 + $0x858] sm:$0xff]
  %v7180 = vld [vmem:[%s5 + $0x860] sm:$0xff]
  %v7181 = vld [vmem:[%s5 + $0x868] sm:$0xff]
  %v7182 = vld [vmem:[%s5 + $0x870] sm:$0xff]
  %v7183 = vld [vmem:[%s5 + $0x878] sm:$0xff]
  %v7184 = vld [vmem:[%s5 + $0x880] sm:$0xff]
  %v7185 = vld [vmem:[%s5 + $0x888] sm:$0xff]
  %v7186 = vld [vmem:[%s5 + $0x890] sm:$0xff]
  %v7187 = vld [vmem:[%s5 + $0x898] sm:$0xff]
  %v7188 = vld [vmem:[%s5 + $0x8a0] sm:$0xff]
  %v7189 = vld [vmem:[%s5 + $0x8a8] sm:$0xff]
  %v7190 = vld [vmem:[%s5 + $0x8b0] sm:$0xff]
  %v7191 = vld [vmem:[%s5 + $0x8b8] sm:$0xff]
  %v7192 = vld [vmem:[%s5 + $0x8c0] sm:$0xff]
  %v7193 = vld [vmem:[%s5 + $0x8c8] sm:$0xff]
  %v7194 = vld [vmem:[%s5 + $0x8d0] sm:$0xff]
  %v7195 = vld [vmem:[%s5 + $0x8d8] sm:$0xff]
  %v7196 = vld [vmem:[%s5 + $0x8e0] sm:$0xff]
  %v7197 = vld [vmem:[%s5 + $0x8e8] sm:$0xff]
  %v7198 = vld [vmem:[%s5 + $0x8f0] sm:$0xff]
  %v7199 = vld [vmem:[%s5 + $0x8f8] sm:$0xff]
  %v7200 = vld [vmem:[%s5 + $0x900] sm:$0xff]
  %v7201 = vld [vmem:[%s5 + $0x908] sm:$0xff]
  %v7202 = vld [vmem:[%s5 + $0x910] sm:$0xff]
  %v7203 = vld [vmem:[%s5 + $0x918] sm:$0xff]
  %v7204 = vld [vmem:[%s5 + $0x920] sm:$0xff]
  %v7205 = vld [vmem:[%s5 + $0x928] sm:$0xff]
  %v7206 = vld [vmem:[%s5 + $0x930] sm:$0xff]
  %v7207 = vld [vmem:[%s5 + $0x938] sm:$0xff]
  %v7208 = vld [vmem:[%s5 + $0x940] sm:$0xff]
  %v7209 = vld [vmem:[%s5 + $0x948] sm:$0xff]
  %v7210 = vld [vmem:[%s5 + $0x950] sm:$0xff]
  %v7211 = vld [vmem:[%s5 + $0x958] sm:$0xff]
  %v7212 = vld [vmem:[%s5 + $0x960] sm:$0xff]
  %v7213 = vld [vmem:[%s5 + $0x968] sm:$0xff]
  %v7214 = vld [vmem:[%s5 + $0x970] sm:$0xff]
  %v7215 = vld [vmem:[%s5 + $0x978] sm:$0xff]
  %v7216 = vld [vmem:[%s5 + $0x980] sm:$0xff]
  %v7217 = vld [vmem:[%s5 + $0x988] sm:$0xff]
  %v7218 = vld [vmem:[%s5 + $0x990] sm:$0xff]
  %v7219 = vld [vmem:[%s5 + $0x998] sm:$0xff]
  %v7220 = vld [vmem:[%s5 + $0x9a0] sm:$0xff]
  %v7221 = vld [vmem:[%s5 + $0x9a8] sm:$0xff]
  %v7222 = vld [vmem:[%s5 + $0x9b0] sm:$0xff]
  %v7223 = vld [vmem:[%s5 + $0x9b8] sm:$0xff]
  %v7224 = vld [vmem:[%s5 + $0x9c0] sm:$0xff]
  %v7225 = vld [vmem:[%s5 + $0x9c8] sm:$0xff]
  %v7226 = vld [vmem:[%s5 + $0x9d0] sm:$0xff]
  %v7227 = vld [vmem:[%s5 + $0x9d8] sm:$0xff]
  %v7228 = vld [vmem:[%s5 + $0x9e0] sm:$0xff]
  %v7229 = vld [vmem:[%s5 + $0x9e8] sm:$0xff]
  %v7230 = vld [vmem:[%s5 + $0x9f0] sm:$0xff]
  %v7231 = vld [vmem:[%s5 + $0x9f8] sm:$0xff]
  %v7232 = vld [vmem:[%s5 + $0xa00] sm:$0xff]
  %v7233 = vld [vmem:[%s5 + $0xa08] sm:$0xff]
  %v7234 = vld [vmem:[%s5 + $0xa10] sm:$0xff]
  %v7235 = vld [vmem:[%s5 + $0xa18] sm:$0xff]
  %v7236 = vld [vmem:[%s5 + $0xa20] sm:$0xff]
  %v7237 = vld [vmem:[%s5 + $0xa28] sm:$0xff]
  %v7238 = vld [vmem:[%s5 + $0xa30] sm:$0xff]
  %v7239 = vld [vmem:[%s5 + $0xa38] sm:$0xff]
  %v7240 = vld [vmem:[%s5 + $0xa40] sm:$0xff]
  %v7241 = vld [vmem:[%s5 + $0xa48] sm:$0xff]
  %v7242 = vld [vmem:[%s5 + $0xa50] sm:$0xff]
  %v7243 = vld [vmem:[%s5 + $0xa58] sm:$0xff]
  %v7244 = vld [vmem:[%s5 + $0xa60] sm:$0xff]
  %v7245 = vld [vmem:[%s5 + $0xa68] sm:$0xff]
  %v7246 = vld [vmem:[%s5 + $0xa70] sm:$0xff]
  %v7247 = vld [vmem:[%s5 + $0xa78] sm:$0xff]
  %v7248 = vld [vmem:[%s5 + $0xa80] sm:$0xff]
  %v7249 = vld [vmem:[%s5 + $0xa88] sm:$0xff]
  %v7250 = vld [vmem:[%s5 + $0xa90] sm:$0xff]
  %v7251 = vld [vmem:[%s5 + $0xa98] sm:$0xff]
  %v7252 = vld [vmem:[%s5 + $0xaa0] sm:$0xff]
  %v7253 = vld [vmem:[%s5 + $0xaa8] sm:$0xff]
  %v7254 = vld [vmem:[%s5 + $0xab0] sm:$0xff]
  %v7255 = vld [vmem:[%s5 + $0xab8] sm:$0xff]
  %v7256 = vld [vmem:[%s5 + $0xac0] sm:$0xff]
  %v7257 = vld [vmem:[%s5 + $0xac8] sm:$0xff]
  %v7258 = vld [vmem:[%s5 + $0xad0] sm:$0xff]
  %v7259 = vld [vmem:[%s5 + $0xad8] sm:$0xff]
  %v7260 = vld [vmem:[%s5 + $0xae0] sm:$0xff]
  %v7261 = vld [vmem:[%s5 + $0xae8] sm:$0xff]
  %v7262 = vld [vmem:[%s5 + $0xaf0] sm:$0xff]
  %v7263 = vld [vmem:[%s5 + $0xaf8] sm:$0xff]
  %v7264 = vld [vmem:[%s5 + $0xb00] sm:$0xff]
  %v7265 = vld [vmem:[%s5 + $0xb08] sm:$0xff]
  %v7266 = vld [vmem:[%s5 + $0xb10] sm:$0xff]
  %v7267 = vld [vmem:[%s5 + $0xb18] sm:$0xff]
  %v7268 = vld [vmem:[%s5 + $0xb20] sm:$0xff]
  %v7269 = vld [vmem:[%s5 + $0xb28] sm:$0xff]
  %v7270 = vld [vmem:[%s5 + $0xb30] sm:$0xff]
  %v7271 = vld [vmem:[%s5 + $0xb38] sm:$0xff]
  %v7272 = vld [vmem:[%s5 + $0xb40] sm:$0xff]
  %v7273 = vld [vmem:[%s5 + $0xb48] sm:$0xff]
  %v7274 = vld [vmem:[%s5 + $0xb50] sm:$0xff]
  %v7275 = vld [vmem:[%s5 + $0xb58] sm:$0xff]
  %v7276 = vld [vmem:[%s5 + $0xb60] sm:$0xff]
  %v7277 = vld [vmem:[%s5 + $0xb68] sm:$0xff]
  %v7278 = vld [vmem:[%s5 + $0xb70] sm:$0xff]
  %v7279 = vld [vmem:[%s5 + $0xb78] sm:$0xff]
  %v7280 = vld [vmem:[%s5 + $0xb80] sm:$0xff]
  %v7281 = vld [vmem:[%s5 + $0xb88] sm:$0xff]
  %v7282 = vld [vmem:[%s5 + $0xb90] sm:$0xff]
  %v7283 = vld [vmem:[%s5 + $0xb98] sm:$0xff]
  %v7284 = vld [vmem:[%s5 + $0xba0] sm:$0xff]
  %v7285 = vld [vmem:[%s5 + $0xba8] sm:$0xff]
  %v7286 = vld [vmem:[%s5 + $0xbb0] sm:$0xff]
  %v7287 = vld [vmem:[%s5 + $0xbb8] sm:$0xff]
  %v7288 = vld [vmem:[%s5 + $0xbc0] sm:$0xff]
  %v7289 = vld [vmem:[%s5 + $0xbc8] sm:$0xff]
  %v7290 = vld [vmem:[%s5 + $0xbd0] sm:$0xff]
  %v7291 = vld [vmem:[%s5 + $0xbd8] sm:$0xff]
  %v7292 = vld [vmem:[%s5 + $0xbe0] sm:$0xff]
  %v7293 = vld [vmem:[%s5 + $0xbe8] sm:$0xff]
  %v7294 = vld [vmem:[%s5 + $0xbf0] sm:$0xff]
  %v7295 = vld [vmem:[%s5 + $0xbf8] sm:$0xff]
  %v7296 = vld [vmem:[%s5 + $0xc00] sm:$0xff]
  %v7297 = vld [vmem:[%s5 + $0xc08] sm:$0xff]
  %v7298 = vld [vmem:[%s5 + $0xc10] sm:$0xff]
  %v7299 = vld [vmem:[%s5 + $0xc18] sm:$0xff]
  %v7300 = vld [vmem:[%s5 + $0xc20] sm:$0xff]
  %v7301 = vld [vmem:[%s5 + $0xc28] sm:$0xff]
  %v7302 = vld [vmem:[%s5 + $0xc30] sm:$0xff]
  %v7303 = vld [vmem:[%s5 + $0xc38] sm:$0xff]
  %v7304 = vld [vmem:[%s5 + $0xc40] sm:$0xff]
  %v7305 = vld [vmem:[%s5 + $0xc48] sm:$0xff]
  %v7306 = vld [vmem:[%s5 + $0xc50] sm:$0xff]
  %v7307 = vld [vmem:[%s5 + $0xc58] sm:$0xff]
  %v7308 = vld [vmem:[%s5 + $0xc60] sm:$0xff]
  %v7309 = vld [vmem:[%s5 + $0xc68] sm:$0xff]
  %v7310 = vld [vmem:[%s5 + $0xc70] sm:$0xff]
  %v7311 = vld [vmem:[%s5 + $0xc78] sm:$0xff]
  %v7312 = vld [vmem:[%s5 + $0xc80] sm:$0xff]
  %v7313 = vld [vmem:[%s5 + $0xc88] sm:$0xff]
  %v7314 = vld [vmem:[%s5 + $0xc90] sm:$0xff]
  %v7315 = vld [vmem:[%s5 + $0xc98] sm:$0xff]
  %v7316 = vld [vmem:[%s5 + $0xca0] sm:$0xff]
  %v7317 = vld [vmem:[%s5 + $0xca8] sm:$0xff]
  %v7318 = vld [vmem:[%s5 + $0xcb0] sm:$0xff]
  %v7319 = vld [vmem:[%s5 + $0xcb8] sm:$0xff]
  %v7320 = vld [vmem:[%s5 + $0xcc0] sm:$0xff]
  %v7321 = vld [vmem:[%s5 + $0xcc8] sm:$0xff]
  %v7322 = vld [vmem:[%s5 + $0xcd0] sm:$0xff]
  %v7323 = vld [vmem:[%s5 + $0xcd8] sm:$0xff]
  %v7324 = vld [vmem:[%s5 + $0xce0] sm:$0xff]
  %v7325 = vld [vmem:[%s5 + $0xce8] sm:$0xff]
  %v7326 = vld [vmem:[%s5 + $0xcf0] sm:$0xff]
  %v7327 = vld [vmem:[%s5 + $0xcf8] sm:$0xff]
  %v7328 = vld [vmem:[%s5 + $0xd00] sm:$0xff]
  %v7329 = vld [vmem:[%s5 + $0xd08] sm:$0xff]
  %v7330 = vld [vmem:[%s5 + $0xd10] sm:$0xff]
  %v7331 = vld [vmem:[%s5 + $0xd18] sm:$0xff]
  %v7332 = vld [vmem:[%s6] sm:$0x3f]
  %v7334 = vlaneseq
  %v7335 = vshrl.u32 %v7334, 7
  %v7336 = vsub.s32 0, %v7335
  %v7337 = vrot.slane %v7332, %v7336
  %v7338 = vlaneseq
  %v7339 = vshrl.u32 %v7338, 7
  %v7340 = vsub.s32 1, %v7339
  %v7341 = vrot.slane %v7332, %v7340
  %v7342 = vlaneseq
  %v7343 = vshrl.u32 %v7342, 7
  %v7344 = vsub.s32 2, %v7343
  %v7345 = vrot.slane %v7332, %v7344
  %v7346 = vlaneseq
  %v7347 = vshrl.u32 %v7346, 7
  %v7348 = vsub.s32 3, %v7347
  %v7349 = vrot.slane %v7332, %v7348
  %v7350 = vlaneseq
  %v7351 = vshrl.u32 %v7350, 7
  %v7352 = vsub.s32 4, %v7351
  %v7353 = vrot.slane %v7332, %v7352
  %v7354 = vlaneseq
  %v7355 = vshrl.u32 %v7354, 7
  %v7356 = vsub.s32 5, %v7355
  %v7357 = vrot.slane %v7332, %v7356
  %v7784 = vunpack.c.l.b16 %v6912
  %v7785 = vunpack.c.h.b16 %v6912
  %v7786 = vunpack.c.l.b16 %v6913
  %v7787 = vunpack.c.h.b16 %v6913
  %v7788 = vunpack.c.l.b16 %v6914
  %v7789 = vunpack.c.h.b16 %v6914
  %v7790 = vunpack.c.l.b16 %v6915
  %v7791 = vunpack.c.h.b16 %v6915
  %v7792 = vunpack.c.l.b16 %v6916
  %v7793 = vunpack.c.h.b16 %v6916
  %v7794 = vunpack.c.l.b16 %v6917
  %v7795 = vunpack.c.h.b16 %v6917
  %v7796 = vunpack.c.l.b16 %v6918
  %v7797 = vunpack.c.h.b16 %v6918
  %v7798 = vunpack.c.l.b16 %v6919
  %v7799 = vunpack.c.h.b16 %v6919
  %v7800 = vunpack.c.l.b16 %v6920
  %v7801 = vunpack.c.h.b16 %v6920
  %v7802 = vunpack.c.l.b16 %v6921
  %v7803 = vunpack.c.h.b16 %v6921
  %v7804 = vunpack.c.l.b16 %v6922
  %v7805 = vunpack.c.h.b16 %v6922
  %v7806 = vunpack.c.l.b16 %v6923
  %v7807 = vunpack.c.h.b16 %v6923
  %v7808 = vunpack.c.l.b16 %v6924
  %v7809 = vunpack.c.h.b16 %v6924
  %v7810 = vunpack.c.l.b16 %v6925
  %v7811 = vunpack.c.h.b16 %v6925
  %v7812 = vunpack.c.l.b16 %v6926
  %v7813 = vunpack.c.h.b16 %v6926
  %v7814 = vunpack.c.l.b16 %v6927
  %v7815 = vunpack.c.h.b16 %v6927
  %v7816 = vunpack.c.l.b16 %v6928
  %v7817 = vunpack.c.h.b16 %v6928
  %v7818 = vunpack.c.l.b16 %v6929
  %v7819 = vunpack.c.h.b16 %v6929
  %v7820 = vunpack.c.l.b16 %v6930
  %v7821 = vunpack.c.h.b16 %v6930
  %v7822 = vunpack.c.l.b16 %v6931
  %v7823 = vunpack.c.h.b16 %v6931
  %v7824 = vunpack.c.l.b16 %v6932
  %v7825 = vunpack.c.h.b16 %v6932
  %v7826 = vunpack.c.l.b16 %v6933
  %v7827 = vunpack.c.h.b16 %v6933
  %v7828 = vunpack.c.l.b16 %v6934
  %v7829 = vunpack.c.h.b16 %v6934
  %v7830 = vunpack.c.l.b16 %v6935
  %v7831 = vunpack.c.h.b16 %v6935
  %v7832 = vunpack.c.l.b16 %v6936
  %v7833 = vunpack.c.h.b16 %v6936
  %v7834 = vunpack.c.l.b16 %v6937
  %v7835 = vunpack.c.h.b16 %v6937
  %v7836 = vunpack.c.l.b16 %v6938
  %v7837 = vunpack.c.h.b16 %v6938
  %v7838 = vunpack.c.l.b16 %v6939
  %v7839 = vunpack.c.h.b16 %v6939
  %v7840 = vunpack.c.l.b16 %v6940
  %v7841 = vunpack.c.h.b16 %v6940
  %v7842 = vunpack.c.l.b16 %v6941
  %v7843 = vunpack.c.h.b16 %v6941
  %v7844 = vunpack.c.l.b16 %v6942
  %v7845 = vunpack.c.h.b16 %v6942
  %v7846 = vunpack.c.l.b16 %v6943
  %v7847 = vunpack.c.h.b16 %v6943
  %v7848 = vunpack.c.l.b16 %v6944
  %v7849 = vunpack.c.h.b16 %v6944
  %v7850 = vunpack.c.l.b16 %v6945
  %v7851 = vunpack.c.h.b16 %v6945
  %v7852 = vunpack.c.l.b16 %v6946
  %v7853 = vunpack.c.h.b16 %v6946
  %v7854 = vunpack.c.l.b16 %v6947
  %v7855 = vunpack.c.h.b16 %v6947
  %v7856 = vunpack.c.l.b16 %v6948
  %v7857 = vunpack.c.h.b16 %v6948
  %v7858 = vunpack.c.l.b16 %v6949
  %v7859 = vunpack.c.h.b16 %v6949
  %v7860 = vunpack.c.l.b16 %v6950
  %v7861 = vunpack.c.h.b16 %v6950
  %v7862 = vunpack.c.l.b16 %v6951
  %v7863 = vunpack.c.h.b16 %v6951
  %v7864 = vunpack.c.l.b16 %v6952
  %v7865 = vunpack.c.h.b16 %v6952
  %v7866 = vunpack.c.l.b16 %v6953
  %v7867 = vunpack.c.h.b16 %v6953
  %v7868 = vunpack.c.l.b16 %v6954
  %v7869 = vunpack.c.h.b16 %v6954
  %v7870 = vunpack.c.l.b16 %v6955
  %v7871 = vunpack.c.h.b16 %v6955
  %v7872 = vunpack.c.l.b16 %v6956
  %v7873 = vunpack.c.h.b16 %v6956
  %v7874 = vunpack.c.l.b16 %v6957
  %v7875 = vunpack.c.h.b16 %v6957
  %v7876 = vunpack.c.l.b16 %v6958
  %v7877 = vunpack.c.h.b16 %v6958
  %v7878 = vunpack.c.l.b16 %v6959
  %v7879 = vunpack.c.h.b16 %v6959
  %v7880 = vunpack.c.l.b16 %v6960
  %v7881 = vunpack.c.h.b16 %v6960
  %v7882 = vunpack.c.l.b16 %v6961
  %v7883 = vunpack.c.h.b16 %v6961
  %v7884 = vunpack.c.l.b16 %v6962
  %v7885 = vunpack.c.h.b16 %v6962
  %v7886 = vunpack.c.l.b16 %v6963
  %v7887 = vunpack.c.h.b16 %v6963
  %v7888 = vunpack.c.l.b16 %v6964
  %v7889 = vunpack.c.h.b16 %v6964
  %v7890 = vunpack.c.l.b16 %v6965
  %v7891 = vunpack.c.h.b16 %v6965
  %v7892 = vunpack.c.l.b16 %v6966
  %v7893 = vunpack.c.h.b16 %v6966
  %v7894 = vunpack.c.l.b16 %v6967
  %v7895 = vunpack.c.h.b16 %v6967
  %v7896 = vunpack.c.l.b16 %v6968
  %v7897 = vunpack.c.h.b16 %v6968
  %v7898 = vunpack.c.l.b16 %v6969
  %v7899 = vunpack.c.h.b16 %v6969
  %v7900 = vunpack.c.l.b16 %v6970
  %v7901 = vunpack.c.h.b16 %v6970
  %v7902 = vunpack.c.l.b16 %v6971
  %v7903 = vunpack.c.h.b16 %v6971
  %v7904 = vunpack.c.l.b16 %v6972
  %v7905 = vunpack.c.h.b16 %v6972
  %v7906 = vunpack.c.l.b16 %v6973
  %v7907 = vunpack.c.h.b16 %v6973
  %v7908 = vunpack.c.l.b16 %v6974
  %v7909 = vunpack.c.h.b16 %v6974
  %v7910 = vunpack.c.l.b16 %v6975
  %v7911 = vunpack.c.h.b16 %v6975
  %v7912 = vunpack.c.l.b16 %v6976
  %v7913 = vunpack.c.h.b16 %v6976
  %v7914 = vunpack.c.l.b16 %v6977
  %v7915 = vunpack.c.h.b16 %v6977
  %v7916 = vunpack.c.l.b16 %v6978
  %v7917 = vunpack.c.h.b16 %v6978
  %v7918 = vunpack.c.l.b16 %v6979
  %v7919 = vunpack.c.h.b16 %v6979
  %v7920 = vunpack.c.l.b16 %v6980
  %v7921 = vunpack.c.h.b16 %v6980
  %v7922 = vunpack.c.l.b16 %v6981
  %v7923 = vunpack.c.h.b16 %v6981
  %v7924 = vunpack.c.l.b16 %v6982
  %v7925 = vunpack.c.h.b16 %v6982
  %v7926 = vunpack.c.l.b16 %v6983
  %v7927 = vunpack.c.h.b16 %v6983
  %v7928 = vunpack.c.l.b16 %v6984
  %v7929 = vunpack.c.h.b16 %v6984
  %v7930 = vunpack.c.l.b16 %v6985
  %v7931 = vunpack.c.h.b16 %v6985
  %v7932 = vunpack.c.l.b16 %v6986
  %v7933 = vunpack.c.h.b16 %v6986
  %v7934 = vunpack.c.l.b16 %v6987
  %v7935 = vunpack.c.h.b16 %v6987
  %v7936 = vunpack.c.l.b16 %v6988
  %v7937 = vunpack.c.h.b16 %v6988
  %v7938 = vunpack.c.l.b16 %v6989
  %v7939 = vunpack.c.h.b16 %v6989
  %v7940 = vunpack.c.l.b16 %v6990
  %v7941 = vunpack.c.h.b16 %v6990
  %v7942 = vunpack.c.l.b16 %v6991
  %v7943 = vunpack.c.h.b16 %v6991
  %v7944 = vunpack.c.l.b16 %v6992
  %v7945 = vunpack.c.h.b16 %v6992
  %v7946 = vunpack.c.l.b16 %v6993
  %v7947 = vunpack.c.h.b16 %v6993
  %v7948 = vunpack.c.l.b16 %v6994
  %v7949 = vunpack.c.h.b16 %v6994
  %v7950 = vunpack.c.l.b16 %v6995
  %v7951 = vunpack.c.h.b16 %v6995
  %v7952 = vunpack.c.l.b16 %v6996
  %v7953 = vunpack.c.h.b16 %v6996
  %v7954 = vunpack.c.l.b16 %v6997
  %v7955 = vunpack.c.h.b16 %v6997
  %v7956 = vunpack.c.l.b16 %v6998
  %v7957 = vunpack.c.h.b16 %v6998
  %v7958 = vunpack.c.l.b16 %v6999
  %v7959 = vunpack.c.h.b16 %v6999
  %v7960 = vunpack.c.l.b16 %v7000
  %v7961 = vunpack.c.h.b16 %v7000
  %v7962 = vunpack.c.l.b16 %v7001
  %v7963 = vunpack.c.h.b16 %v7001
  %v7964 = vunpack.c.l.b16 %v7002
  %v7965 = vunpack.c.h.b16 %v7002
  %v7966 = vunpack.c.l.b16 %v7003
  %v7967 = vunpack.c.h.b16 %v7003
  %v7968 = vunpack.c.l.b16 %v7004
  %v7969 = vunpack.c.h.b16 %v7004
  %v7970 = vunpack.c.l.b16 %v7005
  %v7971 = vunpack.c.h.b16 %v7005
  %v7972 = vunpack.c.l.b16 %v7006
  %v7973 = vunpack.c.h.b16 %v7006
  %v7974 = vunpack.c.l.b16 %v7007
  %v7975 = vunpack.c.h.b16 %v7007
  %v7976 = vunpack.c.l.b16 %v7008
  %v7977 = vunpack.c.h.b16 %v7008
  %v7978 = vunpack.c.l.b16 %v7009
  %v7979 = vunpack.c.h.b16 %v7009
  %v7980 = vunpack.c.l.b16 %v7010
  %v7981 = vunpack.c.h.b16 %v7010
  %v7982 = vunpack.c.l.b16 %v7011
  %v7983 = vunpack.c.h.b16 %v7011
  %v7984 = vunpack.c.l.b16 %v7012
  %v7985 = vunpack.c.h.b16 %v7012
  %v7986 = vunpack.c.l.b16 %v7013
  %v7987 = vunpack.c.h.b16 %v7013
  %v7988 = vunpack.c.l.b16 %v7014
  %v7989 = vunpack.c.h.b16 %v7014
  %v7990 = vunpack.c.l.b16 %v7015
  %v7991 = vunpack.c.h.b16 %v7015
  %v7992 = vunpack.c.l.b16 %v7016
  %v7993 = vunpack.c.h.b16 %v7016
  %v7994 = vunpack.c.l.b16 %v7017
  %v7995 = vunpack.c.h.b16 %v7017
  %v7996 = vunpack.c.l.b16 %v7018
  %v7997 = vunpack.c.h.b16 %v7018
  %v7998 = vunpack.c.l.b16 %v7019
  %v7999 = vunpack.c.h.b16 %v7019
  %v8000 = vunpack.c.l.b16 %v7020
  %v8001 = vunpack.c.h.b16 %v7020
  %v8002 = vunpack.c.l.b16 %v7021
  %v8003 = vunpack.c.h.b16 %v7021
  %v8004 = vunpack.c.l.b16 %v7022
  %v8005 = vunpack.c.h.b16 %v7022
  %v8006 = vunpack.c.l.b16 %v7023
  %v8007 = vunpack.c.h.b16 %v7023
  %v8008 = vunpack.c.l.b16 %v7024
  %v8009 = vunpack.c.h.b16 %v7024
  %v8010 = vunpack.c.l.b16 %v7025
  %v8011 = vunpack.c.h.b16 %v7025
  %v8012 = vunpack.c.l.b16 %v7026
  %v8013 = vunpack.c.h.b16 %v7026
  %v8014 = vunpack.c.l.b16 %v7027
  %v8015 = vunpack.c.h.b16 %v7027
  %v8016 = vunpack.c.l.b16 %v7028
  %v8017 = vunpack.c.h.b16 %v7028
  %v8018 = vunpack.c.l.b16 %v7029
  %v8019 = vunpack.c.h.b16 %v7029
  %v8020 = vunpack.c.l.b16 %v7030
  %v8021 = vunpack.c.h.b16 %v7030
  %v8022 = vunpack.c.l.b16 %v7031
  %v8023 = vunpack.c.h.b16 %v7031
  %v8024 = vunpack.c.l.b16 %v7032
  %v8025 = vunpack.c.h.b16 %v7032
  %v8026 = vunpack.c.l.b16 %v7033
  %v8027 = vunpack.c.h.b16 %v7033
  %v8028 = vunpack.c.l.b16 %v7034
  %v8029 = vunpack.c.h.b16 %v7034
  %v8030 = vunpack.c.l.b16 %v7035
  %v8031 = vunpack.c.h.b16 %v7035
  %v8032 = vunpack.c.l.b16 %v7036
  %v8033 = vunpack.c.h.b16 %v7036
  %v8034 = vunpack.c.l.b16 %v7037
  %v8035 = vunpack.c.h.b16 %v7037
  %v8036 = vunpack.c.l.b16 %v7038
  %v8037 = vunpack.c.h.b16 %v7038
  %v8038 = vunpack.c.l.b16 %v7039
  %v8039 = vunpack.c.h.b16 %v7039
  %v8040 = vunpack.c.l.b16 %v7040
  %v8041 = vunpack.c.h.b16 %v7040
  %v8042 = vunpack.c.l.b16 %v7041
  %v8043 = vunpack.c.h.b16 %v7041
  %v8044 = vunpack.c.l.b16 %v7042
  %v8045 = vunpack.c.h.b16 %v7042
  %v8046 = vunpack.c.l.b16 %v7043
  %v8047 = vunpack.c.h.b16 %v7043
  %v8048 = vunpack.c.l.b16 %v7044
  %v8049 = vunpack.c.h.b16 %v7044
  %v8050 = vunpack.c.l.b16 %v7045
  %v8051 = vunpack.c.h.b16 %v7045
  %v8052 = vunpack.c.l.b16 %v7046
  %v8053 = vunpack.c.h.b16 %v7046
  %v8054 = vunpack.c.l.b16 %v7047
  %v8055 = vunpack.c.h.b16 %v7047
  %v8056 = vunpack.c.l.b16 %v7048
  %v8057 = vunpack.c.h.b16 %v7048
  %v8058 = vunpack.c.l.b16 %v7049
  %v8059 = vunpack.c.h.b16 %v7049
  %v8060 = vunpack.c.l.b16 %v7050
  %v8061 = vunpack.c.h.b16 %v7050
  %v8062 = vunpack.c.l.b16 %v7051
  %v8063 = vunpack.c.h.b16 %v7051
  %v8064 = vunpack.c.l.b16 %v7052
  %v8065 = vunpack.c.h.b16 %v7052
  %v8066 = vunpack.c.l.b16 %v7053
  %v8067 = vunpack.c.h.b16 %v7053
  %v8068 = vunpack.c.l.b16 %v7054
  %v8069 = vunpack.c.h.b16 %v7054
  %v8070 = vunpack.c.l.b16 %v7055
  %v8071 = vunpack.c.h.b16 %v7055
  %v8072 = vunpack.c.l.b16 %v7056
  %v8073 = vunpack.c.h.b16 %v7056
  %v8074 = vunpack.c.l.b16 %v7057
  %v8075 = vunpack.c.h.b16 %v7057
  %v8076 = vunpack.c.l.b16 %v7058
  %v8077 = vunpack.c.h.b16 %v7058
  %v8078 = vunpack.c.l.b16 %v7059
  %v8079 = vunpack.c.h.b16 %v7059
  %v8080 = vunpack.c.l.b16 %v7060
  %v8081 = vunpack.c.h.b16 %v7060
  %v8082 = vunpack.c.l.b16 %v7061
  %v8083 = vunpack.c.h.b16 %v7061
  %v8084 = vunpack.c.l.b16 %v7062
  %v8085 = vunpack.c.h.b16 %v7062
  %v8086 = vunpack.c.l.b16 %v7063
  %v8087 = vunpack.c.h.b16 %v7063
  %v8088 = vunpack.c.l.b16 %v7064
  %v8089 = vunpack.c.h.b16 %v7064
  %v8090 = vunpack.c.l.b16 %v7065
  %v8091 = vunpack.c.h.b16 %v7065
  %v8092 = vunpack.c.l.b16 %v7066
  %v8093 = vunpack.c.h.b16 %v7066
  %v8094 = vunpack.c.l.b16 %v7067
  %v8095 = vunpack.c.h.b16 %v7067
  %v8096 = vunpack.c.l.b16 %v7068
  %v8097 = vunpack.c.h.b16 %v7068
  %v8098 = vunpack.c.l.b16 %v7069
  %v8099 = vunpack.c.h.b16 %v7069
  %v8100 = vunpack.c.l.b16 %v7070
  %v8101 = vunpack.c.h.b16 %v7070
  %v8102 = vunpack.c.l.b16 %v7071
  %v8103 = vunpack.c.h.b16 %v7071
  %v8104 = vunpack.c.l.b16 %v7072
  %v8105 = vunpack.c.h.b16 %v7072
  %v8106 = vunpack.c.l.b16 %v7073
  %v8107 = vunpack.c.h.b16 %v7073
  %v8108 = vunpack.c.l.b16 %v7074
  %v8109 = vunpack.c.h.b16 %v7074
  %v8110 = vunpack.c.l.b16 %v7075
  %v8111 = vunpack.c.h.b16 %v7075
  %v8112 = vunpack.c.l.b16 %v7076
  %v8113 = vunpack.c.h.b16 %v7076
  %v8114 = vunpack.c.l.b16 %v7077
  %v8115 = vunpack.c.h.b16 %v7077
  %v8116 = vunpack.c.l.b16 %v7078
  %v8117 = vunpack.c.h.b16 %v7078
  %v8118 = vunpack.c.l.b16 %v7079
  %v8119 = vunpack.c.h.b16 %v7079
  %v8120 = vunpack.c.l.b16 %v7080
  %v8121 = vunpack.c.h.b16 %v7080
  %v8122 = vunpack.c.l.b16 %v7081
  %v8123 = vunpack.c.h.b16 %v7081
  %v8124 = vunpack.c.l.b16 %v7082
  %v8125 = vunpack.c.h.b16 %v7082
  %v8126 = vunpack.c.l.b16 %v7083
  %v8127 = vunpack.c.h.b16 %v7083
  %v8128 = vunpack.c.l.b16 %v7084
  %v8129 = vunpack.c.h.b16 %v7084
  %v8130 = vunpack.c.l.b16 %v7085
  %v8131 = vunpack.c.h.b16 %v7085
  %v8132 = vunpack.c.l.b16 %v7086
  %v8133 = vunpack.c.h.b16 %v7086
  %v8134 = vunpack.c.l.b16 %v7087
  %v8135 = vunpack.c.h.b16 %v7087
  %v8136 = vunpack.c.l.b16 %v7088
  %v8137 = vunpack.c.h.b16 %v7088
  %v8138 = vunpack.c.l.b16 %v7089
  %v8139 = vunpack.c.h.b16 %v7089
  %v8140 = vunpack.c.l.b16 %v7090
  %v8141 = vunpack.c.h.b16 %v7090
  %v8142 = vunpack.c.l.b16 %v7091
  %v8143 = vunpack.c.h.b16 %v7091
  %v8144 = vunpack.c.l.b16 %v7092
  %v8145 = vunpack.c.h.b16 %v7092
  %v8146 = vunpack.c.l.b16 %v7093
  %v8147 = vunpack.c.h.b16 %v7093
  %v8148 = vunpack.c.l.b16 %v7094
  %v8149 = vunpack.c.h.b16 %v7094
  %v8150 = vunpack.c.l.b16 %v7095
  %v8151 = vunpack.c.h.b16 %v7095
  %v8152 = vunpack.c.l.b16 %v7096
  %v8153 = vunpack.c.h.b16 %v7096
  %v8154 = vunpack.c.l.b16 %v7097
  %v8155 = vunpack.c.h.b16 %v7097
  %v8156 = vunpack.c.l.b16 %v7098
  %v8157 = vunpack.c.h.b16 %v7098
  %v8158 = vunpack.c.l.b16 %v7099
  %v8159 = vunpack.c.h.b16 %v7099
  %v8160 = vunpack.c.l.b16 %v7100
  %v8161 = vunpack.c.h.b16 %v7100
  %v8162 = vunpack.c.l.b16 %v7101
  %v8163 = vunpack.c.h.b16 %v7101
  %v8164 = vunpack.c.l.b16 %v7102
  %v8165 = vunpack.c.h.b16 %v7102
  %v8166 = vunpack.c.l.b16 %v7103
  %v8167 = vunpack.c.h.b16 %v7103
  %v8168 = vunpack.c.l.b16 %v7104
  %v8169 = vunpack.c.h.b16 %v7104
  %v8170 = vunpack.c.l.b16 %v7105
  %v8171 = vunpack.c.h.b16 %v7105
  %v8172 = vunpack.c.l.b16 %v7106
  %v8173 = vunpack.c.h.b16 %v7106
  %v8174 = vunpack.c.l.b16 %v7107
  %v8175 = vunpack.c.h.b16 %v7107
  %v8176 = vunpack.c.l.b16 %v7108
  %v8177 = vunpack.c.h.b16 %v7108
  %v8178 = vunpack.c.l.b16 %v7109
  %v8179 = vunpack.c.h.b16 %v7109
  %v8180 = vunpack.c.l.b16 %v7110
  %v8181 = vunpack.c.h.b16 %v7110
  %v8182 = vunpack.c.l.b16 %v7111
  %v8183 = vunpack.c.h.b16 %v7111
  %v8184 = vunpack.c.l.b16 %v7112
  %v8185 = vunpack.c.h.b16 %v7112
  %v8186 = vunpack.c.l.b16 %v7113
  %v8187 = vunpack.c.h.b16 %v7113
  %v8188 = vunpack.c.l.b16 %v7114
  %v8189 = vunpack.c.h.b16 %v7114
  %v8190 = vunpack.c.l.b16 %v7115
  %v8191 = vunpack.c.h.b16 %v7115
  %v8192 = vunpack.c.l.b16 %v7116
  %v8193 = vunpack.c.h.b16 %v7116
  %v8194 = vunpack.c.l.b16 %v7117
  %v8195 = vunpack.c.h.b16 %v7117
  %v8196 = vunpack.c.l.b16 %v7118
  %v8197 = vunpack.c.h.b16 %v7118
  %v8198 = vunpack.c.l.b16 %v7119
  %v8199 = vunpack.c.h.b16 %v7119
  %v8200 = vunpack.c.l.b16 %v7120
  %v8201 = vunpack.c.h.b16 %v7120
  %v8202 = vunpack.c.l.b16 %v7121
  %v8203 = vunpack.c.h.b16 %v7121
  %v8204 = vunpack.c.l.b16 %v7122
  %v8205 = vunpack.c.h.b16 %v7122
  %v8206 = vunpack.c.l.b16 %v7123
  %v8207 = vunpack.c.h.b16 %v7123
  %v8208 = vunpack.c.l.b16 %v7124
  %v8209 = vunpack.c.h.b16 %v7124
  %v8210 = vunpack.c.l.b16 %v7125
  %v8211 = vunpack.c.h.b16 %v7125
  %v8212 = vunpack.c.l.b16 %v7126
  %v8213 = vunpack.c.h.b16 %v7126
  %v8214 = vunpack.c.l.b16 %v7127
  %v8215 = vunpack.c.h.b16 %v7127
  %v8216 = vunpack.c.l.b16 %v7128
  %v8217 = vunpack.c.h.b16 %v7128
  %v8218 = vunpack.c.l.b16 %v7129
  %v8219 = vunpack.c.h.b16 %v7129
  %v8220 = vunpack.c.l.b16 %v7130
  %v8221 = vunpack.c.h.b16 %v7130
  %v8222 = vunpack.c.l.b16 %v7131
  %v8223 = vunpack.c.h.b16 %v7131
  %v8224 = vunpack.c.l.b16 %v7132
  %v8225 = vunpack.c.h.b16 %v7132
  %v8226 = vunpack.c.l.b16 %v7133
  %v8227 = vunpack.c.h.b16 %v7133
  %v8228 = vunpack.c.l.b16 %v7134
  %v8229 = vunpack.c.h.b16 %v7134
  %v8230 = vunpack.c.l.b16 %v7135
  %v8231 = vunpack.c.h.b16 %v7135
  %v8232 = vunpack.c.l.b16 %v7136
  %v8233 = vunpack.c.h.b16 %v7136
  %v8234 = vunpack.c.l.b16 %v7137
  %v8235 = vunpack.c.h.b16 %v7137
  %v8236 = vunpack.c.l.b16 %v7138
  %v8237 = vunpack.c.h.b16 %v7138
  %v8238 = vunpack.c.l.b16 %v7139
  %v8239 = vunpack.c.h.b16 %v7139
  %v8240 = vunpack.c.l.b16 %v7140
  %v8241 = vunpack.c.h.b16 %v7140
  %v8242 = vunpack.c.l.b16 %v7141
  %v8243 = vunpack.c.h.b16 %v7141
  %v8244 = vunpack.c.l.b16 %v7142
  %v8245 = vunpack.c.h.b16 %v7142
  %v8246 = vunpack.c.l.b16 %v7143
  %v8247 = vunpack.c.h.b16 %v7143
  %v8248 = vunpack.c.l.b16 %v7144
  %v8249 = vunpack.c.h.b16 %v7144
  %v8250 = vunpack.c.l.b16 %v7145
  %v8251 = vunpack.c.h.b16 %v7145
  %v8252 = vunpack.c.l.b16 %v7146
  %v8253 = vunpack.c.h.b16 %v7146
  %v8254 = vunpack.c.l.b16 %v7147
  %v8255 = vunpack.c.h.b16 %v7147
  %v8256 = vunpack.c.l.b16 %v7148
  %v8257 = vunpack.c.h.b16 %v7148
  %v8258 = vunpack.c.l.b16 %v7149
  %v8259 = vunpack.c.h.b16 %v7149
  %v8260 = vunpack.c.l.b16 %v7150
  %v8261 = vunpack.c.h.b16 %v7150
  %v8262 = vunpack.c.l.b16 %v7151
  %v8263 = vunpack.c.h.b16 %v7151
  %v8264 = vunpack.c.l.b16 %v7152
  %v8265 = vunpack.c.h.b16 %v7152
  %v8266 = vunpack.c.l.b16 %v7153
  %v8267 = vunpack.c.h.b16 %v7153
  %v8268 = vunpack.c.l.b16 %v7154
  %v8269 = vunpack.c.h.b16 %v7154
  %v8270 = vunpack.c.l.b16 %v7155
  %v8271 = vunpack.c.h.b16 %v7155
  %v8272 = vunpack.c.l.b16 %v7156
  %v8273 = vunpack.c.h.b16 %v7156
  %v8274 = vunpack.c.l.b16 %v7157
  %v8275 = vunpack.c.h.b16 %v7157
  %v8276 = vunpack.c.l.b16 %v7158
  %v8277 = vunpack.c.h.b16 %v7158
  %v8278 = vunpack.c.l.b16 %v7159
  %v8279 = vunpack.c.h.b16 %v7159
  %v8280 = vunpack.c.l.b16 %v7160
  %v8281 = vunpack.c.h.b16 %v7160
  %v8282 = vunpack.c.l.b16 %v7161
  %v8283 = vunpack.c.h.b16 %v7161
  %v8284 = vunpack.c.l.b16 %v7162
  %v8285 = vunpack.c.h.b16 %v7162
  %v8286 = vunpack.c.l.b16 %v7163
  %v8287 = vunpack.c.h.b16 %v7163
  %v8288 = vunpack.c.l.b16 %v7164
  %v8289 = vunpack.c.h.b16 %v7164
  %v8290 = vunpack.c.l.b16 %v7165
  %v8291 = vunpack.c.h.b16 %v7165
  %v8292 = vunpack.c.l.b16 %v7166
  %v8293 = vunpack.c.h.b16 %v7166
  %v8294 = vunpack.c.l.b16 %v7167
  %v8295 = vunpack.c.h.b16 %v7167
  %v8296 = vunpack.c.l.b16 %v7168
  %v8297 = vunpack.c.h.b16 %v7168
  %v8298 = vunpack.c.l.b16 %v7169
  %v8299 = vunpack.c.h.b16 %v7169
  %v8300 = vunpack.c.l.b16 %v7170
  %v8301 = vunpack.c.h.b16 %v7170
  %v8302 = vunpack.c.l.b16 %v7171
  %v8303 = vunpack.c.h.b16 %v7171
  %v8304 = vunpack.c.l.b16 %v7172
  %v8305 = vunpack.c.h.b16 %v7172
  %v8306 = vunpack.c.l.b16 %v7173
  %v8307 = vunpack.c.h.b16 %v7173
  %v8308 = vunpack.c.l.b16 %v7174
  %v8309 = vunpack.c.h.b16 %v7174
  %v8310 = vunpack.c.l.b16 %v7175
  %v8311 = vunpack.c.h.b16 %v7175
  %v8312 = vunpack.c.l.b16 %v7176
  %v8313 = vunpack.c.h.b16 %v7176
  %v8314 = vunpack.c.l.b16 %v7177
  %v8315 = vunpack.c.h.b16 %v7177
  %v8316 = vunpack.c.l.b16 %v7178
  %v8317 = vunpack.c.h.b16 %v7178
  %v8318 = vunpack.c.l.b16 %v7179
  %v8319 = vunpack.c.h.b16 %v7179
  %v8320 = vunpack.c.l.b16 %v7180
  %v8321 = vunpack.c.h.b16 %v7180
  %v8322 = vunpack.c.l.b16 %v7181
  %v8323 = vunpack.c.h.b16 %v7181
  %v8324 = vunpack.c.l.b16 %v7182
  %v8325 = vunpack.c.h.b16 %v7182
  %v8326 = vunpack.c.l.b16 %v7183
  %v8327 = vunpack.c.h.b16 %v7183
  %v8328 = vunpack.c.l.b16 %v7184
  %v8329 = vunpack.c.h.b16 %v7184
  %v8330 = vunpack.c.l.b16 %v7185
  %v8331 = vunpack.c.h.b16 %v7185
  %v8332 = vunpack.c.l.b16 %v7186
  %v8333 = vunpack.c.h.b16 %v7186
  %v8334 = vunpack.c.l.b16 %v7187
  %v8335 = vunpack.c.h.b16 %v7187
  %v8336 = vunpack.c.l.b16 %v7188
  %v8337 = vunpack.c.h.b16 %v7188
  %v8338 = vunpack.c.l.b16 %v7189
  %v8339 = vunpack.c.h.b16 %v7189
  %v8340 = vunpack.c.l.b16 %v7190
  %v8341 = vunpack.c.h.b16 %v7190
  %v8342 = vunpack.c.l.b16 %v7191
  %v8343 = vunpack.c.h.b16 %v7191
  %v8344 = vunpack.c.l.b16 %v7192
  %v8345 = vunpack.c.h.b16 %v7192
  %v8346 = vunpack.c.l.b16 %v7193
  %v8347 = vunpack.c.h.b16 %v7193
  %v8348 = vunpack.c.l.b16 %v7194
  %v8349 = vunpack.c.h.b16 %v7194
  %v8350 = vunpack.c.l.b16 %v7195
  %v8351 = vunpack.c.h.b16 %v7195
  %v8352 = vunpack.c.l.b16 %v7196
  %v8353 = vunpack.c.h.b16 %v7196
  %v8354 = vunpack.c.l.b16 %v7197
  %v8355 = vunpack.c.h.b16 %v7197
  %v8356 = vunpack.c.l.b16 %v7198
  %v8357 = vunpack.c.h.b16 %v7198
  %v8358 = vunpack.c.l.b16 %v7199
  %v8359 = vunpack.c.h.b16 %v7199
  %v8360 = vunpack.c.l.b16 %v7200
  %v8361 = vunpack.c.h.b16 %v7200
  %v8362 = vunpack.c.l.b16 %v7201
  %v8363 = vunpack.c.h.b16 %v7201
  %v8364 = vunpack.c.l.b16 %v7202
  %v8365 = vunpack.c.h.b16 %v7202
  %v8366 = vunpack.c.l.b16 %v7203
  %v8367 = vunpack.c.h.b16 %v7203
  %v8368 = vunpack.c.l.b16 %v7204
  %v8369 = vunpack.c.h.b16 %v7204
  %v8370 = vunpack.c.l.b16 %v7205
  %v8371 = vunpack.c.h.b16 %v7205
  %v8372 = vunpack.c.l.b16 %v7206
  %v8373 = vunpack.c.h.b16 %v7206
  %v8374 = vunpack.c.l.b16 %v7207
  %v8375 = vunpack.c.h.b16 %v7207
  %v8376 = vunpack.c.l.b16 %v7208
  %v8377 = vunpack.c.h.b16 %v7208
  %v8378 = vunpack.c.l.b16 %v7209
  %v8379 = vunpack.c.h.b16 %v7209
  %v8380 = vunpack.c.l.b16 %v7210
  %v8381 = vunpack.c.h.b16 %v7210
  %v8382 = vunpack.c.l.b16 %v7211
  %v8383 = vunpack.c.h.b16 %v7211
  %v8384 = vunpack.c.l.b16 %v7212
  %v8385 = vunpack.c.h.b16 %v7212
  %v8386 = vunpack.c.l.b16 %v7213
  %v8387 = vunpack.c.h.b16 %v7213
  %v8388 = vunpack.c.l.b16 %v7214
  %v8389 = vunpack.c.h.b16 %v7214
  %v8390 = vunpack.c.l.b16 %v7215
  %v8391 = vunpack.c.h.b16 %v7215
  %v8392 = vunpack.c.l.b16 %v7216
  %v8393 = vunpack.c.h.b16 %v7216
  %v8394 = vunpack.c.l.b16 %v7217
  %v8395 = vunpack.c.h.b16 %v7217
  %v8396 = vunpack.c.l.b16 %v7218
  %v8397 = vunpack.c.h.b16 %v7218
  %v8398 = vunpack.c.l.b16 %v7219
  %v8399 = vunpack.c.h.b16 %v7219
  %v8400 = vunpack.c.l.b16 %v7220
  %v8401 = vunpack.c.h.b16 %v7220
  %v8402 = vunpack.c.l.b16 %v7221
  %v8403 = vunpack.c.h.b16 %v7221
  %v8404 = vunpack.c.l.b16 %v7222
  %v8405 = vunpack.c.h.b16 %v7222
  %v8406 = vunpack.c.l.b16 %v7223
  %v8407 = vunpack.c.h.b16 %v7223
  %v8408 = vunpack.c.l.b16 %v7224
  %v8409 = vunpack.c.h.b16 %v7224
  %v8410 = vunpack.c.l.b16 %v7225
  %v8411 = vunpack.c.h.b16 %v7225
  %v8412 = vunpack.c.l.b16 %v7226
  %v8413 = vunpack.c.h.b16 %v7226
  %v8414 = vunpack.c.l.b16 %v7227
  %v8415 = vunpack.c.h.b16 %v7227
  %v8416 = vunpack.c.l.b16 %v7228
  %v8417 = vunpack.c.h.b16 %v7228
  %v8418 = vunpack.c.l.b16 %v7229
  %v8419 = vunpack.c.h.b16 %v7229
  %v8420 = vunpack.c.l.b16 %v7230
  %v8421 = vunpack.c.h.b16 %v7230
  %v8422 = vunpack.c.l.b16 %v7231
  %v8423 = vunpack.c.h.b16 %v7231
  %v8424 = vunpack.c.l.b16 %v7232
  %v8425 = vunpack.c.h.b16 %v7232
  %v8426 = vunpack.c.l.b16 %v7233
  %v8427 = vunpack.c.h.b16 %v7233
  %v8428 = vunpack.c.l.b16 %v7234
  %v8429 = vunpack.c.h.b16 %v7234
  %v8430 = vunpack.c.l.b16 %v7235
  %v8431 = vunpack.c.h.b16 %v7235
  %v8432 = vunpack.c.l.b16 %v7236
  %v8433 = vunpack.c.h.b16 %v7236
  %v8434 = vunpack.c.l.b16 %v7237
  %v8435 = vunpack.c.h.b16 %v7237
  %v8436 = vunpack.c.l.b16 %v7238
  %v8437 = vunpack.c.h.b16 %v7238
  %v8438 = vunpack.c.l.b16 %v7239
  %v8439 = vunpack.c.h.b16 %v7239
  %v8440 = vunpack.c.l.b16 %v7240
  %v8441 = vunpack.c.h.b16 %v7240
  %v8442 = vunpack.c.l.b16 %v7241
  %v8443 = vunpack.c.h.b16 %v7241
  %v8444 = vunpack.c.l.b16 %v7242
  %v8445 = vunpack.c.h.b16 %v7242
  %v8446 = vunpack.c.l.b16 %v7243
  %v8447 = vunpack.c.h.b16 %v7243
  %v8448 = vunpack.c.l.b16 %v7244
  %v8449 = vunpack.c.h.b16 %v7244
  %v8450 = vunpack.c.l.b16 %v7245
  %v8451 = vunpack.c.h.b16 %v7245
  %v8452 = vunpack.c.l.b16 %v7246
  %v8453 = vunpack.c.h.b16 %v7246
  %v8454 = vunpack.c.l.b16 %v7247
  %v8455 = vunpack.c.h.b16 %v7247
  %v8456 = vunpack.c.l.b16 %v7248
  %v8457 = vunpack.c.h.b16 %v7248
  %v8458 = vunpack.c.l.b16 %v7249
  %v8459 = vunpack.c.h.b16 %v7249
  %v8460 = vunpack.c.l.b16 %v7250
  %v8461 = vunpack.c.h.b16 %v7250
  %v8462 = vunpack.c.l.b16 %v7251
  %v8463 = vunpack.c.h.b16 %v7251
  %v8464 = vunpack.c.l.b16 %v7252
  %v8465 = vunpack.c.h.b16 %v7252
  %v8466 = vunpack.c.l.b16 %v7253
  %v8467 = vunpack.c.h.b16 %v7253
  %v8468 = vunpack.c.l.b16 %v7254
  %v8469 = vunpack.c.h.b16 %v7254
  %v8470 = vunpack.c.l.b16 %v7255
  %v8471 = vunpack.c.h.b16 %v7255
  %v8472 = vunpack.c.l.b16 %v7256
  %v8473 = vunpack.c.h.b16 %v7256
  %v8474 = vunpack.c.l.b16 %v7257
  %v8475 = vunpack.c.h.b16 %v7257
  %v8476 = vunpack.c.l.b16 %v7258
  %v8477 = vunpack.c.h.b16 %v7258
  %v8478 = vunpack.c.l.b16 %v7259
  %v8479 = vunpack.c.h.b16 %v7259
  %v8480 = vunpack.c.l.b16 %v7260
  %v8481 = vunpack.c.h.b16 %v7260
  %v8482 = vunpack.c.l.b16 %v7261
  %v8483 = vunpack.c.h.b16 %v7261
  %v8484 = vunpack.c.l.b16 %v7262
  %v8485 = vunpack.c.h.b16 %v7262
  %v8486 = vunpack.c.l.b16 %v7263
  %v8487 = vunpack.c.h.b16 %v7263
  %v8488 = vunpack.c.l.b16 %v7264
  %v8489 = vunpack.c.h.b16 %v7264
  %v8490 = vunpack.c.l.b16 %v7265
  %v8491 = vunpack.c.h.b16 %v7265
  %v8492 = vunpack.c.l.b16 %v7266
  %v8493 = vunpack.c.h.b16 %v7266
  %v8494 = vunpack.c.l.b16 %v7267
  %v8495 = vunpack.c.h.b16 %v7267
  %v8496 = vunpack.c.l.b16 %v7268
  %v8497 = vunpack.c.h.b16 %v7268
  %v8498 = vunpack.c.l.b16 %v7269
  %v8499 = vunpack.c.h.b16 %v7269
  %v8500 = vunpack.c.l.b16 %v7270
  %v8501 = vunpack.c.h.b16 %v7270
  %v8502 = vunpack.c.l.b16 %v7271
  %v8503 = vunpack.c.h.b16 %v7271
  %v8504 = vunpack.c.l.b16 %v7272
  %v8505 = vunpack.c.h.b16 %v7272
  %v8506 = vunpack.c.l.b16 %v7273
  %v8507 = vunpack.c.h.b16 %v7273
  %v8508 = vunpack.c.l.b16 %v7274
  %v8509 = vunpack.c.h.b16 %v7274
  %v8510 = vunpack.c.l.b16 %v7275
  %v8511 = vunpack.c.h.b16 %v7275
  %v8512 = vunpack.c.l.b16 %v7276
  %v8513 = vunpack.c.h.b16 %v7276
  %v8514 = vunpack.c.l.b16 %v7277
  %v8515 = vunpack.c.h.b16 %v7277
  %v8516 = vunpack.c.l.b16 %v7278
  %v8517 = vunpack.c.h.b16 %v7278
  %v8518 = vunpack.c.l.b16 %v7279
  %v8519 = vunpack.c.h.b16 %v7279
  %v8520 = vunpack.c.l.b16 %v7280
  %v8521 = vunpack.c.h.b16 %v7280
  %v8522 = vunpack.c.l.b16 %v7281
  %v8523 = vunpack.c.h.b16 %v7281
  %v8524 = vunpack.c.l.b16 %v7282
  %v8525 = vunpack.c.h.b16 %v7282
  %v8526 = vunpack.c.l.b16 %v7283
  %v8527 = vunpack.c.h.b16 %v7283
  %v8528 = vunpack.c.l.b16 %v7284
  %v8529 = vunpack.c.h.b16 %v7284
  %v8530 = vunpack.c.l.b16 %v7285
  %v8531 = vunpack.c.h.b16 %v7285
  %v8532 = vunpack.c.l.b16 %v7286
  %v8533 = vunpack.c.h.b16 %v7286
  %v8534 = vunpack.c.l.b16 %v7287
  %v8535 = vunpack.c.h.b16 %v7287
  %v8536 = vunpack.c.l.b16 %v7288
  %v8537 = vunpack.c.h.b16 %v7288
  %v8538 = vunpack.c.l.b16 %v7289
  %v8539 = vunpack.c.h.b16 %v7289
  %v8540 = vunpack.c.l.b16 %v7290
  %v8541 = vunpack.c.h.b16 %v7290
  %v8542 = vunpack.c.l.b16 %v7291
  %v8543 = vunpack.c.h.b16 %v7291
  %v8544 = vunpack.c.l.b16 %v7292
  %v8545 = vunpack.c.h.b16 %v7292
  %v8546 = vunpack.c.l.b16 %v7293
  %v8547 = vunpack.c.h.b16 %v7293
  %v8548 = vunpack.c.l.b16 %v7294
  %v8549 = vunpack.c.h.b16 %v7294
  %v8550 = vunpack.c.l.b16 %v7295
  %v8551 = vunpack.c.h.b16 %v7295
  %v8552 = vunpack.c.l.b16 %v7296
  %v8553 = vunpack.c.h.b16 %v7296
  %v8554 = vunpack.c.l.b16 %v7297
  %v8555 = vunpack.c.h.b16 %v7297
  %v8556 = vunpack.c.l.b16 %v7298
  %v8557 = vunpack.c.h.b16 %v7298
  %v8558 = vunpack.c.l.b16 %v7299
  %v8559 = vunpack.c.h.b16 %v7299
  %v8560 = vunpack.c.l.b16 %v7300
  %v8561 = vunpack.c.h.b16 %v7300
  %v8562 = vunpack.c.l.b16 %v7301
  %v8563 = vunpack.c.h.b16 %v7301
  %v8564 = vunpack.c.l.b16 %v7302
  %v8565 = vunpack.c.h.b16 %v7302
  %v8566 = vunpack.c.l.b16 %v7303
  %v8567 = vunpack.c.h.b16 %v7303
  %v8568 = vunpack.c.l.b16 %v7304
  %v8569 = vunpack.c.h.b16 %v7304
  %v8570 = vunpack.c.l.b16 %v7305
  %v8571 = vunpack.c.h.b16 %v7305
  %v8572 = vunpack.c.l.b16 %v7306
  %v8573 = vunpack.c.h.b16 %v7306
  %v8574 = vunpack.c.l.b16 %v7307
  %v8575 = vunpack.c.h.b16 %v7307
  %v8576 = vunpack.c.l.b16 %v7308
  %v8577 = vunpack.c.h.b16 %v7308
  %v8578 = vunpack.c.l.b16 %v7309
  %v8579 = vunpack.c.h.b16 %v7309
  %v8580 = vunpack.c.l.b16 %v7310
  %v8581 = vunpack.c.h.b16 %v7310
  %v8582 = vunpack.c.l.b16 %v7311
  %v8583 = vunpack.c.h.b16 %v7311
  %v8584 = vunpack.c.l.b16 %v7312
  %v8585 = vunpack.c.h.b16 %v7312
  %v8586 = vunpack.c.l.b16 %v7313
  %v8587 = vunpack.c.h.b16 %v7313
  %v8588 = vunpack.c.l.b16 %v7314
  %v8589 = vunpack.c.h.b16 %v7314
  %v8590 = vunpack.c.l.b16 %v7315
  %v8591 = vunpack.c.h.b16 %v7315
  %v8592 = vunpack.c.l.b16 %v7316
  %v8593 = vunpack.c.h.b16 %v7316
  %v8594 = vunpack.c.l.b16 %v7317
  %v8595 = vunpack.c.h.b16 %v7317
  %v8596 = vunpack.c.l.b16 %v7318
  %v8597 = vunpack.c.h.b16 %v7318
  %v8598 = vunpack.c.l.b16 %v7319
  %v8599 = vunpack.c.h.b16 %v7319
  %v8600 = vunpack.c.l.b16 %v7320
  %v8601 = vunpack.c.h.b16 %v7320
  %v8602 = vunpack.c.l.b16 %v7321
  %v8603 = vunpack.c.h.b16 %v7321
  %v8604 = vunpack.c.l.b16 %v7322
  %v8605 = vunpack.c.h.b16 %v7322
  %v8606 = vunpack.c.l.b16 %v7323
  %v8607 = vunpack.c.h.b16 %v7323
  %v8608 = vunpack.c.l.b16 %v7324
  %v8609 = vunpack.c.h.b16 %v7324
  %v8610 = vunpack.c.l.b16 %v7325
  %v8611 = vunpack.c.h.b16 %v7325
  %v8612 = vunpack.c.l.b16 %v7326
  %v8613 = vunpack.c.h.b16 %v7326
  %v8614 = vunpack.c.l.b16 %v7327
  %v8615 = vunpack.c.h.b16 %v7327
  %v8616 = vunpack.c.l.b16 %v7328
  %v8617 = vunpack.c.h.b16 %v7328
  %v8618 = vunpack.c.l.b16 %v7329
  %v8619 = vunpack.c.h.b16 %v7329
  %v8620 = vunpack.c.l.b16 %v7330
  %v8621 = vunpack.c.h.b16 %v7330
  %v8622 = vunpack.c.l.b16 %v7331
  %v8623 = vunpack.c.h.b16 %v7331
  %v8624 = vpack.c.b16 %v7790, %v7784
  %v8625 = vpack.c.b16 %v7791, %v7785
  %v8626 = vpack.c.b16 %v7792, %v7786
  %v8627 = vpack.c.b16 %v7793, %v7787
  %v8628 = vpack.c.b16 %v7794, %v7788
  %v8629 = vpack.c.b16 %v7795, %v7789
  %v8630 = vpack.c.b16 %v7802, %v7796
  %v8631 = vpack.c.b16 %v7803, %v7797
  %v8632 = vpack.c.b16 %v7804, %v7798
  %v8633 = vpack.c.b16 %v7805, %v7799
  %v8634 = vpack.c.b16 %v7806, %v7800
  %v8635 = vpack.c.b16 %v7807, %v7801
  %v8636 = vpack.c.b16 %v7814, %v7808
  %v8637 = vpack.c.b16 %v7815, %v7809
  %v8638 = vpack.c.b16 %v7816, %v7810
  %v8639 = vpack.c.b16 %v7817, %v7811
  %v8640 = vpack.c.b16 %v7818, %v7812
  %v8641 = vpack.c.b16 %v7819, %v7813
  %v8642 = vpack.c.b16 %v7826, %v7820
  %v8643 = vpack.c.b16 %v7827, %v7821
  %v8644 = vpack.c.b16 %v7828, %v7822
  %v8645 = vpack.c.b16 %v7829, %v7823
  %v8646 = vpack.c.b16 %v7830, %v7824
  %v8647 = vpack.c.b16 %v7831, %v7825
  %v8648 = vpack.c.b16 %v7838, %v7832
  %v8649 = vpack.c.b16 %v7839, %v7833
  %v8650 = vpack.c.b16 %v7840, %v7834
  %v8651 = vpack.c.b16 %v7841, %v7835
  %v8652 = vpack.c.b16 %v7842, %v7836
  %v8653 = vpack.c.b16 %v7843, %v7837
  %v8654 = vpack.c.b16 %v7850, %v7844
  %v8655 = vpack.c.b16 %v7851, %v7845
  %v8656 = vpack.c.b16 %v7852, %v7846
  %v8657 = vpack.c.b16 %v7853, %v7847
  %v8658 = vpack.c.b16 %v7854, %v7848
  %v8659 = vpack.c.b16 %v7855, %v7849
  %v8660 = vpack.c.b16 %v7862, %v7856
  %v8661 = vpack.c.b16 %v7863, %v7857
  %v8662 = vpack.c.b16 %v7864, %v7858
  %v8663 = vpack.c.b16 %v7865, %v7859
  %v8664 = vpack.c.b16 %v7866, %v7860
  %v8665 = vpack.c.b16 %v7867, %v7861
  %v8666 = vpack.c.b16 %v7874, %v7868
  %v8667 = vpack.c.b16 %v7875, %v7869
  %v8668 = vpack.c.b16 %v7876, %v7870
  %v8669 = vpack.c.b16 %v7877, %v7871
  %v8670 = vpack.c.b16 %v7878, %v7872
  %v8671 = vpack.c.b16 %v7879, %v7873
  %v8672 = vpack.c.b16 %v7886, %v7880
  %v8673 = vpack.c.b16 %v7887, %v7881
  %v8674 = vpack.c.b16 %v7888, %v7882
  %v8675 = vpack.c.b16 %v7889, %v7883
  %v8676 = vpack.c.b16 %v7890, %v7884
  %v8677 = vpack.c.b16 %v7891, %v7885
  %v8678 = vpack.c.b16 %v7898, %v7892
  %v8679 = vpack.c.b16 %v7899, %v7893
  %v8680 = vpack.c.b16 %v7900, %v7894
  %v8681 = vpack.c.b16 %v7901, %v7895
  %v8682 = vpack.c.b16 %v7902, %v7896
  %v8683 = vpack.c.b16 %v7903, %v7897
  %v8684 = vpack.c.b16 %v7910, %v7904
  %v8685 = vpack.c.b16 %v7911, %v7905
  %v8686 = vpack.c.b16 %v7912, %v7906
  %v8687 = vpack.c.b16 %v7913, %v7907
  %v8688 = vpack.c.b16 %v7914, %v7908
  %v8689 = vpack.c.b16 %v7915, %v7909
  %v8690 = vpack.c.b16 %v7922, %v7916
  %v8691 = vpack.c.b16 %v7923, %v7917
  %v8692 = vpack.c.b16 %v7924, %v7918
  %v8693 = vpack.c.b16 %v7925, %v7919
  %v8694 = vpack.c.b16 %v7926, %v7920
  %v8695 = vpack.c.b16 %v7927, %v7921
  %v8696 = vpack.c.b16 %v7934, %v7928
  %v8697 = vpack.c.b16 %v7935, %v7929
  %v8698 = vpack.c.b16 %v7936, %v7930
  %v8699 = vpack.c.b16 %v7937, %v7931
  %v8700 = vpack.c.b16 %v7938, %v7932
  %v8701 = vpack.c.b16 %v7939, %v7933
  %v8702 = vpack.c.b16 %v7946, %v7940
  %v8703 = vpack.c.b16 %v7947, %v7941
  %v8704 = vpack.c.b16 %v7948, %v7942
  %v8705 = vpack.c.b16 %v7949, %v7943
  %v8706 = vpack.c.b16 %v7950, %v7944
  %v8707 = vpack.c.b16 %v7951, %v7945
  %v8708 = vpack.c.b16 %v7958, %v7952
  %v8709 = vpack.c.b16 %v7959, %v7953
  %v8710 = vpack.c.b16 %v7960, %v7954
  %v8711 = vpack.c.b16 %v7961, %v7955
  %v8712 = vpack.c.b16 %v7962, %v7956
  %v8713 = vpack.c.b16 %v7963, %v7957
  %v8714 = vpack.c.b16 %v7970, %v7964
  %v8715 = vpack.c.b16 %v7971, %v7965
  %v8716 = vpack.c.b16 %v7972, %v7966
  %v8717 = vpack.c.b16 %v7973, %v7967
  %v8718 = vpack.c.b16 %v7974, %v7968
  %v8719 = vpack.c.b16 %v7975, %v7969
  %v8720 = vpack.c.b16 %v7982, %v7976
  %v8721 = vpack.c.b16 %v7983, %v7977
  %v8722 = vpack.c.b16 %v7984, %v7978
  %v8723 = vpack.c.b16 %v7985, %v7979
  %v8724 = vpack.c.b16 %v7986, %v7980
  %v8725 = vpack.c.b16 %v7987, %v7981
  %v8726 = vpack.c.b16 %v7994, %v7988
  %v8727 = vpack.c.b16 %v7995, %v7989
  %v8728 = vpack.c.b16 %v7996, %v7990
  %v8729 = vpack.c.b16 %v7997, %v7991
  %v8730 = vpack.c.b16 %v7998, %v7992
  %v8731 = vpack.c.b16 %v7999, %v7993
  %v8732 = vpack.c.b16 %v8006, %v8000
  %v8733 = vpack.c.b16 %v8007, %v8001
  %v8734 = vpack.c.b16 %v8008, %v8002
  %v8735 = vpack.c.b16 %v8009, %v8003
  %v8736 = vpack.c.b16 %v8010, %v8004
  %v8737 = vpack.c.b16 %v8011, %v8005
  %v8738 = vpack.c.b16 %v8018, %v8012
  %v8739 = vpack.c.b16 %v8019, %v8013
  %v8740 = vpack.c.b16 %v8020, %v8014
  %v8741 = vpack.c.b16 %v8021, %v8015
  %v8742 = vpack.c.b16 %v8022, %v8016
  %v8743 = vpack.c.b16 %v8023, %v8017
  %v8744 = vpack.c.b16 %v8030, %v8024
  %v8745 = vpack.c.b16 %v8031, %v8025
  %v8746 = vpack.c.b16 %v8032, %v8026
  %v8747 = vpack.c.b16 %v8033, %v8027
  %v8748 = vpack.c.b16 %v8034, %v8028
  %v8749 = vpack.c.b16 %v8035, %v8029
  %v8750 = vpack.c.b16 %v8042, %v8036
  %v8751 = vpack.c.b16 %v8043, %v8037
  %v8752 = vpack.c.b16 %v8044, %v8038
  %v8753 = vpack.c.b16 %v8045, %v8039
  %v8754 = vpack.c.b16 %v8046, %v8040
  %v8755 = vpack.c.b16 %v8047, %v8041
  %v8756 = vpack.c.b16 %v8054, %v8048
  %v8757 = vpack.c.b16 %v8055, %v8049
  %v8758 = vpack.c.b16 %v8056, %v8050
  %v8759 = vpack.c.b16 %v8057, %v8051
  %v8760 = vpack.c.b16 %v8058, %v8052
  %v8761 = vpack.c.b16 %v8059, %v8053
  %v8762 = vpack.c.b16 %v8066, %v8060
  %v8763 = vpack.c.b16 %v8067, %v8061
  %v8764 = vpack.c.b16 %v8068, %v8062
  %v8765 = vpack.c.b16 %v8069, %v8063
  %v8766 = vpack.c.b16 %v8070, %v8064
  %v8767 = vpack.c.b16 %v8071, %v8065
  %v8768 = vpack.c.b16 %v8078, %v8072
  %v8769 = vpack.c.b16 %v8079, %v8073
  %v8770 = vpack.c.b16 %v8080, %v8074
  %v8771 = vpack.c.b16 %v8081, %v8075
  %v8772 = vpack.c.b16 %v8082, %v8076
  %v8773 = vpack.c.b16 %v8083, %v8077
  %v8774 = vpack.c.b16 %v8090, %v8084
  %v8775 = vpack.c.b16 %v8091, %v8085
  %v8776 = vpack.c.b16 %v8092, %v8086
  %v8777 = vpack.c.b16 %v8093, %v8087
  %v8778 = vpack.c.b16 %v8094, %v8088
  %v8779 = vpack.c.b16 %v8095, %v8089
  %v8780 = vpack.c.b16 %v8102, %v8096
  %v8781 = vpack.c.b16 %v8103, %v8097
  %v8782 = vpack.c.b16 %v8104, %v8098
  %v8783 = vpack.c.b16 %v8105, %v8099
  %v8784 = vpack.c.b16 %v8106, %v8100
  %v8785 = vpack.c.b16 %v8107, %v8101
  %v8786 = vpack.c.b16 %v8114, %v8108
  %v8787 = vpack.c.b16 %v8115, %v8109
  %v8788 = vpack.c.b16 %v8116, %v8110
  %v8789 = vpack.c.b16 %v8117, %v8111
  %v8790 = vpack.c.b16 %v8118, %v8112
  %v8791 = vpack.c.b16 %v8119, %v8113
  %v8792 = vpack.c.b16 %v8126, %v8120
  %v8793 = vpack.c.b16 %v8127, %v8121
  %v8794 = vpack.c.b16 %v8128, %v8122
  %v8795 = vpack.c.b16 %v8129, %v8123
  %v8796 = vpack.c.b16 %v8130, %v8124
  %v8797 = vpack.c.b16 %v8131, %v8125
  %v8798 = vpack.c.b16 %v8138, %v8132
  %v8799 = vpack.c.b16 %v8139, %v8133
  %v8800 = vpack.c.b16 %v8140, %v8134
  %v8801 = vpack.c.b16 %v8141, %v8135
  %v8802 = vpack.c.b16 %v8142, %v8136
  %v8803 = vpack.c.b16 %v8143, %v8137
  %v8804 = vpack.c.b16 %v8150, %v8144
  %v8805 = vpack.c.b16 %v8151, %v8145
  %v8806 = vpack.c.b16 %v8152, %v8146
  %v8807 = vpack.c.b16 %v8153, %v8147
  %v8808 = vpack.c.b16 %v8154, %v8148
  %v8809 = vpack.c.b16 %v8155, %v8149
  %v8810 = vpack.c.b16 %v8162, %v8156
  %v8811 = vpack.c.b16 %v8163, %v8157
  %v8812 = vpack.c.b16 %v8164, %v8158
  %v8813 = vpack.c.b16 %v8165, %v8159
  %v8814 = vpack.c.b16 %v8166, %v8160
  %v8815 = vpack.c.b16 %v8167, %v8161
  %v8816 = vpack.c.b16 %v8174, %v8168
  %v8817 = vpack.c.b16 %v8175, %v8169
  %v8818 = vpack.c.b16 %v8176, %v8170
  %v8819 = vpack.c.b16 %v8177, %v8171
  %v8820 = vpack.c.b16 %v8178, %v8172
  %v8821 = vpack.c.b16 %v8179, %v8173
  %v8822 = vpack.c.b16 %v8186, %v8180
  %v8823 = vpack.c.b16 %v8187, %v8181
  %v8824 = vpack.c.b16 %v8188, %v8182
  %v8825 = vpack.c.b16 %v8189, %v8183
  %v8826 = vpack.c.b16 %v8190, %v8184
  %v8827 = vpack.c.b16 %v8191, %v8185
  %v8828 = vpack.c.b16 %v8198, %v8192
  %v8829 = vpack.c.b16 %v8199, %v8193
  %v8830 = vpack.c.b16 %v8200, %v8194
  %v8831 = vpack.c.b16 %v8201, %v8195
  %v8832 = vpack.c.b16 %v8202, %v8196
  %v8833 = vpack.c.b16 %v8203, %v8197
  %v8834 = vpack.c.b16 %v8210, %v8204
  %v8835 = vpack.c.b16 %v8211, %v8205
  %v8836 = vpack.c.b16 %v8212, %v8206
  %v8837 = vpack.c.b16 %v8213, %v8207
  %v8838 = vpack.c.b16 %v8214, %v8208
  %v8839 = vpack.c.b16 %v8215, %v8209
  %v8840 = vpack.c.b16 %v8222, %v8216
  %v8841 = vpack.c.b16 %v8223, %v8217
  %v8842 = vpack.c.b16 %v8224, %v8218
  %v8843 = vpack.c.b16 %v8225, %v8219
  %v8844 = vpack.c.b16 %v8226, %v8220
  %v8845 = vpack.c.b16 %v8227, %v8221
  %v8846 = vpack.c.b16 %v8234, %v8228
  %v8847 = vpack.c.b16 %v8235, %v8229
  %v8848 = vpack.c.b16 %v8236, %v8230
  %v8849 = vpack.c.b16 %v8237, %v8231
  %v8850 = vpack.c.b16 %v8238, %v8232
  %v8851 = vpack.c.b16 %v8239, %v8233
  %v8852 = vpack.c.b16 %v8246, %v8240
  %v8853 = vpack.c.b16 %v8247, %v8241
  %v8854 = vpack.c.b16 %v8248, %v8242
  %v8855 = vpack.c.b16 %v8249, %v8243
  %v8856 = vpack.c.b16 %v8250, %v8244
  %v8857 = vpack.c.b16 %v8251, %v8245
  %v8858 = vpack.c.b16 %v8258, %v8252
  %v8859 = vpack.c.b16 %v8259, %v8253
  %v8860 = vpack.c.b16 %v8260, %v8254
  %v8861 = vpack.c.b16 %v8261, %v8255
  %v8862 = vpack.c.b16 %v8262, %v8256
  %v8863 = vpack.c.b16 %v8263, %v8257
  %v8864 = vpack.c.b16 %v8270, %v8264
  %v8865 = vpack.c.b16 %v8271, %v8265
  %v8866 = vpack.c.b16 %v8272, %v8266
  %v8867 = vpack.c.b16 %v8273, %v8267
  %v8868 = vpack.c.b16 %v8274, %v8268
  %v8869 = vpack.c.b16 %v8275, %v8269
  %v8870 = vpack.c.b16 %v8282, %v8276
  %v8871 = vpack.c.b16 %v8283, %v8277
  %v8872 = vpack.c.b16 %v8284, %v8278
  %v8873 = vpack.c.b16 %v8285, %v8279
  %v8874 = vpack.c.b16 %v8286, %v8280
  %v8875 = vpack.c.b16 %v8287, %v8281
  %v8876 = vpack.c.b16 %v8294, %v8288
  %v8877 = vpack.c.b16 %v8295, %v8289
  %v8878 = vpack.c.b16 %v8296, %v8290
  %v8879 = vpack.c.b16 %v8297, %v8291
  %v8880 = vpack.c.b16 %v8298, %v8292
  %v8881 = vpack.c.b16 %v8299, %v8293
  %v8882 = vpack.c.b16 %v8306, %v8300
  %v8883 = vpack.c.b16 %v8307, %v8301
  %v8884 = vpack.c.b16 %v8308, %v8302
  %v8885 = vpack.c.b16 %v8309, %v8303
  %v8886 = vpack.c.b16 %v8310, %v8304
  %v8887 = vpack.c.b16 %v8311, %v8305
  %v8888 = vpack.c.b16 %v8318, %v8312
  %v8889 = vpack.c.b16 %v8319, %v8313
  %v8890 = vpack.c.b16 %v8320, %v8314
  %v8891 = vpack.c.b16 %v8321, %v8315
  %v8892 = vpack.c.b16 %v8322, %v8316
  %v8893 = vpack.c.b16 %v8323, %v8317
  %v8894 = vpack.c.b16 %v8330, %v8324
  %v8895 = vpack.c.b16 %v8331, %v8325
  %v8896 = vpack.c.b16 %v8332, %v8326
  %v8897 = vpack.c.b16 %v8333, %v8327
  %v8898 = vpack.c.b16 %v8334, %v8328
  %v8899 = vpack.c.b16 %v8335, %v8329
  %v8900 = vpack.c.b16 %v8342, %v8336
  %v8901 = vpack.c.b16 %v8343, %v8337
  %v8902 = vpack.c.b16 %v8344, %v8338
  %v8903 = vpack.c.b16 %v8345, %v8339
  %v8904 = vpack.c.b16 %v8346, %v8340
  %v8905 = vpack.c.b16 %v8347, %v8341
  %v8906 = vpack.c.b16 %v8354, %v8348
  %v8907 = vpack.c.b16 %v8355, %v8349
  %v8908 = vpack.c.b16 %v8356, %v8350
  %v8909 = vpack.c.b16 %v8357, %v8351
  %v8910 = vpack.c.b16 %v8358, %v8352
  %v8911 = vpack.c.b16 %v8359, %v8353
  %v8912 = vpack.c.b16 %v8366, %v8360
  %v8913 = vpack.c.b16 %v8367, %v8361
  %v8914 = vpack.c.b16 %v8368, %v8362
  %v8915 = vpack.c.b16 %v8369, %v8363
  %v8916 = vpack.c.b16 %v8370, %v8364
  %v8917 = vpack.c.b16 %v8371, %v8365
  %v8918 = vpack.c.b16 %v8378, %v8372
  %v8919 = vpack.c.b16 %v8379, %v8373
  %v8920 = vpack.c.b16 %v8380, %v8374
  %v8921 = vpack.c.b16 %v8381, %v8375
  %v8922 = vpack.c.b16 %v8382, %v8376
  %v8923 = vpack.c.b16 %v8383, %v8377
  %v8924 = vpack.c.b16 %v8390, %v8384
  %v8925 = vpack.c.b16 %v8391, %v8385
  %v8926 = vpack.c.b16 %v8392, %v8386
  %v8927 = vpack.c.b16 %v8393, %v8387
  %v8928 = vpack.c.b16 %v8394, %v8388
  %v8929 = vpack.c.b16 %v8395, %v8389
  %v8930 = vpack.c.b16 %v8402, %v8396
  %v8931 = vpack.c.b16 %v8403, %v8397
  %v8932 = vpack.c.b16 %v8404, %v8398
  %v8933 = vpack.c.b16 %v8405, %v8399
  %v8934 = vpack.c.b16 %v8406, %v8400
  %v8935 = vpack.c.b16 %v8407, %v8401
  %v8936 = vpack.c.b16 %v8414, %v8408
  %v8937 = vpack.c.b16 %v8415, %v8409
  %v8938 = vpack.c.b16 %v8416, %v8410
  %v8939 = vpack.c.b16 %v8417, %v8411
  %v8940 = vpack.c.b16 %v8418, %v8412
  %v8941 = vpack.c.b16 %v8419, %v8413
  %v8942 = vpack.c.b16 %v8426, %v8420
  %v8943 = vpack.c.b16 %v8427, %v8421
  %v8944 = vpack.c.b16 %v8428, %v8422
  %v8945 = vpack.c.b16 %v8429, %v8423
  %v8946 = vpack.c.b16 %v8430, %v8424
  %v8947 = vpack.c.b16 %v8431, %v8425
  %v8948 = vpack.c.b16 %v8438, %v8432
  %v8949 = vpack.c.b16 %v8439, %v8433
  %v8950 = vpack.c.b16 %v8440, %v8434
  %v8951 = vpack.c.b16 %v8441, %v8435
  %v8952 = vpack.c.b16 %v8442, %v8436
  %v8953 = vpack.c.b16 %v8443, %v8437
  %v8954 = vpack.c.b16 %v8450, %v8444
  %v8955 = vpack.c.b16 %v8451, %v8445
  %v8956 = vpack.c.b16 %v8452, %v8446
  %v8957 = vpack.c.b16 %v8453, %v8447
  %v8958 = vpack.c.b16 %v8454, %v8448
  %v8959 = vpack.c.b16 %v8455, %v8449
  %v8960 = vpack.c.b16 %v8462, %v8456
  %v8961 = vpack.c.b16 %v8463, %v8457
  %v8962 = vpack.c.b16 %v8464, %v8458
  %v8963 = vpack.c.b16 %v8465, %v8459
  %v8964 = vpack.c.b16 %v8466, %v8460
  %v8965 = vpack.c.b16 %v8467, %v8461
  %v8966 = vpack.c.b16 %v8474, %v8468
  %v8967 = vpack.c.b16 %v8475, %v8469
  %v8968 = vpack.c.b16 %v8476, %v8470
  %v8969 = vpack.c.b16 %v8477, %v8471
  %v8970 = vpack.c.b16 %v8478, %v8472
  %v8971 = vpack.c.b16 %v8479, %v8473
  %v8972 = vpack.c.b16 %v8486, %v8480
  %v8973 = vpack.c.b16 %v8487, %v8481
  %v8974 = vpack.c.b16 %v8488, %v8482
  %v8975 = vpack.c.b16 %v8489, %v8483
  %v8976 = vpack.c.b16 %v8490, %v8484
  %v8977 = vpack.c.b16 %v8491, %v8485
  %v8978 = vpack.c.b16 %v8498, %v8492
  %v8979 = vpack.c.b16 %v8499, %v8493
  %v8980 = vpack.c.b16 %v8500, %v8494
  %v8981 = vpack.c.b16 %v8501, %v8495
  %v8982 = vpack.c.b16 %v8502, %v8496
  %v8983 = vpack.c.b16 %v8503, %v8497
  %v8984 = vpack.c.b16 %v8510, %v8504
  %v8985 = vpack.c.b16 %v8511, %v8505
  %v8986 = vpack.c.b16 %v8512, %v8506
  %v8987 = vpack.c.b16 %v8513, %v8507
  %v8988 = vpack.c.b16 %v8514, %v8508
  %v8989 = vpack.c.b16 %v8515, %v8509
  %v8990 = vpack.c.b16 %v8522, %v8516
  %v8991 = vpack.c.b16 %v8523, %v8517
  %v8992 = vpack.c.b16 %v8524, %v8518
  %v8993 = vpack.c.b16 %v8525, %v8519
  %v8994 = vpack.c.b16 %v8526, %v8520
  %v8995 = vpack.c.b16 %v8527, %v8521
  %v8996 = vpack.c.b16 %v8534, %v8528
  %v8997 = vpack.c.b16 %v8535, %v8529
  %v8998 = vpack.c.b16 %v8536, %v8530
  %v8999 = vpack.c.b16 %v8537, %v8531
  %v9000 = vpack.c.b16 %v8538, %v8532
  %v9001 = vpack.c.b16 %v8539, %v8533
  %v9002 = vpack.c.b16 %v8546, %v8540
  %v9003 = vpack.c.b16 %v8547, %v8541
  %v9004 = vpack.c.b16 %v8548, %v8542
  %v9005 = vpack.c.b16 %v8549, %v8543
  %v9006 = vpack.c.b16 %v8550, %v8544
  %v9007 = vpack.c.b16 %v8551, %v8545
  %v9008 = vpack.c.b16 %v8558, %v8552
  %v9009 = vpack.c.b16 %v8559, %v8553
  %v9010 = vpack.c.b16 %v8560, %v8554
  %v9011 = vpack.c.b16 %v8561, %v8555
  %v9012 = vpack.c.b16 %v8562, %v8556
  %v9013 = vpack.c.b16 %v8563, %v8557
  %v9014 = vpack.c.b16 %v8570, %v8564
  %v9015 = vpack.c.b16 %v8571, %v8565
  %v9016 = vpack.c.b16 %v8572, %v8566
  %v9017 = vpack.c.b16 %v8573, %v8567
  %v9018 = vpack.c.b16 %v8574, %v8568
  %v9019 = vpack.c.b16 %v8575, %v8569
  %v9020 = vpack.c.b16 %v8582, %v8576
  %v9021 = vpack.c.b16 %v8583, %v8577
  %v9022 = vpack.c.b16 %v8584, %v8578
  %v9023 = vpack.c.b16 %v8585, %v8579
  %v9024 = vpack.c.b16 %v8586, %v8580
  %v9025 = vpack.c.b16 %v8587, %v8581
  %v9026 = vpack.c.b16 %v8594, %v8588
  %v9027 = vpack.c.b16 %v8595, %v8589
  %v9028 = vpack.c.b16 %v8596, %v8590
  %v9029 = vpack.c.b16 %v8597, %v8591
  %v9030 = vpack.c.b16 %v8598, %v8592
  %v9031 = vpack.c.b16 %v8599, %v8593
  %v9032 = vpack.c.b16 %v8606, %v8600
  %v9033 = vpack.c.b16 %v8607, %v8601
  %v9034 = vpack.c.b16 %v8608, %v8602
  %v9035 = vpack.c.b16 %v8609, %v8603
  %v9036 = vpack.c.b16 %v8610, %v8604
  %v9037 = vpack.c.b16 %v8611, %v8605
  %v9038 = vpack.c.b16 %v8618, %v8612
  %v9039 = vpack.c.b16 %v8619, %v8613
  %v9040 = vpack.c.b16 %v8620, %v8614
  %v9041 = vpack.c.b16 %v8621, %v8615
  %v9042 = vpack.c.b16 %v8622, %v8616
  %v9043 = vpack.c.b16 %v8623, %v8617
  %vm9464 = vcmask 785408
  %v9466 = vsel %vm9464, %v6902, 0
  %v9469 = vsel %vm9464, %v6911, 0
  %9471 = vmatprep.subr.bf16.mxu0 %v8625
  %9472 = vmatpush1.bf16.msra.mxu0 %v8624
  %9473 = vmatprep.subr.bf16.mxu0 %v8631
  %9474 = vmatpush1.bf16.msra.mxu0 %v8630
  %9475 = vmatprep.subr.bf16.mxu0 %v8637
  %9476 = vmatpush1.bf16.msra.mxu0 %v8636
  %9477 = vmatprep.subr.bf16.mxu0 %v8643
  %9478 = vmatpush1.bf16.msra.mxu0 %v8642
  %9479 = vmatprep.subr.bf16.mxu0 %v8649
  %9480 = vmatpush1.bf16.msra.mxu0 %v8648
  %9481 = vmatprep.subr.bf16.mxu0 %v8655
  %9482 = vmatpush1.bf16.msra.mxu0 %v8654
  %9483 = vmatprep.subr.bf16.mxu0 %v8661
  %9484 = vmatpush1.bf16.msra.mxu0 %v8660
  %9485 = vmatprep.subr.bf16.mxu0 %v8667
  %9486 = vmatpush1.bf16.msra.mxu0 %v8666
  %9487 = vmatprep.subr.bf16.mxu0 %v8673
  %9488 = vmatpush1.bf16.msra.mxu0 %v8672
  %9489 = vmatprep.subr.bf16.mxu0 %v8679
  %9490 = vmatpush1.bf16.msra.mxu0 %v8678
  %9491 = vmatprep.subr.bf16.mxu0 %v8685
  %9492 = vmatpush1.bf16.msra.mxu0 %v8684
  %9493 = vmatprep.subr.bf16.mxu0 %v8691
  %9494 = vmatpush1.bf16.msra.mxu0 %v8690
  %9495 = vmatprep.subr.bf16.mxu0 %v8697
  %9496 = vmatpush1.bf16.msra.mxu0 %v8696
  %9497 = vmatprep.subr.bf16.mxu0 %v8703
  %9498 = vmatpush1.bf16.msra.mxu0 %v8702
  %9499 = vmatprep.subr.bf16.mxu0 %v8709
  %9500 = vmatpush1.bf16.msra.mxu0 %v8708
  %9501 = vmatprep.subr.bf16.mxu0 %v8715
  %9502 = vmatpush1.bf16.msra.mxu0 %v8714
  %9503 = vmatprep.mubr.bf16.mxu0 %v6895
  %9504 = vmatmul.mubr.bf16.gmra.mrb[0].mxu0 %v6894
  %v9505 = vpop.f32.mrb[0].mxu0
  %v9506 = vadd.f32 %v7337, %v9505
  %v9507 = vpop.f32.mrb[0].mxu0
  %v9508 = vadd.f32 %v7341, %v9507
  %v9509 = vpop.f32.mrb[0].mxu0
  %v9510 = vadd.f32 %v7337, %v9509
  %v9511 = vpop.f32.mrb[0].mxu0
  %v9512 = vadd.f32 %v7341, %v9511
  %9513 = vmatprep.mubr.bf16.mxu0 %v6904
  %9514 = vmatmul.mubr.bf16.gmra.mrb[0].mxu0 %v6903
  %v9515 = vpop.f32.mrb[0].mxu0
  %v9516 = vadd.f32 %v7337, %v9515
  %v9517 = vpop.f32.mrb[0].mxu0
  %v9518 = vadd.f32 %v7341, %v9517
  %v9519 = vpop.f32.mrb[0].mxu0
  %v9520 = vpop.f32.mrb[0].mxu0
  %9521 = vdwg.mxu0
  %9522 = vmatprep.subr.bf16.mxu0 %v8721
  %9523 = vmatpush1.bf16.msra.mxu0 %v8720
  %9524 = vmatprep.subr.bf16.mxu0 %v8727
  %9525 = vmatpush1.bf16.msra.mxu0 %v8726
  %9526 = vmatprep.subr.bf16.mxu0 %v8733
  %9527 = vmatpush1.bf16.msra.mxu0 %v8732
  %9528 = vmatprep.subr.bf16.mxu0 %v8739
  %9529 = vmatpush1.bf16.msra.mxu0 %v8738
  %9530 = vmatprep.subr.bf16.mxu0 %v8745
  %9531 = vmatpush1.bf16.msra.mxu0 %v8744
  %9532 = vmatprep.subr.bf16.mxu0 %v8751
  %9533 = vmatpush1.bf16.msra.mxu0 %v8750
  %9534 = vmatprep.subr.bf16.mxu0 %v8757
  %9535 = vmatpush1.bf16.msra.mxu0 %v8756
  %9536 = vmatprep.subr.bf16.mxu0 %v8763
  %9537 = vmatpush1.bf16.msra.mxu0 %v8762
  %9538 = vmatprep.subr.bf16.mxu0 %v8769
  %9539 = vmatpush1.bf16.msra.mxu0 %v8768
  %9540 = vmatprep.subr.bf16.mxu0 %v8775
  %9541 = vmatpush1.bf16.msra.mxu0 %v8774
  %9542 = vmatprep.subr.bf16.mxu0 %v8781
  %9543 = vmatpush1.bf16.msra.mxu0 %v8780
  %9544 = vmatprep.subr.bf16.mxu0 %v8787
  %9545 = vmatpush1.bf16.msra.mxu0 %v8786
  %9546 = vmatprep.subr.bf16.mxu0 %v8793
  %9547 = vmatpush1.bf16.msra.mxu0 %v8792
  %9548 = vmatprep.subr.bf16.mxu0 %v8799
  %9549 = vmatpush1.bf16.msra.mxu0 %v8798
  %9550 = vmatprep.subr.bf16.mxu0 %v8805
  %9551 = vmatpush1.bf16.msra.mxu0 %v8804
  %9552 = vmatprep.subr.bf16.mxu0 %v8811
  %9553 = vmatpush1.bf16.msra.mxu0 %v8810
  %9554 = vmatprep.mubr.bf16.mxu0 %v6897
  %9555 = vmatmul.mubr.bf16.gmra.mrb[0].mxu0 %v6896
  %v9556 = vpop.f32.mrb[0].mxu0
  %v9557 = vadd.f32 %v9506, %v9556
  %v9558 = vpop.f32.mrb[0].mxu0
  %v9559 = vadd.f32 %v9508, %v9558
  %v9560 = vpop.f32.mrb[0].mxu0
  %v9561 = vadd.f32 %v9510, %v9560
  %v9562 = vpop.f32.mrb[0].mxu0
  %v9563 = vadd.f32 %v9512, %v9562
  %9564 = vmatprep.mubr.bf16.mxu0 %v6906
  %9565 = vmatmul.mubr.bf16.gmra.mrb[0].mxu0 %v6905
  %v9566 = vpop.f32.mrb[0].mxu0
  %v9567 = vadd.f32 %v9516, %v9566
  %v9568 = vpop.f32.mrb[0].mxu0
  %v9569 = vadd.f32 %v9518, %v9568
  %v9570 = vpop.f32.mrb[0].mxu0
  %v9571 = vpop.f32.mrb[0].mxu0
  %9572 = vdwg.mxu0
  %9573 = vmatprep.subr.bf16.mxu0 %v8817
  %9574 = vmatpush1.bf16.msra.mxu0 %v8816
  %9575 = vmatprep.subr.bf16.mxu0 %v8823
  %9576 = vmatpush1.bf16.msra.mxu0 %v8822
  %9577 = vmatprep.subr.bf16.mxu0 %v8829
  %9578 = vmatpush1.bf16.msra.mxu0 %v8828
  %9579 = vmatprep.subr.bf16.mxu0 %v8835
  %9580 = vmatpush1.bf16.msra.mxu0 %v8834
  %9581 = vmatprep.subr.bf16.mxu0 %v8841
  %9582 = vmatpush1.bf16.msra.mxu0 %v8840
  %9583 = vmatprep.subr.bf16.mxu0 %v8847
  %9584 = vmatpush1.bf16.msra.mxu0 %v8846
  %9585 = vmatprep.subr.bf16.mxu0 %v8853
  %9586 = vmatpush1.bf16.msra.mxu0 %v8852
  %9587 = vmatprep.subr.bf16.mxu0 %v8859
  %9588 = vmatpush1.bf16.msra.mxu0 %v8858
  %9589 = vmatprep.subr.bf16.mxu0 %v8865
  %9590 = vmatpush1.bf16.msra.mxu0 %v8864
  %9591 = vmatprep.subr.bf16.mxu0 %v8871
  %9592 = vmatpush1.bf16.msra.mxu0 %v8870
  %9593 = vmatprep.subr.bf16.mxu0 %v8877
  %9594 = vmatpush1.bf16.msra.mxu0 %v8876
  %9595 = vmatprep.subr.bf16.mxu0 %v8883
  %9596 = vmatpush1.bf16.msra.mxu0 %v8882
  %9597 = vmatprep.subr.bf16.mxu0 %v8889
  %9598 = vmatpush1.bf16.msra.mxu0 %v8888
  %9599 = vmatprep.subr.bf16.mxu0 %v8895
  %9600 = vmatpush1.bf16.msra.mxu0 %v8894
  %9601 = vmatprep.subr.bf16.mxu0 %v8901
  %9602 = vmatpush1.bf16.msra.mxu0 %v8900
  %9603 = vmatprep.subr.bf16.mxu0 %v8907
  %9604 = vmatpush1.bf16.msra.mxu0 %v8906
  %9605 = vmatprep.mubr.bf16.mxu0 %v6899
  %9606 = vmatmul.mubr.bf16.gmra.mrb[0].mxu0 %v6898
  %v9607 = vpop.f32.mrb[0].mxu0
  %v9608 = vadd.f32 %v9557, %v9607
  %v9609 = vpop.f32.mrb[0].mxu0
  %v9610 = vadd.f32 %v9559, %v9609
  %v9611 = vpop.f32.mrb[0].mxu0
  %v9612 = vadd.f32 %v9561, %v9611
  %v9613 = vpop.f32.mrb[0].mxu0
  %v9614 = vadd.f32 %v9563, %v9613
  %9615 = vmatprep.mubr.bf16.mxu0 %v6908
  %9616 = vmatmul.mubr.bf16.gmra.mrb[0].mxu0 %v6907
  %v9617 = vpop.f32.mrb[0].mxu0
  %v9618 = vadd.f32 %v9567, %v9617
  %v9619 = vpop.f32.mrb[0].mxu0
  %v9620 = vadd.f32 %v9569, %v9619
  %v9621 = vpop.f32.mrb[0].mxu0
  %v9622 = vpop.f32.mrb[0].mxu0
  %9623 = vdwg.mxu0
  %9624 = vmatprep.subr.bf16.mxu0 %v8913
  %9625 = vmatpush1.bf16.msra.mxu0 %v8912
  %9626 = vmatprep.subr.bf16.mxu0 %v8919
  %9627 = vmatpush1.bf16.msra.mxu0 %v8918
  %9628 = vmatprep.subr.bf16.mxu0 %v8925
  %9629 = vmatpush1.bf16.msra.mxu0 %v8924
  %9630 = vmatprep.subr.bf16.mxu0 %v8931
  %9631 = vmatpush1.bf16.msra.mxu0 %v8930
  %9632 = vmatprep.subr.bf16.mxu0 %v8937
  %9633 = vmatpush1.bf16.msra.mxu0 %v8936
  %9634 = vmatprep.subr.bf16.mxu0 %v8943
  %9635 = vmatpush1.bf16.msra.mxu0 %v8942
  %9636 = vmatprep.subr.bf16.mxu0 %v8949
  %9637 = vmatpush1.bf16.msra.mxu0 %v8948
  %9638 = vmatprep.subr.bf16.mxu0 %v8955
  %9639 = vmatpush1.bf16.msra.mxu0 %v8954
  %9640 = vmatprep.subr.bf16.mxu0 %v8961
  %9641 = vmatpush1.bf16.msra.mxu0 %v8960
  %9642 = vmatprep.subr.bf16.mxu0 %v8967
  %9643 = vmatpush1.bf16.msra.mxu0 %v8966
  %9644 = vmatprep.subr.bf16.mxu0 %v8973
  %9645 = vmatpush1.bf16.msra.mxu0 %v8972
  %9646 = vmatprep.subr.bf16.mxu0 %v8979
  %9647 = vmatpush1.bf16.msra.mxu0 %v8978
  %9648 = vmatprep.subr.bf16.mxu0 %v8985
  %9649 = vmatpush1.bf16.msra.mxu0 %v8984
  %9650 = vmatprep.subr.bf16.mxu0 %v8991
  %9651 = vmatpush1.bf16.msra.mxu0 %v8990
  %9652 = vmatprep.subr.bf16.mxu0 %v8997
  %9653 = vmatpush1.bf16.msra.mxu0 %v8996
  %9654 = vmatprep.subr.bf16.mxu0 %v9003
  %9655 = vmatpush1.bf16.msra.mxu0 %v9002
  %9656 = vmatprep.mubr.bf16.mxu0 %v6901
  %9657 = vmatmul.mubr.bf16.gmra.mrb[0].mxu0 %v6900
  %v9658 = vpop.f32.mrb[0].mxu0
  %v9659 = vadd.f32 %v9608, %v9658
  %v9660 = vpop.f32.mrb[0].mxu0
  %v9661 = vadd.f32 %v9610, %v9660
  %v9662 = vpop.f32.mrb[0].mxu0
  %v9663 = vadd.f32 %v9612, %v9662
  %v9664 = vpop.f32.mrb[0].mxu0
  %v9665 = vadd.f32 %v9614, %v9664
  %9666 = vmatprep.mubr.bf16.mxu0 %v6910
  %9667 = vmatmul.mubr.bf16.gmra.mrb[0].mxu0 %v6909
  %v9668 = vpop.f32.mrb[0].mxu0
  %v9669 = vadd.f32 %v9618, %v9668
  %v9670 = vpop.f32.mrb[0].mxu0
  %v9671 = vadd.f32 %v9620, %v9670
  %v9672 = vpop.f32.mrb[0].mxu0
  %v9673 = vpop.f32.mrb[0].mxu0
  %9674 = vdwg.mxu0
  %9675 = vmatprep.subr.bf16.mxu0 %v9009
  %9676 = vmatpush1.bf16.msra.mxu0 %v9008
  %9677 = vmatprep.subr.bf16.mxu0 %v9015
  %9678 = vmatpush1.bf16.msra.mxu0 %v9014
  %9679 = vmatprep.subr.bf16.mxu0 %v9021
  %9680 = vmatpush1.bf16.msra.mxu0 %v9020
  %9681 = vmatprep.subr.bf16.mxu0 %v9027
  %9682 = vmatpush1.bf16.msra.mxu0 %v9026
  %9683 = vmatprep.subr.bf16.mxu0 %v9033
  %9684 = vmatpush1.bf16.msra.mxu0 %v9032
  %9685 = vmatprep.subr.bf16.mxu0 %v9039
  %9686 = vmatpush1.bf16.msra.mxu0 %v9038
  %9687 = vmatprep.subr.bf16.mxu0 0
  %9688 = vmatpush1.bf16.msra.mxu0 0
  %9689 = vmatprep.subr.bf16.mxu0 0
  %9690 = vmatpush1.bf16.msra.mxu0 0
  %9691 = vmatprep.subr.bf16.mxu0 0
  %9692 = vmatpush1.bf16.msra.mxu0 0
  %9693 = vmatprep.subr.bf16.mxu0 0
  %9694 = vmatpush1.bf16.msra.mxu0 0
  %9695 = vmatprep.subr.bf16.mxu0 0
  %9696 = vmatpush1.bf16.msra.mxu0 0
  %9697 = vmatprep.subr.bf16.mxu0 0
  %9698 = vmatpush1.bf16.msra.mxu0 0
  %9699 = vmatprep.subr.bf16.mxu0 0
  %9700 = vmatpush1.bf16.msra.mxu0 0
  %9701 = vmatprep.subr.bf16.mxu0 0
  %9702 = vmatpush1.bf16.msra.mxu0 0
  %9703 = vmatprep.subr.bf16.mxu0 0
  %9704 = vmatpush1.bf16.msra.mxu0 0
  %9705 = vmatprep.subr.bf16.mxu0 0
  %9706 = vmatpush1.bf16.msra.mxu0 0
  %9707 = vmatprep.mubr.bf16.mxu0 0
  %9708 = vmatmul.mubr.bf16.gmra.mrb[0].mxu0 %v9466
  %v9709 = vpop.f32.mrb[0].mxu0
  %v9710 = vadd.f32 %v9659, %v9709
  %v9711 = vpop.f32.mrb[0].mxu0
  %v9712 = vadd.f32 %v9661, %v9711
  %v9713 = vpop.f32.mrb[0].mxu0
  %v9714 = vadd.f32 %v9663, %v9713
  %v9715 = vpop.f32.mrb[0].mxu0
  %v9716 = vadd.f32 %v9665, %v9715
  %9717 = vmatprep.mubr.bf16.mxu0 0
  %9718 = vmatmul.mubr.bf16.gmra.mrb[0].mxu0 %v9469
  %v9719 = vpop.f32.mrb[0].mxu0
  %v9720 = vadd.f32 %v9669, %v9719
  %v9721 = vpop.f32.mrb[0].mxu0
  %v9722 = vadd.f32 %v9671, %v9721
  %v9723 = vpop.f32.mrb[0].mxu0
  %v9724 = vpop.f32.mrb[0].mxu0
  %9725 = vdwg.mxu0
  %9726 = vmatprep.subr.bf16.mxu0 %v8627
  %9727 = vmatpush1.bf16.msra.mxu0 %v8626
  %9728 = vmatprep.subr.bf16.mxu0 %v8633
  %9729 = vmatpush1.bf16.msra.mxu0 %v8632
  %9730 = vmatprep.subr.bf16.mxu0 %v8639
  %9731 = vmatpush1.bf16.msra.mxu0 %v8638
  %9732 = vmatprep.subr.bf16.mxu0 %v8645
  %9733 = vmatpush1.bf16.msra.mxu0 %v8644
  %9734 = vmatprep.subr.bf16.mxu0 %v8651
  %9735 = vmatpush1.bf16.msra.mxu0 %v8650
  %9736 = vmatprep.subr.bf16.mxu0 %v8657
  %9737 = vmatpush1.bf16.msra.mxu0 %v8656
  %9738 = vmatprep.subr.bf16.mxu0 %v8663
  %9739 = vmatpush1.bf16.msra.mxu0 %v8662
  %9740 = vmatprep.subr.bf16.mxu0 %v8669
  %9741 = vmatpush1.bf16.msra.mxu0 %v8668
  %9742 = vmatprep.subr.bf16.mxu0 %v8675
  %9743 = vmatpush1.bf16.msra.mxu0 %v8674
  %9744 = vmatprep.subr.bf16.mxu0 %v8681
  %9745 = vmatpush1.bf16.msra.mxu0 %v8680
  %9746 = vmatprep.subr.bf16.mxu0 %v8687
  %9747 = vmatpush1.bf16.msra.mxu0 %v8686
  %9748 = vmatprep.subr.bf16.mxu0 %v8693
  %9749 = vmatpush1.bf16.msra.mxu0 %v8692
  %9750 = vmatprep.subr.bf16.mxu0 %v8699
  %9751 = vmatpush1.bf16.msra.mxu0 %v8698
  %9752 = vmatprep.subr.bf16.mxu0 %v8705
  %9753 = vmatpush1.bf16.msra.mxu0 %v8704
  %9754 = vmatprep.subr.bf16.mxu0 %v8711
  %9755 = vmatpush1.bf16.msra.mxu0 %v8710
  %9756 = vmatprep.subr.bf16.mxu0 %v8717
  %9757 = vmatpush1.bf16.msra.mxu0 %v8716
  %9758 = vmatprep.mubr.bf16.mxu0 %v6895
  %9759 = vmatmul.mubr.bf16.gmra.mrb[0].mxu0 %v6894
  %v9760 = vpop.f32.mrb[0].mxu0
  %v9761 = vadd.f32 %v7345, %v9760
  %v9762 = vpop.f32.mrb[0].mxu0
  %v9763 = vadd.f32 %v7349, %v9762
  %v9764 = vpop.f32.mrb[0].mxu0
  %v9765 = vadd.f32 %v7345, %v9764
  %v9766 = vpop.f32.mrb[0].mxu0
  %v9767 = vadd.f32 %v7349, %v9766
  %9768 = vmatprep.mubr.bf16.mxu0 %v6904
  %9769 = vmatmul.mubr.bf16.gmra.mrb[0].mxu0 %v6903
  %v9770 = vpop.f32.mrb[0].mxu0
  %v9771 = vadd.f32 %v7345, %v9770
  %v9772 = vpop.f32.mrb[0].mxu0
  %v9773 = vadd.f32 %v7349, %v9772
  %v9774 = vpop.f32.mrb[0].mxu0
  %v9775 = vpop.f32.mrb[0].mxu0
  %9776 = vdwg.mxu0
  %9777 = vmatprep.subr.bf16.mxu0 %v8723
  %9778 = vmatpush1.bf16.msra.mxu0 %v8722
  %9779 = vmatprep.subr.bf16.mxu0 %v8729
  %9780 = vmatpush1.bf16.msra.mxu0 %v8728
  %9781 = vmatprep.subr.bf16.mxu0 %v8735
  %9782 = vmatpush1.bf16.msra.mxu0 %v8734
  %9783 = vmatprep.subr.bf16.mxu0 %v8741
  %9784 = vmatpush1.bf16.msra.mxu0 %v8740
  %9785 = vmatprep.subr.bf16.mxu0 %v8747
  %9786 = vmatpush1.bf16.msra.mxu0 %v8746
  %9787 = vmatprep.subr.bf16.mxu0 %v8753
  %9788 = vmatpush1.bf16.msra.mxu0 %v8752
  %9789 = vmatprep.subr.bf16.mxu0 %v8759
  %9790 = vmatpush1.bf16.msra.mxu0 %v8758
  %9791 = vmatprep.subr.bf16.mxu0 %v8765
  %9792 = vmatpush1.bf16.msra.mxu0 %v8764
  %9793 = vmatprep.subr.bf16.mxu0 %v8771
  %9794 = vmatpush1.bf16.msra.mxu0 %v8770
  %9795 = vmatprep.subr.bf16.mxu0 %v8777
  %9796 = vmatpush1.bf16.msra.mxu0 %v8776
  %9797 = vmatprep.subr.bf16.mxu0 %v8783
  %9798 = vmatpush1.bf16.msra.mxu0 %v8782
  %9799 = vmatprep.subr.bf16.mxu0 %v8789
  %9800 = vmatpush1.bf16.msra.mxu0 %v8788
  %9801 = vmatprep.subr.bf16.mxu0 %v8795
  %9802 = vmatpush1.bf16.msra.mxu0 %v8794
  %9803 = vmatprep.subr.bf16.mxu0 %v8801
  %9804 = vmatpush1.bf16.msra.mxu0 %v8800
  %9805 = vmatprep.subr.bf16.mxu0 %v8807
  %9806 = vmatpush1.bf16.msra.mxu0 %v8806
  %9807 = vmatprep.subr.bf16.mxu0 %v8813
  %9808 = vmatpush1.bf16.msra.mxu0 %v8812
  %9809 = vmatprep.mubr.bf16.mxu0 %v6897
  %9810 = vmatmul.mubr.bf16.gmra.mrb[0].mxu0 %v6896
  %v9811 = vpop.f32.mrb[0].mxu0
  %v9812 = vadd.f32 %v9761, %v9811
  %v9813 = vpop.f32.mrb[0].mxu0
  %v9814 = vadd.f32 %v9763, %v9813
  %v9815 = vpop.f32.mrb[0].mxu0
  %v9816 = vadd.f32 %v9765, %v9815
  %v9817 = vpop.f32.mrb[0].mxu0
  %v9818 = vadd.f32 %v9767, %v9817
  %9819 = vmatprep.mubr.bf16.mxu0 %v6906
  %9820 = vmatmul.mubr.bf16.gmra.mrb[0].mxu0 %v6905
  %v9821 = vpop.f32.mrb[0].mxu0
  %v9822 = vadd.f32 %v9771, %v9821
  %v9823 = vpop.f32.mrb[0].mxu0
  %v9824 = vadd.f32 %v9773, %v9823
  %v9825 = vpop.f32.mrb[0].mxu0
  %v9826 = vpop.f32.mrb[0].mxu0
  %9827 = vdwg.mxu0
  %9828 = vmatprep.subr.bf16.mxu0 %v8819
  %9829 = vmatpush1.bf16.msra.mxu0 %v8818
  %9830 = vmatprep.subr.bf16.mxu0 %v8825
  %9831 = vmatpush1.bf16.msra.mxu0 %v8824
  %9832 = vmatprep.subr.bf16.mxu0 %v8831
  %9833 = vmatpush1.bf16.msra.mxu0 %v8830
  %9834 = vmatprep.subr.bf16.mxu0 %v8837
  %9835 = vmatpush1.bf16.msra.mxu0 %v8836
  %9836 = vmatprep.subr.bf16.mxu0 %v8843
  %9837 = vmatpush1.bf16.msra.mxu0 %v8842
  %9838 = vmatprep.subr.bf16.mxu0 %v8849
  %9839 = vmatpush1.bf16.msra.mxu0 %v8848
  %9840 = vmatprep.subr.bf16.mxu0 %v8855
  %9841 = vmatpush1.bf16.msra.mxu0 %v8854
  %9842 = vmatprep.subr.bf16.mxu0 %v8861
  %9843 = vmatpush1.bf16.msra.mxu0 %v8860
  %9844 = vmatprep.subr.bf16.mxu0 %v8867
  %9845 = vmatpush1.bf16.msra.mxu0 %v8866
  %9846 = vmatprep.subr.bf16.mxu0 %v8873
  %9847 = vmatpush1.bf16.msra.mxu0 %v8872
  %9848 = vmatprep.subr.bf16.mxu0 %v8879
  %9849 = vmatpush1.bf16.msra.mxu0 %v8878
  %9850 = vmatprep.subr.bf16.mxu0 %v8885
  %9851 = vmatpush1.bf16.msra.mxu0 %v8884
  %9852 = vmatprep.subr.bf16.mxu0 %v8891
  %9853 = vmatpush1.bf16.msra.mxu0 %v8890
  %9854 = vmatprep.subr.bf16.mxu0 %v8897
  %9855 = vmatpush1.bf16.msra.mxu0 %v8896
  %9856 = vmatprep.subr.bf16.mxu0 %v8903
  %9857 = vmatpush1.bf16.msra.mxu0 %v8902
  %9858 = vmatprep.subr.bf16.mxu0 %v8909
  %9859 = vmatpush1.bf16.msra.mxu0 %v8908
  %9860 = vmatprep.mubr.bf16.mxu0 %v6899
  %9861 = vmatmul.mubr.bf16.gmra.mrb[0].mxu0 %v6898
  %v9862 = vpop.f32.mrb[0].mxu0
  %v9863 = vadd.f32 %v9812, %v9862
  %v9864 = vpop.f32.mrb[0].mxu0
  %v9865 = vadd.f32 %v9814, %v9864
  %v9866 = vpop.f32.mrb[0].mxu0
  %v9867 = vadd.f32 %v9816, %v9866
  %v9868 = vpop.f32.mrb[0].mxu0
  %v9869 = vadd.f32 %v9818, %v9868
  %9870 = vmatprep.mubr.bf16.mxu0 %v6908
  %9871 = vmatmul.mubr.bf16.gmra.mrb[0].mxu0 %v6907
  %v9872 = vpop.f32.mrb[0].mxu0
  %v9873 = vadd.f32 %v9822, %v9872
  %v9874 = vpop.f32.mrb[0].mxu0
  %v9875 = vadd.f32 %v9824, %v9874
  %v9876 = vpop.f32.mrb[0].mxu0
  %v9877 = vpop.f32.mrb[0].mxu0
  %9878 = vdwg.mxu0
  %9879 = vmatprep.subr.bf16.mxu0 %v8915
  %9880 = vmatpush1.bf16.msra.mxu0 %v8914
  %9881 = vmatprep.subr.bf16.mxu0 %v8921
  %9882 = vmatpush1.bf16.msra.mxu0 %v8920
  %9883 = vmatprep.subr.bf16.mxu0 %v8927
  %9884 = vmatpush1.bf16.msra.mxu0 %v8926
  %9885 = vmatprep.subr.bf16.mxu0 %v8933
  %9886 = vmatpush1.bf16.msra.mxu0 %v8932
  %9887 = vmatprep.subr.bf16.mxu0 %v8939
  %9888 = vmatpush1.bf16.msra.mxu0 %v8938
  %9889 = vmatprep.subr.bf16.mxu0 %v8945
  %9890 = vmatpush1.bf16.msra.mxu0 %v8944
  %9891 = vmatprep.subr.bf16.mxu0 %v8951
  %9892 = vmatpush1.bf16.msra.mxu0 %v8950
  %9893 = vmatprep.subr.bf16.mxu0 %v8957
  %9894 = vmatpush1.bf16.msra.mxu0 %v8956
  %9895 = vmatprep.subr.bf16.mxu0 %v8963
  %9896 = vmatpush1.bf16.msra.mxu0 %v8962
  %9897 = vmatprep.subr.bf16.mxu0 %v8969
  %9898 = vmatpush1.bf16.msra.mxu0 %v8968
  %9899 = vmatprep.subr.bf16.mxu0 %v8975
  %9900 = vmatpush1.bf16.msra.mxu0 %v8974
  %9901 = vmatprep.subr.bf16.mxu0 %v8981
  %9902 = vmatpush1.bf16.msra.mxu0 %v8980
  %9903 = vmatprep.subr.bf16.mxu0 %v8987
  %9904 = vmatpush1.bf16.msra.mxu0 %v8986
  %9905 = vmatprep.subr.bf16.mxu0 %v8993
  %9906 = vmatpush1.bf16.msra.mxu0 %v8992
  %9907 = vmatprep.subr.bf16.mxu0 %v8999
  %9908 = vmatpush1.bf16.msra.mxu0 %v8998
  %9909 = vmatprep.subr.bf16.mxu0 %v9005
  %9910 = vmatpush1.bf16.msra.mxu0 %v9004
  %9911 = vmatprep.mubr.bf16.mxu0 %v6901
  %9912 = vmatmul.mubr.bf16.gmra.mrb[0].mxu0 %v6900
  %v9913 = vpop.f32.mrb[0].mxu0
  %v9914 = vadd.f32 %v9863, %v9913
  %v9915 = vpop.f32.mrb[0].mxu0
  %v9916 = vadd.f32 %v9865, %v9915
  %v9917 = vpop.f32.mrb[0].mxu0
  %v9918 = vadd.f32 %v9867, %v9917
  %v9919 = vpop.f32.mrb[0].mxu0
  %v9920 = vadd.f32 %v9869, %v9919
  %9921 = vmatprep.mubr.bf16.mxu0 %v6910
  %9922 = vmatmul.mubr.bf16.gmra.mrb[0].mxu0 %v6909
  %v9923 = vpop.f32.mrb[0].mxu0
  %v9924 = vadd.f32 %v9873, %v9923
  %v9925 = vpop.f32.mrb[0].mxu0
  %v9926 = vadd.f32 %v9875, %v9925
  %v9927 = vpop.f32.mrb[0].mxu0
  %v9928 = vpop.f32.mrb[0].mxu0
  %9929 = vdwg.mxu0
  %9930 = vmatprep.subr.bf16.mxu0 %v9011
  %9931 = vmatpush1.bf16.msra.mxu0 %v9010
  %9932 = vmatprep.subr.bf16.mxu0 %v9017
  %9933 = vmatpush1.bf16.msra.mxu0 %v9016
  %9934 = vmatprep.subr.bf16.mxu0 %v9023
  %9935 = vmatpush1.bf16.msra.mxu0 %v9022
  %9936 = vmatprep.subr.bf16.mxu0 %v9029
  %9937 = vmatpush1.bf16.msra.mxu0 %v9028
  %9938 = vmatprep.subr.bf16.mxu0 %v9035
  %9939 = vmatpush1.bf16.msra.mxu0 %v9034
  %9940 = vmatprep.subr.bf16.mxu0 %v9041
  %9941 = vmatpush1.bf16.msra.mxu0 %v9040
  %9942 = vmatprep.subr.bf16.mxu0 0
  %9943 = vmatpush1.bf16.msra.mxu0 0
  %9944 = vmatprep.subr.bf16.mxu0 0
  %9945 = vmatpush1.bf16.msra.mxu0 0
  %9946 = vmatprep.subr.bf16.mxu0 0
  %9947 = vmatpush1.bf16.msra.mxu0 0
  %9948 = vmatprep.subr.bf16.mxu0 0
  %9949 = vmatpush1.bf16.msra.mxu0 0
  %9950 = vmatprep.subr.bf16.mxu0 0
  %9951 = vmatpush1.bf16.msra.mxu0 0
  %9952 = vmatprep.subr.bf16.mxu0 0
  %9953 = vmatpush1.bf16.msra.mxu0 0
  %9954 = vmatprep.subr.bf16.mxu0 0
  %9955 = vmatpush1.bf16.msra.mxu0 0
  %9956 = vmatprep.subr.bf16.mxu0 0
  %9957 = vmatpush1.bf16.msra.mxu0 0
  %9958 = vmatprep.subr.bf16.mxu0 0
  %9959 = vmatpush1.bf16.msra.mxu0 0
  %9960 = vmatprep.subr.bf16.mxu0 0
  %9961 = vmatpush1.bf16.msra.mxu0 0
  %9962 = vmatprep.mubr.bf16.mxu0 0
  %9963 = vmatmul.mubr.bf16.gmra.mrb[0].mxu0 %v9466
  %v9964 = vpop.f32.mrb[0].mxu0
  %v9965 = vadd.f32 %v9914, %v9964
  %v9966 = vpop.f32.mrb[0].mxu0
  %v9967 = vadd.f32 %v9916, %v9966
  %v9968 = vpop.f32.mrb[0].mxu0
  %v9969 = vadd.f32 %v9918, %v9968
  %v9970 = vpop.f32.mrb[0].mxu0
  %v9971 = vadd.f32 %v9920, %v9970
  %9972 = vmatprep.mubr.bf16.mxu0 0
  %9973 = vmatmul.mubr.bf16.gmra.mrb[0].mxu0 %v9469
  %v9974 = vpop.f32.mrb[0].mxu0
  %v9975 = vadd.f32 %v9924, %v9974
  %v9976 = vpop.f32.mrb[0].mxu0
  %v9977 = vadd.f32 %v9926, %v9976
  %v9978 = vpop.f32.mrb[0].mxu0
  %v9979 = vpop.f32.mrb[0].mxu0
  %9980 = vdwg.mxu0
  %9981 = vmatprep.subr.bf16.mxu0 %v8629
  %9982 = vmatpush1.bf16.msra.mxu0 %v8628
  %9983 = vmatprep.subr.bf16.mxu0 %v8635
  %9984 = vmatpush1.bf16.msra.mxu0 %v8634
  %9985 = vmatprep.subr.bf16.mxu0 %v8641
  %9986 = vmatpush1.bf16.msra.mxu0 %v8640
  %9987 = vmatprep.subr.bf16.mxu0 %v8647
  %9988 = vmatpush1.bf16.msra.mxu0 %v8646
  %9989 = vmatprep.subr.bf16.mxu0 %v8653
  %9990 = vmatpush1.bf16.msra.mxu0 %v8652
  %9991 = vmatprep.subr.bf16.mxu0 %v8659
  %9992 = vmatpush1.bf16.msra.mxu0 %v8658
  %9993 = vmatprep.subr.bf16.mxu0 %v8665
  %9994 = vmatpush1.bf16.msra.mxu0 %v8664
  %9995 = vmatprep.subr.bf16.mxu0 %v8671
  %9996 = vmatpush1.bf16.msra.mxu0 %v8670
  %9997 = vmatprep.subr.bf16.mxu0 %v8677
  %9998 = vmatpush1.bf16.msra.mxu0 %v8676
  %9999 = vmatprep.subr.bf16.mxu0 %v8683
  %10000 = vmatpush1.bf16.msra.mxu0 %v8682
  %10001 = vmatprep.subr.bf16.mxu0 %v8689
  %10002 = vmatpush1.bf16.msra.mxu0 %v8688
  %10003 = vmatprep.subr.bf16.mxu0 %v8695
  %10004 = vmatpush1.bf16.msra.mxu0 %v8694
  %10005 = vmatprep.subr.bf16.mxu0 %v8701
  %10006 = vmatpush1.bf16.msra.mxu0 %v8700
  %10007 = vmatprep.subr.bf16.mxu0 %v8707
  %10008 = vmatpush1.bf16.msra.mxu0 %v8706
  %10009 = vmatprep.subr.bf16.mxu0 %v8713
  %10010 = vmatpush1.bf16.msra.mxu0 %v8712
  %10011 = vmatprep.subr.bf16.mxu0 %v8719
  %10012 = vmatpush1.bf16.msra.mxu0 %v8718
  %10013 = vmatprep.mubr.bf16.mxu0 %v6895
  %10014 = vmatmul.mubr.bf16.gmra.mrb[0].mxu0 %v6894
  %v10015 = vpop.f32.mrb[0].mxu0
  %v10016 = vadd.f32 %v7353, %v10015
  %v10017 = vpop.f32.mrb[0].mxu0
  %v10018 = vadd.f32 %v7357, %v10017
  %v10019 = vpop.f32.mrb[0].mxu0
  %v10020 = vadd.f32 %v7353, %v10019
  %v10021 = vpop.f32.mrb[0].mxu0
  %v10022 = vadd.f32 %v7357, %v10021
  %10023 = vmatprep.mubr.bf16.mxu0 %v6904
  %10024 = vmatmul.mubr.bf16.gmra.mrb[0].mxu0 %v6903
  %v10025 = vpop.f32.mrb[0].mxu0
  %v10026 = vadd.f32 %v7353, %v10025
  %v10027 = vpop.f32.mrb[0].mxu0
  %v10028 = vadd.f32 %v7357, %v10027
  %v10029 = vpop.f32.mrb[0].mxu0
  %v10030 = vpop.f32.mrb[0].mxu0
  %10031 = vdwg.mxu0
  %10032 = vmatprep.subr.bf16.mxu0 %v8725
  %10033 = vmatpush1.bf16.msra.mxu0 %v8724
  %10034 = vmatprep.subr.bf16.mxu0 %v8731
  %10035 = vmatpush1.bf16.msra.mxu0 %v8730
  %10036 = vmatprep.subr.bf16.mxu0 %v8737
  %10037 = vmatpush1.bf16.msra.mxu0 %v8736
  %10038 = vmatprep.subr.bf16.mxu0 %v8743
  %10039 = vmatpush1.bf16.msra.mxu0 %v8742
  %10040 = vmatprep.subr.bf16.mxu0 %v8749
  %10041 = vmatpush1.bf16.msra.mxu0 %v8748
  %10042 = vmatprep.subr.bf16.mxu0 %v8755
  %10043 = vmatpush1.bf16.msra.mxu0 %v8754
  %10044 = vmatprep.subr.bf16.mxu0 %v8761
  %10045 = vmatpush1.bf16.msra.mxu0 %v8760
  %10046 = vmatprep.subr.bf16.mxu0 %v8767
  %10047 = vmatpush1.bf16.msra.mxu0 %v8766
  %10048 = vmatprep.subr.bf16.mxu0 %v8773
  %10049 = vmatpush1.bf16.msra.mxu0 %v8772
  %10050 = vmatprep.subr.bf16.mxu0 %v8779
  %10051 = vmatpush1.bf16.msra.mxu0 %v8778
  %10052 = vmatprep.subr.bf16.mxu0 %v8785
  %10053 = vmatpush1.bf16.msra.mxu0 %v8784
  %10054 = vmatprep.subr.bf16.mxu0 %v8791
  %10055 = vmatpush1.bf16.msra.mxu0 %v8790
  %10056 = vmatprep.subr.bf16.mxu0 %v8797
  %10057 = vmatpush1.bf16.msra.mxu0 %v8796
  %10058 = vmatprep.subr.bf16.mxu0 %v8803
  %10059 = vmatpush1.bf16.msra.mxu0 %v8802
  %10060 = vmatprep.subr.bf16.mxu0 %v8809
  %10061 = vmatpush1.bf16.msra.mxu0 %v8808
  %10062 = vmatprep.subr.bf16.mxu0 %v8815
  %10063 = vmatpush1.bf16.msra.mxu0 %v8814
  %10064 = vmatprep.mubr.bf16.mxu0 %v6897
  %10065 = vmatmul.mubr.bf16.gmra.mrb[0].mxu0 %v6896
  %v10066 = vpop.f32.mrb[0].mxu0
  %v10067 = vadd.f32 %v10016, %v10066
  %v10068 = vpop.f32.mrb[0].mxu0
  %v10069 = vadd.f32 %v10018, %v10068
  %v10070 = vpop.f32.mrb[0].mxu0
  %v10071 = vadd.f32 %v10020, %v10070
  %v10072 = vpop.f32.mrb[0].mxu0
  %v10073 = vadd.f32 %v10022, %v10072
  %10074 = vmatprep.mubr.bf16.mxu0 %v6906
  %10075 = vmatmul.mubr.bf16.gmra.mrb[0].mxu0 %v6905
  %v10076 = vpop.f32.mrb[0].mxu0
  %v10077 = vadd.f32 %v10026, %v10076
  %v10078 = vpop.f32.mrb[0].mxu0
  %v10079 = vadd.f32 %v10028, %v10078
  %v10080 = vpop.f32.mrb[0].mxu0
  %v10081 = vpop.f32.mrb[0].mxu0
  %10082 = vdwg.mxu0
  %10083 = vmatprep.subr.bf16.mxu0 %v8821
  %10084 = vmatpush1.bf16.msra.mxu0 %v8820
  %10085 = vmatprep.subr.bf16.mxu0 %v8827
  %10086 = vmatpush1.bf16.msra.mxu0 %v8826
  %10087 = vmatprep.subr.bf16.mxu0 %v8833
  %10088 = vmatpush1.bf16.msra.mxu0 %v8832
  %10089 = vmatprep.subr.bf16.mxu0 %v8839
  %10090 = vmatpush1.bf16.msra.mxu0 %v8838
  %10091 = vmatprep.subr.bf16.mxu0 %v8845
  %10092 = vmatpush1.bf16.msra.mxu0 %v8844
  %10093 = vmatprep.subr.bf16.mxu0 %v8851
  %10094 = vmatpush1.bf16.msra.mxu0 %v8850
  %10095 = vmatprep.subr.bf16.mxu0 %v8857
  %10096 = vmatpush1.bf16.msra.mxu0 %v8856
  %10097 = vmatprep.subr.bf16.mxu0 %v8863
  %10098 = vmatpush1.bf16.msra.mxu0 %v8862
  %10099 = vmatprep.subr.bf16.mxu0 %v8869
  %10100 = vmatpush1.bf16.msra.mxu0 %v8868
  %10101 = vmatprep.subr.bf16.mxu0 %v8875
  %10102 = vmatpush1.bf16.msra.mxu0 %v8874
  %10103 = vmatprep.subr.bf16.mxu0 %v8881
  %10104 = vmatpush1.bf16.msra.mxu0 %v8880
  %10105 = vmatprep.subr.bf16.mxu0 %v8887
  %10106 = vmatpush1.bf16.msra.mxu0 %v8886
  %10107 = vmatprep.subr.bf16.mxu0 %v8893
  %10108 = vmatpush1.bf16.msra.mxu0 %v8892
  %10109 = vmatprep.subr.bf16.mxu0 %v8899
  %10110 = vmatpush1.bf16.msra.mxu0 %v8898
  %10111 = vmatprep.subr.bf16.mxu0 %v8905
  %10112 = vmatpush1.bf16.msra.mxu0 %v8904
  %10113 = vmatprep.subr.bf16.mxu0 %v8911
  %10114 = vmatpush1.bf16.msra.mxu0 %v8910
  %10115 = vmatprep.mubr.bf16.mxu0 %v6899
  %10116 = vmatmul.mubr.bf16.gmra.mrb[0].mxu0 %v6898
  %v10117 = vpop.f32.mrb[0].mxu0
  %v10118 = vadd.f32 %v10067, %v10117
  %v10119 = vpop.f32.mrb[0].mxu0
  %v10120 = vadd.f32 %v10069, %v10119
  %v10121 = vpop.f32.mrb[0].mxu0
  %v10122 = vadd.f32 %v10071, %v10121
  %v10123 = vpop.f32.mrb[0].mxu0
  %v10124 = vadd.f32 %v10073, %v10123
  %10125 = vmatprep.mubr.bf16.mxu0 %v6908
  %10126 = vmatmul.mubr.bf16.gmra.mrb[0].mxu0 %v6907
  %v10127 = vpop.f32.mrb[0].mxu0
  %v10128 = vadd.f32 %v10077, %v10127
  %v10129 = vpop.f32.mrb[0].mxu0
  %v10130 = vadd.f32 %v10079, %v10129
  %v10131 = vpop.f32.mrb[0].mxu0
  %v10132 = vpop.f32.mrb[0].mxu0
  %10133 = vdwg.mxu0
  %10134 = vmatprep.subr.bf16.mxu0 %v8917
  %10135 = vmatpush1.bf16.msra.mxu0 %v8916
  %10136 = vmatprep.subr.bf16.mxu0 %v8923
  %10137 = vmatpush1.bf16.msra.mxu0 %v8922
  %10138 = vmatprep.subr.bf16.mxu0 %v8929
  %10139 = vmatpush1.bf16.msra.mxu0 %v8928
  %10140 = vmatprep.subr.bf16.mxu0 %v8935
  %10141 = vmatpush1.bf16.msra.mxu0 %v8934
  %10142 = vmatprep.subr.bf16.mxu0 %v8941
  %10143 = vmatpush1.bf16.msra.mxu0 %v8940
  %10144 = vmatprep.subr.bf16.mxu0 %v8947
  %10145 = vmatpush1.bf16.msra.mxu0 %v8946
  %10146 = vmatprep.subr.bf16.mxu0 %v8953
  %10147 = vmatpush1.bf16.msra.mxu0 %v8952
  %10148 = vmatprep.subr.bf16.mxu0 %v8959
  %10149 = vmatpush1.bf16.msra.mxu0 %v8958
  %10150 = vmatprep.subr.bf16.mxu0 %v8965
  %10151 = vmatpush1.bf16.msra.mxu0 %v8964
  %10152 = vmatprep.subr.bf16.mxu0 %v8971
  %10153 = vmatpush1.bf16.msra.mxu0 %v8970
  %10154 = vmatprep.subr.bf16.mxu0 %v8977
  %10155 = vmatpush1.bf16.msra.mxu0 %v8976
  %10156 = vmatprep.subr.bf16.mxu0 %v8983
  %10157 = vmatpush1.bf16.msra.mxu0 %v8982
  %10158 = vmatprep.subr.bf16.mxu0 %v8989
  %10159 = vmatpush1.bf16.msra.mxu0 %v8988
  %10160 = vmatprep.subr.bf16.mxu0 %v8995
  %10161 = vmatpush1.bf16.msra.mxu0 %v8994
  %10162 = vmatprep.subr.bf16.mxu0 %v9001
  %10163 = vmatpush1.bf16.msra.mxu0 %v9000
  %10164 = vmatprep.subr.bf16.mxu0 %v9007
  %10165 = vmatpush1.bf16.msra.mxu0 %v9006
  %10166 = vmatprep.mubr.bf16.mxu0 %v6901
  %10167 = vmatmul.mubr.bf16.gmra.mrb[0].mxu0 %v6900
  %v10168 = vpop.f32.mrb[0].mxu0
  %v10169 = vadd.f32 %v10118, %v10168
  %v10170 = vpop.f32.mrb[0].mxu0
  %v10171 = vadd.f32 %v10120, %v10170
  %v10172 = vpop.f32.mrb[0].mxu0
  %v10173 = vadd.f32 %v10122, %v10172
  %v10174 = vpop.f32.mrb[0].mxu0
  %v10175 = vadd.f32 %v10124, %v10174
  %10176 = vmatprep.mubr.bf16.mxu0 %v6910
  %10177 = vmatmul.mubr.bf16.gmra.mrb[0].mxu0 %v6909
  %v10178 = vpop.f32.mrb[0].mxu0
  %v10179 = vadd.f32 %v10128, %v10178
  %v10180 = vpop.f32.mrb[0].mxu0
  %v10181 = vadd.f32 %v10130, %v10180
  %v10182 = vpop.f32.mrb[0].mxu0
  %v10183 = vpop.f32.mrb[0].mxu0
  %10184 = vdwg.mxu0
  %10185 = vmatprep.subr.bf16.mxu0 %v9013
  %10186 = vmatpush1.bf16.msra.mxu0 %v9012
  %10187 = vmatprep.subr.bf16.mxu0 %v9019
  %10188 = vmatpush1.bf16.msra.mxu0 %v9018
  %10189 = vmatprep.subr.bf16.mxu0 %v9025
  %10190 = vmatpush1.bf16.msra.mxu0 %v9024
  %10191 = vmatprep.subr.bf16.mxu0 %v9031
  %10192 = vmatpush1.bf16.msra.mxu0 %v9030
  %10193 = vmatprep.subr.bf16.mxu0 %v9037
  %10194 = vmatpush1.bf16.msra.mxu0 %v9036
  %10195 = vmatprep.subr.bf16.mxu0 %v9043
  %10196 = vmatpush1.bf16.msra.mxu0 %v9042
  %10197 = vmatprep.subr.bf16.mxu0 0
  %10198 = vmatpush1.bf16.msra.mxu0 0
  %10199 = vmatprep.subr.bf16.mxu0 0
  %10200 = vmatpush1.bf16.msra.mxu0 0
  %10201 = vmatprep.subr.bf16.mxu0 0
  %10202 = vmatpush1.bf16.msra.mxu0 0
  %10203 = vmatprep.subr.bf16.mxu0 0
  %10204 = vmatpush1.bf16.msra.mxu0 0
  %10205 = vmatprep.subr.bf16.mxu0 0
  %10206 = vmatpush1.bf16.msra.mxu0 0
  %10207 = vmatprep.subr.bf16.mxu0 0
  %10208 = vmatpush1.bf16.msra.mxu0 0
  %10209 = vmatprep.subr.bf16.mxu0 0
  %10210 = vmatpush1.bf16.msra.mxu0 0
  %10211 = vmatprep.subr.bf16.mxu0 0
  %10212 = vmatpush1.bf16.msra.mxu0 0
  %10213 = vmatprep.subr.bf16.mxu0 0
  %10214 = vmatpush1.bf16.msra.mxu0 0
  %10215 = vmatprep.subr.bf16.mxu0 0
  %10216 = vmatpush1.bf16.msra.mxu0 0
  %10217 = vmatprep.mubr.bf16.mxu0 0
  %10218 = vmatmul.mubr.bf16.gmra.mrb[0].mxu0 %v9466
  %v10219 = vpop.f32.mrb[0].mxu0
  %v10220 = vadd.f32 %v10169, %v10219
  %v10221 = vpop.f32.mrb[0].mxu0
  %v10222 = vadd.f32 %v10171, %v10221
  %v10223 = vpop.f32.mrb[0].mxu0
  %v10224 = vadd.f32 %v10173, %v10223
  %v10225 = vpop.f32.mrb[0].mxu0
  %v10226 = vadd.f32 %v10175, %v10225
  %10227 = vmatprep.mubr.bf16.mxu0 0
  %10228 = vmatmul.mubr.bf16.gmra.mrb[0].mxu0 %v9469
  %v10229 = vpop.f32.mrb[0].mxu0
  %v10230 = vadd.f32 %v10179, %v10229
  %v10231 = vpop.f32.mrb[0].mxu0
  %v10232 = vadd.f32 %v10181, %v10231
  %v10233 = vpop.f32.mrb[0].mxu0
  %v10234 = vpop.f32.mrb[0].mxu0
  %10235 = vdwg.mxu0
  %v10236 = vmax.f32 %v9710, 0.0
  %v10237 = vmax.f32 %v9712, 0.0
  %v10238 = vmax.f32 %v9965, 0.0
  %v10239 = vmax.f32 %v9967, 0.0
  %v10240 = vmax.f32 %v10220, 0.0
  %v10241 = vmax.f32 %v10222, 0.0
  %v10242 = vmax.f32 %v9714, 0.0
  %v10243 = vmax.f32 %v9716, 0.0
  %v10244 = vmax.f32 %v9969, 0.0
  %v10245 = vmax.f32 %v9971, 0.0
  %v10246 = vmax.f32 %v10224, 0.0
  %v10247 = vmax.f32 %v10226, 0.0
  %v10248 = vmax.f32 %v9720, 0.0
  %v10249 = vmax.f32 %v9722, 0.0
  %v10250 = vmax.f32 %v9975, 0.0
  %v10251 = vmax.f32 %v9977, 0.0
  %v10252 = vmax.f32 %v10230, 0.0
  %v10253 = vmax.f32 %v10232, 0.0
  %v10254 = vpack.c.bf16 %v10242, %v10236
  %v10255 = vpack.c.bf16 %v10243, %v10237
  %v10256 = vpack.c.bf16 %v10244, %v10238
  %v10257 = vpack.c.bf16 %v10245, %v10239
  %v10258 = vpack.c.bf16 %v10246, %v10240
  %v10259 = vpack.c.bf16 %v10247, %v10241
  %v10260 = vpack.c.bf16 %v10248, %v10248
  %v10261 = vpack.c.bf16 %v10249, %v10249
  %v10262 = vpack.c.bf16 %v10250, %v10250
  %v10263 = vpack.c.bf16 %v10251, %v10251
  %v10264 = vpack.c.bf16 %v10252, %v10252
  %v10265 = vpack.c.bf16 %v10253, %v10253
  %v10266 = vld [vmem:[%s7] sm:$0xff]
  %v10267 = vld [vmem:[%s7 + $0x8] sm:$0xff]
  %v10268 = vld [vmem:[%s7 + $0x10] sm:$0xff]
  %v10269 = vld [vmem:[%s7 + $0x18] sm:$0xff]
  %v10270 = vld [vmem:[%s7 + $0x20] sm:$0xff]
  %v10271 = vld [vmem:[%s7 + $0x28] sm:$0xff]
  %v10272 = vld [vmem:[%s7 + $0x30] sm:$0xff]
  %v10273 = vld [vmem:[%s7 + $0x38] sm:$0xff]
  %v10274 = vld [vmem:[%s7 + $0x40] sm:$0xff]
  %v10275 = vld [vmem:[%s7 + $0x48] sm:$0xff]
  %v10276 = vld [vmem:[%s7 + $0x50] sm:$0xff]
  %v10277 = vld [vmem:[%s7 + $0x58] sm:$0xff]
  %v10278 = vld [vmem:[%s7 + $0x60] sm:$0xff]
  %v10279 = vld [vmem:[%s7 + $0x68] sm:$0xff]
  %v10280 = vld [vmem:[%s7 + $0x70] sm:$0xff]
  %v10281 = vld [vmem:[%s7 + $0x78] sm:$0xff]
  %v10282 = vld [vmem:[%s7 + $0x80] sm:$0xff]
  %v10283 = vld [vmem:[%s7 + $0x88] sm:$0xff]
  %v10284 = vld [vmem:[%s7 + $0x90] sm:$0xff]
  %v10285 = vld [vmem:[%s7 + $0x98] sm:$0xff]
  %v10286 = vld [vmem:[%s7 + $0xa0] sm:$0xff]
  %v10287 = vld [vmem:[%s7 + $0xa8] sm:$0xff]
  %v10288 = vld [vmem:[%s7 + $0xb0] sm:$0xff]
  %v10289 = vld [vmem:[%s7 + $0xb8] sm:$0xff]
  %v10290 = vld [vmem:[%s7 + $0xc0] sm:$0xff]
  %v10291 = vld [vmem:[%s7 + $0xc8] sm:$0xff]
  %v10292 = vld [vmem:[%s7 + $0xd0] sm:$0xff]
  %v10293 = vld [vmem:[%s7 + $0xd8] sm:$0xff]
  %v10294 = vld [vmem:[%s7 + $0xe0] sm:$0xff]
  %v10295 = vld [vmem:[%s7 + $0xe8] sm:$0xff]
  %v10296 = vld [vmem:[%s7 + $0xf0] sm:$0xff]
  %v10297 = vld [vmem:[%s7 + $0xf8] sm:$0xff]
  %v10298 = vld [vmem:[%s7 + $0x100] sm:$0xff]
  %v10299 = vld [vmem:[%s7 + $0x108] sm:$0xff]
  %v10300 = vld [vmem:[%s7 + $0x110] sm:$0xff]
  %v10301 = vld [vmem:[%s7 + $0x118] sm:$0xff]
  %v10302 = vld [vmem:[%s7 + $0x120] sm:$0xff]
  %v10303 = vld [vmem:[%s7 + $0x128] sm:$0xff]
  %v10304 = vld [vmem:[%s7 + $0x130] sm:$0xff]
  %v10305 = vld [vmem:[%s7 + $0x138] sm:$0xff]
  %v10306 = vld [vmem:[%s7 + $0x140] sm:$0xff]
  %v10307 = vld [vmem:[%s7 + $0x148] sm:$0xff]
  %v10308 = vld [vmem:[%s7 + $0x150] sm:$0xff]
  %v10309 = vld [vmem:[%s7 + $0x158] sm:$0xff]
  %v10310 = vld [vmem:[%s7 + $0x160] sm:$0xff]
  %v10311 = vld [vmem:[%s7 + $0x168] sm:$0xff]
  %v10312 = vld [vmem:[%s7 + $0x170] sm:$0xff]
  %v10313 = vld [vmem:[%s7 + $0x178] sm:$0xff]
  %v10314 = vld [vmem:[%s7 + $0x180] sm:$0xff]
  %v10315 = vld [vmem:[%s7 + $0x188] sm:$0xff]
  %v10316 = vld [vmem:[%s7 + $0x190] sm:$0xff]
  %v10317 = vld [vmem:[%s7 + $0x198] sm:$0xff]
  %v10318 = vld [vmem:[%s7 + $0x1a0] sm:$0xff]
  %v10319 = vld [vmem:[%s7 + $0x1a8] sm:$0xff]
  %v10320 = vld [vmem:[%s7 + $0x1b0] sm:$0xff]
  %v10321 = vld [vmem:[%s7 + $0x1b8] sm:$0xff]
  %v10322 = vld [vmem:[%s7 + $0x1c0] sm:$0xff]
  %v10323 = vld [vmem:[%s7 + $0x1c8] sm:$0xff]
  %v10324 = vld [vmem:[%s7 + $0x1d0] sm:$0xff]
  %v10325 = vld [vmem:[%s7 + $0x1d8] sm:$0xff]
  %v10326 = vld [vmem:[%s7 + $0x1e0] sm:$0xff]
  %v10327 = vld [vmem:[%s7 + $0x1e8] sm:$0xff]
  %v10328 = vld [vmem:[%s7 + $0x1f0] sm:$0xff]
  %v10329 = vld [vmem:[%s7 + $0x1f8] sm:$0xff]
  %v10330 = vld [vmem:[%s7 + $0x200] sm:$0xff]
  %v10331 = vld [vmem:[%s7 + $0x208] sm:$0xff]
  %v10332 = vld [vmem:[%s7 + $0x210] sm:$0xff]
  %v10333 = vld [vmem:[%s7 + $0x218] sm:$0xff]
  %v10334 = vld [vmem:[%s7 + $0x220] sm:$0xff]
  %v10335 = vld [vmem:[%s7 + $0x228] sm:$0xff]
  %v10336 = vld [vmem:[%s7 + $0x230] sm:$0xff]
  %v10337 = vld [vmem:[%s7 + $0x238] sm:$0xff]
  %v10338 = vld [vmem:[%s7 + $0x240] sm:$0xff]
  %v10339 = vld [vmem:[%s7 + $0x248] sm:$0xff]
  %v10340 = vld [vmem:[%s7 + $0x250] sm:$0xff]
  %v10341 = vld [vmem:[%s7 + $0x258] sm:$0xff]
  %v10342 = vld [vmem:[%s7 + $0x260] sm:$0xff]
  %v10343 = vld [vmem:[%s7 + $0x268] sm:$0xff]
  %v10344 = vld [vmem:[%s7 + $0x270] sm:$0xff]
  %v10345 = vld [vmem:[%s7 + $0x278] sm:$0xff]
  %v10346 = vld [vmem:[%s7 + $0x280] sm:$0xff]
  %v10347 = vld [vmem:[%s7 + $0x288] sm:$0xff]
  %v10348 = vld [vmem:[%s7 + $0x290] sm:$0xff]
  %v10349 = vld [vmem:[%s7 + $0x298] sm:$0xff]
  %v10350 = vld [vmem:[%s7 + $0x2a0] sm:$0xff]
  %v10351 = vld [vmem:[%s7 + $0x2a8] sm:$0xff]
  %v10352 = vld [vmem:[%s7 + $0x2b0] sm:$0xff]
  %v10353 = vld [vmem:[%s7 + $0x2b8] sm:$0xff]
  %v10354 = vld [vmem:[%s7 + $0x2c0] sm:$0xff]
  %v10355 = vld [vmem:[%s7 + $0x2c8] sm:$0xff]
  %v10356 = vld [vmem:[%s7 + $0x2d0] sm:$0xff]
  %v10357 = vld [vmem:[%s7 + $0x2d8] sm:$0xff]
  %v10358 = vld [vmem:[%s7 + $0x2e0] sm:$0xff]
  %v10359 = vld [vmem:[%s7 + $0x2e8] sm:$0xff]
  %v10360 = vld [vmem:[%s7 + $0x2f0] sm:$0xff]
  %v10361 = vld [vmem:[%s7 + $0x2f8] sm:$0xff]
  %v10362 = vld [vmem:[%s7 + $0x300] sm:$0xff]
  %v10363 = vld [vmem:[%s7 + $0x308] sm:$0xff]
  %v10364 = vld [vmem:[%s7 + $0x310] sm:$0xff]
  %v10365 = vld [vmem:[%s7 + $0x318] sm:$0xff]
  %v10366 = vld [vmem:[%s7 + $0x320] sm:$0xff]
  %v10367 = vld [vmem:[%s7 + $0x328] sm:$0xff]
  %v10368 = vld [vmem:[%s7 + $0x330] sm:$0xff]
  %v10369 = vld [vmem:[%s7 + $0x338] sm:$0xff]
  %v10370 = vld [vmem:[%s7 + $0x340] sm:$0xff]
  %v10371 = vld [vmem:[%s7 + $0x348] sm:$0xff]
  %v10372 = vld [vmem:[%s7 + $0x350] sm:$0xff]
  %v10373 = vld [vmem:[%s7 + $0x358] sm:$0xff]
  %v10374 = vld [vmem:[%s7 + $0x360] sm:$0xff]
  %v10375 = vld [vmem:[%s7 + $0x368] sm:$0xff]
  %v10376 = vld [vmem:[%s7 + $0x370] sm:$0xff]
  %v10377 = vld [vmem:[%s7 + $0x378] sm:$0xff]
  %v10378 = vld [vmem:[%s7 + $0x380] sm:$0xff]
  %v10379 = vld [vmem:[%s7 + $0x388] sm:$0xff]
  %v10380 = vld [vmem:[%s7 + $0x390] sm:$0xff]
  %v10381 = vld [vmem:[%s7 + $0x398] sm:$0xff]
  %v10382 = vld [vmem:[%s7 + $0x3a0] sm:$0xff]
  %v10383 = vld [vmem:[%s7 + $0x3a8] sm:$0xff]
  %v10384 = vld [vmem:[%s7 + $0x3b0] sm:$0xff]
  %v10385 = vld [vmem:[%s7 + $0x3b8] sm:$0xff]
  %v10386 = vld [vmem:[%s7 + $0x3c0] sm:$0xff]
  %v10387 = vld [vmem:[%s7 + $0x3c8] sm:$0xff]
  %v10388 = vld [vmem:[%s7 + $0x3d0] sm:$0xff]
  %v10389 = vld [vmem:[%s7 + $0x3d8] sm:$0xff]
  %v10390 = vld [vmem:[%s7 + $0x3e0] sm:$0xff]
  %v10391 = vld [vmem:[%s7 + $0x3e8] sm:$0xff]
  %v10392 = vld [vmem:[%s7 + $0x3f0] sm:$0xff]
  %v10393 = vld [vmem:[%s7 + $0x3f8] sm:$0xff]
  %v10394 = vld [vmem:[%s7 + $0x400] sm:$0xff]
  %v10395 = vld [vmem:[%s7 + $0x408] sm:$0xff]
  %v10396 = vld [vmem:[%s7 + $0x410] sm:$0xff]
  %v10397 = vld [vmem:[%s7 + $0x418] sm:$0xff]
  %v10398 = vld [vmem:[%s7 + $0x420] sm:$0xff]
  %v10399 = vld [vmem:[%s7 + $0x428] sm:$0xff]
  %v10400 = vld [vmem:[%s7 + $0x430] sm:$0xff]
  %v10401 = vld [vmem:[%s7 + $0x438] sm:$0xff]
  %v10402 = vld [vmem:[%s7 + $0x440] sm:$0xff]
  %v10403 = vld [vmem:[%s7 + $0x448] sm:$0xff]
  %v10404 = vld [vmem:[%s7 + $0x450] sm:$0xff]
  %v10405 = vld [vmem:[%s7 + $0x458] sm:$0xff]
  %v10406 = vld [vmem:[%s7 + $0x460] sm:$0xff]
  %v10407 = vld [vmem:[%s7 + $0x468] sm:$0xff]
  %v10408 = vld [vmem:[%s7 + $0x470] sm:$0xff]
  %v10409 = vld [vmem:[%s7 + $0x478] sm:$0xff]
  %v10410 = vld [vmem:[%s7 + $0x480] sm:$0xff]
  %v10411 = vld [vmem:[%s7 + $0x488] sm:$0xff]
  %v10412 = vld [vmem:[%s7 + $0x490] sm:$0xff]
  %v10413 = vld [vmem:[%s7 + $0x498] sm:$0xff]
  %v10414 = vld [vmem:[%s7 + $0x4a0] sm:$0xff]
  %v10415 = vld [vmem:[%s7 + $0x4a8] sm:$0xff]
  %v10416 = vld [vmem:[%s7 + $0x4b0] sm:$0xff]
  %v10417 = vld [vmem:[%s7 + $0x4b8] sm:$0xff]
  %v10418 = vld [vmem:[%s7 + $0x4c0] sm:$0xff]
  %v10419 = vld [vmem:[%s7 + $0x4c8] sm:$0xff]
  %v10420 = vld [vmem:[%s7 + $0x4d0] sm:$0xff]
  %v10421 = vld [vmem:[%s7 + $0x4d8] sm:$0xff]
  %v10422 = vld [vmem:[%s7 + $0x4e0] sm:$0xff]
  %v10423 = vld [vmem:[%s7 + $0x4e8] sm:$0xff]
  %v10424 = vld [vmem:[%s7 + $0x4f0] sm:$0xff]
  %v10425 = vld [vmem:[%s7 + $0x4f8] sm:$0xff]
  %v10426 = vld [vmem:[%s7 + $0x500] sm:$0xff]
  %v10427 = vld [vmem:[%s7 + $0x508] sm:$0xff]
  %v10428 = vld [vmem:[%s7 + $0x510] sm:$0xff]
  %v10429 = vld [vmem:[%s7 + $0x518] sm:$0xff]
  %v10430 = vld [vmem:[%s7 + $0x520] sm:$0xff]
  %v10431 = vld [vmem:[%s7 + $0x528] sm:$0xff]
  %v10432 = vld [vmem:[%s7 + $0x530] sm:$0xff]
  %v10433 = vld [vmem:[%s7 + $0x538] sm:$0xff]
  %v10434 = vld [vmem:[%s7 + $0x540] sm:$0xff]
  %v10435 = vld [vmem:[%s7 + $0x548] sm:$0xff]
  %v10436 = vld [vmem:[%s7 + $0x550] sm:$0xff]
  %v10437 = vld [vmem:[%s7 + $0x558] sm:$0xff]
  %v10438 = vld [vmem:[%s7 + $0x560] sm:$0xff]
  %v10439 = vld [vmem:[%s7 + $0x568] sm:$0xff]
  %v10440 = vld [vmem:[%s7 + $0x570] sm:$0xff]
  %v10441 = vld [vmem:[%s7 + $0x578] sm:$0xff]
  %v10442 = vld [vmem:[%s7 + $0x580] sm:$0xff]
  %v10443 = vld [vmem:[%s7 + $0x588] sm:$0xff]
  %v10444 = vld [vmem:[%s7 + $0x590] sm:$0xff]
  %v10445 = vld [vmem:[%s7 + $0x598] sm:$0xff]
  %v10446 = vld [vmem:[%s7 + $0x5a0] sm:$0xff]
  %v10447 = vld [vmem:[%s7 + $0x5a8] sm:$0xff]
  %v10448 = vld [vmem:[%s7 + $0x5b0] sm:$0xff]
  %v10449 = vld [vmem:[%s7 + $0x5b8] sm:$0xff]
  %v10450 = vld [vmem:[%s7 + $0x5c0] sm:$0xff]
  %v10451 = vld [vmem:[%s7 + $0x5c8] sm:$0xff]
  %v10452 = vld [vmem:[%s7 + $0x5d0] sm:$0xff]
  %v10453 = vld [vmem:[%s7 + $0x5d8] sm:$0xff]
  %v10454 = vld [vmem:[%s7 + $0x5e0] sm:$0xff]
  %v10455 = vld [vmem:[%s7 + $0x5e8] sm:$0xff]
  %v10456 = vld [vmem:[%s7 + $0x5f0] sm:$0xff]
  %v10457 = vld [vmem:[%s7 + $0x5f8] sm:$0xff]
  %v10458 = vld [vmem:[%s8] sm:$0xf]
  %v10460 = vlaneseq
  %v10461 = vshrl.u32 %v10460, 7
  %v10462 = vsub.s32 0, %v10461
  %v10463 = vrot.slane %v10458, %v10462
  %v10464 = vlaneseq
  %v10465 = vshrl.u32 %v10464, 7
  %v10466 = vsub.s32 1, %v10465
  %v10467 = vrot.slane %v10458, %v10466
  %v10468 = vlaneseq
  %v10469 = vshrl.u32 %v10468, 7
  %v10470 = vsub.s32 2, %v10469
  %v10471 = vrot.slane %v10458, %v10470
  %v10472 = vlaneseq
  %v10473 = vshrl.u32 %v10472, 7
  %v10474 = vsub.s32 3, %v10473
  %v10475 = vrot.slane %v10458, %v10474
  %v10672 = vunpack.c.l.b16 %v10266
  %v10673 = vunpack.c.h.b16 %v10266
  %v10674 = vunpack.c.l.b16 %v10267
  %v10675 = vunpack.c.h.b16 %v10267
  %v10676 = vunpack.c.l.b16 %v10268
  %v10677 = vunpack.c.h.b16 %v10268
  %v10678 = vunpack.c.l.b16 %v10269
  %v10679 = vunpack.c.h.b16 %v10269
  %v10680 = vunpack.c.l.b16 %v10270
  %v10681 = vunpack.c.h.b16 %v10270
  %v10682 = vunpack.c.l.b16 %v10271
  %v10683 = vunpack.c.h.b16 %v10271
  %v10684 = vunpack.c.l.b16 %v10272
  %v10685 = vunpack.c.h.b16 %v10272
  %v10686 = vunpack.c.l.b16 %v10273
  %v10687 = vunpack.c.h.b16 %v10273
  %v10688 = vunpack.c.l.b16 %v10274
  %v10689 = vunpack.c.h.b16 %v10274
  %v10690 = vunpack.c.l.b16 %v10275
  %v10691 = vunpack.c.h.b16 %v10275
  %v10692 = vunpack.c.l.b16 %v10276
  %v10693 = vunpack.c.h.b16 %v10276
  %v10694 = vunpack.c.l.b16 %v10277
  %v10695 = vunpack.c.h.b16 %v10277
  %v10696 = vunpack.c.l.b16 %v10278
  %v10697 = vunpack.c.h.b16 %v10278
  %v10698 = vunpack.c.l.b16 %v10279
  %v10699 = vunpack.c.h.b16 %v10279
  %v10700 = vunpack.c.l.b16 %v10280
  %v10701 = vunpack.c.h.b16 %v10280
  %v10702 = vunpack.c.l.b16 %v10281
  %v10703 = vunpack.c.h.b16 %v10281
  %v10704 = vunpack.c.l.b16 %v10282
  %v10705 = vunpack.c.h.b16 %v10282
  %v10706 = vunpack.c.l.b16 %v10283
  %v10707 = vunpack.c.h.b16 %v10283
  %v10708 = vunpack.c.l.b16 %v10284
  %v10709 = vunpack.c.h.b16 %v10284
  %v10710 = vunpack.c.l.b16 %v10285
  %v10711 = vunpack.c.h.b16 %v10285
  %v10712 = vunpack.c.l.b16 %v10286
  %v10713 = vunpack.c.h.b16 %v10286
  %v10714 = vunpack.c.l.b16 %v10287
  %v10715 = vunpack.c.h.b16 %v10287
  %v10716 = vunpack.c.l.b16 %v10288
  %v10717 = vunpack.c.h.b16 %v10288
  %v10718 = vunpack.c.l.b16 %v10289
  %v10719 = vunpack.c.h.b16 %v10289
  %v10720 = vunpack.c.l.b16 %v10290
  %v10721 = vunpack.c.h.b16 %v10290
  %v10722 = vunpack.c.l.b16 %v10291
  %v10723 = vunpack.c.h.b16 %v10291
  %v10724 = vunpack.c.l.b16 %v10292
  %v10725 = vunpack.c.h.b16 %v10292
  %v10726 = vunpack.c.l.b16 %v10293
  %v10727 = vunpack.c.h.b16 %v10293
  %v10728 = vunpack.c.l.b16 %v10294
  %v10729 = vunpack.c.h.b16 %v10294
  %v10730 = vunpack.c.l.b16 %v10295
  %v10731 = vunpack.c.h.b16 %v10295
  %v10732 = vunpack.c.l.b16 %v10296
  %v10733 = vunpack.c.h.b16 %v10296
  %v10734 = vunpack.c.l.b16 %v10297
  %v10735 = vunpack.c.h.b16 %v10297
  %v10736 = vunpack.c.l.b16 %v10298
  %v10737 = vunpack.c.h.b16 %v10298
  %v10738 = vunpack.c.l.b16 %v10299
  %v10739 = vunpack.c.h.b16 %v10299
  %v10740 = vunpack.c.l.b16 %v10300
  %v10741 = vunpack.c.h.b16 %v10300
  %v10742 = vunpack.c.l.b16 %v10301
  %v10743 = vunpack.c.h.b16 %v10301
  %v10744 = vunpack.c.l.b16 %v10302
  %v10745 = vunpack.c.h.b16 %v10302
  %v10746 = vunpack.c.l.b16 %v10303
  %v10747 = vunpack.c.h.b16 %v10303
  %v10748 = vunpack.c.l.b16 %v10304
  %v10749 = vunpack.c.h.b16 %v10304
  %v10750 = vunpack.c.l.b16 %v10305
  %v10751 = vunpack.c.h.b16 %v10305
  %v10752 = vunpack.c.l.b16 %v10306
  %v10753 = vunpack.c.h.b16 %v10306
  %v10754 = vunpack.c.l.b16 %v10307
  %v10755 = vunpack.c.h.b16 %v10307
  %v10756 = vunpack.c.l.b16 %v10308
  %v10757 = vunpack.c.h.b16 %v10308
  %v10758 = vunpack.c.l.b16 %v10309
  %v10759 = vunpack.c.h.b16 %v10309
  %v10760 = vunpack.c.l.b16 %v10310
  %v10761 = vunpack.c.h.b16 %v10310
  %v10762 = vunpack.c.l.b16 %v10311
  %v10763 = vunpack.c.h.b16 %v10311
  %v10764 = vunpack.c.l.b16 %v10312
  %v10765 = vunpack.c.h.b16 %v10312
  %v10766 = vunpack.c.l.b16 %v10313
  %v10767 = vunpack.c.h.b16 %v10313
  %v10768 = vunpack.c.l.b16 %v10314
  %v10769 = vunpack.c.h.b16 %v10314
  %v10770 = vunpack.c.l.b16 %v10315
  %v10771 = vunpack.c.h.b16 %v10315
  %v10772 = vunpack.c.l.b16 %v10316
  %v10773 = vunpack.c.h.b16 %v10316
  %v10774 = vunpack.c.l.b16 %v10317
  %v10775 = vunpack.c.h.b16 %v10317
  %v10776 = vunpack.c.l.b16 %v10318
  %v10777 = vunpack.c.h.b16 %v10318
  %v10778 = vunpack.c.l.b16 %v10319
  %v10779 = vunpack.c.h.b16 %v10319
  %v10780 = vunpack.c.l.b16 %v10320
  %v10781 = vunpack.c.h.b16 %v10320
  %v10782 = vunpack.c.l.b16 %v10321
  %v10783 = vunpack.c.h.b16 %v10321
  %v10784 = vunpack.c.l.b16 %v10322
  %v10785 = vunpack.c.h.b16 %v10322
  %v10786 = vunpack.c.l.b16 %v10323
  %v10787 = vunpack.c.h.b16 %v10323
  %v10788 = vunpack.c.l.b16 %v10324
  %v10789 = vunpack.c.h.b16 %v10324
  %v10790 = vunpack.c.l.b16 %v10325
  %v10791 = vunpack.c.h.b16 %v10325
  %v10792 = vunpack.c.l.b16 %v10326
  %v10793 = vunpack.c.h.b16 %v10326
  %v10794 = vunpack.c.l.b16 %v10327
  %v10795 = vunpack.c.h.b16 %v10327
  %v10796 = vunpack.c.l.b16 %v10328
  %v10797 = vunpack.c.h.b16 %v10328
  %v10798 = vunpack.c.l.b16 %v10329
  %v10799 = vunpack.c.h.b16 %v10329
  %v10800 = vunpack.c.l.b16 %v10330
  %v10801 = vunpack.c.h.b16 %v10330
  %v10802 = vunpack.c.l.b16 %v10331
  %v10803 = vunpack.c.h.b16 %v10331
  %v10804 = vunpack.c.l.b16 %v10332
  %v10805 = vunpack.c.h.b16 %v10332
  %v10806 = vunpack.c.l.b16 %v10333
  %v10807 = vunpack.c.h.b16 %v10333
  %v10808 = vunpack.c.l.b16 %v10334
  %v10809 = vunpack.c.h.b16 %v10334
  %v10810 = vunpack.c.l.b16 %v10335
  %v10811 = vunpack.c.h.b16 %v10335
  %v10812 = vunpack.c.l.b16 %v10336
  %v10813 = vunpack.c.h.b16 %v10336
  %v10814 = vunpack.c.l.b16 %v10337
  %v10815 = vunpack.c.h.b16 %v10337
  %v10816 = vunpack.c.l.b16 %v10338
  %v10817 = vunpack.c.h.b16 %v10338
  %v10818 = vunpack.c.l.b16 %v10339
  %v10819 = vunpack.c.h.b16 %v10339
  %v10820 = vunpack.c.l.b16 %v10340
  %v10821 = vunpack.c.h.b16 %v10340
  %v10822 = vunpack.c.l.b16 %v10341
  %v10823 = vunpack.c.h.b16 %v10341
  %v10824 = vunpack.c.l.b16 %v10342
  %v10825 = vunpack.c.h.b16 %v10342
  %v10826 = vunpack.c.l.b16 %v10343
  %v10827 = vunpack.c.h.b16 %v10343
  %v10828 = vunpack.c.l.b16 %v10344
  %v10829 = vunpack.c.h.b16 %v10344
  %v10830 = vunpack.c.l.b16 %v10345
  %v10831 = vunpack.c.h.b16 %v10345
  %v10832 = vunpack.c.l.b16 %v10346
  %v10833 = vunpack.c.h.b16 %v10346
  %v10834 = vunpack.c.l.b16 %v10347
  %v10835 = vunpack.c.h.b16 %v10347
  %v10836 = vunpack.c.l.b16 %v10348
  %v10837 = vunpack.c.h.b16 %v10348
  %v10838 = vunpack.c.l.b16 %v10349
  %v10839 = vunpack.c.h.b16 %v10349
  %v10840 = vunpack.c.l.b16 %v10350
  %v10841 = vunpack.c.h.b16 %v10350
  %v10842 = vunpack.c.l.b16 %v10351
  %v10843 = vunpack.c.h.b16 %v10351
  %v10844 = vunpack.c.l.b16 %v10352
  %v10845 = vunpack.c.h.b16 %v10352
  %v10846 = vunpack.c.l.b16 %v10353
  %v10847 = vunpack.c.h.b16 %v10353
  %v10848 = vunpack.c.l.b16 %v10354
  %v10849 = vunpack.c.h.b16 %v10354
  %v10850 = vunpack.c.l.b16 %v10355
  %v10851 = vunpack.c.h.b16 %v10355
  %v10852 = vunpack.c.l.b16 %v10356
  %v10853 = vunpack.c.h.b16 %v10356
  %v10854 = vunpack.c.l.b16 %v10357
  %v10855 = vunpack.c.h.b16 %v10357
  %v10856 = vunpack.c.l.b16 %v10358
  %v10857 = vunpack.c.h.b16 %v10358
  %v10858 = vunpack.c.l.b16 %v10359
  %v10859 = vunpack.c.h.b16 %v10359
  %v10860 = vunpack.c.l.b16 %v10360
  %v10861 = vunpack.c.h.b16 %v10360
  %v10862 = vunpack.c.l.b16 %v10361
  %v10863 = vunpack.c.h.b16 %v10361
  %v10864 = vunpack.c.l.b16 %v10362
  %v10865 = vunpack.c.h.b16 %v10362
  %v10866 = vunpack.c.l.b16 %v10363
  %v10867 = vunpack.c.h.b16 %v10363
  %v10868 = vunpack.c.l.b16 %v10364
  %v10869 = vunpack.c.h.b16 %v10364
  %v10870 = vunpack.c.l.b16 %v10365
  %v10871 = vunpack.c.h.b16 %v10365
  %v10872 = vunpack.c.l.b16 %v10366
  %v10873 = vunpack.c.h.b16 %v10366
  %v10874 = vunpack.c.l.b16 %v10367
  %v10875 = vunpack.c.h.b16 %v10367
  %v10876 = vunpack.c.l.b16 %v10368
  %v10877 = vunpack.c.h.b16 %v10368
  %v10878 = vunpack.c.l.b16 %v10369
  %v10879 = vunpack.c.h.b16 %v10369
  %v10880 = vunpack.c.l.b16 %v10370
  %v10881 = vunpack.c.h.b16 %v10370
  %v10882 = vunpack.c.l.b16 %v10371
  %v10883 = vunpack.c.h.b16 %v10371
  %v10884 = vunpack.c.l.b16 %v10372
  %v10885 = vunpack.c.h.b16 %v10372
  %v10886 = vunpack.c.l.b16 %v10373
  %v10887 = vunpack.c.h.b16 %v10373
  %v10888 = vunpack.c.l.b16 %v10374
  %v10889 = vunpack.c.h.b16 %v10374
  %v10890 = vunpack.c.l.b16 %v10375
  %v10891 = vunpack.c.h.b16 %v10375
  %v10892 = vunpack.c.l.b16 %v10376
  %v10893 = vunpack.c.h.b16 %v10376
  %v10894 = vunpack.c.l.b16 %v10377
  %v10895 = vunpack.c.h.b16 %v10377
  %v10896 = vunpack.c.l.b16 %v10378
  %v10897 = vunpack.c.h.b16 %v10378
  %v10898 = vunpack.c.l.b16 %v10379
  %v10899 = vunpack.c.h.b16 %v10379
  %v10900 = vunpack.c.l.b16 %v10380
  %v10901 = vunpack.c.h.b16 %v10380
  %v10902 = vunpack.c.l.b16 %v10381
  %v10903 = vunpack.c.h.b16 %v10381
  %v10904 = vunpack.c.l.b16 %v10382
  %v10905 = vunpack.c.h.b16 %v10382
  %v10906 = vunpack.c.l.b16 %v10383
  %v10907 = vunpack.c.h.b16 %v10383
  %v10908 = vunpack.c.l.b16 %v10384
  %v10909 = vunpack.c.h.b16 %v10384
  %v10910 = vunpack.c.l.b16 %v10385
  %v10911 = vunpack.c.h.b16 %v10385
  %v10912 = vunpack.c.l.b16 %v10386
  %v10913 = vunpack.c.h.b16 %v10386
  %v10914 = vunpack.c.l.b16 %v10387
  %v10915 = vunpack.c.h.b16 %v10387
  %v10916 = vunpack.c.l.b16 %v10388
  %v10917 = vunpack.c.h.b16 %v10388
  %v10918 = vunpack.c.l.b16 %v10389
  %v10919 = vunpack.c.h.b16 %v10389
  %v10920 = vunpack.c.l.b16 %v10390
  %v10921 = vunpack.c.h.b16 %v10390
  %v10922 = vunpack.c.l.b16 %v10391
  %v10923 = vunpack.c.h.b16 %v10391
  %v10924 = vunpack.c.l.b16 %v10392
  %v10925 = vunpack.c.h.b16 %v10392
  %v10926 = vunpack.c.l.b16 %v10393
  %v10927 = vunpack.c.h.b16 %v10393
  %v10928 = vunpack.c.l.b16 %v10394
  %v10929 = vunpack.c.h.b16 %v10394
  %v10930 = vunpack.c.l.b16 %v10395
  %v10931 = vunpack.c.h.b16 %v10395
  %v10932 = vunpack.c.l.b16 %v10396
  %v10933 = vunpack.c.h.b16 %v10396
  %v10934 = vunpack.c.l.b16 %v10397
  %v10935 = vunpack.c.h.b16 %v10397
  %v10936 = vunpack.c.l.b16 %v10398
  %v10937 = vunpack.c.h.b16 %v10398
  %v10938 = vunpack.c.l.b16 %v10399
  %v10939 = vunpack.c.h.b16 %v10399
  %v10940 = vunpack.c.l.b16 %v10400
  %v10941 = vunpack.c.h.b16 %v10400
  %v10942 = vunpack.c.l.b16 %v10401
  %v10943 = vunpack.c.h.b16 %v10401
  %v10944 = vunpack.c.l.b16 %v10402
  %v10945 = vunpack.c.h.b16 %v10402
  %v10946 = vunpack.c.l.b16 %v10403
  %v10947 = vunpack.c.h.b16 %v10403
  %v10948 = vunpack.c.l.b16 %v10404
  %v10949 = vunpack.c.h.b16 %v10404
  %v10950 = vunpack.c.l.b16 %v10405
  %v10951 = vunpack.c.h.b16 %v10405
  %v10952 = vunpack.c.l.b16 %v10406
  %v10953 = vunpack.c.h.b16 %v10406
  %v10954 = vunpack.c.l.b16 %v10407
  %v10955 = vunpack.c.h.b16 %v10407
  %v10956 = vunpack.c.l.b16 %v10408
  %v10957 = vunpack.c.h.b16 %v10408
  %v10958 = vunpack.c.l.b16 %v10409
  %v10959 = vunpack.c.h.b16 %v10409
  %v10960 = vunpack.c.l.b16 %v10410
  %v10961 = vunpack.c.h.b16 %v10410
  %v10962 = vunpack.c.l.b16 %v10411
  %v10963 = vunpack.c.h.b16 %v10411
  %v10964 = vunpack.c.l.b16 %v10412
  %v10965 = vunpack.c.h.b16 %v10412
  %v10966 = vunpack.c.l.b16 %v10413
  %v10967 = vunpack.c.h.b16 %v10413
  %v10968 = vunpack.c.l.b16 %v10414
  %v10969 = vunpack.c.h.b16 %v10414
  %v10970 = vunpack.c.l.b16 %v10415
  %v10971 = vunpack.c.h.b16 %v10415
  %v10972 = vunpack.c.l.b16 %v10416
  %v10973 = vunpack.c.h.b16 %v10416
  %v10974 = vunpack.c.l.b16 %v10417
  %v10975 = vunpack.c.h.b16 %v10417
  %v10976 = vunpack.c.l.b16 %v10418
  %v10977 = vunpack.c.h.b16 %v10418
  %v10978 = vunpack.c.l.b16 %v10419
  %v10979 = vunpack.c.h.b16 %v10419
  %v10980 = vunpack.c.l.b16 %v10420
  %v10981 = vunpack.c.h.b16 %v10420
  %v10982 = vunpack.c.l.b16 %v10421
  %v10983 = vunpack.c.h.b16 %v10421
  %v10984 = vunpack.c.l.b16 %v10422
  %v10985 = vunpack.c.h.b16 %v10422
  %v10986 = vunpack.c.l.b16 %v10423
  %v10987 = vunpack.c.h.b16 %v10423
  %v10988 = vunpack.c.l.b16 %v10424
  %v10989 = vunpack.c.h.b16 %v10424
  %v10990 = vunpack.c.l.b16 %v10425
  %v10991 = vunpack.c.h.b16 %v10425
  %v10992 = vunpack.c.l.b16 %v10426
  %v10993 = vunpack.c.h.b16 %v10426
  %v10994 = vunpack.c.l.b16 %v10427
  %v10995 = vunpack.c.h.b16 %v10427
  %v10996 = vunpack.c.l.b16 %v10428
  %v10997 = vunpack.c.h.b16 %v10428
  %v10998 = vunpack.c.l.b16 %v10429
  %v10999 = vunpack.c.h.b16 %v10429
  %v11000 = vunpack.c.l.b16 %v10430
  %v11001 = vunpack.c.h.b16 %v10430
  %v11002 = vunpack.c.l.b16 %v10431
  %v11003 = vunpack.c.h.b16 %v10431
  %v11004 = vunpack.c.l.b16 %v10432
  %v11005 = vunpack.c.h.b16 %v10432
  %v11006 = vunpack.c.l.b16 %v10433
  %v11007 = vunpack.c.h.b16 %v10433
  %v11008 = vunpack.c.l.b16 %v10434
  %v11009 = vunpack.c.h.b16 %v10434
  %v11010 = vunpack.c.l.b16 %v10435
  %v11011 = vunpack.c.h.b16 %v10435
  %v11012 = vunpack.c.l.b16 %v10436
  %v11013 = vunpack.c.h.b16 %v10436
  %v11014 = vunpack.c.l.b16 %v10437
  %v11015 = vunpack.c.h.b16 %v10437
  %v11016 = vunpack.c.l.b16 %v10438
  %v11017 = vunpack.c.h.b16 %v10438
  %v11018 = vunpack.c.l.b16 %v10439
  %v11019 = vunpack.c.h.b16 %v10439
  %v11020 = vunpack.c.l.b16 %v10440
  %v11021 = vunpack.c.h.b16 %v10440
  %v11022 = vunpack.c.l.b16 %v10441
  %v11023 = vunpack.c.h.b16 %v10441
  %v11024 = vunpack.c.l.b16 %v10442
  %v11025 = vunpack.c.h.b16 %v10442
  %v11026 = vunpack.c.l.b16 %v10443
  %v11027 = vunpack.c.h.b16 %v10443
  %v11028 = vunpack.c.l.b16 %v10444
  %v11029 = vunpack.c.h.b16 %v10444
  %v11030 = vunpack.c.l.b16 %v10445
  %v11031 = vunpack.c.h.b16 %v10445
  %v11032 = vunpack.c.l.b16 %v10446
  %v11033 = vunpack.c.h.b16 %v10446
  %v11034 = vunpack.c.l.b16 %v10447
  %v11035 = vunpack.c.h.b16 %v10447
  %v11036 = vunpack.c.l.b16 %v10448
  %v11037 = vunpack.c.h.b16 %v10448
  %v11038 = vunpack.c.l.b16 %v10449
  %v11039 = vunpack.c.h.b16 %v10449
  %v11040 = vunpack.c.l.b16 %v10450
  %v11041 = vunpack.c.h.b16 %v10450
  %v11042 = vunpack.c.l.b16 %v10451
  %v11043 = vunpack.c.h.b16 %v10451
  %v11044 = vunpack.c.l.b16 %v10452
  %v11045 = vunpack.c.h.b16 %v10452
  %v11046 = vunpack.c.l.b16 %v10453
  %v11047 = vunpack.c.h.b16 %v10453
  %v11048 = vunpack.c.l.b16 %v10454
  %v11049 = vunpack.c.h.b16 %v10454
  %v11050 = vunpack.c.l.b16 %v10455
  %v11051 = vunpack.c.h.b16 %v10455
  %v11052 = vunpack.c.l.b16 %v10456
  %v11053 = vunpack.c.h.b16 %v10456
  %v11054 = vunpack.c.l.b16 %v10457
  %v11055 = vunpack.c.h.b16 %v10457
  %v11056 = vpack.c.b16 %v10676, %v10672
  %v11057 = vpack.c.b16 %v10677, %v10673
  %v11058 = vpack.c.b16 %v10678, %v10674
  %v11059 = vpack.c.b16 %v10679, %v10675
  %v11060 = vpack.c.b16 %v10684, %v10680
  %v11061 = vpack.c.b16 %v10685, %v10681
  %v11062 = vpack.c.b16 %v10686, %v10682
  %v11063 = vpack.c.b16 %v10687, %v10683
  %v11064 = vpack.c.b16 %v10692, %v10688
  %v11065 = vpack.c.b16 %v10693, %v10689
  %v11066 = vpack.c.b16 %v10694, %v10690
  %v11067 = vpack.c.b16 %v10695, %v10691
  %v11068 = vpack.c.b16 %v10700, %v10696
  %v11069 = vpack.c.b16 %v10701, %v10697
  %v11070 = vpack.c.b16 %v10702, %v10698
  %v11071 = vpack.c.b16 %v10703, %v10699
  %v11072 = vpack.c.b16 %v10708, %v10704
  %v11073 = vpack.c.b16 %v10709, %v10705
  %v11074 = vpack.c.b16 %v10710, %v10706
  %v11075 = vpack.c.b16 %v10711, %v10707
  %v11076 = vpack.c.b16 %v10716, %v10712
  %v11077 = vpack.c.b16 %v10717, %v10713
  %v11078 = vpack.c.b16 %v10718, %v10714
  %v11079 = vpack.c.b16 %v10719, %v10715
  %v11080 = vpack.c.b16 %v10724, %v10720
  %v11081 = vpack.c.b16 %v10725, %v10721
  %v11082 = vpack.c.b16 %v10726, %v10722
  %v11083 = vpack.c.b16 %v10727, %v10723
  %v11084 = vpack.c.b16 %v10732, %v10728
  %v11085 = vpack.c.b16 %v10733, %v10729
  %v11086 = vpack.c.b16 %v10734, %v10730
  %v11087 = vpack.c.b16 %v10735, %v10731
  %v11088 = vpack.c.b16 %v10740, %v10736
  %v11089 = vpack.c.b16 %v10741, %v10737
  %v11090 = vpack.c.b16 %v10742, %v10738
  %v11091 = vpack.c.b16 %v10743, %v10739
  %v11092 = vpack.c.b16 %v10748, %v10744
  %v11093 = vpack.c.b16 %v10749, %v10745
  %v11094 = vpack.c.b16 %v10750, %v10746
  %v11095 = vpack.c.b16 %v10751, %v10747
  %v11096 = vpack.c.b16 %v10756, %v10752
  %v11097 = vpack.c.b16 %v10757, %v10753
  %v11098 = vpack.c.b16 %v10758, %v10754
  %v11099 = vpack.c.b16 %v10759, %v10755
  %v11100 = vpack.c.b16 %v10764, %v10760
  %v11101 = vpack.c.b16 %v10765, %v10761
  %v11102 = vpack.c.b16 %v10766, %v10762
  %v11103 = vpack.c.b16 %v10767, %v10763
  %v11104 = vpack.c.b16 %v10772, %v10768
  %v11105 = vpack.c.b16 %v10773, %v10769
  %v11106 = vpack.c.b16 %v10774, %v10770
  %v11107 = vpack.c.b16 %v10775, %v10771
  %v11108 = vpack.c.b16 %v10780, %v10776
  %v11109 = vpack.c.b16 %v10781, %v10777
  %v11110 = vpack.c.b16 %v10782, %v10778
  %v11111 = vpack.c.b16 %v10783, %v10779
  %v11112 = vpack.c.b16 %v10788, %v10784
  %v11113 = vpack.c.b16 %v10789, %v10785
  %v11114 = vpack.c.b16 %v10790, %v10786
  %v11115 = vpack.c.b16 %v10791, %v10787
  %v11116 = vpack.c.b16 %v10796, %v10792
  %v11117 = vpack.c.b16 %v10797, %v10793
  %v11118 = vpack.c.b16 %v10798, %v10794
  %v11119 = vpack.c.b16 %v10799, %v10795
  %v11120 = vpack.c.b16 %v10804, %v10800
  %v11121 = vpack.c.b16 %v10805, %v10801
  %v11122 = vpack.c.b16 %v10806, %v10802
  %v11123 = vpack.c.b16 %v10807, %v10803
  %v11124 = vpack.c.b16 %v10812, %v10808
  %v11125 = vpack.c.b16 %v10813, %v10809
  %v11126 = vpack.c.b16 %v10814, %v10810
  %v11127 = vpack.c.b16 %v10815, %v10811
  %v11128 = vpack.c.b16 %v10820, %v10816
  %v11129 = vpack.c.b16 %v10821, %v10817
  %v11130 = vpack.c.b16 %v10822, %v10818
  %v11131 = vpack.c.b16 %v10823, %v10819
  %v11132 = vpack.c.b16 %v10828, %v10824
  %v11133 = vpack.c.b16 %v10829, %v10825
  %v11134 = vpack.c.b16 %v10830, %v10826
  %v11135 = vpack.c.b16 %v10831, %v10827
  %v11136 = vpack.c.b16 %v10836, %v10832
  %v11137 = vpack.c.b16 %v10837, %v10833
  %v11138 = vpack.c.b16 %v10838, %v10834
  %v11139 = vpack.c.b16 %v10839, %v10835
  %v11140 = vpack.c.b16 %v10844, %v10840
  %v11141 = vpack.c.b16 %v10845, %v10841
  %v11142 = vpack.c.b16 %v10846, %v10842
  %v11143 = vpack.c.b16 %v10847, %v10843
  %v11144 = vpack.c.b16 %v10852, %v10848
  %v11145 = vpack.c.b16 %v10853, %v10849
  %v11146 = vpack.c.b16 %v10854, %v10850
  %v11147 = vpack.c.b16 %v10855, %v10851
  %v11148 = vpack.c.b16 %v10860, %v10856
  %v11149 = vpack.c.b16 %v10861, %v10857
  %v11150 = vpack.c.b16 %v10862, %v10858
  %v11151 = vpack.c.b16 %v10863, %v10859
  %v11152 = vpack.c.b16 %v10868, %v10864
  %v11153 = vpack.c.b16 %v10869, %v10865
  %v11154 = vpack.c.b16 %v10870, %v10866
  %v11155 = vpack.c.b16 %v10871, %v10867
  %v11156 = vpack.c.b16 %v10876, %v10872
  %v11157 = vpack.c.b16 %v10877, %v10873
  %v11158 = vpack.c.b16 %v10878, %v10874
  %v11159 = vpack.c.b16 %v10879, %v10875
  %v11160 = vpack.c.b16 %v10884, %v10880
  %v11161 = vpack.c.b16 %v10885, %v10881
  %v11162 = vpack.c.b16 %v10886, %v10882
  %v11163 = vpack.c.b16 %v10887, %v10883
  %v11164 = vpack.c.b16 %v10892, %v10888
  %v11165 = vpack.c.b16 %v10893, %v10889
  %v11166 = vpack.c.b16 %v10894, %v10890
  %v11167 = vpack.c.b16 %v10895, %v10891
  %v11168 = vpack.c.b16 %v10900, %v10896
  %v11169 = vpack.c.b16 %v10901, %v10897
  %v11170 = vpack.c.b16 %v10902, %v10898
  %v11171 = vpack.c.b16 %v10903, %v10899
  %v11172 = vpack.c.b16 %v10908, %v10904
  %v11173 = vpack.c.b16 %v10909, %v10905
  %v11174 = vpack.c.b16 %v10910, %v10906
  %v11175 = vpack.c.b16 %v10911, %v10907
  %v11176 = vpack.c.b16 %v10916, %v10912
  %v11177 = vpack.c.b16 %v10917, %v10913
  %v11178 = vpack.c.b16 %v10918, %v10914
  %v11179 = vpack.c.b16 %v10919, %v10915
  %v11180 = vpack.c.b16 %v10924, %v10920
  %v11181 = vpack.c.b16 %v10925, %v10921
  %v11182 = vpack.c.b16 %v10926, %v10922
  %v11183 = vpack.c.b16 %v10927, %v10923
  %v11184 = vpack.c.b16 %v10932, %v10928
  %v11185 = vpack.c.b16 %v10933, %v10929
  %v11186 = vpack.c.b16 %v10934, %v10930
  %v11187 = vpack.c.b16 %v10935, %v10931
  %v11188 = vpack.c.b16 %v10940, %v10936
  %v11189 = vpack.c.b16 %v10941, %v10937
  %v11190 = vpack.c.b16 %v10942, %v10938
  %v11191 = vpack.c.b16 %v10943, %v10939
  %v11192 = vpack.c.b16 %v10948, %v10944
  %v11193 = vpack.c.b16 %v10949, %v10945
  %v11194 = vpack.c.b16 %v10950, %v10946
  %v11195 = vpack.c.b16 %v10951, %v10947
  %v11196 = vpack.c.b16 %v10956, %v10952
  %v11197 = vpack.c.b16 %v10957, %v10953
  %v11198 = vpack.c.b16 %v10958, %v10954
  %v11199 = vpack.c.b16 %v10959, %v10955
  %v11200 = vpack.c.b16 %v10964, %v10960
  %v11201 = vpack.c.b16 %v10965, %v10961
  %v11202 = vpack.c.b16 %v10966, %v10962
  %v11203 = vpack.c.b16 %v10967, %v10963
  %v11204 = vpack.c.b16 %v10972, %v10968
  %v11205 = vpack.c.b16 %v10973, %v10969
  %v11206 = vpack.c.b16 %v10974, %v10970
  %v11207 = vpack.c.b16 %v10975, %v10971
  %v11208 = vpack.c.b16 %v10980, %v10976
  %v11209 = vpack.c.b16 %v10981, %v10977
  %v11210 = vpack.c.b16 %v10982, %v10978
  %v11211 = vpack.c.b16 %v10983, %v10979
  %v11212 = vpack.c.b16 %v10988, %v10984
  %v11213 = vpack.c.b16 %v10989, %v10985
  %v11214 = vpack.c.b16 %v10990, %v10986
  %v11215 = vpack.c.b16 %v10991, %v10987
  %v11216 = vpack.c.b16 %v10996, %v10992
  %v11217 = vpack.c.b16 %v10997, %v10993
  %v11218 = vpack.c.b16 %v10998, %v10994
  %v11219 = vpack.c.b16 %v10999, %v10995
  %v11220 = vpack.c.b16 %v11004, %v11000
  %v11221 = vpack.c.b16 %v11005, %v11001
  %v11222 = vpack.c.b16 %v11006, %v11002
  %v11223 = vpack.c.b16 %v11007, %v11003
  %v11224 = vpack.c.b16 %v11012, %v11008
  %v11225 = vpack.c.b16 %v11013, %v11009
  %v11226 = vpack.c.b16 %v11014, %v11010
  %v11227 = vpack.c.b16 %v11015, %v11011
  %v11228 = vpack.c.b16 %v11020, %v11016
  %v11229 = vpack.c.b16 %v11021, %v11017
  %v11230 = vpack.c.b16 %v11022, %v11018
  %v11231 = vpack.c.b16 %v11023, %v11019
  %v11232 = vpack.c.b16 %v11028, %v11024
  %v11233 = vpack.c.b16 %v11029, %v11025
  %v11234 = vpack.c.b16 %v11030, %v11026
  %v11235 = vpack.c.b16 %v11031, %v11027
  %v11236 = vpack.c.b16 %v11036, %v11032
  %v11237 = vpack.c.b16 %v11037, %v11033
  %v11238 = vpack.c.b16 %v11038, %v11034
  %v11239 = vpack.c.b16 %v11039, %v11035
  %v11240 = vpack.c.b16 %v11044, %v11040
  %v11241 = vpack.c.b16 %v11045, %v11041
  %v11242 = vpack.c.b16 %v11046, %v11042
  %v11243 = vpack.c.b16 %v11047, %v11043
  %v11244 = vpack.c.b16 %v11052, %v11048
  %v11245 = vpack.c.b16 %v11053, %v11049
  %v11246 = vpack.c.b16 %v11054, %v11050
  %v11247 = vpack.c.b16 %v11055, %v11051
  %11440 = vmatprep.subr.bf16.mxu0 %v11057
  %11441 = vmatpush1.bf16.msra.mxu0 %v11056
  %11442 = vmatprep.subr.bf16.mxu0 %v11061
  %11443 = vmatpush1.bf16.msra.mxu0 %v11060
  %11444 = vmatprep.subr.bf16.mxu0 %v11065
  %11445 = vmatpush1.bf16.msra.mxu0 %v11064
  %11446 = vmatprep.subr.bf16.mxu0 %v11069
  %11447 = vmatpush1.bf16.msra.mxu0 %v11068
  %11448 = vmatprep.subr.bf16.mxu0 %v11073
  %11449 = vmatpush1.bf16.msra.mxu0 %v11072
  %11450 = vmatprep.subr.bf16.mxu0 %v11077
  %11451 = vmatpush1.bf16.msra.mxu0 %v11076
  %11452 = vmatprep.subr.bf16.mxu0 %v11081
  %11453 = vmatpush1.bf16.msra.mxu0 %v11080
  %11454 = vmatprep.subr.bf16.mxu0 %v11085
  %11455 = vmatpush1.bf16.msra.mxu0 %v11084
  %11456 = vmatprep.subr.bf16.mxu0 %v11089
  %11457 = vmatpush1.bf16.msra.mxu0 %v11088
  %11458 = vmatprep.subr.bf16.mxu0 %v11093
  %11459 = vmatpush1.bf16.msra.mxu0 %v11092
  %11460 = vmatprep.subr.bf16.mxu0 %v11097
  %11461 = vmatpush1.bf16.msra.mxu0 %v11096
  %11462 = vmatprep.subr.bf16.mxu0 %v11101
  %11463 = vmatpush1.bf16.msra.mxu0 %v11100
  %11464 = vmatprep.subr.bf16.mxu0 %v11105
  %11465 = vmatpush1.bf16.msra.mxu0 %v11104
  %11466 = vmatprep.subr.bf16.mxu0 %v11109
  %11467 = vmatpush1.bf16.msra.mxu0 %v11108
  %11468 = vmatprep.subr.bf16.mxu0 %v11113
  %11469 = vmatpush1.bf16.msra.mxu0 %v11112
  %11470 = vmatprep.subr.bf16.mxu0 %v11117
  %11471 = vmatpush1.bf16.msra.mxu0 %v11116
  %11472 = vmatprep.mubr.bf16.mxu0 %v10255
  %11473 = vmatmul.mubr.bf16.gmra.mrb[0].mxu0 %v10254
  %v11474 = vpop.f32.mrb[0].mxu0
  %v11475 = vadd.f32 %v10463, %v11474
  %v11476 = vpop.f32.mrb[0].mxu0
  %v11477 = vadd.f32 %v10467, %v11476
  %v11478 = vpop.f32.mrb[0].mxu0
  %v11479 = vadd.f32 %v10463, %v11478
  %v11480 = vpop.f32.mrb[0].mxu0
  %v11481 = vadd.f32 %v10467, %v11480
  %11482 = vmatprep.mubr.bf16.mxu0 %v10261
  %11483 = vmatmul.mubr.bf16.gmra.mrb[0].mxu0 %v10260
  %v11484 = vpop.f32.mrb[0].mxu0
  %v11485 = vadd.f32 %v10463, %v11484
  %v11486 = vpop.f32.mrb[0].mxu0
  %v11487 = vadd.f32 %v10467, %v11486
  %v11488 = vpop.f32.mrb[0].mxu0
  %v11489 = vpop.f32.mrb[0].mxu0
  %11490 = vdwg.mxu0
  %11491 = vmatprep.subr.bf16.mxu0 %v11121
  %11492 = vmatpush1.bf16.msra.mxu0 %v11120
  %11493 = vmatprep.subr.bf16.mxu0 %v11125
  %11494 = vmatpush1.bf16.msra.mxu0 %v11124
  %11495 = vmatprep.subr.bf16.mxu0 %v11129
  %11496 = vmatpush1.bf16.msra.mxu0 %v11128
  %11497 = vmatprep.subr.bf16.mxu0 %v11133
  %11498 = vmatpush1.bf16.msra.mxu0 %v11132
  %11499 = vmatprep.subr.bf16.mxu0 %v11137
  %11500 = vmatpush1.bf16.msra.mxu0 %v11136
  %11501 = vmatprep.subr.bf16.mxu0 %v11141
  %11502 = vmatpush1.bf16.msra.mxu0 %v11140
  %11503 = vmatprep.subr.bf16.mxu0 %v11145
  %11504 = vmatpush1.bf16.msra.mxu0 %v11144
  %11505 = vmatprep.subr.bf16.mxu0 %v11149
  %11506 = vmatpush1.bf16.msra.mxu0 %v11148
  %11507 = vmatprep.subr.bf16.mxu0 %v11153
  %11508 = vmatpush1.bf16.msra.mxu0 %v11152
  %11509 = vmatprep.subr.bf16.mxu0 %v11157
  %11510 = vmatpush1.bf16.msra.mxu0 %v11156
  %11511 = vmatprep.subr.bf16.mxu0 %v11161
  %11512 = vmatpush1.bf16.msra.mxu0 %v11160
  %11513 = vmatprep.subr.bf16.mxu0 %v11165
  %11514 = vmatpush1.bf16.msra.mxu0 %v11164
  %11515 = vmatprep.subr.bf16.mxu0 %v11169
  %11516 = vmatpush1.bf16.msra.mxu0 %v11168
  %11517 = vmatprep.subr.bf16.mxu0 %v11173
  %11518 = vmatpush1.bf16.msra.mxu0 %v11172
  %11519 = vmatprep.subr.bf16.mxu0 %v11177
  %11520 = vmatpush1.bf16.msra.mxu0 %v11176
  %11521 = vmatprep.subr.bf16.mxu0 %v11181
  %11522 = vmatpush1.bf16.msra.mxu0 %v11180
  %11523 = vmatprep.mubr.bf16.mxu0 %v10257
  %11524 = vmatmul.mubr.bf16.gmra.mrb[0].mxu0 %v10256
  %v11525 = vpop.f32.mrb[0].mxu0
  %v11526 = vadd.f32 %v11475, %v11525
  %v11527 = vpop.f32.mrb[0].mxu0
  %v11528 = vadd.f32 %v11477, %v11527
  %v11529 = vpop.f32.mrb[0].mxu0
  %v11530 = vadd.f32 %v11479, %v11529
  %v11531 = vpop.f32.mrb[0].mxu0
  %v11532 = vadd.f32 %v11481, %v11531
  %11533 = vmatprep.mubr.bf16.mxu0 %v10263
  %11534 = vmatmul.mubr.bf16.gmra.mrb[0].mxu0 %v10262
  %v11535 = vpop.f32.mrb[0].mxu0
  %v11536 = vadd.f32 %v11485, %v11535
  %v11537 = vpop.f32.mrb[0].mxu0
  %v11538 = vadd.f32 %v11487, %v11537
  %v11539 = vpop.f32.mrb[0].mxu0
  %v11540 = vpop.f32.mrb[0].mxu0
  %11541 = vdwg.mxu0
  %11542 = vmatprep.subr.bf16.mxu0 %v11185
  %11543 = vmatpush1.bf16.msra.mxu0 %v11184
  %11544 = vmatprep.subr.bf16.mxu0 %v11189
  %11545 = vmatpush1.bf16.msra.mxu0 %v11188
  %11546 = vmatprep.subr.bf16.mxu0 %v11193
  %11547 = vmatpush1.bf16.msra.mxu0 %v11192
  %11548 = vmatprep.subr.bf16.mxu0 %v11197
  %11549 = vmatpush1.bf16.msra.mxu0 %v11196
  %11550 = vmatprep.subr.bf16.mxu0 %v11201
  %11551 = vmatpush1.bf16.msra.mxu0 %v11200
  %11552 = vmatprep.subr.bf16.mxu0 %v11205
  %11553 = vmatpush1.bf16.msra.mxu0 %v11204
  %11554 = vmatprep.subr.bf16.mxu0 %v11209
  %11555 = vmatpush1.bf16.msra.mxu0 %v11208
  %11556 = vmatprep.subr.bf16.mxu0 %v11213
  %11557 = vmatpush1.bf16.msra.mxu0 %v11212
  %11558 = vmatprep.subr.bf16.mxu0 %v11217
  %11559 = vmatpush1.bf16.msra.mxu0 %v11216
  %11560 = vmatprep.subr.bf16.mxu0 %v11221
  %11561 = vmatpush1.bf16.msra.mxu0 %v11220
  %11562 = vmatprep.subr.bf16.mxu0 %v11225
  %11563 = vmatpush1.bf16.msra.mxu0 %v11224
  %11564 = vmatprep.subr.bf16.mxu0 %v11229
  %11565 = vmatpush1.bf16.msra.mxu0 %v11228
  %11566 = vmatprep.subr.bf16.mxu0 %v11233
  %11567 = vmatpush1.bf16.msra.mxu0 %v11232
  %11568 = vmatprep.subr.bf16.mxu0 %v11237
  %11569 = vmatpush1.bf16.msra.mxu0 %v11236
  %11570 = vmatprep.subr.bf16.mxu0 %v11241
  %11571 = vmatpush1.bf16.msra.mxu0 %v11240
  %11572 = vmatprep.subr.bf16.mxu0 %v11245
  %11573 = vmatpush1.bf16.msra.mxu0 %v11244
  %11574 = vmatprep.mubr.bf16.mxu0 %v10259
  %11575 = vmatmul.mubr.bf16.gmra.mrb[0].mxu0 %v10258
  %v11576 = vpop.f32.mrb[0].mxu0
  %v11577 = vadd.f32 %v11526, %v11576
  %v11578 = vpop.f32.mrb[0].mxu0
  %v11579 = vadd.f32 %v11528, %v11578
  %v11580 = vpop.f32.mrb[0].mxu0
  %v11581 = vadd.f32 %v11530, %v11580
  %v11582 = vpop.f32.mrb[0].mxu0
  %v11583 = vadd.f32 %v11532, %v11582
  %11584 = vmatprep.mubr.bf16.mxu0 %v10265
  %11585 = vmatmul.mubr.bf16.gmra.mrb[0].mxu0 %v10264
  %v11586 = vpop.f32.mrb[0].mxu0
  %v11587 = vadd.f32 %v11536, %v11586
  %v11588 = vpop.f32.mrb[0].mxu0
  %v11589 = vadd.f32 %v11538, %v11588
  %v11590 = vpop.f32.mrb[0].mxu0
  %v11591 = vpop.f32.mrb[0].mxu0
  %11592 = vdwg.mxu0
  %11593 = vmatprep.subr.bf16.mxu0 %v11059
  %11594 = vmatpush1.bf16.msra.mxu0 %v11058
  %11595 = vmatprep.subr.bf16.mxu0 %v11063
  %11596 = vmatpush1.bf16.msra.mxu0 %v11062
  %11597 = vmatprep.subr.bf16.mxu0 %v11067
  %11598 = vmatpush1.bf16.msra.mxu0 %v11066
  %11599 = vmatprep.subr.bf16.mxu0 %v11071
  %11600 = vmatpush1.bf16.msra.mxu0 %v11070
  %11601 = vmatprep.subr.bf16.mxu0 %v11075
  %11602 = vmatpush1.bf16.msra.mxu0 %v11074
  %11603 = vmatprep.subr.bf16.mxu0 %v11079
  %11604 = vmatpush1.bf16.msra.mxu0 %v11078
  %11605 = vmatprep.subr.bf16.mxu0 %v11083
  %11606 = vmatpush1.bf16.msra.mxu0 %v11082
  %11607 = vmatprep.subr.bf16.mxu0 %v11087
  %11608 = vmatpush1.bf16.msra.mxu0 %v11086
  %11609 = vmatprep.subr.bf16.mxu0 %v11091
  %11610 = vmatpush1.bf16.msra.mxu0 %v11090
  %11611 = vmatprep.subr.bf16.mxu0 %v11095
  %11612 = vmatpush1.bf16.msra.mxu0 %v11094
  %11613 = vmatprep.subr.bf16.mxu0 %v11099
  %11614 = vmatpush1.bf16.msra.mxu0 %v11098
  %11615 = vmatprep.subr.bf16.mxu0 %v11103
  %11616 = vmatpush1.bf16.msra.mxu0 %v11102
  %11617 = vmatprep.subr.bf16.mxu0 %v11107
  %11618 = vmatpush1.bf16.msra.mxu0 %v11106
  %11619 = vmatprep.subr.bf16.mxu0 %v11111
  %11620 = vmatpush1.bf16.msra.mxu0 %v11110
  %11621 = vmatprep.subr.bf16.mxu0 %v11115
  %11622 = vmatpush1.bf16.msra.mxu0 %v11114
  %11623 = vmatprep.subr.bf16.mxu0 %v11119
  %11624 = vmatpush1.bf16.msra.mxu0 %v11118
  %11625 = vmatprep.mubr.bf16.mxu0 %v10255
  %11626 = vmatmul.mubr.bf16.gmra.mrb[0].mxu0 %v10254
  %v11627 = vpop.f32.mrb[0].mxu0
  %v11628 = vadd.f32 %v10471, %v11627
  %v11629 = vpop.f32.mrb[0].mxu0
  %v11630 = vadd.f32 %v10475, %v11629
  %v11631 = vpop.f32.mrb[0].mxu0
  %v11632 = vadd.f32 %v10471, %v11631
  %v11633 = vpop.f32.mrb[0].mxu0
  %v11634 = vadd.f32 %v10475, %v11633
  %11635 = vmatprep.mubr.bf16.mxu0 %v10261
  %11636 = vmatmul.mubr.bf16.gmra.mrb[0].mxu0 %v10260
  %v11637 = vpop.f32.mrb[0].mxu0
  %v11638 = vadd.f32 %v10471, %v11637
  %v11639 = vpop.f32.mrb[0].mxu0
  %v11640 = vadd.f32 %v10475, %v11639
  %v11641 = vpop.f32.mrb[0].mxu0
  %v11642 = vpop.f32.mrb[0].mxu0
  %11643 = vdwg.mxu0
  %11644 = vmatprep.subr.bf16.mxu0 %v11123
  %11645 = vmatpush1.bf16.msra.mxu0 %v11122
  %11646 = vmatprep.subr.bf16.mxu0 %v11127
  %11647 = vmatpush1.bf16.msra.mxu0 %v11126
  %11648 = vmatprep.subr.bf16.mxu0 %v11131
  %11649 = vmatpush1.bf16.msra.mxu0 %v11130
  %11650 = vmatprep.subr.bf16.mxu0 %v11135
  %11651 = vmatpush1.bf16.msra.mxu0 %v11134
  %11652 = vmatprep.subr.bf16.mxu0 %v11139
  %11653 = vmatpush1.bf16.msra.mxu0 %v11138
  %11654 = vmatprep.subr.bf16.mxu0 %v11143
  %11655 = vmatpush1.bf16.msra.mxu0 %v11142
  %11656 = vmatprep.subr.bf16.mxu0 %v11147
  %11657 = vmatpush1.bf16.msra.mxu0 %v11146
  %11658 = vmatprep.subr.bf16.mxu0 %v11151
  %11659 = vmatpush1.bf16.msra.mxu0 %v11150
  %11660 = vmatprep.subr.bf16.mxu0 %v11155
  %11661 = vmatpush1.bf16.msra.mxu0 %v11154
  %11662 = vmatprep.subr.bf16.mxu0 %v11159
  %11663 = vmatpush1.bf16.msra.mxu0 %v11158
  %11664 = vmatprep.subr.bf16.mxu0 %v11163
  %11665 = vmatpush1.bf16.msra.mxu0 %v11162
  %11666 = vmatprep.subr.bf16.mxu0 %v11167
  %11667 = vmatpush1.bf16.msra.mxu0 %v11166
  %11668 = vmatprep.subr.bf16.mxu0 %v11171
  %11669 = vmatpush1.bf16.msra.mxu0 %v11170
  %11670 = vmatprep.subr.bf16.mxu0 %v11175
  %11671 = vmatpush1.bf16.msra.mxu0 %v11174
  %11672 = vmatprep.subr.bf16.mxu0 %v11179
  %11673 = vmatpush1.bf16.msra.mxu0 %v11178
  %11674 = vmatprep.subr.bf16.mxu0 %v11183
  %11675 = vmatpush1.bf16.msra.mxu0 %v11182
  %11676 = vmatprep.mubr.bf16.mxu0 %v10257
  %11677 = vmatmul.mubr.bf16.gmra.mrb[0].mxu0 %v10256
  %v11678 = vpop.f32.mrb[0].mxu0
  %v11679 = vadd.f32 %v11628, %v11678
  %v11680 = vpop.f32.mrb[0].mxu0
  %v11681 = vadd.f32 %v11630, %v11680
  %v11682 = vpop.f32.mrb[0].mxu0
  %v11683 = vadd.f32 %v11632, %v11682
  %v11684 = vpop.f32.mrb[0].mxu0
  %v11685 = vadd.f32 %v11634, %v11684
  %11686 = vmatprep.mubr.bf16.mxu0 %v10263
  %11687 = vmatmul.mubr.bf16.gmra.mrb[0].mxu0 %v10262
  %v11688 = vpop.f32.mrb[0].mxu0
  %v11689 = vadd.f32 %v11638, %v11688
  %v11690 = vpop.f32.mrb[0].mxu0
  %v11691 = vadd.f32 %v11640, %v11690
  %v11692 = vpop.f32.mrb[0].mxu0
  %v11693 = vpop.f32.mrb[0].mxu0
  %11694 = vdwg.mxu0
  %11695 = vmatprep.subr.bf16.mxu0 %v11187
  %11696 = vmatpush1.bf16.msra.mxu0 %v11186
  %11697 = vmatprep.subr.bf16.mxu0 %v11191
  %11698 = vmatpush1.bf16.msra.mxu0 %v11190
  %11699 = vmatprep.subr.bf16.mxu0 %v11195
  %11700 = vmatpush1.bf16.msra.mxu0 %v11194
  %11701 = vmatprep.subr.bf16.mxu0 %v11199
  %11702 = vmatpush1.bf16.msra.mxu0 %v11198
  %11703 = vmatprep.subr.bf16.mxu0 %v11203
  %11704 = vmatpush1.bf16.msra.mxu0 %v11202
  %11705 = vmatprep.subr.bf16.mxu0 %v11207
  %11706 = vmatpush1.bf16.msra.mxu0 %v11206
  %11707 = vmatprep.subr.bf16.mxu0 %v11211
  %11708 = vmatpush1.bf16.msra.mxu0 %v11210
  %11709 = vmatprep.subr.bf16.mxu0 %v11215
  %11710 = vmatpush1.bf16.msra.mxu0 %v11214
  %11711 = vmatprep.subr.bf16.mxu0 %v11219
  %11712 = vmatpush1.bf16.msra.mxu0 %v11218
  %11713 = vmatprep.subr.bf16.mxu0 %v11223
  %11714 = vmatpush1.bf16.msra.mxu0 %v11222
  %11715 = vmatprep.subr.bf16.mxu0 %v11227
  %11716 = vmatpush1.bf16.msra.mxu0 %v11226
  %11717 = vmatprep.subr.bf16.mxu0 %v11231
  %11718 = vmatpush1.bf16.msra.mxu0 %v11230
  %11719 = vmatprep.subr.bf16.mxu0 %v11235
  %11720 = vmatpush1.bf16.msra.mxu0 %v11234
  %11721 = vmatprep.subr.bf16.mxu0 %v11239
  %11722 = vmatpush1.bf16.msra.mxu0 %v11238
  %11723 = vmatprep.subr.bf16.mxu0 %v11243
  %11724 = vmatpush1.bf16.msra.mxu0 %v11242
  %11725 = vmatprep.subr.bf16.mxu0 %v11247
  %11726 = vmatpush1.bf16.msra.mxu0 %v11246
  %11727 = vmatprep.mubr.bf16.mxu0 %v10259
  %11728 = vmatmul.mubr.bf16.gmra.mrb[0].mxu0 %v10258
  %v11729 = vpop.f32.mrb[0].mxu0
  %v11730 = vadd.f32 %v11679, %v11729
  %v11731 = vpop.f32.mrb[0].mxu0
  %v11732 = vadd.f32 %v11681, %v11731
  %v11733 = vpop.f32.mrb[0].mxu0
  %v11734 = vadd.f32 %v11683, %v11733
  %v11735 = vpop.f32.mrb[0].mxu0
  %v11736 = vadd.f32 %v11685, %v11735
  %11737 = vmatprep.mubr.bf16.mxu0 %v10265
  %11738 = vmatmul.mubr.bf16.gmra.mrb[0].mxu0 %v10264
  %v11739 = vpop.f32.mrb[0].mxu0
  %v11740 = vadd.f32 %v11689, %v11739
  %v11741 = vpop.f32.mrb[0].mxu0
  %v11742 = vadd.f32 %v11691, %v11741
  %v11743 = vpop.f32.mrb[0].mxu0
  %v11744 = vpop.f32.mrb[0].mxu0
  %11745 = vdwg.mxu0
  %v11746 = vmax.f32 %v11577, 0.0
  %v11747 = vmax.f32 %v11579, 0.0
  %v11748 = vmax.f32 %v11730, 0.0
  %v11749 = vmax.f32 %v11732, 0.0
  %v11750 = vmax.f32 %v11581, 0.0
  %v11751 = vmax.f32 %v11583, 0.0
  %v11752 = vmax.f32 %v11734, 0.0
  %v11753 = vmax.f32 %v11736, 0.0
  %v11754 = vmax.f32 %v11587, 0.0
  %v11755 = vmax.f32 %v11589, 0.0
  %v11756 = vmax.f32 %v11740, 0.0
  %v11757 = vmax.f32 %v11742, 0.0
  %v11758 = vld [vmem:[%s9] sm:$0xf]
  %v11760 = vlaneseq
  %v11761 = vshrl.u32 %v11760, 7
  %v11762 = vsub.s32 0, %v11761
  %v11763 = vrot.slane %v11758, %v11762
  %v11764 = vlaneseq
  %v11765 = vshrl.u32 %v11764, 7
  %v11766 = vsub.s32 1, %v11765
  %v11767 = vrot.slane %v11758, %v11766
  %v11768 = vlaneseq
  %v11769 = vshrl.u32 %v11768, 7
  %v11770 = vsub.s32 2, %v11769
  %v11771 = vrot.slane %v11758, %v11770
  %v11772 = vlaneseq
  %v11773 = vshrl.u32 %v11772, 7
  %v11774 = vsub.s32 3, %v11773
  %v11775 = vrot.slane %v11758, %v11774
  %v11780 = vmul.f32 %v11746, %v11763
  %v11781 = vmul.f32 %v11747, %v11767
  %v11782 = vmul.f32 %v11748, %v11771
  %v11783 = vmul.f32 %v11749, %v11775
  %v11784 = vmul.f32 %v11750, %v11763
  %v11785 = vmul.f32 %v11751, %v11767
  %v11786 = vmul.f32 %v11752, %v11771
  %v11787 = vmul.f32 %v11753, %v11775
  %v11788 = vmul.f32 %v11754, %v11763
  %v11789 = vmul.f32 %v11755, %v11767
  %v11790 = vmul.f32 %v11756, %v11771
  %v11791 = vmul.f32 %v11757, %v11775
  %v11792 = vadd.f32 %v11780, %v11781
  %v11793 = vadd.f32 %v11792, %v11782
  %v11794 = vadd.f32 %v11793, %v11783
  %11795 = vadd.xlane.f32.xlu0 %v11794
  %v11796 = vpop.xlane.xlu0 %11795
  %v11797 = vadd.f32 %v11784, %v11785
  %v11798 = vadd.f32 %v11797, %v11786
  %v11799 = vadd.f32 %v11798, %v11787
  %11800 = vadd.xlane.f32.xlu0 %v11799
  %v11801 = vpop.xlane.xlu0 %11800
  %v11802 = vadd.f32 %v11788, %v11789
  %v11803 = vadd.f32 %v11802, %v11790
  %v11804 = vadd.f32 %v11803, %v11791
  %11805 = vadd.xlane.f32.xlu0 %v11804
  %v11806 = vpop.xlane.xlu0 %11805
  %v11807 = vld [vmem:[#allocation2] sm:$0x1]
  %v11809 = vlaneseq
  %v11810 = vshrl.u32 %v11809, 7
  %v11811 = vsub.s32 0, %v11810
  %v11812 = vrot.slane %v11807, %v11811
  %v11814 = vadd.f32 %v11796, %v11812
  %v11815 = vadd.f32 %v11801, %v11812
  %v11816 = vadd.f32 %v11806, %v11812
  %vm11817 = vcmask 7168
  %11818 = vst.msk [vmem:[%s11] sm:$0xff] %vm11817, %v11814
  %11819 = vst.msk [vmem:[%s11 + $0x8] sm:$0xff] %vm11817, %v11815
  %11820 = vst.msk [vmem:[%s11 + $0x10] sm:$0xff] %vm11817, %v11816
  // Predicated region
  $region46: #{dqn_forward.1} parent=0 // pred_check
    _
  $region47: #{dqn_forward.1} parent=0 // pred_check_branch
    %11822 = sbr.rel (0) target = $region49
  $region48: #{dqn_forward.1} parent=0 // pred_region
    _
  $region49: #{dqn_forward.1} parent=0 // pred_fallthru
    _
  // Predicated region
  $region50: #{dqn_forward.1} parent=0 // pred_check
    _
  $region51: #{dqn_forward.1} parent=0 // pred_check_branch
    %11824 = sbr.rel (0) target = $region53
  $region52: #{dqn_forward.1} parent=0 // pred_region
    _
  $region53: #{dqn_forward.1} parent=0 // pred_fallthru
    _

</llo_original>
